<compile_context>
chip_gen: v7x
topology: tpu7x:2x2x1
jax: 0.10.0
libtpu: 0.0.40
codegen_flags: <defaults>
</compile_context>

<pallas_src>
import jax
import jax.numpy as jnp
from jax.experimental import pallas as pl
from jax.experimental.pallas import tpu as pltpu

# ---- hyperparameters (from the reference `args` class) ----------------------
VOCAB = 22          # vocab_size
EMB = 16            # gen_small_embedding
HID = 16            # cnn_hidden_size
MAX_LEN = 35        # gen_max_len
PAD_ID = 21         # pad_token_id
N_LAYERS = 4        # cnn_n_layers
LN_EPS = 1e-12      # layer_norm_eps
KSIZE = 17
N_TAPS = KSIZE // 2         # masked-'A' conv keeps taps 0..7 (strictly causal)
OUT_VOCAB = VOCAB - 1       # 21
DEC_DIM = 2 * HID + 1       # 33
PACK_K = N_TAPS * HID       # 128: packed conv contraction width

LANE = 128                  # TPU lane width
LP = 40                     # MAX_LEN padded to a sublane-tile multiple
G_MAX = 16                  # sequences per grid block (16 * 40 = 640 rows)

# row layout of the packed parameter-vector slab ([VEC_ROWS, 128] f32)
ROW_UP_B = 0
ROW_DEC_DENSE_B = 1
ROW_DEC_OUT_B = 2
ROW_BLK0 = 3
ROWS_PER_BLK = 9            # ln1_g ln1_b c1_b ln2_g ln2_b c2_b ln3_g ln3_b c3_b
VEC_ROWS = 40               # 3 + 4*9 = 39, padded to 40

SEED_TOKENS = jnp.array(
    [6, 5, 17, 10, 12, 16, 20, 6, 8, 16, 8, 20, 16, 3, 6, 15, 15, 17, 5, 20,
     6, 3, 16, 18, 6, 15, 1, 1, 6, 17, 5, 3, 16, 21, 21], dtype=jnp.int32)


def _ln_stat(x, eps=LN_EPS):
    """LayerNorm normalization only (affine applied separately / folded away)."""
    mu = jnp.mean(x, axis=-1, keepdims=True)
    xc = x - mu
    var = jnp.mean(xc * xc, axis=-1, keepdims=True)
    return xc * jax.lax.rsqrt(var + eps)


def _layer_norm(x, g, b):
    return _ln_stat(x) * g + b


def _relu(x):
    return jnp.maximum(x, 0.0)


def gen_bytenet_kernel(idx_ref,            # SMEM (1,) int32 (scalar prefetch)
                       emb_ref,            # [G*LP, EMB]
                       mut_ref,            # [G, 1]
                       vecs_ref,           # [VEC_ROWS, LANE] packed LN/bias slab
                       up_w_ref,           # [EMB, 2*HID]  (ln0 affine folded)
                       c1_w_ref,           # [N_LAYERS, 2*HID, HID]
                       c2_w_ref,           # [N_LAYERS, PACK_K, HID]
                       c3_w_ref,           # [N_LAYERS, HID, 2*HID]
                       dec_dense_w_ref,    # [DEC_DIM, DEC_DIM]
                       dec_out_w_ref,      # [DEC_DIM, LANE] (dec LN folded, lane-padded)
                       out_ref,            # [G, LANE]
                       im_ref):            # VMEM scratch [G*LP, PACK_K]
    f32 = jnp.float32
    NLB = emb_ref.shape[0]                 # G * LP rows in this block
    G = out_ref.shape[0]

    vecs = vecs_ref[...]                   # [VEC_ROWS, 128]

    # In-sequence position of each flattened row, from a sublane iota.  f32 math
    # (exact for these magnitudes) avoids vector integer div/mod.
    rowf = jax.lax.broadcasted_iota(jnp.int32, (NLB, 1), 0).astype(f32)
    posf = rowf - LP * jnp.floor(rowf * (1.0 / LP))               # [NLB, 1]
    # Tap k (k in 0..7) reads x[p-8+k]; drop it when it would reach before the
    # start of the row's own sequence (also kills roll wrap-around rows).
    tap_keep = [posf >= float(N_TAPS - k) for k in range(N_TAPS)]

    # ---- AbEmbeddings tail: LayerNorm (affine folded into up_w) + UpEmbedding --
    emb_n = _ln_stat(emb_ref[...])
    up_b = vecs[ROW_UP_B:ROW_UP_B + 1, :2 * HID]
    h = jnp.dot(emb_n, up_w_ref[...], preferred_element_type=f32) + up_b   # [NLB, 2*HID]

    # ---- ByteNet blocks (r_list = [1, 1, 1, 1] since cnn_max_r = 1) ------------
    for blk in range(N_LAYERS):
        base = ROW_BLK0 + blk * ROWS_PER_BLK
        ln1_g = vecs[base + 0:base + 1, :2 * HID]
        ln1_b = vecs[base + 1:base + 2, :2 * HID]
        c1_b = vecs[base + 2:base + 3, :HID]
        ln2_g = vecs[base + 3:base + 4, :HID]
        ln2_b = vecs[base + 4:base + 5, :HID]
        c2_b = vecs[base + 5:base + 6, :HID]
        ln3_g = vecs[base + 6:base + 7, :HID]
        ln3_b = vecs[base + 7:base + 8, :HID]
        c3_b = vecs[base + 8:base + 9, :2 * HID]

        y = h
        t = _relu(_layer_norm(h, ln1_g, ln1_b))
        t = jnp.dot(t, c1_w_ref[blk], preferred_element_type=f32) + c1_b   # [NLB, HID]
        t = _relu(_layer_norm(t, ln2_g, ln2_b))

        # Masked 'A' conv (kernel 17, dilation 1, ConstantPad1d(8,8)): the mask
        # zeroes taps >= 8, so out[p] = bias + sum_{k<8} x[p-8+k] @ W_k.
        # Build the tap-packed im2col [NLB, 128] in a VMEM scratch via sublane
        # rolls (XLU) + 16-lane-group stores, then run ONE K=128 MXU matmul.
        for k in range(N_TAPS):
            rolled = pltpu.roll(t, shift=N_TAPS - k, axis=0)      # rolled[p] = t[p-8+k]
            im_ref[:, k * HID:(k + 1) * HID] = jnp.where(tap_keep[k], rolled, 0.0)
        acc = jnp.dot(im_ref[...], c2_w_ref[blk],
                      preferred_element_type=f32) + c2_b                    # [NLB, HID]

        t = _relu(_layer_norm(acc, ln3_g, ln3_b))
        t = jnp.dot(t, c3_w_ref[blk], preferred_element_type=f32) + c3_b   # [NLB, 2*HID]
        h = t + y

    # ---- ByteNetDecoder on position `index` ------------------------------------
    # Gather h[b, index, :] per sequence without an O(N^2) one-hot matmul: mask
    # the single matching row and sublane-reduce each LP-row group (exact: one
    # hit per sequence, the rest are zeros).
    idxf = idx_ref[0].astype(f32)
    selm = (posf == idxf).astype(f32)                              # [NLB, 1]
    masked = h * selm
    h_sel = jnp.concatenate(
        [jnp.sum(masked[b * LP:(b + 1) * LP, :], axis=0, keepdims=True)
         for b in range(G)], axis=0)                               # [G, 2*HID]

    feat = jnp.concatenate([h_sel, mut_ref[...]], axis=1)          # [G, 33]
    dd_b = vecs[ROW_DEC_DENSE_B:ROW_DEC_DENSE_B + 1, :DEC_DIM]
    d = jnp.dot(feat, dec_dense_w_ref[...], preferred_element_type=f32) + dd_b
    d = _ln_stat(_relu(d))                       # decoder LN affine folded into out W/b
    do_b = vecs[ROW_DEC_OUT_B:ROW_DEC_OUT_B + 1, :]
    out_ref[...] = jnp.dot(d, dec_out_w_ref[...],
                           preferred_element_type=f32) + do_b      # [G, 128] lane-dense


def init_params(key):
    """Deterministic synthetic parameters (shapes follow the PyTorch module)."""
    def normal(k, shape, scale=0.05):
        return scale * jax.random.normal(k, shape, dtype=jnp.float32)

    keys = iter(jax.random.split(key, 32))
    p = {}
    aa = normal(next(keys), (VOCAB, EMB))
    p["aa_emb"] = aa.at[PAD_ID].set(0.0)          # padding_idx = 21 (wrapper gather)
    pos = normal(next(keys), (MAX_LEN, EMB))
    p["pos_emb"] = pos.at[0].set(0.0)             # padding_idx = 0  (wrapper gather)
    p["ln0_g"] = jnp.ones((1, EMB), jnp.float32)
    p["ln0_b"] = jnp.zeros((1, EMB), jnp.float32)
    p["up_w"] = normal(next(keys), (EMB, 2 * HID))          # Linear stored [in, out]
    p["up_b"] = normal(next(keys), (1, 2 * HID))

    p["ln1_g"] = jnp.ones((N_LAYERS, 1, 2 * HID), jnp.float32)
    p["ln1_b"] = jnp.zeros((N_LAYERS, 1, 2 * HID), jnp.float32)
    p["c1_w"] = normal(next(keys), (N_LAYERS, 2 * HID, HID))    # conv1x1 as [in, out]
    p["c1_b"] = normal(next(keys), (N_LAYERS, 1, HID))
    p["ln2_g"] = jnp.ones((N_LAYERS, 1, HID), jnp.float32)
    p["ln2_b"] = jnp.zeros((N_LAYERS, 1, HID), jnp.float32)
    # MaskedConv1d 'A': PyTorch weight [out, in, 17]; taps >= 8 are zeroed by the
    # mask, so only taps 0..7 are stored, packed tap-major along the contraction:
    # c2_w[blk, k*HID + i, j] == W_torch[blk][j, i, k].
    p["c2_w"] = normal(next(keys), (N_LAYERS, PACK_K, HID))
    p["c2_b"] = normal(next(keys), (N_LAYERS, 1, HID))
    p["ln3_g"] = jnp.ones((N_LAYERS, 1, HID), jnp.float32)
    p["ln3_b"] = jnp.zeros((N_LAYERS, 1, HID), jnp.float32)
    p["c3_w"] = normal(next(keys), (N_LAYERS, HID, 2 * HID))
    p["c3_b"] = normal(next(keys), (N_LAYERS, 1, 2 * HID))

    p["dec_dense_w"] = normal(next(keys), (DEC_DIM, DEC_DIM))
    p["dec_dense_b"] = normal(next(keys), (1, DEC_DIM))
    p["dec_ln_g"] = jnp.ones((1, DEC_DIM), jnp.float32)
    p["dec_ln_b"] = jnp.zeros((1, DEC_DIM), jnp.float32)
    p["dec_out_w"] = normal(next(keys), (DEC_DIM, OUT_VOCAB))
    p["dec_out_b"] = normal(next(keys), (1, OUT_VOCAB))
    return p


def pack_params(p):
    """Fold LN affines into adjacent matmuls and pack all small vectors into one slab."""
    f32 = jnp.float32
    # LN(emb)*g0+b0 then @up_w+b  ==  norm(emb) @ (g0[:,None]*up_w) + (b0@up_w + up_b)
    up_w_f = (p["ln0_g"].reshape(EMB, 1) * p["up_w"]).astype(f32)
    up_b_f = (p["ln0_b"] @ p["up_w"] + p["up_b"]).astype(f32)
    # norm(r)*g+b then @out_w+b  ==  norm(r) @ (g[:,None]*out_w) + (b@out_w + out_b)
    dec_out_w_f = (p["dec_ln_g"].reshape(DEC_DIM, 1) * p["dec_out_w"]).astype(f32)
    dec_out_b_f = (p["dec_ln_b"] @ p["dec_out_w"] + p["dec_out_b"]).astype(f32)
    # lane-dense decoder output: pad 21 -> 128 columns with zeros
    dec_out_w_pad = jnp.zeros((DEC_DIM, LANE), f32).at[:, :OUT_VOCAB].set(dec_out_w_f)

    vecs = jnp.zeros((VEC_ROWS, LANE), f32)

    def put(v, row, val):
        val = jnp.asarray(val, f32).reshape(-1)
        return v.at[row, :val.shape[0]].set(val)

    vecs = put(vecs, ROW_UP_B, up_b_f)
    vecs = put(vecs, ROW_DEC_DENSE_B, p["dec_dense_b"])
    vecs = put(vecs, ROW_DEC_OUT_B, dec_out_b_f)
    names = ["ln1_g", "ln1_b", "c1_b", "ln2_g", "ln2_b", "c2_b", "ln3_g", "ln3_b", "c3_b"]
    for blk in range(N_LAYERS):
        base = ROW_BLK0 + blk * ROWS_PER_BLK
        for off, name in enumerate(names):
            vecs = put(vecs, base + off, p[name][blk])

    return {"vecs": vecs, "up_w": up_w_f,
            "c1_w": p["c1_w"].astype(f32), "c2_w": p["c2_w"].astype(f32),
            "c3_w": p["c3_w"].astype(f32),
            "dec_dense_w": p["dec_dense_w"].astype(f32),
            "dec_out_w": dec_out_w_pad}


def gen_bytenet_forward(x_tokens, lens, weights, params, index=0):
    """Equivalent of GenByteNet.forward(x, lens, weights, index, return_all=False)."""
    del lens, weights  # unused by the reference forward (return_all=False path)
    N, L = x_tokens.shape
    assert L == MAX_LEN, "seed comparison requires seq_len == gen_max_len (35)"

    packed = pack_params(params)

    # --- batch tiling: G sequences per grid step --------------------------------
    if N <= G_MAX:
        G, Np = N, N
    else:
        G = G_MAX
        Np = ((N + G - 1) // G) * G
    nb = Np // G

    x_i32 = x_tokens.astype(jnp.int32)
    if Np != N:                                  # pad batch with all-PAD sequences
        x_i32 = jnp.concatenate(
            [x_i32, jnp.full((Np - N, L), PAD_ID, jnp.int32)], axis=0)

    # --- pad each sequence 35 -> 40 rows (sublane-tile aligned); pads are inert --
    xp = jnp.full((Np, LP), PAD_ID, jnp.int32).at[:, :L].set(x_i32)

    # --- embedding gathers + position ids (plain-JAX glue) -----------------------
    mask = (xp != PAD_ID).astype(jnp.int32)
    pid = jnp.cumsum(mask, axis=1) * mask
    # TODO(synk): pid can reach MAX_LEN for a fully unpadded row; PyTorch's
    # nn.Embedding(gen_max_len) would raise there, here the gather clamps.
    emb = params["aa_emb"][xp] + params["pos_emb"][pid]              # [Np, LP, EMB]
    emb_flat = emb.reshape(Np * LP, EMB).astype(jnp.float32)

    # --- mutation-count feature at `index` ----------------------------------------
    ne_seed = (x_i32 != SEED_TOKENS[None, :L]).astype(jnp.float32)
    dist = jnp.cumsum(ne_seed, axis=1)                               # [Np, L]
    mut = jax.lax.dynamic_slice_in_dim(dist, index, 1, axis=1)       # [Np, 1]

    idx_arr = jnp.reshape(jnp.asarray(index, jnp.int32), (1,))       # scalar prefetch

    grid_spec = pltpu.PrefetchScalarGridSpec(
        num_scalar_prefetch=1,
        grid=(nb,),
        in_specs=[
            pl.BlockSpec((G * LP, EMB), lambda i, idx: (i, 0)),
            pl.BlockSpec((G, 1), lambda i, idx: (i, 0)),
            pl.BlockSpec((VEC_ROWS, LANE), lambda i, idx: (0, 0)),
            pl.BlockSpec((EMB, 2 * HID), lambda i, idx: (0, 0)),
            pl.BlockSpec((N_LAYERS, 2 * HID, HID), lambda i, idx: (0, 0, 0)),
            pl.BlockSpec((N_LAYERS, PACK_K, HID), lambda i, idx: (0, 0, 0)),
            pl.BlockSpec((N_LAYERS, HID, 2 * HID), lambda i, idx: (0, 0, 0)),
            pl.BlockSpec((DEC_DIM, DEC_DIM), lambda i, idx: (0, 0)),
            pl.BlockSpec((DEC_DIM, LANE), lambda i, idx: (0, 0)),
        ],
        out_specs=pl.BlockSpec((G, LANE), lambda i, idx: (i, 0)),
        scratch_shapes=[pltpu.VMEM((G * LP, PACK_K), jnp.float32)],
    )

    out_pad = pl.pallas_call(
        gen_bytenet_kernel,
        out_shape=jax.ShapeDtypeStruct((Np, LANE), jnp.float32),
        grid_spec=grid_spec,
        compiler_params=pltpu.CompilerParams(
            dimension_semantics=("parallel",)),
    )(idx_arr, emb_flat, mut, packed["vecs"], packed["up_w"],
      packed["c1_w"], packed["c2_w"], packed["c3_w"],
      packed["dec_dense_w"], packed["dec_out_w"])

    return out_pad[:N, :OUT_VOCAB]


if __name__ == "__main__":
    key = jax.random.PRNGKey(0)
    k_tok, k_par = jax.random.split(key)

    N = 2
    x = jax.random.randint(k_tok, (N, MAX_LEN), 0, VOCAB, dtype=jnp.int32)
    x = x.at[:, -2:].set(PAD_ID)                       # trailing padding, like real batches
    lens = jnp.array([33, 30], dtype=jnp.int32)        # unused by forward
    weights = jnp.ones((N,), jnp.float32)              # unused by forward
    params = init_params(k_par)

    out = gen_bytenet_forward(x, lens, weights, params, index=0)
    out = jax.block_until_ready(out)
    assert out.shape == (N, OUT_VOCAB) and out.dtype == jnp.float32
    print("KERNEL_OK")
</pallas_src>

<mosaic_0001>
module attributes {stable_mosaic.version = 11 : i64} {
  func.func @gen_bytenet_kernel(%arg0: i32, %arg1: memref<1xi32, #tpu.memory_space<smem>>, %arg2: memref<80x16xf32, #tpu.memory_space<vmem>>, %arg3: memref<2x1xf32, #tpu.memory_space<vmem>>, %arg4: memref<40x128xf32, #tpu.memory_space<vmem>>, %arg5: memref<16x32xf32, #tpu.memory_space<vmem>>, %arg6: memref<4x32x16xf32, #tpu.memory_space<vmem>>, %arg7: memref<4x128x16xf32, #tpu.memory_space<vmem>>, %arg8: memref<4x16x32xf32, #tpu.memory_space<vmem>>, %arg9: memref<33x33xf32, #tpu.memory_space<vmem>>, %arg10: memref<33x128xf32, #tpu.memory_space<vmem>>, %arg11: memref<2x128xf32, #tpu.memory_space<vmem>>, %arg12: memref<80x128xf32, #tpu.memory_space<vmem>>) attributes {dimension_semantics = [#tpu.dimension_semantics<parallel>], iteration_bounds = array<i64: 1>, scalar_prefetch = 1 : i64, scratch_operands = 1 : i64, tpu.core_type = #tpu.core_type<tc>, window_params = [{transform_indices = @transform_0, window_bounds = array<i64: 80, 16>}, {transform_indices = @transform_1, window_bounds = array<i64: 2, 1>}, {pipeline_mode = #tpu.pipeline_mode<synchronous>, transform_indices = @transform_2, window_bounds = array<i64: 40, 128>}, {pipeline_mode = #tpu.pipeline_mode<synchronous>, transform_indices = @transform_3, window_bounds = array<i64: 16, 32>}, {pipeline_mode = #tpu.pipeline_mode<synchronous>, transform_indices = @transform_4, window_bounds = array<i64: 4, 32, 16>}, {pipeline_mode = #tpu.pipeline_mode<synchronous>, transform_indices = @transform_5, window_bounds = array<i64: 4, 128, 16>}, {pipeline_mode = #tpu.pipeline_mode<synchronous>, transform_indices = @transform_6, window_bounds = array<i64: 4, 16, 32>}, {pipeline_mode = #tpu.pipeline_mode<synchronous>, transform_indices = @transform_7, window_bounds = array<i64: 33, 33>}, {pipeline_mode = #tpu.pipeline_mode<synchronous>, transform_indices = @transform_8, window_bounds = array<i64: 33, 128>}, {transform_indices = @transform_9, window_bounds = array<i64: 2, 128>}]} {
    %c0 = arith.constant 0 : index
    %c0_0 = arith.constant 0 : index
    %0 = vector.load %arg4[%c0, %c0_0] : memref<40x128xf32, #tpu.memory_space<vmem>>, vector<40x128xf32>
    %1 = tpu.iota {dimensions = array<i32: 0>} : vector<80x1xi32>
    %2 = arith.sitofp %1 : vector<80x1xi32> to vector<80x1xf32>
    %cst = arith.constant 2.500000e-02 : f32
    %3 = vector.broadcast %cst : f32 to vector<80x1xf32>
    %4 = arith.mulf %2, %3 : vector<80x1xf32>
    %5 = math.floor %4 : vector<80x1xf32>
    %cst_1 = arith.constant 4.000000e+01 : f32
    %6 = vector.broadcast %cst_1 : f32 to vector<80x1xf32>
    %7 = arith.mulf %6, %5 : vector<80x1xf32>
    %8 = arith.subf %2, %7 : vector<80x1xf32>
    %cst_2 = arith.constant 8.000000e+00 : f32
    %9 = vector.broadcast %cst_2 : f32 to vector<80x1xf32>
    %10 = arith.cmpf oge, %8, %9 : vector<80x1xf32>
    %cst_3 = arith.constant 7.000000e+00 : f32
    %11 = vector.broadcast %cst_3 : f32 to vector<80x1xf32>
    %12 = arith.cmpf oge, %8, %11 : vector<80x1xf32>
    %cst_4 = arith.constant 6.000000e+00 : f32
    %13 = vector.broadcast %cst_4 : f32 to vector<80x1xf32>
    %14 = arith.cmpf oge, %8, %13 : vector<80x1xf32>
    %cst_5 = arith.constant 5.000000e+00 : f32
    %15 = vector.broadcast %cst_5 : f32 to vector<80x1xf32>
    %16 = arith.cmpf oge, %8, %15 : vector<80x1xf32>
    %cst_6 = arith.constant 4.000000e+00 : f32
    %17 = vector.broadcast %cst_6 : f32 to vector<80x1xf32>
    %18 = arith.cmpf oge, %8, %17 : vector<80x1xf32>
    %cst_7 = arith.constant 3.000000e+00 : f32
    %19 = vector.broadcast %cst_7 : f32 to vector<80x1xf32>
    %20 = arith.cmpf oge, %8, %19 : vector<80x1xf32>
    %cst_8 = arith.constant 2.000000e+00 : f32
    %21 = vector.broadcast %cst_8 : f32 to vector<80x1xf32>
    %22 = arith.cmpf oge, %8, %21 : vector<80x1xf32>
    %cst_9 = arith.constant 1.000000e+00 : f32
    %23 = vector.broadcast %cst_9 : f32 to vector<80x1xf32>
    %24 = arith.cmpf oge, %8, %23 : vector<80x1xf32>
    %c0_10 = arith.constant 0 : index
    %c0_11 = arith.constant 0 : index
    %25 = vector.load %arg2[%c0_10, %c0_11] : memref<80x16xf32, #tpu.memory_space<vmem>>, vector<80x16xf32>
    %cst_12 = arith.constant dense<0.000000e+00> : vector<80xf32>
    %26 = vector.multi_reduction <add>, %25, %cst_12 [1] : vector<80x16xf32> to vector<80xf32>
    %27 = vector.shape_cast %26 : vector<80xf32> to vector<80x1xf32>
    %cst_13 = arith.constant 1.600000e+01 : f32
    %28 = vector.broadcast %cst_13 : f32 to vector<80x1xf32>
    %29 = arith.divf %27, %28 : vector<80x1xf32>
    %30 = vector.broadcast %29 : vector<80x1xf32> to vector<80x16xf32>
    %31 = arith.subf %25, %30 : vector<80x16xf32>
    %32 = arith.mulf %31, %31 : vector<80x16xf32>
    %cst_14 = arith.constant dense<0.000000e+00> : vector<80xf32>
    %33 = vector.multi_reduction <add>, %32, %cst_14 [1] : vector<80x16xf32> to vector<80xf32>
    %34 = vector.shape_cast %33 : vector<80xf32> to vector<80x1xf32>
    %cst_15 = arith.constant 1.600000e+01 : f32
    %35 = vector.broadcast %cst_15 : f32 to vector<80x1xf32>
    %36 = arith.divf %34, %35 : vector<80x1xf32>
    %cst_16 = arith.constant 9.99999996E-13 : f32
    %37 = vector.broadcast %cst_16 : f32 to vector<80x1xf32>
    %38 = arith.addf %36, %37 : vector<80x1xf32>
    %39 = math.rsqrt %38 : vector<80x1xf32>
    %40 = vector.broadcast %39 : vector<80x1xf32> to vector<80x16xf32>
    %41 = arith.mulf %31, %40 : vector<80x16xf32>
    %42 = vector.extract_strided_slice %0 {offsets = [0, 0], sizes = [1, 32], strides = [1, 1]} : vector<40x128xf32> to vector<1x32xf32>
    %c0_17 = arith.constant 0 : index
    %c0_18 = arith.constant 0 : index
    %43 = vector.load %arg5[%c0_17, %c0_18] : memref<16x32xf32, #tpu.memory_space<vmem>>, vector<16x32xf32>
    %cst_19 = arith.constant dense<0.000000e+00> : vector<80x32xf32>
    %44 = tpu.matmul %41, %43, %cst_19 {dimension_numbers = #tpu.dot_dimension_numbers<[1], [0], [0], [1], [0, 0, 1, 1], [], []>} : vector<80x16xf32>, vector<16x32xf32>, vector<80x32xf32> -> vector<80x32xf32>
    %45 = vector.broadcast %42 : vector<1x32xf32> to vector<80x32xf32>
    %46 = arith.addf %44, %45 : vector<80x32xf32>
    %47 = vector.extract_strided_slice %0 {offsets = [3, 0], sizes = [1, 32], strides = [1, 1]} : vector<40x128xf32> to vector<1x32xf32>
    %48 = vector.extract_strided_slice %0 {offsets = [4, 0], sizes = [1, 32], strides = [1, 1]} : vector<40x128xf32> to vector<1x32xf32>
    %49 = vector.extract_strided_slice %0 {offsets = [5, 0], sizes = [1, 16], strides = [1, 1]} : vector<40x128xf32> to vector<1x16xf32>
    %50 = vector.extract_strided_slice %0 {offsets = [6, 0], sizes = [1, 16], strides = [1, 1]} : vector<40x128xf32> to vector<1x16xf32>
    %51 = vector.extract_strided_slice %0 {offsets = [7, 0], sizes = [1, 16], strides = [1, 1]} : vector<40x128xf32> to vector<1x16xf32>
    %52 = vector.extract_strided_slice %0 {offsets = [8, 0], sizes = [1, 16], strides = [1, 1]} : vector<40x128xf32> to vector<1x16xf32>
    %53 = vector.extract_strided_slice %0 {offsets = [9, 0], sizes = [1, 16], strides = [1, 1]} : vector<40x128xf32> to vector<1x16xf32>
    %54 = vector.extract_strided_slice %0 {offsets = [10, 0], sizes = [1, 16], strides = [1, 1]} : vector<40x128xf32> to vector<1x16xf32>
    %55 = vector.extract_strided_slice %0 {offsets = [11, 0], sizes = [1, 32], strides = [1, 1]} : vector<40x128xf32> to vector<1x32xf32>
    %cst_20 = arith.constant dense<0.000000e+00> : vector<80xf32>
    %56 = vector.multi_reduction <add>, %46, %cst_20 [1] : vector<80x32xf32> to vector<80xf32>
    %57 = vector.shape_cast %56 : vector<80xf32> to vector<80x1xf32>
    %cst_21 = arith.constant 3.200000e+01 : f32
    %58 = vector.broadcast %cst_21 : f32 to vector<80x1xf32>
    %59 = arith.divf %57, %58 : vector<80x1xf32>
    %60 = vector.broadcast %59 : vector<80x1xf32> to vector<80x32xf32>
    %61 = arith.subf %46, %60 : vector<80x32xf32>
    %62 = arith.mulf %61, %61 : vector<80x32xf32>
    %cst_22 = arith.constant dense<0.000000e+00> : vector<80xf32>
    %63 = vector.multi_reduction <add>, %62, %cst_22 [1] : vector<80x32xf32> to vector<80xf32>
    %64 = vector.shape_cast %63 : vector<80xf32> to vector<80x1xf32>
    %cst_23 = arith.constant 3.200000e+01 : f32
    %65 = vector.broadcast %cst_23 : f32 to vector<80x1xf32>
    %66 = arith.divf %64, %65 : vector<80x1xf32>
    %cst_24 = arith.constant 9.99999996E-13 : f32
    %67 = vector.broadcast %cst_24 : f32 to vector<80x1xf32>
    %68 = arith.addf %66, %67 : vector<80x1xf32>
    %69 = math.rsqrt %68 : vector<80x1xf32>
    %70 = vector.broadcast %69 : vector<80x1xf32> to vector<80x32xf32>
    %71 = arith.mulf %61, %70 : vector<80x32xf32>
    %72 = vector.broadcast %47 : vector<1x32xf32> to vector<80x32xf32>
    %73 = arith.mulf %71, %72 : vector<80x32xf32>
    %74 = vector.broadcast %48 : vector<1x32xf32> to vector<80x32xf32>
    %75 = arith.addf %73, %74 : vector<80x32xf32>
    %cst_25 = arith.constant 0.000000e+00 : f32
    %76 = vector.broadcast %cst_25 : f32 to vector<80x32xf32>
    %77 = arith.maximumf %75, %76 : vector<80x32xf32>
    %c0_26 = arith.constant 0 : index
    %c0_27 = arith.constant 0 : index
    %c0_28 = arith.constant 0 : index
    %78 = vector.load %arg6[%c0_26, %c0_27, %c0_28] : memref<4x32x16xf32, #tpu.memory_space<vmem>>, vector<1x32x16xf32>
    %79 = vector.shape_cast %78 : vector<1x32x16xf32> to vector<32x16xf32>
    %cst_29 = arith.constant dense<0.000000e+00> : vector<80x16xf32>
    %80 = tpu.matmul %77, %79, %cst_29 {dimension_numbers = #tpu.dot_dimension_numbers<[1], [0], [0], [1], [0, 0, 1, 1], [], []>} : vector<80x32xf32>, vector<32x16xf32>, vector<80x16xf32> -> vector<80x16xf32>
    %81 = vector.broadcast %49 : vector<1x16xf32> to vector<80x16xf32>
    %82 = arith.addf %80, %81 : vector<80x16xf32>
    %cst_30 = arith.constant dense<0.000000e+00> : vector<80xf32>
    %83 = vector.multi_reduction <add>, %82, %cst_30 [1] : vector<80x16xf32> to vector<80xf32>
    %84 = vector.shape_cast %83 : vector<80xf32> to vector<80x1xf32>
    %cst_31 = arith.constant 1.600000e+01 : f32
    %85 = vector.broadcast %cst_31 : f32 to vector<80x1xf32>
    %86 = arith.divf %84, %85 : vector<80x1xf32>
    %87 = vector.broadcast %86 : vector<80x1xf32> to vector<80x16xf32>
    %88 = arith.subf %82, %87 : vector<80x16xf32>
    %89 = arith.mulf %88, %88 : vector<80x16xf32>
    %cst_32 = arith.constant dense<0.000000e+00> : vector<80xf32>
    %90 = vector.multi_reduction <add>, %89, %cst_32 [1] : vector<80x16xf32> to vector<80xf32>
    %91 = vector.shape_cast %90 : vector<80xf32> to vector<80x1xf32>
    %cst_33 = arith.constant 1.600000e+01 : f32
    %92 = vector.broadcast %cst_33 : f32 to vector<80x1xf32>
    %93 = arith.divf %91, %92 : vector<80x1xf32>
    %cst_34 = arith.constant 9.99999996E-13 : f32
    %94 = vector.broadcast %cst_34 : f32 to vector<80x1xf32>
    %95 = arith.addf %93, %94 : vector<80x1xf32>
    %96 = math.rsqrt %95 : vector<80x1xf32>
    %97 = vector.broadcast %96 : vector<80x1xf32> to vector<80x16xf32>
    %98 = arith.mulf %88, %97 : vector<80x16xf32>
    %99 = vector.broadcast %50 : vector<1x16xf32> to vector<80x16xf32>
    %100 = arith.mulf %98, %99 : vector<80x16xf32>
    %101 = vector.broadcast %51 : vector<1x16xf32> to vector<80x16xf32>
    %102 = arith.addf %100, %101 : vector<80x16xf32>
    %cst_35 = arith.constant 0.000000e+00 : f32
    %103 = vector.broadcast %cst_35 : f32 to vector<80x16xf32>
    %104 = arith.maximumf %102, %103 : vector<80x16xf32>
    %c8_i32 = arith.constant 8 : i32
    %105 = tpu.dynamic_rotate %104 by %c8_i32 dim 0 : vector<80x16xf32>, i32 -> vector<80x16xf32>
    %cst_36 = arith.constant 0.000000e+00 : f32
    %106 = vector.shape_cast %10 : vector<80x1xi1> to vector<80x1xi1>
    %107 = vector.broadcast %106 : vector<80x1xi1> to vector<80x16xi1>
    %108 = vector.broadcast %cst_36 : f32 to vector<80x16xf32>
    %109 = arith.select %107, %105, %108 : vector<80x16xi1>, vector<80x16xf32>
    %c0_37 = arith.constant 0 : index
    %c0_38 = arith.constant 0 : index
    %110 = vector.load %arg12[%c0_37, %c0_38] : memref<80x128xf32, #tpu.memory_space<vmem>>, vector<80x16xf32>
    tpu.vector_store %arg12[%c0_37, %c0_38], %109 {strides = array<i32>} : memref<80x128xf32, #tpu.memory_space<vmem>>, vector<80x16xf32>,
    %c7_i32 = arith.constant 7 : i32
    %111 = tpu.dynamic_rotate %104 by %c7_i32 dim 0 : vector<80x16xf32>, i32 -> vector<80x16xf32>
    %cst_39 = arith.constant 0.000000e+00 : f32
    %112 = vector.shape_cast %12 : vector<80x1xi1> to vector<80x1xi1>
    %113 = vector.broadcast %112 : vector<80x1xi1> to vector<80x16xi1>
    %114 = vector.broadcast %cst_39 : f32 to vector<80x16xf32>
    %115 = arith.select %113, %111, %114 : vector<80x16xi1>, vector<80x16xf32>
    %c0_40 = arith.constant 0 : index
    %c16 = arith.constant 16 : index
    %116 = vector.load %arg12[%c0_40, %c16] : memref<80x128xf32, #tpu.memory_space<vmem>>, vector<80x16xf32>
    tpu.vector_store %arg12[%c0_40, %c16], %115 {strides = array<i32>} : memref<80x128xf32, #tpu.memory_space<vmem>>, vector<80x16xf32>,
    %c6_i32 = arith.constant 6 : i32
    %117 = tpu.dynamic_rotate %104 by %c6_i32 dim 0 : vector<80x16xf32>, i32 -> vector<80x16xf32>
    %cst_41 = arith.constant 0.000000e+00 : f32
    %118 = vector.shape_cast %14 : vector<80x1xi1> to vector<80x1xi1>
    %119 = vector.broadcast %118 : vector<80x1xi1> to vector<80x16xi1>
    %120 = vector.broadcast %cst_41 : f32 to vector<80x16xf32>
    %121 = arith.select %119, %117, %120 : vector<80x16xi1>, vector<80x16xf32>
    %c0_42 = arith.constant 0 : index
    %c32 = arith.constant 32 : index
    %122 = vector.load %arg12[%c0_42, %c32] : memref<80x128xf32, #tpu.memory_space<vmem>>, vector<80x16xf32>
    tpu.vector_store %arg12[%c0_42, %c32], %121 {strides = array<i32>} : memref<80x128xf32, #tpu.memory_space<vmem>>, vector<80x16xf32>,
    %c5_i32 = arith.constant 5 : i32
    %123 = tpu.dynamic_rotate %104 by %c5_i32 dim 0 : vector<80x16xf32>, i32 -> vector<80x16xf32>
    %cst_43 = arith.constant 0.000000e+00 : f32
    %124 = vector.shape_cast %16 : vector<80x1xi1> to vector<80x1xi1>
    %125 = vector.broadcast %124 : vector<80x1xi1> to vector<80x16xi1>
    %126 = vector.broadcast %cst_43 : f32 to vector<80x16xf32>
    %127 = arith.select %125, %123, %126 : vector<80x16xi1>, vector<80x16xf32>
    %c0_44 = arith.constant 0 : index
    %c48 = arith.constant 48 : index
    %128 = vector.load %arg12[%c0_44, %c48] : memref<80x128xf32, #tpu.memory_space<vmem>>, vector<80x16xf32>
    tpu.vector_store %arg12[%c0_44, %c48], %127 {strides = array<i32>} : memref<80x128xf32, #tpu.memory_space<vmem>>, vector<80x16xf32>,
    %c4_i32 = arith.constant 4 : i32
    %129 = tpu.dynamic_rotate %104 by %c4_i32 dim 0 : vector<80x16xf32>, i32 -> vector<80x16xf32>
    %cst_45 = arith.constant 0.000000e+00 : f32
    %130 = vector.shape_cast %18 : vector<80x1xi1> to vector<80x1xi1>
    %131 = vector.broadcast %130 : vector<80x1xi1> to vector<80x16xi1>
    %132 = vector.broadcast %cst_45 : f32 to vector<80x16xf32>
    %133 = arith.select %131, %129, %132 : vector<80x16xi1>, vector<80x16xf32>
    %c0_46 = arith.constant 0 : index
    %c64 = arith.constant 64 : index
    %134 = vector.load %arg12[%c0_46, %c64] : memref<80x128xf32, #tpu.memory_space<vmem>>, vector<80x16xf32>
    tpu.vector_store %arg12[%c0_46, %c64], %133 {strides = array<i32>} : memref<80x128xf32, #tpu.memory_space<vmem>>, vector<80x16xf32>,
    %c3_i32 = arith.constant 3 : i32
    %135 = tpu.dynamic_rotate %104 by %c3_i32 dim 0 : vector<80x16xf32>, i32 -> vector<80x16xf32>
    %cst_47 = arith.constant 0.000000e+00 : f32
    %136 = vector.shape_cast %20 : vector<80x1xi1> to vector<80x1xi1>
    %137 = vector.broadcast %136 : vector<80x1xi1> to vector<80x16xi1>
    %138 = vector.broadcast %cst_47 : f32 to vector<80x16xf32>
    %139 = arith.select %137, %135, %138 : vector<80x16xi1>, vector<80x16xf32>
    %c0_48 = arith.constant 0 : index
    %c80 = arith.constant 80 : index
    %140 = vector.load %arg12[%c0_48, %c80] : memref<80x128xf32, #tpu.memory_space<vmem>>, vector<80x16xf32>
    tpu.vector_store %arg12[%c0_48, %c80], %139 {strides = array<i32>} : memref<80x128xf32, #tpu.memory_space<vmem>>, vector<80x16xf32>,
    %c2_i32 = arith.constant 2 : i32
    %141 = tpu.dynamic_rotate %104 by %c2_i32 dim 0 : vector<80x16xf32>, i32 -> vector<80x16xf32>
    %cst_49 = arith.constant 0.000000e+00 : f32
    %142 = vector.shape_cast %22 : vector<80x1xi1> to vector<80x1xi1>
    %143 = vector.broadcast %142 : vector<80x1xi1> to vector<80x16xi1>
    %144 = vector.broadcast %cst_49 : f32 to vector<80x16xf32>
    %145 = arith.select %143, %141, %144 : vector<80x16xi1>, vector<80x16xf32>
    %c0_50 = arith.constant 0 : index
    %c96 = arith.constant 96 : index
    %146 = vector.load %arg12[%c0_50, %c96] : memref<80x128xf32, #tpu.memory_space<vmem>>, vector<80x16xf32>
    tpu.vector_store %arg12[%c0_50, %c96], %145 {strides = array<i32>} : memref<80x128xf32, #tpu.memory_space<vmem>>, vector<80x16xf32>,
    %c1_i32 = arith.constant 1 : i32
    %147 = tpu.dynamic_rotate %104 by %c1_i32 dim 0 : vector<80x16xf32>, i32 -> vector<80x16xf32>
    %cst_51 = arith.constant 0.000000e+00 : f32
    %148 = vector.shape_cast %24 : vector<80x1xi1> to vector<80x1xi1>
    %149 = vector.broadcast %148 : vector<80x1xi1> to vector<80x16xi1>
    %150 = vector.broadcast %cst_51 : f32 to vector<80x16xf32>
    %151 = arith.select %149, %147, %150 : vector<80x16xi1>, vector<80x16xf32>
    %c0_52 = arith.constant 0 : index
    %c112 = arith.constant 112 : index
    %152 = vector.load %arg12[%c0_52, %c112] : memref<80x128xf32, #tpu.memory_space<vmem>>, vector<80x16xf32>
    tpu.vector_store %arg12[%c0_52, %c112], %151 {strides = array<i32>} : memref<80x128xf32, #tpu.memory_space<vmem>>, vector<80x16xf32>,
    %c0_53 = arith.constant 0 : index
    %c0_54 = arith.constant 0 : index
    %153 = vector.load %arg12[%c0_53, %c0_54] : memref<80x128xf32, #tpu.memory_space<vmem>>, vector<80x128xf32>
    %c0_55 = arith.constant 0 : index
    %c0_56 = arith.constant 0 : index
    %c0_57 = arith.constant 0 : index
    %154 = vector.load %arg7[%c0_55, %c0_56, %c0_57] : memref<4x128x16xf32, #tpu.memory_space<vmem>>, vector<1x128x16xf32>
    %155 = vector.shape_cast %154 : vector<1x128x16xf32> to vector<128x16xf32>
    %cst_58 = arith.constant dense<0.000000e+00> : vector<80x16xf32>
    %156 = tpu.matmul %153, %155, %cst_58 {dimension_numbers = #tpu.dot_dimension_numbers<[1], [0], [0], [1], [0, 0, 1, 1], [], []>} : vector<80x128xf32>, vector<128x16xf32>, vector<80x16xf32> -> vector<80x16xf32>
    %157 = vector.broadcast %52 : vector<1x16xf32> to vector<80x16xf32>
    %158 = arith.addf %156, %157 : vector<80x16xf32>
    %cst_59 = arith.constant dense<0.000000e+00> : vector<80xf32>
    %159 = vector.multi_reduction <add>, %158, %cst_59 [1] : vector<80x16xf32> to vector<80xf32>
    %160 = vector.shape_cast %159 : vector<80xf32> to vector<80x1xf32>
    %cst_60 = arith.constant 1.600000e+01 : f32
    %161 = vector.broadcast %cst_60 : f32 to vector<80x1xf32>
    %162 = arith.divf %160, %161 : vector<80x1xf32>
    %163 = vector.broadcast %162 : vector<80x1xf32> to vector<80x16xf32>
    %164 = arith.subf %158, %163 : vector<80x16xf32>
    %165 = arith.mulf %164, %164 : vector<80x16xf32>
    %cst_61 = arith.constant dense<0.000000e+00> : vector<80xf32>
    %166 = vector.multi_reduction <add>, %165, %cst_61 [1] : vector<80x16xf32> to vector<80xf32>
    %167 = vector.shape_cast %166 : vector<80xf32> to vector<80x1xf32>
    %cst_62 = arith.constant 1.600000e+01 : f32
    %168 = vector.broadcast %cst_62 : f32 to vector<80x1xf32>
    %169 = arith.divf %167, %168 : vector<80x1xf32>
    %cst_63 = arith.constant 9.99999996E-13 : f32
    %170 = vector.broadcast %cst_63 : f32 to vector<80x1xf32>
    %171 = arith.addf %169, %170 : vector<80x1xf32>
    %172 = math.rsqrt %171 : vector<80x1xf32>
    %173 = vector.broadcast %172 : vector<80x1xf32> to vector<80x16xf32>
    %174 = arith.mulf %164, %173 : vector<80x16xf32>
    %175 = vector.broadcast %53 : vector<1x16xf32> to vector<80x16xf32>
    %176 = arith.mulf %174, %175 : vector<80x16xf32>
    %177 = vector.broadcast %54 : vector<1x16xf32> to vector<80x16xf32>
    %178 = arith.addf %176, %177 : vector<80x16xf32>
    %cst_64 = arith.constant 0.000000e+00 : f32
    %179 = vector.broadcast %cst_64 : f32 to vector<80x16xf32>
    %180 = arith.maximumf %178, %179 : vector<80x16xf32>
    %c0_65 = arith.constant 0 : index
    %c0_66 = arith.constant 0 : index
    %c0_67 = arith.constant 0 : index
    %181 = vector.load %arg8[%c0_65, %c0_66, %c0_67] : memref<4x16x32xf32, #tpu.memory_space<vmem>>, vector<1x16x32xf32>
    %182 = vector.shape_cast %181 : vector<1x16x32xf32> to vector<16x32xf32>
    %cst_68 = arith.constant dense<0.000000e+00> : vector<80x32xf32>
    %183 = tpu.matmul %180, %182, %cst_68 {dimension_numbers = #tpu.dot_dimension_numbers<[1], [0], [0], [1], [0, 0, 1, 1], [], []>} : vector<80x16xf32>, vector<16x32xf32>, vector<80x32xf32> -> vector<80x32xf32>
    %184 = vector.broadcast %55 : vector<1x32xf32> to vector<80x32xf32>
    %185 = arith.addf %183, %184 : vector<80x32xf32>
    %186 = arith.addf %185, %46 : vector<80x32xf32>
    %187 = vector.extract_strided_slice %0 {offsets = [12, 0], sizes = [1, 32], strides = [1, 1]} : vector<40x128xf32> to vector<1x32xf32>
    %188 = vector.extract_strided_slice %0 {offsets = [13, 0], sizes = [1, 32], strides = [1, 1]} : vector<40x128xf32> to vector<1x32xf32>
    %189 = vector.extract_strided_slice %0 {offsets = [14, 0], sizes = [1, 16], strides = [1, 1]} : vector<40x128xf32> to vector<1x16xf32>
    %190 = vector.extract_strided_slice %0 {offsets = [15, 0], sizes = [1, 16], strides = [1, 1]} : vector<40x128xf32> to vector<1x16xf32>
    %191 = vector.extract_strided_slice %0 {offsets = [16, 0], sizes = [1, 16], strides = [1, 1]} : vector<40x128xf32> to vector<1x16xf32>
    %192 = vector.extract_strided_slice %0 {offsets = [17, 0], sizes = [1, 16], strides = [1, 1]} : vector<40x128xf32> to vector<1x16xf32>
    %193 = vector.extract_strided_slice %0 {offsets = [18, 0], sizes = [1, 16], strides = [1, 1]} : vector<40x128xf32> to vector<1x16xf32>
    %194 = vector.extract_strided_slice %0 {offsets = [19, 0], sizes = [1, 16], strides = [1, 1]} : vector<40x128xf32> to vector<1x16xf32>
    %195 = vector.extract_strided_slice %0 {offsets = [20, 0], sizes = [1, 32], strides = [1, 1]} : vector<40x128xf32> to vector<1x32xf32>
    %cst_69 = arith.constant dense<0.000000e+00> : vector<80xf32>
    %196 = vector.multi_reduction <add>, %186, %cst_69 [1] : vector<80x32xf32> to vector<80xf32>
    %197 = vector.shape_cast %196 : vector<80xf32> to vector<80x1xf32>
    %cst_70 = arith.constant 3.200000e+01 : f32
    %198 = vector.broadcast %cst_70 : f32 to vector<80x1xf32>
    %199 = arith.divf %197, %198 : vector<80x1xf32>
    %200 = vector.broadcast %199 : vector<80x1xf32> to vector<80x32xf32>
    %201 = arith.subf %186, %200 : vector<80x32xf32>
    %202 = arith.mulf %201, %201 : vector<80x32xf32>
    %cst_71 = arith.constant dense<0.000000e+00> : vector<80xf32>
    %203 = vector.multi_reduction <add>, %202, %cst_71 [1] : vector<80x32xf32> to vector<80xf32>
    %204 = vector.shape_cast %203 : vector<80xf32> to vector<80x1xf32>
    %cst_72 = arith.constant 3.200000e+01 : f32
    %205 = vector.broadcast %cst_72 : f32 to vector<80x1xf32>
    %206 = arith.divf %204, %205 : vector<80x1xf32>
    %cst_73 = arith.constant 9.99999996E-13 : f32
    %207 = vector.broadcast %cst_73 : f32 to vector<80x1xf32>
    %208 = arith.addf %206, %207 : vector<80x1xf32>
    %209 = math.rsqrt %208 : vector<80x1xf32>
    %210 = vector.broadcast %209 : vector<80x1xf32> to vector<80x32xf32>
    %211 = arith.mulf %201, %210 : vector<80x32xf32>
    %212 = vector.broadcast %187 : vector<1x32xf32> to vector<80x32xf32>
    %213 = arith.mulf %211, %212 : vector<80x32xf32>
    %214 = vector.broadcast %188 : vector<1x32xf32> to vector<80x32xf32>
    %215 = arith.addf %213, %214 : vector<80x32xf32>
    %cst_74 = arith.constant 0.000000e+00 : f32
    %216 = vector.broadcast %cst_74 : f32 to vector<80x32xf32>
    %217 = arith.maximumf %215, %216 : vector<80x32xf32>
    %c1 = arith.constant 1 : index
    %c0_75 = arith.constant 0 : index
    %c0_76 = arith.constant 0 : index
    %218 = vector.load %arg6[%c1, %c0_75, %c0_76] : memref<4x32x16xf32, #tpu.memory_space<vmem>>, vector<1x32x16xf32>
    %219 = vector.shape_cast %218 : vector<1x32x16xf32> to vector<32x16xf32>
    %cst_77 = arith.constant dense<0.000000e+00> : vector<80x16xf32>
    %220 = tpu.matmul %217, %219, %cst_77 {dimension_numbers = #tpu.dot_dimension_numbers<[1], [0], [0], [1], [0, 0, 1, 1], [], []>} : vector<80x32xf32>, vector<32x16xf32>, vector<80x16xf32> -> vector<80x16xf32>
    %221 = vector.broadcast %189 : vector<1x16xf32> to vector<80x16xf32>
    %222 = arith.addf %220, %221 : vector<80x16xf32>
    %cst_78 = arith.constant dense<0.000000e+00> : vector<80xf32>
    %223 = vector.multi_reduction <add>, %222, %cst_78 [1] : vector<80x16xf32> to vector<80xf32>
    %224 = vector.shape_cast %223 : vector<80xf32> to vector<80x1xf32>
    %cst_79 = arith.constant 1.600000e+01 : f32
    %225 = vector.broadcast %cst_79 : f32 to vector<80x1xf32>
    %226 = arith.divf %224, %225 : vector<80x1xf32>
    %227 = vector.broadcast %226 : vector<80x1xf32> to vector<80x16xf32>
    %228 = arith.subf %222, %227 : vector<80x16xf32>
    %229 = arith.mulf %228, %228 : vector<80x16xf32>
    %cst_80 = arith.constant dense<0.000000e+00> : vector<80xf32>
    %230 = vector.multi_reduction <add>, %229, %cst_80 [1] : vector<80x16xf32> to vector<80xf32>
    %231 = vector.shape_cast %230 : vector<80xf32> to vector<80x1xf32>
    %cst_81 = arith.constant 1.600000e+01 : f32
    %232 = vector.broadcast %cst_81 : f32 to vector<80x1xf32>
    %233 = arith.divf %231, %232 : vector<80x1xf32>
    %cst_82 = arith.constant 9.99999996E-13 : f32
    %234 = vector.broadcast %cst_82 : f32 to vector<80x1xf32>
    %235 = arith.addf %233, %234 : vector<80x1xf32>
    %236 = math.rsqrt %235 : vector<80x1xf32>
    %237 = vector.broadcast %236 : vector<80x1xf32> to vector<80x16xf32>
    %238 = arith.mulf %228, %237 : vector<80x16xf32>
    %239 = vector.broadcast %190 : vector<1x16xf32> to vector<80x16xf32>
    %240 = arith.mulf %238, %239 : vector<80x16xf32>
    %241 = vector.broadcast %191 : vector<1x16xf32> to vector<80x16xf32>
    %242 = arith.addf %240, %241 : vector<80x16xf32>
    %cst_83 = arith.constant 0.000000e+00 : f32
    %243 = vector.broadcast %cst_83 : f32 to vector<80x16xf32>
    %244 = arith.maximumf %242, %243 : vector<80x16xf32>
    %c8_i32_84 = arith.constant 8 : i32
    %245 = tpu.dynamic_rotate %244 by %c8_i32_84 dim 0 : vector<80x16xf32>, i32 -> vector<80x16xf32>
    %cst_85 = arith.constant 0.000000e+00 : f32
    %246 = vector.shape_cast %10 : vector<80x1xi1> to vector<80x1xi1>
    %247 = vector.broadcast %246 : vector<80x1xi1> to vector<80x16xi1>
    %248 = vector.broadcast %cst_85 : f32 to vector<80x16xf32>
    %249 = arith.select %247, %245, %248 : vector<80x16xi1>, vector<80x16xf32>
    %c0_86 = arith.constant 0 : index
    %c0_87 = arith.constant 0 : index
    %250 = vector.load %arg12[%c0_86, %c0_87] : memref<80x128xf32, #tpu.memory_space<vmem>>, vector<80x16xf32>
    tpu.vector_store %arg12[%c0_86, %c0_87], %249 {strides = array<i32>} : memref<80x128xf32, #tpu.memory_space<vmem>>, vector<80x16xf32>,
    %c7_i32_88 = arith.constant 7 : i32
    %251 = tpu.dynamic_rotate %244 by %c7_i32_88 dim 0 : vector<80x16xf32>, i32 -> vector<80x16xf32>
    %cst_89 = arith.constant 0.000000e+00 : f32
    %252 = vector.shape_cast %12 : vector<80x1xi1> to vector<80x1xi1>
    %253 = vector.broadcast %252 : vector<80x1xi1> to vector<80x16xi1>
    %254 = vector.broadcast %cst_89 : f32 to vector<80x16xf32>
    %255 = arith.select %253, %251, %254 : vector<80x16xi1>, vector<80x16xf32>
    %c0_90 = arith.constant 0 : index
    %c16_91 = arith.constant 16 : index
    %256 = vector.load %arg12[%c0_90, %c16_91] : memref<80x128xf32, #tpu.memory_space<vmem>>, vector<80x16xf32>
    tpu.vector_store %arg12[%c0_90, %c16_91], %255 {strides = array<i32>} : memref<80x128xf32, #tpu.memory_space<vmem>>, vector<80x16xf32>,
    %c6_i32_92 = arith.constant 6 : i32
    %257 = tpu.dynamic_rotate %244 by %c6_i32_92 dim 0 : vector<80x16xf32>, i32 -> vector<80x16xf32>
    %cst_93 = arith.constant 0.000000e+00 : f32
    %258 = vector.shape_cast %14 : vector<80x1xi1> to vector<80x1xi1>
    %259 = vector.broadcast %258 : vector<80x1xi1> to vector<80x16xi1>
    %260 = vector.broadcast %cst_93 : f32 to vector<80x16xf32>
    %261 = arith.select %259, %257, %260 : vector<80x16xi1>, vector<80x16xf32>
    %c0_94 = arith.constant 0 : index
    %c32_95 = arith.constant 32 : index
    %262 = vector.load %arg12[%c0_94, %c32_95] : memref<80x128xf32, #tpu.memory_space<vmem>>, vector<80x16xf32>
    tpu.vector_store %arg12[%c0_94, %c32_95], %261 {strides = array<i32>} : memref<80x128xf32, #tpu.memory_space<vmem>>, vector<80x16xf32>,
    %c5_i32_96 = arith.constant 5 : i32
    %263 = tpu.dynamic_rotate %244 by %c5_i32_96 dim 0 : vector<80x16xf32>, i32 -> vector<80x16xf32>
    %cst_97 = arith.constant 0.000000e+00 : f32
    %264 = vector.shape_cast %16 : vector<80x1xi1> to vector<80x1xi1>
    %265 = vector.broadcast %264 : vector<80x1xi1> to vector<80x16xi1>
    %266 = vector.broadcast %cst_97 : f32 to vector<80x16xf32>
    %267 = arith.select %265, %263, %266 : vector<80x16xi1>, vector<80x16xf32>
    %c0_98 = arith.constant 0 : index
    %c48_99 = arith.constant 48 : index
    %268 = vector.load %arg12[%c0_98, %c48_99] : memref<80x128xf32, #tpu.memory_space<vmem>>, vector<80x16xf32>
    tpu.vector_store %arg12[%c0_98, %c48_99], %267 {strides = array<i32>} : memref<80x128xf32, #tpu.memory_space<vmem>>, vector<80x16xf32>,
    %c4_i32_100 = arith.constant 4 : i32
    %269 = tpu.dynamic_rotate %244 by %c4_i32_100 dim 0 : vector<80x16xf32>, i32 -> vector<80x16xf32>
    %cst_101 = arith.constant 0.000000e+00 : f32
    %270 = vector.shape_cast %18 : vector<80x1xi1> to vector<80x1xi1>
    %271 = vector.broadcast %270 : vector<80x1xi1> to vector<80x16xi1>
    %272 = vector.broadcast %cst_101 : f32 to vector<80x16xf32>
    %273 = arith.select %271, %269, %272 : vector<80x16xi1>, vector<80x16xf32>
    %c0_102 = arith.constant 0 : index
    %c64_103 = arith.constant 64 : index
    %274 = vector.load %arg12[%c0_102, %c64_103] : memref<80x128xf32, #tpu.memory_space<vmem>>, vector<80x16xf32>
    tpu.vector_store %arg12[%c0_102, %c64_103], %273 {strides = array<i32>} : memref<80x128xf32, #tpu.memory_space<vmem>>, vector<80x16xf32>,
    %c3_i32_104 = arith.constant 3 : i32
    %275 = tpu.dynamic_rotate %244 by %c3_i32_104 dim 0 : vector<80x16xf32>, i32 -> vector<80x16xf32>
    %cst_105 = arith.constant 0.000000e+00 : f32
    %276 = vector.shape_cast %20 : vector<80x1xi1> to vector<80x1xi1>
    %277 = vector.broadcast %276 : vector<80x1xi1> to vector<80x16xi1>
    %278 = vector.broadcast %cst_105 : f32 to vector<80x16xf32>
    %279 = arith.select %277, %275, %278 : vector<80x16xi1>, vector<80x16xf32>
    %c0_106 = arith.constant 0 : index
    %c80_107 = arith.constant 80 : index
    %280 = vector.load %arg12[%c0_106, %c80_107] : memref<80x128xf32, #tpu.memory_space<vmem>>, vector<80x16xf32>
    tpu.vector_store %arg12[%c0_106, %c80_107], %279 {strides = array<i32>} : memref<80x128xf32, #tpu.memory_space<vmem>>, vector<80x16xf32>,
    %c2_i32_108 = arith.constant 2 : i32
    %281 = tpu.dynamic_rotate %244 by %c2_i32_108 dim 0 : vector<80x16xf32>, i32 -> vector<80x16xf32>
    %cst_109 = arith.constant 0.000000e+00 : f32
    %282 = vector.shape_cast %22 : vector<80x1xi1> to vector<80x1xi1>
    %283 = vector.broadcast %282 : vector<80x1xi1> to vector<80x16xi1>
    %284 = vector.broadcast %cst_109 : f32 to vector<80x16xf32>
    %285 = arith.select %283, %281, %284 : vector<80x16xi1>, vector<80x16xf32>
    %c0_110 = arith.constant 0 : index
    %c96_111 = arith.constant 96 : index
    %286 = vector.load %arg12[%c0_110, %c96_111] : memref<80x128xf32, #tpu.memory_space<vmem>>, vector<80x16xf32>
    tpu.vector_store %arg12[%c0_110, %c96_111], %285 {strides = array<i32>} : memref<80x128xf32, #tpu.memory_space<vmem>>, vector<80x16xf32>,
    %c1_i32_112 = arith.constant 1 : i32
    %287 = tpu.dynamic_rotate %244 by %c1_i32_112 dim 0 : vector<80x16xf32>, i32 -> vector<80x16xf32>
    %cst_113 = arith.constant 0.000000e+00 : f32
    %288 = vector.shape_cast %24 : vector<80x1xi1> to vector<80x1xi1>
    %289 = vector.broadcast %288 : vector<80x1xi1> to vector<80x16xi1>
    %290 = vector.broadcast %cst_113 : f32 to vector<80x16xf32>
    %291 = arith.select %289, %287, %290 : vector<80x16xi1>, vector<80x16xf32>
    %c0_114 = arith.constant 0 : index
    %c112_115 = arith.constant 112 : index
    %292 = vector.load %arg12[%c0_114, %c112_115] : memref<80x128xf32, #tpu.memory_space<vmem>>, vector<80x16xf32>
    tpu.vector_store %arg12[%c0_114, %c112_115], %291 {strides = array<i32>} : memref<80x128xf32, #tpu.memory_space<vmem>>, vector<80x16xf32>,
    %c0_116 = arith.constant 0 : index
    %c0_117 = arith.constant 0 : index
    %293 = vector.load %arg12[%c0_116, %c0_117] : memref<80x128xf32, #tpu.memory_space<vmem>>, vector<80x128xf32>
    %c1_118 = arith.constant 1 : index
    %c0_119 = arith.constant 0 : index
    %c0_120 = arith.constant 0 : index
    %294 = vector.load %arg7[%c1_118, %c0_119, %c0_120] : memref<4x128x16xf32, #tpu.memory_space<vmem>>, vector<1x128x16xf32>
    %295 = vector.shape_cast %294 : vector<1x128x16xf32> to vector<128x16xf32>
    %cst_121 = arith.constant dense<0.000000e+00> : vector<80x16xf32>
    %296 = tpu.matmul %293, %295, %cst_121 {dimension_numbers = #tpu.dot_dimension_numbers<[1], [0], [0], [1], [0, 0, 1, 1], [], []>} : vector<80x128xf32>, vector<128x16xf32>, vector<80x16xf32> -> vector<80x16xf32>
    %297 = vector.broadcast %192 : vector<1x16xf32> to vector<80x16xf32>
    %298 = arith.addf %296, %297 : vector<80x16xf32>
    %cst_122 = arith.constant dense<0.000000e+00> : vector<80xf32>
    %299 = vector.multi_reduction <add>, %298, %cst_122 [1] : vector<80x16xf32> to vector<80xf32>
    %300 = vector.shape_cast %299 : vector<80xf32> to vector<80x1xf32>
    %cst_123 = arith.constant 1.600000e+01 : f32
    %301 = vector.broadcast %cst_123 : f32 to vector<80x1xf32>
    %302 = arith.divf %300, %301 : vector<80x1xf32>
    %303 = vector.broadcast %302 : vector<80x1xf32> to vector<80x16xf32>
    %304 = arith.subf %298, %303 : vector<80x16xf32>
    %305 = arith.mulf %304, %304 : vector<80x16xf32>
    %cst_124 = arith.constant dense<0.000000e+00> : vector<80xf32>
    %306 = vector.multi_reduction <add>, %305, %cst_124 [1] : vector<80x16xf32> to vector<80xf32>
    %307 = vector.shape_cast %306 : vector<80xf32> to vector<80x1xf32>
    %cst_125 = arith.constant 1.600000e+01 : f32
    %308 = vector.broadcast %cst_125 : f32 to vector<80x1xf32>
    %309 = arith.divf %307, %308 : vector<80x1xf32>
    %cst_126 = arith.constant 9.99999996E-13 : f32
    %310 = vector.broadcast %cst_126 : f32 to vector<80x1xf32>
    %311 = arith.addf %309, %310 : vector<80x1xf32>
    %312 = math.rsqrt %311 : vector<80x1xf32>
    %313 = vector.broadcast %312 : vector<80x1xf32> to vector<80x16xf32>
    %314 = arith.mulf %304, %313 : vector<80x16xf32>
    %315 = vector.broadcast %193 : vector<1x16xf32> to vector<80x16xf32>
    %316 = arith.mulf %314, %315 : vector<80x16xf32>
    %317 = vector.broadcast %194 : vector<1x16xf32> to vector<80x16xf32>
    %318 = arith.addf %316, %317 : vector<80x16xf32>
    %cst_127 = arith.constant 0.000000e+00 : f32
    %319 = vector.broadcast %cst_127 : f32 to vector<80x16xf32>
    %320 = arith.maximumf %318, %319 : vector<80x16xf32>
    %c1_128 = arith.constant 1 : index
    %c0_129 = arith.constant 0 : index
    %c0_130 = arith.constant 0 : index
    %321 = vector.load %arg8[%c1_128, %c0_129, %c0_130] : memref<4x16x32xf32, #tpu.memory_space<vmem>>, vector<1x16x32xf32>
    %322 = vector.shape_cast %321 : vector<1x16x32xf32> to vector<16x32xf32>
    %cst_131 = arith.constant dense<0.000000e+00> : vector<80x32xf32>
    %323 = tpu.matmul %320, %322, %cst_131 {dimension_numbers = #tpu.dot_dimension_numbers<[1], [0], [0], [1], [0, 0, 1, 1], [], []>} : vector<80x16xf32>, vector<16x32xf32>, vector<80x32xf32> -> vector<80x32xf32>
    %324 = vector.broadcast %195 : vector<1x32xf32> to vector<80x32xf32>
    %325 = arith.addf %323, %324 : vector<80x32xf32>
    %326 = arith.addf %325, %186 : vector<80x32xf32>
    %327 = vector.extract_strided_slice %0 {offsets = [21, 0], sizes = [1, 32], strides = [1, 1]} : vector<40x128xf32> to vector<1x32xf32>
    %328 = vector.extract_strided_slice %0 {offsets = [22, 0], sizes = [1, 32], strides = [1, 1]} : vector<40x128xf32> to vector<1x32xf32>
    %329 = vector.extract_strided_slice %0 {offsets = [23, 0], sizes = [1, 16], strides = [1, 1]} : vector<40x128xf32> to vector<1x16xf32>
    %330 = vector.extract_strided_slice %0 {offsets = [24, 0], sizes = [1, 16], strides = [1, 1]} : vector<40x128xf32> to vector<1x16xf32>
    %331 = vector.extract_strided_slice %0 {offsets = [25, 0], sizes = [1, 16], strides = [1, 1]} : vector<40x128xf32> to vector<1x16xf32>
    %332 = vector.extract_strided_slice %0 {offsets = [26, 0], sizes = [1, 16], strides = [1, 1]} : vector<40x128xf32> to vector<1x16xf32>
    %333 = vector.extract_strided_slice %0 {offsets = [27, 0], sizes = [1, 16], strides = [1, 1]} : vector<40x128xf32> to vector<1x16xf32>
    %334 = vector.extract_strided_slice %0 {offsets = [28, 0], sizes = [1, 16], strides = [1, 1]} : vector<40x128xf32> to vector<1x16xf32>
    %335 = vector.extract_strided_slice %0 {offsets = [29, 0], sizes = [1, 32], strides = [1, 1]} : vector<40x128xf32> to vector<1x32xf32>
    %cst_132 = arith.constant dense<0.000000e+00> : vector<80xf32>
    %336 = vector.multi_reduction <add>, %326, %cst_132 [1] : vector<80x32xf32> to vector<80xf32>
    %337 = vector.shape_cast %336 : vector<80xf32> to vector<80x1xf32>
    %cst_133 = arith.constant 3.200000e+01 : f32
    %338 = vector.broadcast %cst_133 : f32 to vector<80x1xf32>
    %339 = arith.divf %337, %338 : vector<80x1xf32>
    %340 = vector.broadcast %339 : vector<80x1xf32> to vector<80x32xf32>
    %341 = arith.subf %326, %340 : vector<80x32xf32>
    %342 = arith.mulf %341, %341 : vector<80x32xf32>
    %cst_134 = arith.constant dense<0.000000e+00> : vector<80xf32>
    %343 = vector.multi_reduction <add>, %342, %cst_134 [1] : vector<80x32xf32> to vector<80xf32>
    %344 = vector.shape_cast %343 : vector<80xf32> to vector<80x1xf32>
    %cst_135 = arith.constant 3.200000e+01 : f32
    %345 = vector.broadcast %cst_135 : f32 to vector<80x1xf32>
    %346 = arith.divf %344, %345 : vector<80x1xf32>
    %cst_136 = arith.constant 9.99999996E-13 : f32
    %347 = vector.broadcast %cst_136 : f32 to vector<80x1xf32>
    %348 = arith.addf %346, %347 : vector<80x1xf32>
    %349 = math.rsqrt %348 : vector<80x1xf32>
    %350 = vector.broadcast %349 : vector<80x1xf32> to vector<80x32xf32>
    %351 = arith.mulf %341, %350 : vector<80x32xf32>
    %352 = vector.broadcast %327 : vector<1x32xf32> to vector<80x32xf32>
    %353 = arith.mulf %351, %352 : vector<80x32xf32>
    %354 = vector.broadcast %328 : vector<1x32xf32> to vector<80x32xf32>
    %355 = arith.addf %353, %354 : vector<80x32xf32>
    %cst_137 = arith.constant 0.000000e+00 : f32
    %356 = vector.broadcast %cst_137 : f32 to vector<80x32xf32>
    %357 = arith.maximumf %355, %356 : vector<80x32xf32>
    %c2 = arith.constant 2 : index
    %c0_138 = arith.constant 0 : index
    %c0_139 = arith.constant 0 : index
    %358 = vector.load %arg6[%c2, %c0_138, %c0_139] : memref<4x32x16xf32, #tpu.memory_space<vmem>>, vector<1x32x16xf32>
    %359 = vector.shape_cast %358 : vector<1x32x16xf32> to vector<32x16xf32>
    %cst_140 = arith.constant dense<0.000000e+00> : vector<80x16xf32>
    %360 = tpu.matmul %357, %359, %cst_140 {dimension_numbers = #tpu.dot_dimension_numbers<[1], [0], [0], [1], [0, 0, 1, 1], [], []>} : vector<80x32xf32>, vector<32x16xf32>, vector<80x16xf32> -> vector<80x16xf32>
    %361 = vector.broadcast %329 : vector<1x16xf32> to vector<80x16xf32>
    %362 = arith.addf %360, %361 : vector<80x16xf32>
    %cst_141 = arith.constant dense<0.000000e+00> : vector<80xf32>
    %363 = vector.multi_reduction <add>, %362, %cst_141 [1] : vector<80x16xf32> to vector<80xf32>
    %364 = vector.shape_cast %363 : vector<80xf32> to vector<80x1xf32>
    %cst_142 = arith.constant 1.600000e+01 : f32
    %365 = vector.broadcast %cst_142 : f32 to vector<80x1xf32>
    %366 = arith.divf %364, %365 : vector<80x1xf32>
    %367 = vector.broadcast %366 : vector<80x1xf32> to vector<80x16xf32>
    %368 = arith.subf %362, %367 : vector<80x16xf32>
    %369 = arith.mulf %368, %368 : vector<80x16xf32>
    %cst_143 = arith.constant dense<0.000000e+00> : vector<80xf32>
    %370 = vector.multi_reduction <add>, %369, %cst_143 [1] : vector<80x16xf32> to vector<80xf32>
    %371 = vector.shape_cast %370 : vector<80xf32> to vector<80x1xf32>
    %cst_144 = arith.constant 1.600000e+01 : f32
    %372 = vector.broadcast %cst_144 : f32 to vector<80x1xf32>
    %373 = arith.divf %371, %372 : vector<80x1xf32>
    %cst_145 = arith.constant 9.99999996E-13 : f32
    %374 = vector.broadcast %cst_145 : f32 to vector<80x1xf32>
    %375 = arith.addf %373, %374 : vector<80x1xf32>
    %376 = math.rsqrt %375 : vector<80x1xf32>
    %377 = vector.broadcast %376 : vector<80x1xf32> to vector<80x16xf32>
    %378 = arith.mulf %368, %377 : vector<80x16xf32>
    %379 = vector.broadcast %330 : vector<1x16xf32> to vector<80x16xf32>
    %380 = arith.mulf %378, %379 : vector<80x16xf32>
    %381 = vector.broadcast %331 : vector<1x16xf32> to vector<80x16xf32>
    %382 = arith.addf %380, %381 : vector<80x16xf32>
    %cst_146 = arith.constant 0.000000e+00 : f32
    %383 = vector.broadcast %cst_146 : f32 to vector<80x16xf32>
    %384 = arith.maximumf %382, %383 : vector<80x16xf32>
    %c8_i32_147 = arith.constant 8 : i32
    %385 = tpu.dynamic_rotate %384 by %c8_i32_147 dim 0 : vector<80x16xf32>, i32 -> vector<80x16xf32>
    %cst_148 = arith.constant 0.000000e+00 : f32
    %386 = vector.shape_cast %10 : vector<80x1xi1> to vector<80x1xi1>
    %387 = vector.broadcast %386 : vector<80x1xi1> to vector<80x16xi1>
    %388 = vector.broadcast %cst_148 : f32 to vector<80x16xf32>
    %389 = arith.select %387, %385, %388 : vector<80x16xi1>, vector<80x16xf32>
    %c0_149 = arith.constant 0 : index
    %c0_150 = arith.constant 0 : index
    %390 = vector.load %arg12[%c0_149, %c0_150] : memref<80x128xf32, #tpu.memory_space<vmem>>, vector<80x16xf32>
    tpu.vector_store %arg12[%c0_149, %c0_150], %389 {strides = array<i32>} : memref<80x128xf32, #tpu.memory_space<vmem>>, vector<80x16xf32>,
    %c7_i32_151 = arith.constant 7 : i32
    %391 = tpu.dynamic_rotate %384 by %c7_i32_151 dim 0 : vector<80x16xf32>, i32 -> vector<80x16xf32>
    %cst_152 = arith.constant 0.000000e+00 : f32
    %392 = vector.shape_cast %12 : vector<80x1xi1> to vector<80x1xi1>
    %393 = vector.broadcast %392 : vector<80x1xi1> to vector<80x16xi1>
    %394 = vector.broadcast %cst_152 : f32 to vector<80x16xf32>
    %395 = arith.select %393, %391, %394 : vector<80x16xi1>, vector<80x16xf32>
    %c0_153 = arith.constant 0 : index
    %c16_154 = arith.constant 16 : index
    %396 = vector.load %arg12[%c0_153, %c16_154] : memref<80x128xf32, #tpu.memory_space<vmem>>, vector<80x16xf32>
    tpu.vector_store %arg12[%c0_153, %c16_154], %395 {strides = array<i32>} : memref<80x128xf32, #tpu.memory_space<vmem>>, vector<80x16xf32>,
    %c6_i32_155 = arith.constant 6 : i32
    %397 = tpu.dynamic_rotate %384 by %c6_i32_155 dim 0 : vector<80x16xf32>, i32 -> vector<80x16xf32>
    %cst_156 = arith.constant 0.000000e+00 : f32
    %398 = vector.shape_cast %14 : vector<80x1xi1> to vector<80x1xi1>
    %399 = vector.broadcast %398 : vector<80x1xi1> to vector<80x16xi1>
    %400 = vector.broadcast %cst_156 : f32 to vector<80x16xf32>
    %401 = arith.select %399, %397, %400 : vector<80x16xi1>, vector<80x16xf32>
    %c0_157 = arith.constant 0 : index
    %c32_158 = arith.constant 32 : index
    %402 = vector.load %arg12[%c0_157, %c32_158] : memref<80x128xf32, #tpu.memory_space<vmem>>, vector<80x16xf32>
    tpu.vector_store %arg12[%c0_157, %c32_158], %401 {strides = array<i32>} : memref<80x128xf32, #tpu.memory_space<vmem>>, vector<80x16xf32>,
    %c5_i32_159 = arith.constant 5 : i32
    %403 = tpu.dynamic_rotate %384 by %c5_i32_159 dim 0 : vector<80x16xf32>, i32 -> vector<80x16xf32>
    %cst_160 = arith.constant 0.000000e+00 : f32
    %404 = vector.shape_cast %16 : vector<80x1xi1> to vector<80x1xi1>
    %405 = vector.broadcast %404 : vector<80x1xi1> to vector<80x16xi1>
    %406 = vector.broadcast %cst_160 : f32 to vector<80x16xf32>
    %407 = arith.select %405, %403, %406 : vector<80x16xi1>, vector<80x16xf32>
    %c0_161 = arith.constant 0 : index
    %c48_162 = arith.constant 48 : index
    %408 = vector.load %arg12[%c0_161, %c48_162] : memref<80x128xf32, #tpu.memory_space<vmem>>, vector<80x16xf32>
    tpu.vector_store %arg12[%c0_161, %c48_162], %407 {strides = array<i32>} : memref<80x128xf32, #tpu.memory_space<vmem>>, vector<80x16xf32>,
    %c4_i32_163 = arith.constant 4 : i32
    %409 = tpu.dynamic_rotate %384 by %c4_i32_163 dim 0 : vector<80x16xf32>, i32 -> vector<80x16xf32>
    %cst_164 = arith.constant 0.000000e+00 : f32
    %410 = vector.shape_cast %18 : vector<80x1xi1> to vector<80x1xi1>
    %411 = vector.broadcast %410 : vector<80x1xi1> to vector<80x16xi1>
    %412 = vector.broadcast %cst_164 : f32 to vector<80x16xf32>
    %413 = arith.select %411, %409, %412 : vector<80x16xi1>, vector<80x16xf32>
    %c0_165 = arith.constant 0 : index
    %c64_166 = arith.constant 64 : index
    %414 = vector.load %arg12[%c0_165, %c64_166] : memref<80x128xf32, #tpu.memory_space<vmem>>, vector<80x16xf32>
    tpu.vector_store %arg12[%c0_165, %c64_166], %413 {strides = array<i32>} : memref<80x128xf32, #tpu.memory_space<vmem>>, vector<80x16xf32>,
    %c3_i32_167 = arith.constant 3 : i32
    %415 = tpu.dynamic_rotate %384 by %c3_i32_167 dim 0 : vector<80x16xf32>, i32 -> vector<80x16xf32>
    %cst_168 = arith.constant 0.000000e+00 : f32
    %416 = vector.shape_cast %20 : vector<80x1xi1> to vector<80x1xi1>
    %417 = vector.broadcast %416 : vector<80x1xi1> to vector<80x16xi1>
    %418 = vector.broadcast %cst_168 : f32 to vector<80x16xf32>
    %419 = arith.select %417, %415, %418 : vector<80x16xi1>, vector<80x16xf32>
    %c0_169 = arith.constant 0 : index
    %c80_170 = arith.constant 80 : index
    %420 = vector.load %arg12[%c0_169, %c80_170] : memref<80x128xf32, #tpu.memory_space<vmem>>, vector<80x16xf32>
    tpu.vector_store %arg12[%c0_169, %c80_170], %419 {strides = array<i32>} : memref<80x128xf32, #tpu.memory_space<vmem>>, vector<80x16xf32>,
    %c2_i32_171 = arith.constant 2 : i32
    %421 = tpu.dynamic_rotate %384 by %c2_i32_171 dim 0 : vector<80x16xf32>, i32 -> vector<80x16xf32>
    %cst_172 = arith.constant 0.000000e+00 : f32
    %422 = vector.shape_cast %22 : vector<80x1xi1> to vector<80x1xi1>
    %423 = vector.broadcast %422 : vector<80x1xi1> to vector<80x16xi1>
    %424 = vector.broadcast %cst_172 : f32 to vector<80x16xf32>
    %425 = arith.select %423, %421, %424 : vector<80x16xi1>, vector<80x16xf32>
    %c0_173 = arith.constant 0 : index
    %c96_174 = arith.constant 96 : index
    %426 = vector.load %arg12[%c0_173, %c96_174] : memref<80x128xf32, #tpu.memory_space<vmem>>, vector<80x16xf32>
    tpu.vector_store %arg12[%c0_173, %c96_174], %425 {strides = array<i32>} : memref<80x128xf32, #tpu.memory_space<vmem>>, vector<80x16xf32>,
    %c1_i32_175 = arith.constant 1 : i32
    %427 = tpu.dynamic_rotate %384 by %c1_i32_175 dim 0 : vector<80x16xf32>, i32 -> vector<80x16xf32>
    %cst_176 = arith.constant 0.000000e+00 : f32
    %428 = vector.shape_cast %24 : vector<80x1xi1> to vector<80x1xi1>
    %429 = vector.broadcast %428 : vector<80x1xi1> to vector<80x16xi1>
    %430 = vector.broadcast %cst_176 : f32 to vector<80x16xf32>
    %431 = arith.select %429, %427, %430 : vector<80x16xi1>, vector<80x16xf32>
    %c0_177 = arith.constant 0 : index
    %c112_178 = arith.constant 112 : index
    %432 = vector.load %arg12[%c0_177, %c112_178] : memref<80x128xf32, #tpu.memory_space<vmem>>, vector<80x16xf32>
    tpu.vector_store %arg12[%c0_177, %c112_178], %431 {strides = array<i32>} : memref<80x128xf32, #tpu.memory_space<vmem>>, vector<80x16xf32>,
    %c0_179 = arith.constant 0 : index
    %c0_180 = arith.constant 0 : index
    %433 = vector.load %arg12[%c0_179, %c0_180] : memref<80x128xf32, #tpu.memory_space<vmem>>, vector<80x128xf32>
    %c2_181 = arith.constant 2 : index
    %c0_182 = arith.constant 0 : index
    %c0_183 = arith.constant 0 : index
    %434 = vector.load %arg7[%c2_181, %c0_182, %c0_183] : memref<4x128x16xf32, #tpu.memory_space<vmem>>, vector<1x128x16xf32>
    %435 = vector.shape_cast %434 : vector<1x128x16xf32> to vector<128x16xf32>
    %cst_184 = arith.constant dense<0.000000e+00> : vector<80x16xf32>
    %436 = tpu.matmul %433, %435, %cst_184 {dimension_numbers = #tpu.dot_dimension_numbers<[1], [0], [0], [1], [0, 0, 1, 1], [], []>} : vector<80x128xf32>, vector<128x16xf32>, vector<80x16xf32> -> vector<80x16xf32>
    %437 = vector.broadcast %332 : vector<1x16xf32> to vector<80x16xf32>
    %438 = arith.addf %436, %437 : vector<80x16xf32>
    %cst_185 = arith.constant dense<0.000000e+00> : vector<80xf32>
    %439 = vector.multi_reduction <add>, %438, %cst_185 [1] : vector<80x16xf32> to vector<80xf32>
    %440 = vector.shape_cast %439 : vector<80xf32> to vector<80x1xf32>
    %cst_186 = arith.constant 1.600000e+01 : f32
    %441 = vector.broadcast %cst_186 : f32 to vector<80x1xf32>
    %442 = arith.divf %440, %441 : vector<80x1xf32>
    %443 = vector.broadcast %442 : vector<80x1xf32> to vector<80x16xf32>
    %444 = arith.subf %438, %443 : vector<80x16xf32>
    %445 = arith.mulf %444, %444 : vector<80x16xf32>
    %cst_187 = arith.constant dense<0.000000e+00> : vector<80xf32>
    %446 = vector.multi_reduction <add>, %445, %cst_187 [1] : vector<80x16xf32> to vector<80xf32>
    %447 = vector.shape_cast %446 : vector<80xf32> to vector<80x1xf32>
    %cst_188 = arith.constant 1.600000e+01 : f32
    %448 = vector.broadcast %cst_188 : f32 to vector<80x1xf32>
    %449 = arith.divf %447, %448 : vector<80x1xf32>
    %cst_189 = arith.constant 9.99999996E-13 : f32
    %450 = vector.broadcast %cst_189 : f32 to vector<80x1xf32>
    %451 = arith.addf %449, %450 : vector<80x1xf32>
    %452 = math.rsqrt %451 : vector<80x1xf32>
    %453 = vector.broadcast %452 : vector<80x1xf32> to vector<80x16xf32>
    %454 = arith.mulf %444, %453 : vector<80x16xf32>
    %455 = vector.broadcast %333 : vector<1x16xf32> to vector<80x16xf32>
    %456 = arith.mulf %454, %455 : vector<80x16xf32>
    %457 = vector.broadcast %334 : vector<1x16xf32> to vector<80x16xf32>
    %458 = arith.addf %456, %457 : vector<80x16xf32>
    %cst_190 = arith.constant 0.000000e+00 : f32
    %459 = vector.broadcast %cst_190 : f32 to vector<80x16xf32>
    %460 = arith.maximumf %458, %459 : vector<80x16xf32>
    %c2_191 = arith.constant 2 : index
    %c0_192 = arith.constant 0 : index
    %c0_193 = arith.constant 0 : index
    %461 = vector.load %arg8[%c2_191, %c0_192, %c0_193] : memref<4x16x32xf32, #tpu.memory_space<vmem>>, vector<1x16x32xf32>
    %462 = vector.shape_cast %461 : vector<1x16x32xf32> to vector<16x32xf32>
    %cst_194 = arith.constant dense<0.000000e+00> : vector<80x32xf32>
    %463 = tpu.matmul %460, %462, %cst_194 {dimension_numbers = #tpu.dot_dimension_numbers<[1], [0], [0], [1], [0, 0, 1, 1], [], []>} : vector<80x16xf32>, vector<16x32xf32>, vector<80x32xf32> -> vector<80x32xf32>
    %464 = vector.broadcast %335 : vector<1x32xf32> to vector<80x32xf32>
    %465 = arith.addf %463, %464 : vector<80x32xf32>
    %466 = arith.addf %465, %326 : vector<80x32xf32>
    %467 = vector.extract_strided_slice %0 {offsets = [30, 0], sizes = [1, 32], strides = [1, 1]} : vector<40x128xf32> to vector<1x32xf32>
    %468 = vector.extract_strided_slice %0 {offsets = [31, 0], sizes = [1, 32], strides = [1, 1]} : vector<40x128xf32> to vector<1x32xf32>
    %469 = vector.extract_strided_slice %0 {offsets = [32, 0], sizes = [1, 16], strides = [1, 1]} : vector<40x128xf32> to vector<1x16xf32>
    %470 = vector.extract_strided_slice %0 {offsets = [33, 0], sizes = [1, 16], strides = [1, 1]} : vector<40x128xf32> to vector<1x16xf32>
    %471 = vector.extract_strided_slice %0 {offsets = [34, 0], sizes = [1, 16], strides = [1, 1]} : vector<40x128xf32> to vector<1x16xf32>
    %472 = vector.extract_strided_slice %0 {offsets = [35, 0], sizes = [1, 16], strides = [1, 1]} : vector<40x128xf32> to vector<1x16xf32>
    %473 = vector.extract_strided_slice %0 {offsets = [36, 0], sizes = [1, 16], strides = [1, 1]} : vector<40x128xf32> to vector<1x16xf32>
    %474 = vector.extract_strided_slice %0 {offsets = [37, 0], sizes = [1, 16], strides = [1, 1]} : vector<40x128xf32> to vector<1x16xf32>
    %475 = vector.extract_strided_slice %0 {offsets = [38, 0], sizes = [1, 32], strides = [1, 1]} : vector<40x128xf32> to vector<1x32xf32>
    %cst_195 = arith.constant dense<0.000000e+00> : vector<80xf32>
    %476 = vector.multi_reduction <add>, %466, %cst_195 [1] : vector<80x32xf32> to vector<80xf32>
    %477 = vector.shape_cast %476 : vector<80xf32> to vector<80x1xf32>
    %cst_196 = arith.constant 3.200000e+01 : f32
    %478 = vector.broadcast %cst_196 : f32 to vector<80x1xf32>
    %479 = arith.divf %477, %478 : vector<80x1xf32>
    %480 = vector.broadcast %479 : vector<80x1xf32> to vector<80x32xf32>
    %481 = arith.subf %466, %480 : vector<80x32xf32>
    %482 = arith.mulf %481, %481 : vector<80x32xf32>
    %cst_197 = arith.constant dense<0.000000e+00> : vector<80xf32>
    %483 = vector.multi_reduction <add>, %482, %cst_197 [1] : vector<80x32xf32> to vector<80xf32>
    %484 = vector.shape_cast %483 : vector<80xf32> to vector<80x1xf32>
    %cst_198 = arith.constant 3.200000e+01 : f32
    %485 = vector.broadcast %cst_198 : f32 to vector<80x1xf32>
    %486 = arith.divf %484, %485 : vector<80x1xf32>
    %cst_199 = arith.constant 9.99999996E-13 : f32
    %487 = vector.broadcast %cst_199 : f32 to vector<80x1xf32>
    %488 = arith.addf %486, %487 : vector<80x1xf32>
    %489 = math.rsqrt %488 : vector<80x1xf32>
    %490 = vector.broadcast %489 : vector<80x1xf32> to vector<80x32xf32>
    %491 = arith.mulf %481, %490 : vector<80x32xf32>
    %492 = vector.broadcast %467 : vector<1x32xf32> to vector<80x32xf32>
    %493 = arith.mulf %491, %492 : vector<80x32xf32>
    %494 = vector.broadcast %468 : vector<1x32xf32> to vector<80x32xf32>
    %495 = arith.addf %493, %494 : vector<80x32xf32>
    %cst_200 = arith.constant 0.000000e+00 : f32
    %496 = vector.broadcast %cst_200 : f32 to vector<80x32xf32>
    %497 = arith.maximumf %495, %496 : vector<80x32xf32>
    %c3 = arith.constant 3 : index
    %c0_201 = arith.constant 0 : index
    %c0_202 = arith.constant 0 : index
    %498 = vector.load %arg6[%c3, %c0_201, %c0_202] : memref<4x32x16xf32, #tpu.memory_space<vmem>>, vector<1x32x16xf32>
    %499 = vector.shape_cast %498 : vector<1x32x16xf32> to vector<32x16xf32>
    %cst_203 = arith.constant dense<0.000000e+00> : vector<80x16xf32>
    %500 = tpu.matmul %497, %499, %cst_203 {dimension_numbers = #tpu.dot_dimension_numbers<[1], [0], [0], [1], [0, 0, 1, 1], [], []>} : vector<80x32xf32>, vector<32x16xf32>, vector<80x16xf32> -> vector<80x16xf32>
    %501 = vector.broadcast %469 : vector<1x16xf32> to vector<80x16xf32>
    %502 = arith.addf %500, %501 : vector<80x16xf32>
    %cst_204 = arith.constant dense<0.000000e+00> : vector<80xf32>
    %503 = vector.multi_reduction <add>, %502, %cst_204 [1] : vector<80x16xf32> to vector<80xf32>
    %504 = vector.shape_cast %503 : vector<80xf32> to vector<80x1xf32>
    %cst_205 = arith.constant 1.600000e+01 : f32
    %505 = vector.broadcast %cst_205 : f32 to vector<80x1xf32>
    %506 = arith.divf %504, %505 : vector<80x1xf32>
    %507 = vector.broadcast %506 : vector<80x1xf32> to vector<80x16xf32>
    %508 = arith.subf %502, %507 : vector<80x16xf32>
    %509 = arith.mulf %508, %508 : vector<80x16xf32>
    %cst_206 = arith.constant dense<0.000000e+00> : vector<80xf32>
    %510 = vector.multi_reduction <add>, %509, %cst_206 [1] : vector<80x16xf32> to vector<80xf32>
    %511 = vector.shape_cast %510 : vector<80xf32> to vector<80x1xf32>
    %cst_207 = arith.constant 1.600000e+01 : f32
    %512 = vector.broadcast %cst_207 : f32 to vector<80x1xf32>
    %513 = arith.divf %511, %512 : vector<80x1xf32>
    %cst_208 = arith.constant 9.99999996E-13 : f32
    %514 = vector.broadcast %cst_208 : f32 to vector<80x1xf32>
    %515 = arith.addf %513, %514 : vector<80x1xf32>
    %516 = math.rsqrt %515 : vector<80x1xf32>
    %517 = vector.broadcast %516 : vector<80x1xf32> to vector<80x16xf32>
    %518 = arith.mulf %508, %517 : vector<80x16xf32>
    %519 = vector.broadcast %470 : vector<1x16xf32> to vector<80x16xf32>
    %520 = arith.mulf %518, %519 : vector<80x16xf32>
    %521 = vector.broadcast %471 : vector<1x16xf32> to vector<80x16xf32>
    %522 = arith.addf %520, %521 : vector<80x16xf32>
    %cst_209 = arith.constant 0.000000e+00 : f32
    %523 = vector.broadcast %cst_209 : f32 to vector<80x16xf32>
    %524 = arith.maximumf %522, %523 : vector<80x16xf32>
    %c8_i32_210 = arith.constant 8 : i32
    %525 = tpu.dynamic_rotate %524 by %c8_i32_210 dim 0 : vector<80x16xf32>, i32 -> vector<80x16xf32>
    %cst_211 = arith.constant 0.000000e+00 : f32
    %526 = vector.shape_cast %10 : vector<80x1xi1> to vector<80x1xi1>
    %527 = vector.broadcast %526 : vector<80x1xi1> to vector<80x16xi1>
    %528 = vector.broadcast %cst_211 : f32 to vector<80x16xf32>
    %529 = arith.select %527, %525, %528 : vector<80x16xi1>, vector<80x16xf32>
    %c0_212 = arith.constant 0 : index
    %c0_213 = arith.constant 0 : index
    %530 = vector.load %arg12[%c0_212, %c0_213] : memref<80x128xf32, #tpu.memory_space<vmem>>, vector<80x16xf32>
    tpu.vector_store %arg12[%c0_212, %c0_213], %529 {strides = array<i32>} : memref<80x128xf32, #tpu.memory_space<vmem>>, vector<80x16xf32>,
    %c7_i32_214 = arith.constant 7 : i32
    %531 = tpu.dynamic_rotate %524 by %c7_i32_214 dim 0 : vector<80x16xf32>, i32 -> vector<80x16xf32>
    %cst_215 = arith.constant 0.000000e+00 : f32
    %532 = vector.shape_cast %12 : vector<80x1xi1> to vector<80x1xi1>
    %533 = vector.broadcast %532 : vector<80x1xi1> to vector<80x16xi1>
    %534 = vector.broadcast %cst_215 : f32 to vector<80x16xf32>
    %535 = arith.select %533, %531, %534 : vector<80x16xi1>, vector<80x16xf32>
    %c0_216 = arith.constant 0 : index
    %c16_217 = arith.constant 16 : index
    %536 = vector.load %arg12[%c0_216, %c16_217] : memref<80x128xf32, #tpu.memory_space<vmem>>, vector<80x16xf32>
    tpu.vector_store %arg12[%c0_216, %c16_217], %535 {strides = array<i32>} : memref<80x128xf32, #tpu.memory_space<vmem>>, vector<80x16xf32>,
    %c6_i32_218 = arith.constant 6 : i32
    %537 = tpu.dynamic_rotate %524 by %c6_i32_218 dim 0 : vector<80x16xf32>, i32 -> vector<80x16xf32>
    %cst_219 = arith.constant 0.000000e+00 : f32
    %538 = vector.shape_cast %14 : vector<80x1xi1> to vector<80x1xi1>
    %539 = vector.broadcast %538 : vector<80x1xi1> to vector<80x16xi1>
    %540 = vector.broadcast %cst_219 : f32 to vector<80x16xf32>
    %541 = arith.select %539, %537, %540 : vector<80x16xi1>, vector<80x16xf32>
    %c0_220 = arith.constant 0 : index
    %c32_221 = arith.constant 32 : index
    %542 = vector.load %arg12[%c0_220, %c32_221] : memref<80x128xf32, #tpu.memory_space<vmem>>, vector<80x16xf32>
    tpu.vector_store %arg12[%c0_220, %c32_221], %541 {strides = array<i32>} : memref<80x128xf32, #tpu.memory_space<vmem>>, vector<80x16xf32>,
    %c5_i32_222 = arith.constant 5 : i32
    %543 = tpu.dynamic_rotate %524 by %c5_i32_222 dim 0 : vector<80x16xf32>, i32 -> vector<80x16xf32>
    %cst_223 = arith.constant 0.000000e+00 : f32
    %544 = vector.shape_cast %16 : vector<80x1xi1> to vector<80x1xi1>
    %545 = vector.broadcast %544 : vector<80x1xi1> to vector<80x16xi1>
    %546 = vector.broadcast %cst_223 : f32 to vector<80x16xf32>
    %547 = arith.select %545, %543, %546 : vector<80x16xi1>, vector<80x16xf32>
    %c0_224 = arith.constant 0 : index
    %c48_225 = arith.constant 48 : index
    %548 = vector.load %arg12[%c0_224, %c48_225] : memref<80x128xf32, #tpu.memory_space<vmem>>, vector<80x16xf32>
    tpu.vector_store %arg12[%c0_224, %c48_225], %547 {strides = array<i32>} : memref<80x128xf32, #tpu.memory_space<vmem>>, vector<80x16xf32>,
    %c4_i32_226 = arith.constant 4 : i32
    %549 = tpu.dynamic_rotate %524 by %c4_i32_226 dim 0 : vector<80x16xf32>, i32 -> vector<80x16xf32>
    %cst_227 = arith.constant 0.000000e+00 : f32
    %550 = vector.shape_cast %18 : vector<80x1xi1> to vector<80x1xi1>
    %551 = vector.broadcast %550 : vector<80x1xi1> to vector<80x16xi1>
    %552 = vector.broadcast %cst_227 : f32 to vector<80x16xf32>
    %553 = arith.select %551, %549, %552 : vector<80x16xi1>, vector<80x16xf32>
    %c0_228 = arith.constant 0 : index
    %c64_229 = arith.constant 64 : index
    %554 = vector.load %arg12[%c0_228, %c64_229] : memref<80x128xf32, #tpu.memory_space<vmem>>, vector<80x16xf32>
    tpu.vector_store %arg12[%c0_228, %c64_229], %553 {strides = array<i32>} : memref<80x128xf32, #tpu.memory_space<vmem>>, vector<80x16xf32>,
    %c3_i32_230 = arith.constant 3 : i32
    %555 = tpu.dynamic_rotate %524 by %c3_i32_230 dim 0 : vector<80x16xf32>, i32 -> vector<80x16xf32>
    %cst_231 = arith.constant 0.000000e+00 : f32
    %556 = vector.shape_cast %20 : vector<80x1xi1> to vector<80x1xi1>
    %557 = vector.broadcast %556 : vector<80x1xi1> to vector<80x16xi1>
    %558 = vector.broadcast %cst_231 : f32 to vector<80x16xf32>
    %559 = arith.select %557, %555, %558 : vector<80x16xi1>, vector<80x16xf32>
    %c0_232 = arith.constant 0 : index
    %c80_233 = arith.constant 80 : index
    %560 = vector.load %arg12[%c0_232, %c80_233] : memref<80x128xf32, #tpu.memory_space<vmem>>, vector<80x16xf32>
    tpu.vector_store %arg12[%c0_232, %c80_233], %559 {strides = array<i32>} : memref<80x128xf32, #tpu.memory_space<vmem>>, vector<80x16xf32>,
    %c2_i32_234 = arith.constant 2 : i32
    %561 = tpu.dynamic_rotate %524 by %c2_i32_234 dim 0 : vector<80x16xf32>, i32 -> vector<80x16xf32>
    %cst_235 = arith.constant 0.000000e+00 : f32
    %562 = vector.shape_cast %22 : vector<80x1xi1> to vector<80x1xi1>
    %563 = vector.broadcast %562 : vector<80x1xi1> to vector<80x16xi1>
    %564 = vector.broadcast %cst_235 : f32 to vector<80x16xf32>
    %565 = arith.select %563, %561, %564 : vector<80x16xi1>, vector<80x16xf32>
    %c0_236 = arith.constant 0 : index
    %c96_237 = arith.constant 96 : index
    %566 = vector.load %arg12[%c0_236, %c96_237] : memref<80x128xf32, #tpu.memory_space<vmem>>, vector<80x16xf32>
    tpu.vector_store %arg12[%c0_236, %c96_237], %565 {strides = array<i32>} : memref<80x128xf32, #tpu.memory_space<vmem>>, vector<80x16xf32>,
    %c1_i32_238 = arith.constant 1 : i32
    %567 = tpu.dynamic_rotate %524 by %c1_i32_238 dim 0 : vector<80x16xf32>, i32 -> vector<80x16xf32>
    %cst_239 = arith.constant 0.000000e+00 : f32
    %568 = vector.shape_cast %24 : vector<80x1xi1> to vector<80x1xi1>
    %569 = vector.broadcast %568 : vector<80x1xi1> to vector<80x16xi1>
    %570 = vector.broadcast %cst_239 : f32 to vector<80x16xf32>
    %571 = arith.select %569, %567, %570 : vector<80x16xi1>, vector<80x16xf32>
    %c0_240 = arith.constant 0 : index
    %c112_241 = arith.constant 112 : index
    %572 = vector.load %arg12[%c0_240, %c112_241] : memref<80x128xf32, #tpu.memory_space<vmem>>, vector<80x16xf32>
    tpu.vector_store %arg12[%c0_240, %c112_241], %571 {strides = array<i32>} : memref<80x128xf32, #tpu.memory_space<vmem>>, vector<80x16xf32>,
    %c0_242 = arith.constant 0 : index
    %c0_243 = arith.constant 0 : index
    %573 = vector.load %arg12[%c0_242, %c0_243] : memref<80x128xf32, #tpu.memory_space<vmem>>, vector<80x128xf32>
    %c3_244 = arith.constant 3 : index
    %c0_245 = arith.constant 0 : index
    %c0_246 = arith.constant 0 : index
    %574 = vector.load %arg7[%c3_244, %c0_245, %c0_246] : memref<4x128x16xf32, #tpu.memory_space<vmem>>, vector<1x128x16xf32>
    %575 = vector.shape_cast %574 : vector<1x128x16xf32> to vector<128x16xf32>
    %cst_247 = arith.constant dense<0.000000e+00> : vector<80x16xf32>
    %576 = tpu.matmul %573, %575, %cst_247 {dimension_numbers = #tpu.dot_dimension_numbers<[1], [0], [0], [1], [0, 0, 1, 1], [], []>} : vector<80x128xf32>, vector<128x16xf32>, vector<80x16xf32> -> vector<80x16xf32>
    %577 = vector.broadcast %472 : vector<1x16xf32> to vector<80x16xf32>
    %578 = arith.addf %576, %577 : vector<80x16xf32>
    %cst_248 = arith.constant dense<0.000000e+00> : vector<80xf32>
    %579 = vector.multi_reduction <add>, %578, %cst_248 [1] : vector<80x16xf32> to vector<80xf32>
    %580 = vector.shape_cast %579 : vector<80xf32> to vector<80x1xf32>
    %cst_249 = arith.constant 1.600000e+01 : f32
    %581 = vector.broadcast %cst_249 : f32 to vector<80x1xf32>
    %582 = arith.divf %580, %581 : vector<80x1xf32>
    %583 = vector.broadcast %582 : vector<80x1xf32> to vector<80x16xf32>
    %584 = arith.subf %578, %583 : vector<80x16xf32>
    %585 = arith.mulf %584, %584 : vector<80x16xf32>
    %cst_250 = arith.constant dense<0.000000e+00> : vector<80xf32>
    %586 = vector.multi_reduction <add>, %585, %cst_250 [1] : vector<80x16xf32> to vector<80xf32>
    %587 = vector.shape_cast %586 : vector<80xf32> to vector<80x1xf32>
    %cst_251 = arith.constant 1.600000e+01 : f32
    %588 = vector.broadcast %cst_251 : f32 to vector<80x1xf32>
    %589 = arith.divf %587, %588 : vector<80x1xf32>
    %cst_252 = arith.constant 9.99999996E-13 : f32
    %590 = vector.broadcast %cst_252 : f32 to vector<80x1xf32>
    %591 = arith.addf %589, %590 : vector<80x1xf32>
    %592 = math.rsqrt %591 : vector<80x1xf32>
    %593 = vector.broadcast %592 : vector<80x1xf32> to vector<80x16xf32>
    %594 = arith.mulf %584, %593 : vector<80x16xf32>
    %595 = vector.broadcast %473 : vector<1x16xf32> to vector<80x16xf32>
    %596 = arith.mulf %594, %595 : vector<80x16xf32>
    %597 = vector.broadcast %474 : vector<1x16xf32> to vector<80x16xf32>
    %598 = arith.addf %596, %597 : vector<80x16xf32>
    %cst_253 = arith.constant 0.000000e+00 : f32
    %599 = vector.broadcast %cst_253 : f32 to vector<80x16xf32>
    %600 = arith.maximumf %598, %599 : vector<80x16xf32>
    %c3_254 = arith.constant 3 : index
    %c0_255 = arith.constant 0 : index
    %c0_256 = arith.constant 0 : index
    %601 = vector.load %arg8[%c3_254, %c0_255, %c0_256] : memref<4x16x32xf32, #tpu.memory_space<vmem>>, vector<1x16x32xf32>
    %602 = vector.shape_cast %601 : vector<1x16x32xf32> to vector<16x32xf32>
    %cst_257 = arith.constant dense<0.000000e+00> : vector<80x32xf32>
    %603 = tpu.matmul %600, %602, %cst_257 {dimension_numbers = #tpu.dot_dimension_numbers<[1], [0], [0], [1], [0, 0, 1, 1], [], []>} : vector<80x16xf32>, vector<16x32xf32>, vector<80x32xf32> -> vector<80x32xf32>
    %604 = vector.broadcast %475 : vector<1x32xf32> to vector<80x32xf32>
    %605 = arith.addf %603, %604 : vector<80x32xf32>
    %606 = arith.addf %605, %466 : vector<80x32xf32>
    %c0_258 = arith.constant 0 : index
    %607 = memref.load %arg1[%c0_258] : memref<1xi32, #tpu.memory_space<smem>>
    %608 = arith.sitofp %607 : i32 to f32
    %609 = vector.broadcast %608 : f32 to vector<80x1xf32>
    %610 = arith.cmpf oeq, %8, %609 : vector<80x1xf32>
    %611 = arith.extui %610 : vector<80x1xi1> to vector<80x1xi32>
    %612 = arith.sitofp %611 : vector<80x1xi32> to vector<80x1xf32>
    %613 = vector.broadcast %612 : vector<80x1xf32> to vector<80x32xf32>
    %614 = arith.mulf %606, %613 : vector<80x32xf32>
    %615 = vector.extract_strided_slice %614 {offsets = [0, 0], sizes = [40, 32], strides = [1, 1]} : vector<80x32xf32> to vector<40x32xf32>
    %cst_259 = arith.constant dense<0.000000e+00> : vector<32xf32>
    %616 = vector.multi_reduction <add>, %615, %cst_259 [0] : vector<40x32xf32> to vector<32xf32>
    %617 = vector.shape_cast %616 : vector<32xf32> to vector<1x32xf32>
    %618 = vector.extract_strided_slice %614 {offsets = [40, 0], sizes = [40, 32], strides = [1, 1]} : vector<80x32xf32> to vector<40x32xf32>
    %cst_260 = arith.constant dense<0.000000e+00> : vector<32xf32>
    %619 = vector.multi_reduction <add>, %618, %cst_260 [0] : vector<40x32xf32> to vector<32xf32>
    %620 = vector.shape_cast %619 : vector<32xf32> to vector<1x32xf32>
    %621 = tpu.concatenate %617, %620 in 0 : vector<1x32xf32>, vector<1x32xf32> -> vector<2x32xf32>
    %c0_261 = arith.constant 0 : index
    %c0_262 = arith.constant 0 : index
    %622 = vector.load %arg3[%c0_261, %c0_262] : memref<2x1xf32, #tpu.memory_space<vmem>>, vector<2x1xf32>
    %623 = tpu.concatenate %621, %622 in 1 : vector<2x32xf32>, vector<2x1xf32> -> vector<2x33xf32>
    %624 = vector.extract_strided_slice %0 {offsets = [1, 0], sizes = [1, 33], strides = [1, 1]} : vector<40x128xf32> to vector<1x33xf32>
    %c0_263 = arith.constant 0 : index
    %c0_264 = arith.constant 0 : index
    %625 = vector.load %arg9[%c0_263, %c0_264] : memref<33x33xf32, #tpu.memory_space<vmem>>, vector<33x33xf32>
    %cst_265 = arith.constant dense<0.000000e+00> : vector<2x33xf32>
    %626 = tpu.matmul %623, %625, %cst_265 {dimension_numbers = #tpu.dot_dimension_numbers<[1], [0], [0], [1], [0, 0, 1, 1], [], []>} : vector<2x33xf32>, vector<33x33xf32>, vector<2x33xf32> -> vector<2x33xf32>
    %627 = vector.broadcast %624 : vector<1x33xf32> to vector<2x33xf32>
    %628 = arith.addf %626, %627 : vector<2x33xf32>
    %cst_266 = arith.constant 0.000000e+00 : f32
    %629 = vector.broadcast %cst_266 : f32 to vector<2x33xf32>
    %630 = arith.maximumf %628, %629 : vector<2x33xf32>
    %cst_267 = arith.constant dense<0.000000e+00> : vector<2xf32>
    %631 = vector.multi_reduction <add>, %630, %cst_267 [1] : vector<2x33xf32> to vector<2xf32>
    %632 = vector.shape_cast %631 : vector<2xf32> to vector<2x1xf32>
    %cst_268 = arith.constant 3.300000e+01 : f32
    %633 = vector.broadcast %cst_268 : f32 to vector<2x1xf32>
    %634 = arith.divf %632, %633 : vector<2x1xf32>
    %635 = vector.broadcast %634 : vector<2x1xf32> to vector<2x33xf32>
    %636 = arith.subf %630, %635 : vector<2x33xf32>
    %637 = arith.mulf %636, %636 : vector<2x33xf32>
    %cst_269 = arith.constant dense<0.000000e+00> : vector<2xf32>
    %638 = vector.multi_reduction <add>, %637, %cst_269 [1] : vector<2x33xf32> to vector<2xf32>
    %639 = vector.shape_cast %638 : vector<2xf32> to vector<2x1xf32>
    %cst_270 = arith.constant 3.300000e+01 : f32
    %640 = vector.broadcast %cst_270 : f32 to vector<2x1xf32>
    %641 = arith.divf %639, %640 : vector<2x1xf32>
    %cst_271 = arith.constant 9.99999996E-13 : f32
    %642 = vector.broadcast %cst_271 : f32 to vector<2x1xf32>
    %643 = arith.addf %641, %642 : vector<2x1xf32>
    %644 = math.rsqrt %643 : vector<2x1xf32>
    %645 = vector.broadcast %644 : vector<2x1xf32> to vector<2x33xf32>
    %646 = arith.mulf %636, %645 : vector<2x33xf32>
    %647 = vector.extract_strided_slice %0 {offsets = [2, 0], sizes = [1, 128], strides = [1, 1]} : vector<40x128xf32> to vector<1x128xf32>
    %c0_272 = arith.constant 0 : index
    %c0_273 = arith.constant 0 : index
    %648 = vector.load %arg10[%c0_272, %c0_273] : memref<33x128xf32, #tpu.memory_space<vmem>>, vector<33x128xf32>
    %cst_274 = arith.constant dense<0.000000e+00> : vector<2x128xf32>
    %649 = tpu.matmul %646, %648, %cst_274 {dimension_numbers = #tpu.dot_dimension_numbers<[1], [0], [0], [1], [0, 0, 1, 1], [], []>} : vector<2x33xf32>, vector<33x128xf32>, vector<2x128xf32> -> vector<2x128xf32>
    %650 = vector.broadcast %647 : vector<1x128xf32> to vector<2x128xf32>
    %651 = arith.addf %649, %650 : vector<2x128xf32>
    %c0_275 = arith.constant 0 : index
    %c0_276 = arith.constant 0 : index
    %652 = vector.load %arg11[%c0_275, %c0_276] : memref<2x128xf32, #tpu.memory_space<vmem>>, vector<2x128xf32>
    tpu.vector_store %arg11[%c0_275, %c0_276], %651 {strides = array<i32>} : memref<2x128xf32, #tpu.memory_space<vmem>>, vector<2x128xf32>,
    return
  }
  func.func @transform_0(%arg0: i32, %arg1: memref<1xi32, #tpu.memory_space<smem>>) -> (i32, i32) {
    %c0_i32 = arith.constant 0 : i32
    %c0_i32_0 = arith.constant 0 : i32
    return %arg0, %c0_i32 : i32, i32
  }
  func.func @transform_1(%arg0: i32, %arg1: memref<1xi32, #tpu.memory_space<smem>>) -> (i32, i32) {
    %c0_i32 = arith.constant 0 : i32
    %c0_i32_0 = arith.constant 0 : i32
    return %arg0, %c0_i32 : i32, i32
  }
  func.func @transform_2(%arg0: i32, %arg1: memref<1xi32, #tpu.memory_space<smem>>) -> (i32, i32) {
    %c0_i32 = arith.constant 0 : i32
    %c0_i32_0 = arith.constant 0 : i32
    %c0_i32_1 = arith.constant 0 : i32
    return %c0_i32, %c0_i32_0 : i32, i32
  }
  func.func @transform_3(%arg0: i32, %arg1: memref<1xi32, #tpu.memory_space<smem>>) -> (i32, i32) {
    %c0_i32 = arith.constant 0 : i32
    %c0_i32_0 = arith.constant 0 : i32
    %c0_i32_1 = arith.constant 0 : i32
    return %c0_i32, %c0_i32_0 : i32, i32
  }
  func.func @transform_4(%arg0: i32, %arg1: memref<1xi32, #tpu.memory_space<smem>>) -> (i32, i32, i32) {
    %c0_i32 = arith.constant 0 : i32
    %c0_i32_0 = arith.constant 0 : i32
    %c0_i32_1 = arith.constant 0 : i32
    %c0_i32_2 = arith.constant 0 : i32
    return %c0_i32, %c0_i32_0, %c0_i32_1 : i32, i32, i32
  }
  func.func @transform_5(%arg0: i32, %arg1: memref<1xi32, #tpu.memory_space<smem>>) -> (i32, i32, i32) {
    %c0_i32 = arith.constant 0 : i32
    %c0_i32_0 = arith.constant 0 : i32
    %c0_i32_1 = arith.constant 0 : i32
    %c0_i32_2 = arith.constant 0 : i32
    return %c0_i32, %c0_i32_0, %c0_i32_1 : i32, i32, i32
  }
  func.func @transform_6(%arg0: i32, %arg1: memref<1xi32, #tpu.memory_space<smem>>) -> (i32, i32, i32) {
    %c0_i32 = arith.constant 0 : i32
    %c0_i32_0 = arith.constant 0 : i32
    %c0_i32_1 = arith.constant 0 : i32
    %c0_i32_2 = arith.constant 0 : i32
    return %c0_i32, %c0_i32_0, %c0_i32_1 : i32, i32, i32
  }
  func.func @transform_7(%arg0: i32, %arg1: memref<1xi32, #tpu.memory_space<smem>>) -> (i32, i32) {
    %c0_i32 = arith.constant 0 : i32
    %c0_i32_0 = arith.constant 0 : i32
    %c0_i32_1 = arith.constant 0 : i32
    return %c0_i32, %c0_i32_0 : i32, i32
  }
  func.func @transform_8(%arg0: i32, %arg1: memref<1xi32, #tpu.memory_space<smem>>) -> (i32, i32) {
    %c0_i32 = arith.constant 0 : i32
    %c0_i32_0 = arith.constant 0 : i32
    %c0_i32_1 = arith.constant 0 : i32
    return %c0_i32, %c0_i32_0 : i32, i32
  }
  func.func @transform_9(%arg0: i32, %arg1: memref<1xi32, #tpu.memory_space<smem>>) -> (i32, i32) {
    %c0_i32 = arith.constant 0 : i32
    %c0_i32_0 = arith.constant 0 : i32
    return %arg0, %c0_i32 : i32, i32
  }
}

</mosaic_0001>

<llo_original>
// kernel: tpu_custom_call.1
$region0: #{tpu_custom_call.1}
  #allocation0 [shape = 'u32[]', space=smem, size = 0x4, offset = 0x4, fixed_abs, tag = 'smem constant byte address 0x4 - core index']
  #allocation1 [shape = 'u32[144,128]{1,0:T(1,128)}', space=vmem, size = 0x12000, scoped, tag = 'internal scratch']
  #allocation2 [shape = 'f32[80,128]{1,0:T(8,128)}', space=vmem, size = 0xa000, scoped, tag = 'scratch operand']
  #allocation3 [shape = 's32[1]{0}', space=sflag, size = 0x4, scoped, tag = 'scoped memory for tpu_custom_call.1']
  #allocation4 [shape = 's32[1]{0:T(128)S(6)}', space=smem, size = 0x200, scoped, tag = 'prefetched SMEM operand 0']
  %s0 = inlined_call_operand.<no memory space> [shape: s32[1], index: 0, kind: input, shape index: {}]
  %s1 = inlined_call_operand.vmem [shape: f32[80,16], index: 1, kind: input, shape index: {}]
  %s2 = inlined_call_operand.vmem [shape: f32[2,1], index: 2, kind: input, shape index: {}]
  %s3 = inlined_call_operand.vmem [shape: f32[40,128], index: 3, kind: input, shape index: {}]
  %s4 = inlined_call_operand.vmem [shape: f32[16,32], index: 4, kind: input, shape index: {}]
  %s5 = inlined_call_operand.vmem [shape: f32[4,32,16], index: 5, kind: input, shape index: {}]
  %s6 = inlined_call_operand.vmem [shape: f32[4,128,16], index: 6, kind: input, shape index: {}]
  %s7 = inlined_call_operand.vmem [shape: f32[4,16,32], index: 7, kind: input, shape index: {}]
  %s8 = inlined_call_operand.vmem [shape: f32[33,33], index: 8, kind: input, shape index: {}]
  %s9 = inlined_call_operand.vmem [shape: f32[33,128], index: 9, kind: input, shape index: {}]
  %s10 = inlined_call_operand.hbm [shape: f32[2,128], index: 10, kind: output, shape index: {}]
  %s11 = sld [smem:[#allocation0]]
  $region46: #{tpu_custom_call.1} parent=0
    _
  %s13 = ssub.s32 1, %s11
  %s14 = scalar_select 0, %s13, %s11
  %15 = sst [smem:[#allocation4]] %s0
  $region1: #{tpu_custom_call.1} parent=0
    #allocation5 [shape = 'u8[1024]{0}', space=vmem, size = 0x400, scoped, tag = 'output window, operand 0, single buffered']
    #allocation6 [shape = 's32[1]{0}', space=sflag, size = 0x4, scoped, tag = 'scoped memory for tpu_custom_call.1']
    %16 = vsyncpa [#allocation6], 0
    // Predicated region
    $region2: #{tpu_custom_call.1} parent=1 // pred_check
      _
    $region3: #{tpu_custom_call.1} parent=1 // pred_check_branch
      %18 = sbr.rel (0) target = $region5
    $region4: #{tpu_custom_call.1} parent=1 // pred_region
      _
    $region5: #{tpu_custom_call.1} parent=1 // pred_fallthru
      _
    // Predicated region
    $region6: #{tpu_custom_call.1} parent=1 // pred_check
      _
    $region7: #{tpu_custom_call.1} parent=1 // pred_check_branch
      %20 = sbr.rel (0) target = $region9
    $region8: #{tpu_custom_call.1} parent=1 // pred_region
      _
    $region9: #{tpu_custom_call.1} parent=1 // pred_fallthru
      _
    // Predicated region
    $region10: #{tpu_custom_call.1} parent=1 // pred_check
      _
    $region11: #{tpu_custom_call.1} parent=1 // pred_check_branch
      %22 = sbr.rel (0) target = $region13
    $region12: #{tpu_custom_call.1} parent=1 // pred_region
      _
    $region13: #{tpu_custom_call.1} parent=1 // pred_fallthru
      _
    // Predicated region
    $region14: #{tpu_custom_call.1} parent=1 // pred_check
      _
    $region15: #{tpu_custom_call.1} parent=1 // pred_check_branch
      %24 = sbr.rel (0) target = $region17
    $region16: #{tpu_custom_call.1} parent=1 // pred_region
      _
    $region17: #{tpu_custom_call.1} parent=1 // pred_fallthru
      _
    // Predicated region
    $region18: #{tpu_custom_call.1} parent=1 // pred_check
      _
    $region19: #{tpu_custom_call.1} parent=1 // pred_check_branch
      %26 = sbr.rel (0) target = $region21
    $region20: #{tpu_custom_call.1} parent=1 // pred_region
      _
    $region21: #{tpu_custom_call.1} parent=1 // pred_fallthru
      _
    // Predicated region
    $region22: #{tpu_custom_call.1} parent=1 // pred_check
      _
    $region23: #{tpu_custom_call.1} parent=1 // pred_check_branch
      %28 = sbr.rel (0) target = $region25
    $region24: #{tpu_custom_call.1} parent=1 // pred_region
      _
    $region25: #{tpu_custom_call.1} parent=1 // pred_fallthru
      _
    // Predicated region
    $region26: #{tpu_custom_call.1} parent=1 // pred_check
      _
    $region27: #{tpu_custom_call.1} parent=1 // pred_check_branch
      %30 = sbr.rel (0) target = $region29
    $region28: #{tpu_custom_call.1} parent=1 // pred_region
      _
    $region29: #{tpu_custom_call.1} parent=1 // pred_fallthru
      _
    // Predicated region
    $region30: #{tpu_custom_call.1} parent=1 // pred_check
      _
    $region31: #{tpu_custom_call.1} parent=1 // pred_check_branch
      %32 = sbr.rel (0) target = $region33
    $region32: #{tpu_custom_call.1} parent=1 // pred_region
      _
    $region33: #{tpu_custom_call.1} parent=1 // pred_fallthru
      _
    // Predicated region
    $region34: #{tpu_custom_call.1} parent=1 // pred_check
      _
    $region35: #{tpu_custom_call.1} parent=1 // pred_check_branch
      %34 = sbr.rel (0) target = $region37
    $region36: #{tpu_custom_call.1} parent=1 // pred_region
      _
    $region37: #{tpu_custom_call.1} parent=1 // pred_fallthru
      _
    %v35 = vld [vmem:[%s3] sm:$0xff]
    %v36 = vld [vmem:[%s3 + $0x8] sm:$0xff]
    %v37 = vld [vmem:[%s3 + $0x10] sm:$0xff]
    %v38 = vld [vmem:[%s3 + $0x18] sm:$0xff]
    %v39 = vld [vmem:[%s3 + $0x20] sm:$0xff]
    %v40 = vlaneseq
    %v41 = vshrl.u32 %v40, 7
    %v42 = vadd.s32 %v41, 8
    %v43 = vadd.s32 %v41, 16
    %v44 = vadd.s32 %v41, 24
    %v45 = vadd.s32 %v41, 32
    %v46 = vadd.s32 %v41, 40
    %v47 = vadd.s32 %v41, 48
    %v48 = vadd.s32 %v41, 56
    %v49 = vadd.s32 %v41, 64
    %v50 = vadd.s32 %v41, 72
    %v51 = vcvt.s32.f32 %v41
    %v52 = vcvt.s32.f32 %v42
    %v53 = vcvt.s32.f32 %v43
    %v54 = vcvt.s32.f32 %v44
    %v55 = vcvt.s32.f32 %v45
    %v56 = vcvt.s32.f32 %v46
    %v57 = vcvt.s32.f32 %v47
    %v58 = vcvt.s32.f32 %v48
    %v59 = vcvt.s32.f32 %v49
    %v60 = vcvt.s32.f32 %v50
    %v61 = vmul.f32 %v51, 0.025
    %v62 = vmul.f32 %v52, 0.025
    %v63 = vmul.f32 %v53, 0.025
    %v64 = vmul.f32 %v54, 0.025
    %v65 = vmul.f32 %v55, 0.025
    %v66 = vmul.f32 %v56, 0.025
    %v67 = vmul.f32 %v57, 0.025
    %v68 = vmul.f32 %v58, 0.025
    %v69 = vmul.f32 %v59, 0.025
    %v70 = vmul.f32 %v60, 0.025
    %v71 = vfloor.f32 %v61
    %v72 = vfloor.f32 %v62
    %v73 = vfloor.f32 %v63
    %v74 = vfloor.f32 %v64
    %v75 = vfloor.f32 %v65
    %v76 = vfloor.f32 %v66
    %v77 = vfloor.f32 %v67
    %v78 = vfloor.f32 %v68
    %v79 = vfloor.f32 %v69
    %v80 = vfloor.f32 %v70
    %v81 = vmul.f32 %v71, 40.0
    %v82 = vmul.f32 %v72, 40.0
    %v83 = vmul.f32 %v73, 40.0
    %v84 = vmul.f32 %v74, 40.0
    %v85 = vmul.f32 %v75, 40.0
    %v86 = vmul.f32 %v76, 40.0
    %v87 = vmul.f32 %v77, 40.0
    %v88 = vmul.f32 %v78, 40.0
    %v89 = vmul.f32 %v79, 40.0
    %v90 = vmul.f32 %v80, 40.0
    %v91 = vsub.f32 %v51, %v81
    %v92 = vsub.f32 %v52, %v82
    %v93 = vsub.f32 %v53, %v83
    %v94 = vsub.f32 %v54, %v84
    %v95 = vsub.f32 %v55, %v85
    %v96 = vsub.f32 %v56, %v86
    %v97 = vsub.f32 %v57, %v87
    %v98 = vsub.f32 %v58, %v88
    %v99 = vsub.f32 %v59, %v89
    %v100 = vsub.f32 %v60, %v90
    %vm101 = vcmp.ge.f32.partialorder %v91, 8.0
    %vm102 = vcmp.ge.f32.partialorder %v92, 8.0
    %vm103 = vcmp.ge.f32.partialorder %v93, 8.0
    %vm104 = vcmp.ge.f32.partialorder %v94, 8.0
    %vm105 = vcmp.ge.f32.partialorder %v95, 8.0
    %vm106 = vcmp.ge.f32.partialorder %v96, 8.0
    %vm107 = vcmp.ge.f32.partialorder %v97, 8.0
    %vm108 = vcmp.ge.f32.partialorder %v98, 8.0
    %vm109 = vcmp.ge.f32.partialorder %v99, 8.0
    %vm110 = vcmp.ge.f32.partialorder %v100, 8.0
    %vm111 = vcmp.ge.f32.partialorder %v91, 7.0
    %vm112 = vcmp.ge.f32.partialorder %v92, 7.0
    %vm113 = vcmp.ge.f32.partialorder %v93, 7.0
    %vm114 = vcmp.ge.f32.partialorder %v94, 7.0
    %vm115 = vcmp.ge.f32.partialorder %v95, 7.0
    %vm116 = vcmp.ge.f32.partialorder %v96, 7.0
    %vm117 = vcmp.ge.f32.partialorder %v97, 7.0
    %vm118 = vcmp.ge.f32.partialorder %v98, 7.0
    %vm119 = vcmp.ge.f32.partialorder %v99, 7.0
    %vm120 = vcmp.ge.f32.partialorder %v100, 7.0
    %vm121 = vcmp.ge.f32.partialorder %v91, 6.0
    %vm122 = vcmp.ge.f32.partialorder %v92, 6.0
    %vm123 = vcmp.ge.f32.partialorder %v93, 6.0
    %vm124 = vcmp.ge.f32.partialorder %v94, 6.0
    %vm125 = vcmp.ge.f32.partialorder %v95, 6.0
    %vm126 = vcmp.ge.f32.partialorder %v96, 6.0
    %vm127 = vcmp.ge.f32.partialorder %v97, 6.0
    %vm128 = vcmp.ge.f32.partialorder %v98, 6.0
    %vm129 = vcmp.ge.f32.partialorder %v99, 6.0
    %vm130 = vcmp.ge.f32.partialorder %v100, 6.0
    %vm131 = vcmp.ge.f32.partialorder %v91, 5.0
    %vm132 = vcmp.ge.f32.partialorder %v92, 5.0
    %vm133 = vcmp.ge.f32.partialorder %v93, 5.0
    %vm134 = vcmp.ge.f32.partialorder %v94, 5.0
    %vm135 = vcmp.ge.f32.partialorder %v95, 5.0
    %vm136 = vcmp.ge.f32.partialorder %v96, 5.0
    %vm137 = vcmp.ge.f32.partialorder %v97, 5.0
    %vm138 = vcmp.ge.f32.partialorder %v98, 5.0
    %vm139 = vcmp.ge.f32.partialorder %v99, 5.0
    %vm140 = vcmp.ge.f32.partialorder %v100, 5.0
    %vm141 = vcmp.ge.f32.partialorder %v91, 4.0
    %vm142 = vcmp.ge.f32.partialorder %v92, 4.0
    %vm143 = vcmp.ge.f32.partialorder %v93, 4.0
    %vm144 = vcmp.ge.f32.partialorder %v94, 4.0
    %vm145 = vcmp.ge.f32.partialorder %v95, 4.0
    %vm146 = vcmp.ge.f32.partialorder %v96, 4.0
    %vm147 = vcmp.ge.f32.partialorder %v97, 4.0
    %vm148 = vcmp.ge.f32.partialorder %v98, 4.0
    %vm149 = vcmp.ge.f32.partialorder %v99, 4.0
    %vm150 = vcmp.ge.f32.partialorder %v100, 4.0
    %vm151 = vcmp.ge.f32.partialorder %v91, 3.0
    %vm152 = vcmp.ge.f32.partialorder %v92, 3.0
    %vm153 = vcmp.ge.f32.partialorder %v93, 3.0
    %vm154 = vcmp.ge.f32.partialorder %v94, 3.0
    %vm155 = vcmp.ge.f32.partialorder %v95, 3.0
    %vm156 = vcmp.ge.f32.partialorder %v96, 3.0
    %vm157 = vcmp.ge.f32.partialorder %v97, 3.0
    %vm158 = vcmp.ge.f32.partialorder %v98, 3.0
    %vm159 = vcmp.ge.f32.partialorder %v99, 3.0
    %vm160 = vcmp.ge.f32.partialorder %v100, 3.0
    %vm161 = vcmp.ge.f32.partialorder %v91, 2.0
    %vm162 = vcmp.ge.f32.partialorder %v92, 2.0
    %vm163 = vcmp.ge.f32.partialorder %v93, 2.0
    %vm164 = vcmp.ge.f32.partialorder %v94, 2.0
    %vm165 = vcmp.ge.f32.partialorder %v95, 2.0
    %vm166 = vcmp.ge.f32.partialorder %v96, 2.0
    %vm167 = vcmp.ge.f32.partialorder %v97, 2.0
    %vm168 = vcmp.ge.f32.partialorder %v98, 2.0
    %vm169 = vcmp.ge.f32.partialorder %v99, 2.0
    %vm170 = vcmp.ge.f32.partialorder %v100, 2.0
    %vm171 = vcmp.ge.f32.partialorder %v91, 1.0
    %vm172 = vcmp.ge.f32.partialorder %v92, 1.0
    %vm173 = vcmp.ge.f32.partialorder %v93, 1.0
    %vm174 = vcmp.ge.f32.partialorder %v94, 1.0
    %vm175 = vcmp.ge.f32.partialorder %v95, 1.0
    %vm176 = vcmp.ge.f32.partialorder %v96, 1.0
    %vm177 = vcmp.ge.f32.partialorder %v97, 1.0
    %vm178 = vcmp.ge.f32.partialorder %v98, 1.0
    %vm179 = vcmp.ge.f32.partialorder %v99, 1.0
    %vm180 = vcmp.ge.f32.partialorder %v100, 1.0
    %v181 = vld [vmem:[%s1] sm:$0xff]
    %v182 = vld [vmem:[%s1 + $0x8] sm:$0xff]
    %v183 = vld [vmem:[%s1 + $0x10] sm:$0xff]
    %v184 = vld [vmem:[%s1 + $0x18] sm:$0xff]
    %v185 = vld [vmem:[%s1 + $0x20] sm:$0xff]
    %v186 = vld [vmem:[%s1 + $0x28] sm:$0xff]
    %v187 = vld [vmem:[%s1 + $0x30] sm:$0xff]
    %v188 = vld [vmem:[%s1 + $0x38] sm:$0xff]
    %v189 = vld [vmem:[%s1 + $0x40] sm:$0xff]
    %v190 = vld [vmem:[%s1 + $0x48] sm:$0xff]
    %vm191 = vcmask 130048
    %v192 = vsel %vm191, %v181, 0.0
    %193 = vadd.xlane.f32.xlu0 %v192
    %v194 = vpop.xlane.xlu0 %193
    %v195 = vsel %vm191, %v182, 0.0
    %196 = vadd.xlane.f32.xlu0 %v195
    %v197 = vpop.xlane.xlu0 %196
    %v198 = vsel %vm191, %v183, 0.0
    %199 = vadd.xlane.f32.xlu0 %v198
    %v200 = vpop.xlane.xlu0 %199
    %v201 = vsel %vm191, %v184, 0.0
    %202 = vadd.xlane.f32.xlu0 %v201
    %v203 = vpop.xlane.xlu0 %202
    %v204 = vsel %vm191, %v185, 0.0
    %205 = vadd.xlane.f32.xlu0 %v204
    %v206 = vpop.xlane.xlu0 %205
    %v207 = vsel %vm191, %v186, 0.0
    %208 = vadd.xlane.f32.xlu0 %v207
    %v209 = vpop.xlane.xlu0 %208
    %v210 = vsel %vm191, %v187, 0.0
    %211 = vadd.xlane.f32.xlu0 %v210
    %v212 = vpop.xlane.xlu0 %211
    %v213 = vsel %vm191, %v188, 0.0
    %214 = vadd.xlane.f32.xlu0 %v213
    %v215 = vpop.xlane.xlu0 %214
    %v216 = vsel %vm191, %v189, 0.0
    %217 = vadd.xlane.f32.xlu0 %v216
    %v218 = vpop.xlane.xlu0 %217
    %v219 = vsel %vm191, %v190, 0.0
    %220 = vadd.xlane.f32.xlu0 %v219
    %v221 = vpop.xlane.xlu0 %220
    %v222 = vrcp.pop 16.0
    %v223 = vmul.f32 %v194, %v222
    %v224 = vmul.f32 %v197, %v222
    %v225 = vmul.f32 %v200, %v222
    %v226 = vmul.f32 %v203, %v222
    %v227 = vmul.f32 %v206, %v222
    %v228 = vmul.f32 %v209, %v222
    %v229 = vmul.f32 %v212, %v222
    %v230 = vmul.f32 %v215, %v222
    %v231 = vmul.f32 %v218, %v222
    %v232 = vmul.f32 %v221, %v222
    %v233 = vsub.f32 %v181, %v223
    %v234 = vsub.f32 %v182, %v224
    %v235 = vsub.f32 %v183, %v225
    %v236 = vsub.f32 %v184, %v226
    %v237 = vsub.f32 %v185, %v227
    %v238 = vsub.f32 %v186, %v228
    %v239 = vsub.f32 %v187, %v229
    %v240 = vsub.f32 %v188, %v230
    %v241 = vsub.f32 %v189, %v231
    %v242 = vsub.f32 %v190, %v232
    %v243 = vmul.f32 %v233, %v233
    %v244 = vmul.f32 %v234, %v234
    %v245 = vmul.f32 %v235, %v235
    %v246 = vmul.f32 %v236, %v236
    %v247 = vmul.f32 %v237, %v237
    %v248 = vmul.f32 %v238, %v238
    %v249 = vmul.f32 %v239, %v239
    %v250 = vmul.f32 %v240, %v240
    %v251 = vmul.f32 %v241, %v241
    %v252 = vmul.f32 %v242, %v242
    %v253 = vsel %vm191, %v243, 0.0
    %254 = vadd.xlane.f32.xlu0 %v253
    %v255 = vpop.xlane.xlu0 %254
    %v256 = vsel %vm191, %v244, 0.0
    %257 = vadd.xlane.f32.xlu0 %v256
    %v258 = vpop.xlane.xlu0 %257
    %v259 = vsel %vm191, %v245, 0.0
    %260 = vadd.xlane.f32.xlu0 %v259
    %v261 = vpop.xlane.xlu0 %260
    %v262 = vsel %vm191, %v246, 0.0
    %263 = vadd.xlane.f32.xlu0 %v262
    %v264 = vpop.xlane.xlu0 %263
    %v265 = vsel %vm191, %v247, 0.0
    %266 = vadd.xlane.f32.xlu0 %v265
    %v267 = vpop.xlane.xlu0 %266
    %v268 = vsel %vm191, %v248, 0.0
    %269 = vadd.xlane.f32.xlu0 %v268
    %v270 = vpop.xlane.xlu0 %269
    %v271 = vsel %vm191, %v249, 0.0
    %272 = vadd.xlane.f32.xlu0 %v271
    %v273 = vpop.xlane.xlu0 %272
    %v274 = vsel %vm191, %v250, 0.0
    %275 = vadd.xlane.f32.xlu0 %v274
    %v276 = vpop.xlane.xlu0 %275
    %v277 = vsel %vm191, %v251, 0.0
    %278 = vadd.xlane.f32.xlu0 %v277
    %v279 = vpop.xlane.xlu0 %278
    %v280 = vsel %vm191, %v252, 0.0
    %281 = vadd.xlane.f32.xlu0 %v280
    %v282 = vpop.xlane.xlu0 %281
    %v283 = vmul.f32 %v255, %v222
    %v284 = vmul.f32 %v258, %v222
    %v285 = vmul.f32 %v261, %v222
    %v286 = vmul.f32 %v264, %v222
    %v287 = vmul.f32 %v267, %v222
    %v288 = vmul.f32 %v270, %v222
    %v289 = vmul.f32 %v273, %v222
    %v290 = vmul.f32 %v276, %v222
    %v291 = vmul.f32 %v279, %v222
    %v292 = vmul.f32 %v282, %v222
    %v293 = vadd.f32 %v283, 1e-12
    %v294 = vadd.f32 %v284, 1e-12
    %v295 = vadd.f32 %v285, 1e-12
    %v296 = vadd.f32 %v286, 1e-12
    %v297 = vadd.f32 %v287, 1e-12
    %v298 = vadd.f32 %v288, 1e-12
    %v299 = vadd.f32 %v289, 1e-12
    %v300 = vadd.f32 %v290, 1e-12
    %v301 = vadd.f32 %v291, 1e-12
    %v302 = vadd.f32 %v292, 1e-12
    %v303 = vrsqrt.pop %v293
    %v304 = vrsqrt.pop %v294
    %v305 = vrsqrt.pop %v295
    %v306 = vrsqrt.pop %v296
    %v307 = vrsqrt.pop %v297
    %v308 = vrsqrt.pop %v298
    %v309 = vrsqrt.pop %v299
    %v310 = vrsqrt.pop %v300
    %v311 = vrsqrt.pop %v301
    %v312 = vrsqrt.pop %v302
    %v313 = vmul.f32 %v233, %v303
    %v314 = vmul.f32 %v234, %v304
    %v315 = vmul.f32 %v235, %v305
    %v316 = vmul.f32 %v236, %v306
    %v317 = vmul.f32 %v237, %v307
    %v318 = vmul.f32 %v238, %v308
    %v319 = vmul.f32 %v239, %v309
    %v320 = vmul.f32 %v240, %v310
    %v321 = vmul.f32 %v241, %v311
    %v322 = vmul.f32 %v242, %v312
    %v323 = vld [vmem:[%s4] sm:$0xff]
    %v324 = vld [vmem:[%s4 + $0x8] sm:$0xff]
    %v325 = vlaneseq
    %v326 = vshrl.u32 %v325, 7
    %v327 = vsub.s32 0, %v326
    %v328 = vrot.slane %v35, %v327
    %v330 = vsel %vm191, %v313, 0
    %v333 = vsel %vm191, %v314, 0
    %v336 = vsel %vm191, %v315, 0
    %v339 = vsel %vm191, %v316, 0
    %v342 = vsel %vm191, %v317, 0
    %v345 = vsel %vm191, %v318, 0
    %v348 = vsel %vm191, %v319, 0
    %v351 = vsel %vm191, %v320, 0
    %v354 = vsel %vm191, %v321, 0
    %v357 = vsel %vm191, %v322, 0
    %359 = vmatprep.subr.mxu0 0.0
    %360 = vmatpush1.msra.mxu0 %v323
    %361 = vmatprep.subr.mxu0 0.0
    %362 = vmatpush1.msra.mxu0 %v324
    %363 = vmatprep.subr.mxu0 0.0
    %364 = vmatpush1.msra.mxu0 0.0
    %365 = vmatprep.subr.mxu0 0.0
    %366 = vmatpush1.msra.mxu0 0.0
    %367 = vmatprep.subr.mxu0 0.0
    %368 = vmatpush1.msra.mxu0 0.0
    %369 = vmatprep.subr.mxu0 0.0
    %370 = vmatpush1.msra.mxu0 0.0
    %371 = vmatprep.subr.mxu0 0.0
    %372 = vmatpush1.msra.mxu0 0.0
    %373 = vmatprep.subr.mxu0 0.0
    %374 = vmatpush1.msra.mxu0 0.0
    %375 = vmatprep.subr.mxu0 0.0
    %376 = vmatpush1.msra.mxu0 0.0
    %377 = vmatprep.subr.mxu0 0.0
    %378 = vmatpush1.msra.mxu0 0.0
    %379 = vmatprep.subr.mxu0 0.0
    %380 = vmatpush1.msra.mxu0 0.0
    %381 = vmatprep.subr.mxu0 0.0
    %382 = vmatpush1.msra.mxu0 0.0
    %383 = vmatprep.subr.mxu0 0.0
    %384 = vmatpush1.msra.mxu0 0.0
    %385 = vmatprep.subr.mxu0 0.0
    %386 = vmatpush1.msra.mxu0 0.0
    %387 = vmatprep.subr.mxu0 0.0
    %388 = vmatpush1.msra.mxu0 0.0
    %389 = vmatprep.subr.mxu0 0.0
    %390 = vmatpush1.msra.mxu0 0.0
    %391 = vmatprep.subr.mxu0 0.0
    %392 = vmatpush1.msra.mxu0 0.0
    %393 = vmatprep.subr.mxu0 0.0
    %394 = vmatpush1.msra.mxu0 0.0
    %395 = vmatprep.subr.mxu0 0.0
    %396 = vmatpush1.msra.mxu0 0.0
    %397 = vmatprep.subr.mxu0 0.0
    %398 = vmatpush1.msra.mxu0 0.0
    %399 = vmatprep.subr.mxu0 0.0
    %400 = vmatpush1.msra.mxu0 0.0
    %401 = vmatprep.subr.mxu0 0.0
    %402 = vmatpush1.msra.mxu0 0.0
    %403 = vmatprep.subr.mxu0 0.0
    %404 = vmatpush1.msra.mxu0 0.0
    %405 = vmatprep.subr.mxu0 0.0
    %406 = vmatpush1.msra.mxu0 0.0
    %407 = vmatprep.subr.mxu0 0.0
    %408 = vmatpush1.msra.mxu0 0.0
    %409 = vmatprep.subr.mxu0 0.0
    %410 = vmatpush1.msra.mxu0 0.0
    %411 = vmatprep.subr.mxu0 0.0
    %412 = vmatpush1.msra.mxu0 0.0
    %413 = vmatprep.subr.mxu0 0.0
    %414 = vmatpush1.msra.mxu0 0.0
    %415 = vmatprep.subr.mxu0 0.0
    %416 = vmatpush1.msra.mxu0 0.0
    %417 = vmatprep.subr.mxu0 0.0
    %418 = vmatpush1.msra.mxu0 0.0
    %419 = vmatprep.subr.mxu0 0.0
    %420 = vmatpush1.msra.mxu0 0.0
    %421 = vmatprep.subr.mxu0 0.0
    %422 = vmatpush1.msra.mxu0 0.0
    %423 = vmatprep.mubr.f32.mxu0 0.0
    %424 = vmatmul.mubr.f32.gmra.mrb[0].mxu0 %v330
    %v425 = vpop.f32.mrb[0].mxu0
    %v426 = vadd.f32 %v328, %v425
    %v427 = vpop.f32.mrb[0].mxu0
    %428 = vmatprep.mubr.f32.mxu0 0.0
    %429 = vmatmul.mubr.f32.gmra.mrb[0].mxu0 %v333
    %v430 = vpop.f32.mrb[0].mxu0
    %v431 = vadd.f32 %v328, %v430
    %v432 = vpop.f32.mrb[0].mxu0
    %433 = vmatprep.mubr.f32.mxu0 0.0
    %434 = vmatmul.mubr.f32.gmra.mrb[0].mxu0 %v336
    %v435 = vpop.f32.mrb[0].mxu0
    %v436 = vadd.f32 %v328, %v435
    %v437 = vpop.f32.mrb[0].mxu0
    %438 = vmatprep.mubr.f32.mxu0 0.0
    %439 = vmatmul.mubr.f32.gmra.mrb[0].mxu0 %v339
    %v440 = vpop.f32.mrb[0].mxu0
    %v441 = vadd.f32 %v328, %v440
    %v442 = vpop.f32.mrb[0].mxu0
    %443 = vmatprep.mubr.f32.mxu0 0.0
    %444 = vmatmul.mubr.f32.gmra.mrb[0].mxu0 %v342
    %v445 = vpop.f32.mrb[0].mxu0
    %v446 = vadd.f32 %v328, %v445
    %v447 = vpop.f32.mrb[0].mxu0
    %448 = vmatprep.mubr.f32.mxu0 0.0
    %449 = vmatmul.mubr.f32.gmra.mrb[0].mxu0 %v345
    %v450 = vpop.f32.mrb[0].mxu0
    %v451 = vadd.f32 %v328, %v450
    %v452 = vpop.f32.mrb[0].mxu0
    %453 = vmatprep.mubr.f32.mxu0 0.0
    %454 = vmatmul.mubr.f32.gmra.mrb[0].mxu0 %v348
    %v455 = vpop.f32.mrb[0].mxu0
    %v456 = vadd.f32 %v328, %v455
    %v457 = vpop.f32.mrb[0].mxu0
    %458 = vmatprep.mubr.f32.mxu0 0.0
    %459 = vmatmul.mubr.f32.gmra.mrb[0].mxu0 %v351
    %v460 = vpop.f32.mrb[0].mxu0
    %v461 = vadd.f32 %v328, %v460
    %v462 = vpop.f32.mrb[0].mxu0
    %463 = vmatprep.mubr.f32.mxu0 0.0
    %464 = vmatmul.mubr.f32.gmra.mrb[0].mxu0 %v354
    %v465 = vpop.f32.mrb[0].mxu0
    %v466 = vadd.f32 %v328, %v465
    %v467 = vpop.f32.mrb[0].mxu0
    %468 = vmatprep.mubr.f32.mxu0 0.0
    %469 = vmatmul.mubr.f32.gmra.mrb[0].mxu0 %v357
    %v470 = vpop.f32.mrb[0].mxu0
    %v471 = vadd.f32 %v328, %v470
    %v472 = vpop.f32.mrb[0].mxu0
    %473 = vdwg.mxu0
    %vm474 = vcmask 261120
    %v475 = vsel %vm474, %v426, 0.0
    %476 = vadd.xlane.f32.xlu0 %v475
    %v477 = vpop.xlane.xlu0 %476
    %v478 = vsel %vm474, %v431, 0.0
    %479 = vadd.xlane.f32.xlu0 %v478
    %v480 = vpop.xlane.xlu0 %479
    %v481 = vsel %vm474, %v436, 0.0
    %482 = vadd.xlane.f32.xlu0 %v481
    %v483 = vpop.xlane.xlu0 %482
    %v484 = vsel %vm474, %v441, 0.0
    %485 = vadd.xlane.f32.xlu0 %v484
    %v486 = vpop.xlane.xlu0 %485
    %v487 = vsel %vm474, %v446, 0.0
    %488 = vadd.xlane.f32.xlu0 %v487
    %v489 = vpop.xlane.xlu0 %488
    %v490 = vsel %vm474, %v451, 0.0
    %491 = vadd.xlane.f32.xlu0 %v490
    %v492 = vpop.xlane.xlu0 %491
    %v493 = vsel %vm474, %v456, 0.0
    %494 = vadd.xlane.f32.xlu0 %v493
    %v495 = vpop.xlane.xlu0 %494
    %v496 = vsel %vm474, %v461, 0.0
    %497 = vadd.xlane.f32.xlu0 %v496
    %v498 = vpop.xlane.xlu0 %497
    %v499 = vsel %vm474, %v466, 0.0
    %500 = vadd.xlane.f32.xlu0 %v499
    %v501 = vpop.xlane.xlu0 %500
    %v502 = vsel %vm474, %v471, 0.0
    %503 = vadd.xlane.f32.xlu0 %v502
    %v504 = vpop.xlane.xlu0 %503
    %v505 = vrcp.pop 32.0
    %v506 = vmul.f32 %v477, %v505
    %v507 = vmul.f32 %v480, %v505
    %v508 = vmul.f32 %v483, %v505
    %v509 = vmul.f32 %v486, %v505
    %v510 = vmul.f32 %v489, %v505
    %v511 = vmul.f32 %v492, %v505
    %v512 = vmul.f32 %v495, %v505
    %v513 = vmul.f32 %v498, %v505
    %v514 = vmul.f32 %v501, %v505
    %v515 = vmul.f32 %v504, %v505
    %v516 = vsub.f32 %v426, %v506
    %v517 = vsub.f32 %v431, %v507
    %v518 = vsub.f32 %v436, %v508
    %v519 = vsub.f32 %v441, %v509
    %v520 = vsub.f32 %v446, %v510
    %v521 = vsub.f32 %v451, %v511
    %v522 = vsub.f32 %v456, %v512
    %v523 = vsub.f32 %v461, %v513
    %v524 = vsub.f32 %v466, %v514
    %v525 = vsub.f32 %v471, %v515
    %v526 = vmul.f32 %v516, %v516
    %v527 = vmul.f32 %v517, %v517
    %v528 = vmul.f32 %v518, %v518
    %v529 = vmul.f32 %v519, %v519
    %v530 = vmul.f32 %v520, %v520
    %v531 = vmul.f32 %v521, %v521
    %v532 = vmul.f32 %v522, %v522
    %v533 = vmul.f32 %v523, %v523
    %v534 = vmul.f32 %v524, %v524
    %v535 = vmul.f32 %v525, %v525
    %v536 = vsel %vm474, %v526, 0.0
    %537 = vadd.xlane.f32.xlu0 %v536
    %v538 = vpop.xlane.xlu0 %537
    %v539 = vsel %vm474, %v527, 0.0
    %540 = vadd.xlane.f32.xlu0 %v539
    %v541 = vpop.xlane.xlu0 %540
    %v542 = vsel %vm474, %v528, 0.0
    %543 = vadd.xlane.f32.xlu0 %v542
    %v544 = vpop.xlane.xlu0 %543
    %v545 = vsel %vm474, %v529, 0.0
    %546 = vadd.xlane.f32.xlu0 %v545
    %v547 = vpop.xlane.xlu0 %546
    %v548 = vsel %vm474, %v530, 0.0
    %549 = vadd.xlane.f32.xlu0 %v548
    %v550 = vpop.xlane.xlu0 %549
    %v551 = vsel %vm474, %v531, 0.0
    %552 = vadd.xlane.f32.xlu0 %v551
    %v553 = vpop.xlane.xlu0 %552
    %v554 = vsel %vm474, %v532, 0.0
    %555 = vadd.xlane.f32.xlu0 %v554
    %v556 = vpop.xlane.xlu0 %555
    %v557 = vsel %vm474, %v533, 0.0
    %558 = vadd.xlane.f32.xlu0 %v557
    %v559 = vpop.xlane.xlu0 %558
    %v560 = vsel %vm474, %v534, 0.0
    %561 = vadd.xlane.f32.xlu0 %v560
    %v562 = vpop.xlane.xlu0 %561
    %v563 = vsel %vm474, %v535, 0.0
    %564 = vadd.xlane.f32.xlu0 %v563
    %v565 = vpop.xlane.xlu0 %564
    %v566 = vmul.f32 %v538, %v505
    %v567 = vmul.f32 %v541, %v505
    %v568 = vmul.f32 %v544, %v505
    %v569 = vmul.f32 %v547, %v505
    %v570 = vmul.f32 %v550, %v505
    %v571 = vmul.f32 %v553, %v505
    %v572 = vmul.f32 %v556, %v505
    %v573 = vmul.f32 %v559, %v505
    %v574 = vmul.f32 %v562, %v505
    %v575 = vmul.f32 %v565, %v505
    %v576 = vadd.f32 %v566, 1e-12
    %v577 = vadd.f32 %v567, 1e-12
    %v578 = vadd.f32 %v568, 1e-12
    %v579 = vadd.f32 %v569, 1e-12
    %v580 = vadd.f32 %v570, 1e-12
    %v581 = vadd.f32 %v571, 1e-12
    %v582 = vadd.f32 %v572, 1e-12
    %v583 = vadd.f32 %v573, 1e-12
    %v584 = vadd.f32 %v574, 1e-12
    %v585 = vadd.f32 %v575, 1e-12
    %v586 = vrsqrt.pop %v576
    %v587 = vrsqrt.pop %v577
    %v588 = vrsqrt.pop %v578
    %v589 = vrsqrt.pop %v579
    %v590 = vrsqrt.pop %v580
    %v591 = vrsqrt.pop %v581
    %v592 = vrsqrt.pop %v582
    %v593 = vrsqrt.pop %v583
    %v594 = vrsqrt.pop %v584
    %v595 = vrsqrt.pop %v585
    %v596 = vmul.f32 %v516, %v586
    %v597 = vmul.f32 %v517, %v587
    %v598 = vmul.f32 %v518, %v588
    %v599 = vmul.f32 %v519, %v589
    %v600 = vmul.f32 %v520, %v590
    %v601 = vmul.f32 %v521, %v591
    %v602 = vmul.f32 %v522, %v592
    %v603 = vmul.f32 %v523, %v593
    %v604 = vmul.f32 %v524, %v594
    %v605 = vmul.f32 %v525, %v595
    %v606 = vlaneseq
    %v607 = vshrl.u32 %v606, 7
    %v608 = vsub.s32 3, %v607
    %v609 = vrot.slane %v35, %v608
    %v610 = vmul.f32 %v596, %v609
    %v611 = vmul.f32 %v597, %v609
    %v612 = vmul.f32 %v598, %v609
    %v613 = vmul.f32 %v599, %v609
    %v614 = vmul.f32 %v600, %v609
    %v615 = vmul.f32 %v601, %v609
    %v616 = vmul.f32 %v602, %v609
    %v617 = vmul.f32 %v603, %v609
    %v618 = vmul.f32 %v604, %v609
    %v619 = vmul.f32 %v605, %v609
    %v620 = vlaneseq
    %v621 = vshrl.u32 %v620, 7
    %v622 = vsub.s32 4, %v621
    %v623 = vrot.slane %v35, %v622
    %v624 = vadd.f32 %v610, %v623
    %v625 = vadd.f32 %v611, %v623
    %v626 = vadd.f32 %v612, %v623
    %v627 = vadd.f32 %v613, %v623
    %v628 = vadd.f32 %v614, %v623
    %v629 = vadd.f32 %v615, %v623
    %v630 = vadd.f32 %v616, %v623
    %v631 = vadd.f32 %v617, %v623
    %v632 = vadd.f32 %v618, %v623
    %v633 = vadd.f32 %v619, %v623
    %v634 = vmax.f32 %v624, 0.0
    %v635 = vmax.f32 %v625, 0.0
    %v636 = vmax.f32 %v626, 0.0
    %v637 = vmax.f32 %v627, 0.0
    %v638 = vmax.f32 %v628, 0.0
    %v639 = vmax.f32 %v629, 0.0
    %v640 = vmax.f32 %v630, 0.0
    %v641 = vmax.f32 %v631, 0.0
    %v642 = vmax.f32 %v632, 0.0
    %v643 = vmax.f32 %v633, 0.0
    %v644 = vld [vmem:[%s5] sm:$0xff]
    %v645 = vld [vmem:[%s5 + $0x8] sm:$0xff]
    %v646 = vld [vmem:[%s5 + $0x10] sm:$0xff]
    %v647 = vld [vmem:[%s5 + $0x18] sm:$0xff]
    %v648 = vlaneseq
    %v649 = vshrl.u32 %v648, 7
    %v650 = vsub.s32 5, %v649
    %v651 = vrot.slane %v35, %v650
    %v653 = vsel %vm474, %v634, 0
    %v656 = vsel %vm474, %v635, 0
    %v659 = vsel %vm474, %v636, 0
    %v662 = vsel %vm474, %v637, 0
    %v665 = vsel %vm474, %v638, 0
    %v668 = vsel %vm474, %v639, 0
    %v671 = vsel %vm474, %v640, 0
    %v674 = vsel %vm474, %v641, 0
    %v677 = vsel %vm474, %v642, 0
    %v680 = vsel %vm474, %v643, 0
    %682 = vmatprep.subr.mxu0 0.0
    %683 = vmatpush1.msra.mxu0 %v644
    %684 = vmatprep.subr.mxu0 0.0
    %685 = vmatpush1.msra.mxu0 %v645
    %686 = vmatprep.subr.mxu0 0.0
    %687 = vmatpush1.msra.mxu0 %v646
    %688 = vmatprep.subr.mxu0 0.0
    %689 = vmatpush1.msra.mxu0 %v647
    %690 = vmatprep.subr.mxu0 0.0
    %691 = vmatpush1.msra.mxu0 0.0
    %692 = vmatprep.subr.mxu0 0.0
    %693 = vmatpush1.msra.mxu0 0.0
    %694 = vmatprep.subr.mxu0 0.0
    %695 = vmatpush1.msra.mxu0 0.0
    %696 = vmatprep.subr.mxu0 0.0
    %697 = vmatpush1.msra.mxu0 0.0
    %698 = vmatprep.subr.mxu0 0.0
    %699 = vmatpush1.msra.mxu0 0.0
    %700 = vmatprep.subr.mxu0 0.0
    %701 = vmatpush1.msra.mxu0 0.0
    %702 = vmatprep.subr.mxu0 0.0
    %703 = vmatpush1.msra.mxu0 0.0
    %704 = vmatprep.subr.mxu0 0.0
    %705 = vmatpush1.msra.mxu0 0.0
    %706 = vmatprep.subr.mxu0 0.0
    %707 = vmatpush1.msra.mxu0 0.0
    %708 = vmatprep.subr.mxu0 0.0
    %709 = vmatpush1.msra.mxu0 0.0
    %710 = vmatprep.subr.mxu0 0.0
    %711 = vmatpush1.msra.mxu0 0.0
    %712 = vmatprep.subr.mxu0 0.0
    %713 = vmatpush1.msra.mxu0 0.0
    %714 = vmatprep.subr.mxu0 0.0
    %715 = vmatpush1.msra.mxu0 0.0
    %716 = vmatprep.subr.mxu0 0.0
    %717 = vmatpush1.msra.mxu0 0.0
    %718 = vmatprep.subr.mxu0 0.0
    %719 = vmatpush1.msra.mxu0 0.0
    %720 = vmatprep.subr.mxu0 0.0
    %721 = vmatpush1.msra.mxu0 0.0
    %722 = vmatprep.subr.mxu0 0.0
    %723 = vmatpush1.msra.mxu0 0.0
    %724 = vmatprep.subr.mxu0 0.0
    %725 = vmatpush1.msra.mxu0 0.0
    %726 = vmatprep.subr.mxu0 0.0
    %727 = vmatpush1.msra.mxu0 0.0
    %728 = vmatprep.subr.mxu0 0.0
    %729 = vmatpush1.msra.mxu0 0.0
    %730 = vmatprep.subr.mxu0 0.0
    %731 = vmatpush1.msra.mxu0 0.0
    %732 = vmatprep.subr.mxu0 0.0
    %733 = vmatpush1.msra.mxu0 0.0
    %734 = vmatprep.subr.mxu0 0.0
    %735 = vmatpush1.msra.mxu0 0.0
    %736 = vmatprep.subr.mxu0 0.0
    %737 = vmatpush1.msra.mxu0 0.0
    %738 = vmatprep.subr.mxu0 0.0
    %739 = vmatpush1.msra.mxu0 0.0
    %740 = vmatprep.subr.mxu0 0.0
    %741 = vmatpush1.msra.mxu0 0.0
    %742 = vmatprep.subr.mxu0 0.0
    %743 = vmatpush1.msra.mxu0 0.0
    %744 = vmatprep.subr.mxu0 0.0
    %745 = vmatpush1.msra.mxu0 0.0
    %746 = vmatprep.mubr.f32.mxu0 0.0
    %747 = vmatmul.mubr.f32.gmra.mrb[0].mxu0 %v653
    %v748 = vpop.f32.mrb[0].mxu0
    %v749 = vadd.f32 %v651, %v748
    %v750 = vpop.f32.mrb[0].mxu0
    %751 = vmatprep.mubr.f32.mxu0 0.0
    %752 = vmatmul.mubr.f32.gmra.mrb[0].mxu0 %v656
    %v753 = vpop.f32.mrb[0].mxu0
    %v754 = vadd.f32 %v651, %v753
    %v755 = vpop.f32.mrb[0].mxu0
    %756 = vmatprep.mubr.f32.mxu0 0.0
    %757 = vmatmul.mubr.f32.gmra.mrb[0].mxu0 %v659
    %v758 = vpop.f32.mrb[0].mxu0
    %v759 = vadd.f32 %v651, %v758
    %v760 = vpop.f32.mrb[0].mxu0
    %761 = vmatprep.mubr.f32.mxu0 0.0
    %762 = vmatmul.mubr.f32.gmra.mrb[0].mxu0 %v662
    %v763 = vpop.f32.mrb[0].mxu0
    %v764 = vadd.f32 %v651, %v763
    %v765 = vpop.f32.mrb[0].mxu0
    %766 = vmatprep.mubr.f32.mxu0 0.0
    %767 = vmatmul.mubr.f32.gmra.mrb[0].mxu0 %v665
    %v768 = vpop.f32.mrb[0].mxu0
    %v769 = vadd.f32 %v651, %v768
    %v770 = vpop.f32.mrb[0].mxu0
    %771 = vmatprep.mubr.f32.mxu0 0.0
    %772 = vmatmul.mubr.f32.gmra.mrb[0].mxu0 %v668
    %v773 = vpop.f32.mrb[0].mxu0
    %v774 = vadd.f32 %v651, %v773
    %v775 = vpop.f32.mrb[0].mxu0
    %776 = vmatprep.mubr.f32.mxu0 0.0
    %777 = vmatmul.mubr.f32.gmra.mrb[0].mxu0 %v671
    %v778 = vpop.f32.mrb[0].mxu0
    %v779 = vadd.f32 %v651, %v778
    %v780 = vpop.f32.mrb[0].mxu0
    %781 = vmatprep.mubr.f32.mxu0 0.0
    %782 = vmatmul.mubr.f32.gmra.mrb[0].mxu0 %v674
    %v783 = vpop.f32.mrb[0].mxu0
    %v784 = vadd.f32 %v651, %v783
    %v785 = vpop.f32.mrb[0].mxu0
    %786 = vmatprep.mubr.f32.mxu0 0.0
    %787 = vmatmul.mubr.f32.gmra.mrb[0].mxu0 %v677
    %v788 = vpop.f32.mrb[0].mxu0
    %v789 = vadd.f32 %v651, %v788
    %v790 = vpop.f32.mrb[0].mxu0
    %791 = vmatprep.mubr.f32.mxu0 0.0
    %792 = vmatmul.mubr.f32.gmra.mrb[0].mxu0 %v680
    %v793 = vpop.f32.mrb[0].mxu0
    %v794 = vadd.f32 %v651, %v793
    %v795 = vpop.f32.mrb[0].mxu0
    %796 = vdwg.mxu0
    %v797 = vsel %vm191, %v749, 0.0
    %798 = vadd.xlane.f32.xlu0 %v797
    %v799 = vpop.xlane.xlu0 %798
    %v800 = vsel %vm191, %v754, 0.0
    %801 = vadd.xlane.f32.xlu0 %v800
    %v802 = vpop.xlane.xlu0 %801
    %v803 = vsel %vm191, %v759, 0.0
    %804 = vadd.xlane.f32.xlu0 %v803
    %v805 = vpop.xlane.xlu0 %804
    %v806 = vsel %vm191, %v764, 0.0
    %807 = vadd.xlane.f32.xlu0 %v806
    %v808 = vpop.xlane.xlu0 %807
    %v809 = vsel %vm191, %v769, 0.0
    %810 = vadd.xlane.f32.xlu0 %v809
    %v811 = vpop.xlane.xlu0 %810
    %v812 = vsel %vm191, %v774, 0.0
    %813 = vadd.xlane.f32.xlu0 %v812
    %v814 = vpop.xlane.xlu0 %813
    %v815 = vsel %vm191, %v779, 0.0
    %816 = vadd.xlane.f32.xlu0 %v815
    %v817 = vpop.xlane.xlu0 %816
    %v818 = vsel %vm191, %v784, 0.0
    %819 = vadd.xlane.f32.xlu0 %v818
    %v820 = vpop.xlane.xlu0 %819
    %v821 = vsel %vm191, %v789, 0.0
    %822 = vadd.xlane.f32.xlu0 %v821
    %v823 = vpop.xlane.xlu0 %822
    %v824 = vsel %vm191, %v794, 0.0
    %825 = vadd.xlane.f32.xlu0 %v824
    %v826 = vpop.xlane.xlu0 %825
    %v827 = vmul.f32 %v799, %v222
    %v828 = vmul.f32 %v802, %v222
    %v829 = vmul.f32 %v805, %v222
    %v830 = vmul.f32 %v808, %v222
    %v831 = vmul.f32 %v811, %v222
    %v832 = vmul.f32 %v814, %v222
    %v833 = vmul.f32 %v817, %v222
    %v834 = vmul.f32 %v820, %v222
    %v835 = vmul.f32 %v823, %v222
    %v836 = vmul.f32 %v826, %v222
    %v837 = vsub.f32 %v749, %v827
    %v838 = vsub.f32 %v754, %v828
    %v839 = vsub.f32 %v759, %v829
    %v840 = vsub.f32 %v764, %v830
    %v841 = vsub.f32 %v769, %v831
    %v842 = vsub.f32 %v774, %v832
    %v843 = vsub.f32 %v779, %v833
    %v844 = vsub.f32 %v784, %v834
    %v845 = vsub.f32 %v789, %v835
    %v846 = vsub.f32 %v794, %v836
    %v847 = vmul.f32 %v837, %v837
    %v848 = vmul.f32 %v838, %v838
    %v849 = vmul.f32 %v839, %v839
    %v850 = vmul.f32 %v840, %v840
    %v851 = vmul.f32 %v841, %v841
    %v852 = vmul.f32 %v842, %v842
    %v853 = vmul.f32 %v843, %v843
    %v854 = vmul.f32 %v844, %v844
    %v855 = vmul.f32 %v845, %v845
    %v856 = vmul.f32 %v846, %v846
    %v857 = vsel %vm191, %v847, 0.0
    %858 = vadd.xlane.f32.xlu0 %v857
    %v859 = vpop.xlane.xlu0 %858
    %v860 = vsel %vm191, %v848, 0.0
    %861 = vadd.xlane.f32.xlu0 %v860
    %v862 = vpop.xlane.xlu0 %861
    %v863 = vsel %vm191, %v849, 0.0
    %864 = vadd.xlane.f32.xlu0 %v863
    %v865 = vpop.xlane.xlu0 %864
    %v866 = vsel %vm191, %v850, 0.0
    %867 = vadd.xlane.f32.xlu0 %v866
    %v868 = vpop.xlane.xlu0 %867
    %v869 = vsel %vm191, %v851, 0.0
    %870 = vadd.xlane.f32.xlu0 %v869
    %v871 = vpop.xlane.xlu0 %870
    %v872 = vsel %vm191, %v852, 0.0
    %873 = vadd.xlane.f32.xlu0 %v872
    %v874 = vpop.xlane.xlu0 %873
    %v875 = vsel %vm191, %v853, 0.0
    %876 = vadd.xlane.f32.xlu0 %v875
    %v877 = vpop.xlane.xlu0 %876
    %v878 = vsel %vm191, %v854, 0.0
    %879 = vadd.xlane.f32.xlu0 %v878
    %v880 = vpop.xlane.xlu0 %879
    %v881 = vsel %vm191, %v855, 0.0
    %882 = vadd.xlane.f32.xlu0 %v881
    %v883 = vpop.xlane.xlu0 %882
    %v884 = vsel %vm191, %v856, 0.0
    %885 = vadd.xlane.f32.xlu0 %v884
    %v886 = vpop.xlane.xlu0 %885
    %v887 = vmul.f32 %v859, %v222
    %v888 = vmul.f32 %v862, %v222
    %v889 = vmul.f32 %v865, %v222
    %v890 = vmul.f32 %v868, %v222
    %v891 = vmul.f32 %v871, %v222
    %v892 = vmul.f32 %v874, %v222
    %v893 = vmul.f32 %v877, %v222
    %v894 = vmul.f32 %v880, %v222
    %v895 = vmul.f32 %v883, %v222
    %v896 = vmul.f32 %v886, %v222
    %v897 = vadd.f32 %v887, 1e-12
    %v898 = vadd.f32 %v888, 1e-12
    %v899 = vadd.f32 %v889, 1e-12
    %v900 = vadd.f32 %v890, 1e-12
    %v901 = vadd.f32 %v891, 1e-12
    %v902 = vadd.f32 %v892, 1e-12
    %v903 = vadd.f32 %v893, 1e-12
    %v904 = vadd.f32 %v894, 1e-12
    %v905 = vadd.f32 %v895, 1e-12
    %v906 = vadd.f32 %v896, 1e-12
    %v907 = vrsqrt.pop %v897
    %v908 = vrsqrt.pop %v898
    %v909 = vrsqrt.pop %v899
    %v910 = vrsqrt.pop %v900
    %v911 = vrsqrt.pop %v901
    %v912 = vrsqrt.pop %v902
    %v913 = vrsqrt.pop %v903
    %v914 = vrsqrt.pop %v904
    %v915 = vrsqrt.pop %v905
    %v916 = vrsqrt.pop %v906
    %v917 = vmul.f32 %v837, %v907
    %v918 = vmul.f32 %v838, %v908
    %v919 = vmul.f32 %v839, %v909
    %v920 = vmul.f32 %v840, %v910
    %v921 = vmul.f32 %v841, %v911
    %v922 = vmul.f32 %v842, %v912
    %v923 = vmul.f32 %v843, %v913
    %v924 = vmul.f32 %v844, %v914
    %v925 = vmul.f32 %v845, %v915
    %v926 = vmul.f32 %v846, %v916
    %v927 = vlaneseq
    %v928 = vshrl.u32 %v927, 7
    %v929 = vsub.s32 6, %v928
    %v930 = vrot.slane %v35, %v929
    %v931 = vmul.f32 %v917, %v930
    %v932 = vmul.f32 %v918, %v930
    %v933 = vmul.f32 %v919, %v930
    %v934 = vmul.f32 %v920, %v930
    %v935 = vmul.f32 %v921, %v930
    %v936 = vmul.f32 %v922, %v930
    %v937 = vmul.f32 %v923, %v930
    %v938 = vmul.f32 %v924, %v930
    %v939 = vmul.f32 %v925, %v930
    %v940 = vmul.f32 %v926, %v930
    %v941 = vlaneseq
    %v942 = vshrl.u32 %v941, 7
    %v943 = vsub.s32 7, %v942
    %v944 = vrot.slane %v35, %v943
    %v945 = vadd.f32 %v931, %v944
    %v946 = vadd.f32 %v932, %v944
    %v947 = vadd.f32 %v933, %v944
    %v948 = vadd.f32 %v934, %v944
    %v949 = vadd.f32 %v935, %v944
    %v950 = vadd.f32 %v936, %v944
    %v951 = vadd.f32 %v937, %v944
    %v952 = vadd.f32 %v938, %v944
    %v953 = vadd.f32 %v939, %v944
    %v954 = vadd.f32 %v940, %v944
    %v955 = vmax.f32 %v945, 0.0
    %v956 = vmax.f32 %v946, 0.0
    %v957 = vmax.f32 %v947, 0.0
    %v958 = vmax.f32 %v948, 0.0
    %v959 = vmax.f32 %v949, 0.0
    %v960 = vmax.f32 %v950, 0.0
    %v961 = vmax.f32 %v951, 0.0
    %v962 = vmax.f32 %v952, 0.0
    %v963 = vmax.f32 %v953, 0.0
    %v964 = vmax.f32 %v954, 0.0
    %v965 = vsel %vm101, 1, 0
    %v966 = vsel %vm102, 1, 0
    %v967 = vsel %vm103, 1, 0
    %v968 = vsel %vm104, 1, 0
    %v969 = vsel %vm105, 1, 0
    %v970 = vsel %vm106, 1, 0
    %v971 = vsel %vm107, 1, 0
    %v972 = vsel %vm108, 1, 0
    %v973 = vsel %vm109, 1, 0
    %v974 = vsel %vm110, 1, 0
    %vm975 = vcmp.eq.s32.totalorder %v965, 1
    %vm976 = vcmp.eq.s32.totalorder %v966, 1
    %vm977 = vcmp.eq.s32.totalorder %v967, 1
    %vm978 = vcmp.eq.s32.totalorder %v968, 1
    %vm979 = vcmp.eq.s32.totalorder %v969, 1
    %vm980 = vcmp.eq.s32.totalorder %v970, 1
    %vm981 = vcmp.eq.s32.totalorder %v971, 1
    %vm982 = vcmp.eq.s32.totalorder %v972, 1
    %vm983 = vcmp.eq.s32.totalorder %v973, 1
    %vm984 = vcmp.eq.s32.totalorder %v974, 1
    %v985 = vsel %vm975, %v964, 0.0
    %v986 = vsel %vm976, %v955, 0.0
    %v987 = vsel %vm977, %v956, 0.0
    %v988 = vsel %vm978, %v957, 0.0
    %v989 = vsel %vm979, %v958, 0.0
    %v990 = vsel %vm980, %v959, 0.0
    %v991 = vsel %vm981, %v960, 0.0
    %v992 = vsel %vm982, %v961, 0.0
    %v993 = vsel %vm983, %v962, 0.0
    %v994 = vsel %vm984, %v963, 0.0
    %995 = vst.msk [vmem:[#allocation2] sm:$0xff] %vm191, %v985
    %996 = vst.msk [vmem:[#allocation2 + $0x8] sm:$0xff] %vm191, %v986
    %997 = vst.msk [vmem:[#allocation2 + $0x10] sm:$0xff] %vm191, %v987
    %998 = vst.msk [vmem:[#allocation2 + $0x18] sm:$0xff] %vm191, %v988
    %999 = vst.msk [vmem:[#allocation2 + $0x20] sm:$0xff] %vm191, %v989
    %1000 = vst.msk [vmem:[#allocation2 + $0x28] sm:$0xff] %vm191, %v990
    %1001 = vst.msk [vmem:[#allocation2 + $0x30] sm:$0xff] %vm191, %v991
    %1002 = vst.msk [vmem:[#allocation2 + $0x38] sm:$0xff] %vm191, %v992
    %1003 = vst.msk [vmem:[#allocation2 + $0x40] sm:$0xff] %vm191, %v993
    %1004 = vst.msk [vmem:[#allocation2 + $0x48] sm:$0xff] %vm191, %v994
    %v1005 = vrot.slane %v955, 1
    %v1006 = vrot.slane %v956, 1
    %v1007 = vrot.slane %v957, 1
    %v1008 = vrot.slane %v958, 1
    %v1009 = vrot.slane %v959, 1
    %v1010 = vrot.slane %v960, 1
    %v1011 = vrot.slane %v961, 1
    %v1012 = vrot.slane %v962, 1
    %v1013 = vrot.slane %v963, 1
    %v1014 = vrot.slane %v964, 1
    %vm1015 = vcmp.lt.s32.totalorder %v41, 7
    %v1016 = vsel %vm1015, %v1013, %v1014
    %v1017 = vsel %vm1015, %v1012, %v1013
    %v1018 = vsel %vm1015, %v1011, %v1012
    %v1019 = vsel %vm1015, %v1010, %v1011
    %v1020 = vsel %vm1015, %v1009, %v1010
    %v1021 = vsel %vm1015, %v1008, %v1009
    %v1022 = vsel %vm1015, %v1007, %v1008
    %v1023 = vsel %vm1015, %v1006, %v1007
    %v1024 = vsel %vm1015, %v1005, %v1006
    %v1025 = vsel %vm1015, %v1014, %v1005
    %v1026 = vsel %vm111, 1, 0
    %v1027 = vsel %vm112, 1, 0
    %v1028 = vsel %vm113, 1, 0
    %v1029 = vsel %vm114, 1, 0
    %v1030 = vsel %vm115, 1, 0
    %v1031 = vsel %vm116, 1, 0
    %v1032 = vsel %vm117, 1, 0
    %v1033 = vsel %vm118, 1, 0
    %v1034 = vsel %vm119, 1, 0
    %v1035 = vsel %vm120, 1, 0
    %vm1036 = vcmp.eq.s32.totalorder %v1026, 1
    %vm1037 = vcmp.eq.s32.totalorder %v1027, 1
    %vm1038 = vcmp.eq.s32.totalorder %v1028, 1
    %vm1039 = vcmp.eq.s32.totalorder %v1029, 1
    %vm1040 = vcmp.eq.s32.totalorder %v1030, 1
    %vm1041 = vcmp.eq.s32.totalorder %v1031, 1
    %vm1042 = vcmp.eq.s32.totalorder %v1032, 1
    %vm1043 = vcmp.eq.s32.totalorder %v1033, 1
    %vm1044 = vcmp.eq.s32.totalorder %v1034, 1
    %vm1045 = vcmp.eq.s32.totalorder %v1035, 1
    %v1046 = vsel %vm1036, %v1025, 0.0
    %v1047 = vsel %vm1037, %v1024, 0.0
    %v1048 = vsel %vm1038, %v1023, 0.0
    %v1049 = vsel %vm1039, %v1022, 0.0
    %v1050 = vsel %vm1040, %v1021, 0.0
    %v1051 = vsel %vm1041, %v1020, 0.0
    %v1052 = vsel %vm1042, %v1019, 0.0
    %v1053 = vsel %vm1043, %v1018, 0.0
    %v1054 = vsel %vm1044, %v1017, 0.0
    %v1055 = vsel %vm1045, %v1016, 0.0
    %1066 = vrot.lane.b32.xlu0 %v1046, 16
    %v1067 = vpop.permute.xlu0 %1066
    %1068 = vrot.lane.b32.xlu0 %v1047, 16
    %v1069 = vpop.permute.xlu0 %1068
    %1070 = vrot.lane.b32.xlu0 %v1048, 16
    %v1071 = vpop.permute.xlu0 %1070
    %1072 = vrot.lane.b32.xlu0 %v1049, 16
    %v1073 = vpop.permute.xlu0 %1072
    %1074 = vrot.lane.b32.xlu0 %v1050, 16
    %v1075 = vpop.permute.xlu0 %1074
    %1076 = vrot.lane.b32.xlu0 %v1051, 16
    %v1077 = vpop.permute.xlu0 %1076
    %1078 = vrot.lane.b32.xlu0 %v1052, 16
    %v1079 = vpop.permute.xlu0 %1078
    %1080 = vrot.lane.b32.xlu0 %v1053, 16
    %v1081 = vpop.permute.xlu0 %1080
    %1082 = vrot.lane.b32.xlu0 %v1054, 16
    %v1083 = vpop.permute.xlu0 %1082
    %1084 = vrot.lane.b32.xlu0 %v1055, 16
    %v1085 = vpop.permute.xlu0 %1084
    %vm1096 = vcmask 261248
    %1097 = vst.msk [vmem:[#allocation2] sm:$0xff] %vm1096, %v1067
    %1098 = vst.msk [vmem:[#allocation2 + $0x8] sm:$0xff] %vm1096, %v1069
    %1099 = vst.msk [vmem:[#allocation2 + $0x10] sm:$0xff] %vm1096, %v1071
    %1100 = vst.msk [vmem:[#allocation2 + $0x18] sm:$0xff] %vm1096, %v1073
    %1101 = vst.msk [vmem:[#allocation2 + $0x20] sm:$0xff] %vm1096, %v1075
    %1102 = vst.msk [vmem:[#allocation2 + $0x28] sm:$0xff] %vm1096, %v1077
    %1103 = vst.msk [vmem:[#allocation2 + $0x30] sm:$0xff] %vm1096, %v1079
    %1104 = vst.msk [vmem:[#allocation2 + $0x38] sm:$0xff] %vm1096, %v1081
    %1105 = vst.msk [vmem:[#allocation2 + $0x40] sm:$0xff] %vm1096, %v1083
    %1106 = vst.msk [vmem:[#allocation2 + $0x48] sm:$0xff] %vm1096, %v1085
    %v1107 = vrot.slane %v955, 2
    %v1108 = vrot.slane %v956, 2
    %v1109 = vrot.slane %v957, 2
    %v1110 = vrot.slane %v958, 2
    %v1111 = vrot.slane %v959, 2
    %v1112 = vrot.slane %v960, 2
    %v1113 = vrot.slane %v961, 2
    %v1114 = vrot.slane %v962, 2
    %v1115 = vrot.slane %v963, 2
    %v1116 = vrot.slane %v964, 2
    %vm1117 = vcmp.lt.s32.totalorder %v41, 6
    %v1118 = vsel %vm1117, %v1115, %v1116
    %v1119 = vsel %vm1117, %v1114, %v1115
    %v1120 = vsel %vm1117, %v1113, %v1114
    %v1121 = vsel %vm1117, %v1112, %v1113
    %v1122 = vsel %vm1117, %v1111, %v1112
    %v1123 = vsel %vm1117, %v1110, %v1111
    %v1124 = vsel %vm1117, %v1109, %v1110
    %v1125 = vsel %vm1117, %v1108, %v1109
    %v1126 = vsel %vm1117, %v1107, %v1108
    %v1127 = vsel %vm1117, %v1116, %v1107
    %v1128 = vsel %vm121, 1, 0
    %v1129 = vsel %vm122, 1, 0
    %v1130 = vsel %vm123, 1, 0
    %v1131 = vsel %vm124, 1, 0
    %v1132 = vsel %vm125, 1, 0
    %v1133 = vsel %vm126, 1, 0
    %v1134 = vsel %vm127, 1, 0
    %v1135 = vsel %vm128, 1, 0
    %v1136 = vsel %vm129, 1, 0
    %v1137 = vsel %vm130, 1, 0
    %vm1138 = vcmp.eq.s32.totalorder %v1128, 1
    %vm1139 = vcmp.eq.s32.totalorder %v1129, 1
    %vm1140 = vcmp.eq.s32.totalorder %v1130, 1
    %vm1141 = vcmp.eq.s32.totalorder %v1131, 1
    %vm1142 = vcmp.eq.s32.totalorder %v1132, 1
    %vm1143 = vcmp.eq.s32.totalorder %v1133, 1
    %vm1144 = vcmp.eq.s32.totalorder %v1134, 1
    %vm1145 = vcmp.eq.s32.totalorder %v1135, 1
    %vm1146 = vcmp.eq.s32.totalorder %v1136, 1
    %vm1147 = vcmp.eq.s32.totalorder %v1137, 1
    %v1148 = vsel %vm1138, %v1127, 0.0
    %v1149 = vsel %vm1139, %v1126, 0.0
    %v1150 = vsel %vm1140, %v1125, 0.0
    %v1151 = vsel %vm1141, %v1124, 0.0
    %v1152 = vsel %vm1142, %v1123, 0.0
    %v1153 = vsel %vm1143, %v1122, 0.0
    %v1154 = vsel %vm1144, %v1121, 0.0
    %v1155 = vsel %vm1145, %v1120, 0.0
    %v1156 = vsel %vm1146, %v1119, 0.0
    %v1157 = vsel %vm1147, %v1118, 0.0
    %1168 = vrot.lane.b32.xlu0 %v1148, 32
    %v1169 = vpop.permute.xlu0 %1168
    %1170 = vrot.lane.b32.xlu0 %v1149, 32
    %v1171 = vpop.permute.xlu0 %1170
    %1172 = vrot.lane.b32.xlu0 %v1150, 32
    %v1173 = vpop.permute.xlu0 %1172
    %1174 = vrot.lane.b32.xlu0 %v1151, 32
    %v1175 = vpop.permute.xlu0 %1174
    %1176 = vrot.lane.b32.xlu0 %v1152, 32
    %v1177 = vpop.permute.xlu0 %1176
    %1178 = vrot.lane.b32.xlu0 %v1153, 32
    %v1179 = vpop.permute.xlu0 %1178
    %1180 = vrot.lane.b32.xlu0 %v1154, 32
    %v1181 = vpop.permute.xlu0 %1180
    %1182 = vrot.lane.b32.xlu0 %v1155, 32
    %v1183 = vpop.permute.xlu0 %1182
    %1184 = vrot.lane.b32.xlu0 %v1156, 32
    %v1185 = vpop.permute.xlu0 %1184
    %1186 = vrot.lane.b32.xlu0 %v1157, 32
    %v1187 = vpop.permute.xlu0 %1186
    %vm1198 = vcmask 392448
    %1199 = vst.msk [vmem:[#allocation2] sm:$0xff] %vm1198, %v1169
    %1200 = vst.msk [vmem:[#allocation2 + $0x8] sm:$0xff] %vm1198, %v1171
    %1201 = vst.msk [vmem:[#allocation2 + $0x10] sm:$0xff] %vm1198, %v1173
    %1202 = vst.msk [vmem:[#allocation2 + $0x18] sm:$0xff] %vm1198, %v1175
    %1203 = vst.msk [vmem:[#allocation2 + $0x20] sm:$0xff] %vm1198, %v1177
    %1204 = vst.msk [vmem:[#allocation2 + $0x28] sm:$0xff] %vm1198, %v1179
    %1205 = vst.msk [vmem:[#allocation2 + $0x30] sm:$0xff] %vm1198, %v1181
    %1206 = vst.msk [vmem:[#allocation2 + $0x38] sm:$0xff] %vm1198, %v1183
    %1207 = vst.msk [vmem:[#allocation2 + $0x40] sm:$0xff] %vm1198, %v1185
    %1208 = vst.msk [vmem:[#allocation2 + $0x48] sm:$0xff] %vm1198, %v1187
    %v1209 = vrot.slane %v955, 3
    %v1210 = vrot.slane %v956, 3
    %v1211 = vrot.slane %v957, 3
    %v1212 = vrot.slane %v958, 3
    %v1213 = vrot.slane %v959, 3
    %v1214 = vrot.slane %v960, 3
    %v1215 = vrot.slane %v961, 3
    %v1216 = vrot.slane %v962, 3
    %v1217 = vrot.slane %v963, 3
    %v1218 = vrot.slane %v964, 3
    %vm1219 = vcmp.lt.s32.totalorder %v41, 5
    %v1220 = vsel %vm1219, %v1217, %v1218
    %v1221 = vsel %vm1219, %v1216, %v1217
    %v1222 = vsel %vm1219, %v1215, %v1216
    %v1223 = vsel %vm1219, %v1214, %v1215
    %v1224 = vsel %vm1219, %v1213, %v1214
    %v1225 = vsel %vm1219, %v1212, %v1213
    %v1226 = vsel %vm1219, %v1211, %v1212
    %v1227 = vsel %vm1219, %v1210, %v1211
    %v1228 = vsel %vm1219, %v1209, %v1210
    %v1229 = vsel %vm1219, %v1218, %v1209
    %v1230 = vsel %vm131, 1, 0
    %v1231 = vsel %vm132, 1, 0
    %v1232 = vsel %vm133, 1, 0
    %v1233 = vsel %vm134, 1, 0
    %v1234 = vsel %vm135, 1, 0
    %v1235 = vsel %vm136, 1, 0
    %v1236 = vsel %vm137, 1, 0
    %v1237 = vsel %vm138, 1, 0
    %v1238 = vsel %vm139, 1, 0
    %v1239 = vsel %vm140, 1, 0
    %vm1240 = vcmp.eq.s32.totalorder %v1230, 1
    %vm1241 = vcmp.eq.s32.totalorder %v1231, 1
    %vm1242 = vcmp.eq.s32.totalorder %v1232, 1
    %vm1243 = vcmp.eq.s32.totalorder %v1233, 1
    %vm1244 = vcmp.eq.s32.totalorder %v1234, 1
    %vm1245 = vcmp.eq.s32.totalorder %v1235, 1
    %vm1246 = vcmp.eq.s32.totalorder %v1236, 1
    %vm1247 = vcmp.eq.s32.totalorder %v1237, 1
    %vm1248 = vcmp.eq.s32.totalorder %v1238, 1
    %vm1249 = vcmp.eq.s32.totalorder %v1239, 1
    %v1250 = vsel %vm1240, %v1229, 0.0
    %v1251 = vsel %vm1241, %v1228, 0.0
    %v1252 = vsel %vm1242, %v1227, 0.0
    %v1253 = vsel %vm1243, %v1226, 0.0
    %v1254 = vsel %vm1244, %v1225, 0.0
    %v1255 = vsel %vm1245, %v1224, 0.0
    %v1256 = vsel %vm1246, %v1223, 0.0
    %v1257 = vsel %vm1247, %v1222, 0.0
    %v1258 = vsel %vm1248, %v1221, 0.0
    %v1259 = vsel %vm1249, %v1220, 0.0
    %1270 = vrot.lane.b32.xlu0 %v1250, 48
    %v1271 = vpop.permute.xlu0 %1270
    %1272 = vrot.lane.b32.xlu0 %v1251, 48
    %v1273 = vpop.permute.xlu0 %1272
    %1274 = vrot.lane.b32.xlu0 %v1252, 48
    %v1275 = vpop.permute.xlu0 %1274
    %1276 = vrot.lane.b32.xlu0 %v1253, 48
    %v1277 = vpop.permute.xlu0 %1276
    %1278 = vrot.lane.b32.xlu0 %v1254, 48
    %v1279 = vpop.permute.xlu0 %1278
    %1280 = vrot.lane.b32.xlu0 %v1255, 48
    %v1281 = vpop.permute.xlu0 %1280
    %1282 = vrot.lane.b32.xlu0 %v1256, 48
    %v1283 = vpop.permute.xlu0 %1282
    %1284 = vrot.lane.b32.xlu0 %v1257, 48
    %v1285 = vpop.permute.xlu0 %1284
    %1286 = vrot.lane.b32.xlu0 %v1258, 48
    %v1287 = vpop.permute.xlu0 %1286
    %1288 = vrot.lane.b32.xlu0 %v1259, 48
    %v1289 = vpop.permute.xlu0 %1288
    %vm1300 = vcmask 523648
    %1301 = vst.msk [vmem:[#allocation2] sm:$0xff] %vm1300, %v1271
    %1302 = vst.msk [vmem:[#allocation2 + $0x8] sm:$0xff] %vm1300, %v1273
    %1303 = vst.msk [vmem:[#allocation2 + $0x10] sm:$0xff] %vm1300, %v1275
    %1304 = vst.msk [vmem:[#allocation2 + $0x18] sm:$0xff] %vm1300, %v1277
    %1305 = vst.msk [vmem:[#allocation2 + $0x20] sm:$0xff] %vm1300, %v1279
    %1306 = vst.msk [vmem:[#allocation2 + $0x28] sm:$0xff] %vm1300, %v1281
    %1307 = vst.msk [vmem:[#allocation2 + $0x30] sm:$0xff] %vm1300, %v1283
    %1308 = vst.msk [vmem:[#allocation2 + $0x38] sm:$0xff] %vm1300, %v1285
    %1309 = vst.msk [vmem:[#allocation2 + $0x40] sm:$0xff] %vm1300, %v1287
    %1310 = vst.msk [vmem:[#allocation2 + $0x48] sm:$0xff] %vm1300, %v1289
    %v1311 = vrot.slane %v955, 4
    %v1312 = vrot.slane %v956, 4
    %v1313 = vrot.slane %v957, 4
    %v1314 = vrot.slane %v958, 4
    %v1315 = vrot.slane %v959, 4
    %v1316 = vrot.slane %v960, 4
    %v1317 = vrot.slane %v961, 4
    %v1318 = vrot.slane %v962, 4
    %v1319 = vrot.slane %v963, 4
    %v1320 = vrot.slane %v964, 4
    %vm1321 = vcmp.lt.s32.totalorder %v41, 4
    %v1322 = vsel %vm1321, %v1319, %v1320
    %v1323 = vsel %vm1321, %v1318, %v1319
    %v1324 = vsel %vm1321, %v1317, %v1318
    %v1325 = vsel %vm1321, %v1316, %v1317
    %v1326 = vsel %vm1321, %v1315, %v1316
    %v1327 = vsel %vm1321, %v1314, %v1315
    %v1328 = vsel %vm1321, %v1313, %v1314
    %v1329 = vsel %vm1321, %v1312, %v1313
    %v1330 = vsel %vm1321, %v1311, %v1312
    %v1331 = vsel %vm1321, %v1320, %v1311
    %v1332 = vsel %vm141, 1, 0
    %v1333 = vsel %vm142, 1, 0
    %v1334 = vsel %vm143, 1, 0
    %v1335 = vsel %vm144, 1, 0
    %v1336 = vsel %vm145, 1, 0
    %v1337 = vsel %vm146, 1, 0
    %v1338 = vsel %vm147, 1, 0
    %v1339 = vsel %vm148, 1, 0
    %v1340 = vsel %vm149, 1, 0
    %v1341 = vsel %vm150, 1, 0
    %vm1342 = vcmp.eq.s32.totalorder %v1332, 1
    %vm1343 = vcmp.eq.s32.totalorder %v1333, 1
    %vm1344 = vcmp.eq.s32.totalorder %v1334, 1
    %vm1345 = vcmp.eq.s32.totalorder %v1335, 1
    %vm1346 = vcmp.eq.s32.totalorder %v1336, 1
    %vm1347 = vcmp.eq.s32.totalorder %v1337, 1
    %vm1348 = vcmp.eq.s32.totalorder %v1338, 1
    %vm1349 = vcmp.eq.s32.totalorder %v1339, 1
    %vm1350 = vcmp.eq.s32.totalorder %v1340, 1
    %vm1351 = vcmp.eq.s32.totalorder %v1341, 1
    %v1352 = vsel %vm1342, %v1331, 0.0
    %v1353 = vsel %vm1343, %v1330, 0.0
    %v1354 = vsel %vm1344, %v1329, 0.0
    %v1355 = vsel %vm1345, %v1328, 0.0
    %v1356 = vsel %vm1346, %v1327, 0.0
    %v1357 = vsel %vm1347, %v1326, 0.0
    %v1358 = vsel %vm1348, %v1325, 0.0
    %v1359 = vsel %vm1349, %v1324, 0.0
    %v1360 = vsel %vm1350, %v1323, 0.0
    %v1361 = vsel %vm1351, %v1322, 0.0
    %1372 = vrot.lane.b32.xlu0 %v1352, 64
    %v1373 = vpop.permute.xlu0 %1372
    %1374 = vrot.lane.b32.xlu0 %v1353, 64
    %v1375 = vpop.permute.xlu0 %1374
    %1376 = vrot.lane.b32.xlu0 %v1354, 64
    %v1377 = vpop.permute.xlu0 %1376
    %1378 = vrot.lane.b32.xlu0 %v1355, 64
    %v1379 = vpop.permute.xlu0 %1378
    %1380 = vrot.lane.b32.xlu0 %v1356, 64
    %v1381 = vpop.permute.xlu0 %1380
    %1382 = vrot.lane.b32.xlu0 %v1357, 64
    %v1383 = vpop.permute.xlu0 %1382
    %1384 = vrot.lane.b32.xlu0 %v1358, 64
    %v1385 = vpop.permute.xlu0 %1384
    %1386 = vrot.lane.b32.xlu0 %v1359, 64
    %v1387 = vpop.permute.xlu0 %1386
    %1388 = vrot.lane.b32.xlu0 %v1360, 64
    %v1389 = vpop.permute.xlu0 %1388
    %1390 = vrot.lane.b32.xlu0 %v1361, 64
    %v1391 = vpop.permute.xlu0 %1390
    %vm1402 = vcmask 654848
    %1403 = vst.msk [vmem:[#allocation2] sm:$0xff] %vm1402, %v1373
    %1404 = vst.msk [vmem:[#allocation2 + $0x8] sm:$0xff] %vm1402, %v1375
    %1405 = vst.msk [vmem:[#allocation2 + $0x10] sm:$0xff] %vm1402, %v1377
    %1406 = vst.msk [vmem:[#allocation2 + $0x18] sm:$0xff] %vm1402, %v1379
    %1407 = vst.msk [vmem:[#allocation2 + $0x20] sm:$0xff] %vm1402, %v1381
    %1408 = vst.msk [vmem:[#allocation2 + $0x28] sm:$0xff] %vm1402, %v1383
    %1409 = vst.msk [vmem:[#allocation2 + $0x30] sm:$0xff] %vm1402, %v1385
    %1410 = vst.msk [vmem:[#allocation2 + $0x38] sm:$0xff] %vm1402, %v1387
    %1411 = vst.msk [vmem:[#allocation2 + $0x40] sm:$0xff] %vm1402, %v1389
    %1412 = vst.msk [vmem:[#allocation2 + $0x48] sm:$0xff] %vm1402, %v1391
    %v1413 = vrot.slane %v955, 5
    %v1414 = vrot.slane %v956, 5
    %v1415 = vrot.slane %v957, 5
    %v1416 = vrot.slane %v958, 5
    %v1417 = vrot.slane %v959, 5
    %v1418 = vrot.slane %v960, 5
    %v1419 = vrot.slane %v961, 5
    %v1420 = vrot.slane %v962, 5
    %v1421 = vrot.slane %v963, 5
    %v1422 = vrot.slane %v964, 5
    %vm1423 = vcmp.lt.s32.totalorder %v41, 3
    %v1424 = vsel %vm1423, %v1421, %v1422
    %v1425 = vsel %vm1423, %v1420, %v1421
    %v1426 = vsel %vm1423, %v1419, %v1420
    %v1427 = vsel %vm1423, %v1418, %v1419
    %v1428 = vsel %vm1423, %v1417, %v1418
    %v1429 = vsel %vm1423, %v1416, %v1417
    %v1430 = vsel %vm1423, %v1415, %v1416
    %v1431 = vsel %vm1423, %v1414, %v1415
    %v1432 = vsel %vm1423, %v1413, %v1414
    %v1433 = vsel %vm1423, %v1422, %v1413
    %v1434 = vsel %vm151, 1, 0
    %v1435 = vsel %vm152, 1, 0
    %v1436 = vsel %vm153, 1, 0
    %v1437 = vsel %vm154, 1, 0
    %v1438 = vsel %vm155, 1, 0
    %v1439 = vsel %vm156, 1, 0
    %v1440 = vsel %vm157, 1, 0
    %v1441 = vsel %vm158, 1, 0
    %v1442 = vsel %vm159, 1, 0
    %v1443 = vsel %vm160, 1, 0
    %vm1444 = vcmp.eq.s32.totalorder %v1434, 1
    %vm1445 = vcmp.eq.s32.totalorder %v1435, 1
    %vm1446 = vcmp.eq.s32.totalorder %v1436, 1
    %vm1447 = vcmp.eq.s32.totalorder %v1437, 1
    %vm1448 = vcmp.eq.s32.totalorder %v1438, 1
    %vm1449 = vcmp.eq.s32.totalorder %v1439, 1
    %vm1450 = vcmp.eq.s32.totalorder %v1440, 1
    %vm1451 = vcmp.eq.s32.totalorder %v1441, 1
    %vm1452 = vcmp.eq.s32.totalorder %v1442, 1
    %vm1453 = vcmp.eq.s32.totalorder %v1443, 1
    %v1454 = vsel %vm1444, %v1433, 0.0
    %v1455 = vsel %vm1445, %v1432, 0.0
    %v1456 = vsel %vm1446, %v1431, 0.0
    %v1457 = vsel %vm1447, %v1430, 0.0
    %v1458 = vsel %vm1448, %v1429, 0.0
    %v1459 = vsel %vm1449, %v1428, 0.0
    %v1460 = vsel %vm1450, %v1427, 0.0
    %v1461 = vsel %vm1451, %v1426, 0.0
    %v1462 = vsel %vm1452, %v1425, 0.0
    %v1463 = vsel %vm1453, %v1424, 0.0
    %1474 = vrot.lane.b32.xlu0 %v1454, 80
    %v1475 = vpop.permute.xlu0 %1474
    %1476 = vrot.lane.b32.xlu0 %v1455, 80
    %v1477 = vpop.permute.xlu0 %1476
    %1478 = vrot.lane.b32.xlu0 %v1456, 80
    %v1479 = vpop.permute.xlu0 %1478
    %1480 = vrot.lane.b32.xlu0 %v1457, 80
    %v1481 = vpop.permute.xlu0 %1480
    %1482 = vrot.lane.b32.xlu0 %v1458, 80
    %v1483 = vpop.permute.xlu0 %1482
    %1484 = vrot.lane.b32.xlu0 %v1459, 80
    %v1485 = vpop.permute.xlu0 %1484
    %1486 = vrot.lane.b32.xlu0 %v1460, 80
    %v1487 = vpop.permute.xlu0 %1486
    %1488 = vrot.lane.b32.xlu0 %v1461, 80
    %v1489 = vpop.permute.xlu0 %1488
    %1490 = vrot.lane.b32.xlu0 %v1462, 80
    %v1491 = vpop.permute.xlu0 %1490
    %1492 = vrot.lane.b32.xlu0 %v1463, 80
    %v1493 = vpop.permute.xlu0 %1492
    %vm1504 = vcmask 786048
    %1505 = vst.msk [vmem:[#allocation2] sm:$0xff] %vm1504, %v1475
    %1506 = vst.msk [vmem:[#allocation2 + $0x8] sm:$0xff] %vm1504, %v1477
    %1507 = vst.msk [vmem:[#allocation2 + $0x10] sm:$0xff] %vm1504, %v1479
    %1508 = vst.msk [vmem:[#allocation2 + $0x18] sm:$0xff] %vm1504, %v1481
    %1509 = vst.msk [vmem:[#allocation2 + $0x20] sm:$0xff] %vm1504, %v1483
    %1510 = vst.msk [vmem:[#allocation2 + $0x28] sm:$0xff] %vm1504, %v1485
    %1511 = vst.msk [vmem:[#allocation2 + $0x30] sm:$0xff] %vm1504, %v1487
    %1512 = vst.msk [vmem:[#allocation2 + $0x38] sm:$0xff] %vm1504, %v1489
    %1513 = vst.msk [vmem:[#allocation2 + $0x40] sm:$0xff] %vm1504, %v1491
    %1514 = vst.msk [vmem:[#allocation2 + $0x48] sm:$0xff] %vm1504, %v1493
    %v1515 = vrot.slane %v955, 6
    %v1516 = vrot.slane %v956, 6
    %v1517 = vrot.slane %v957, 6
    %v1518 = vrot.slane %v958, 6
    %v1519 = vrot.slane %v959, 6
    %v1520 = vrot.slane %v960, 6
    %v1521 = vrot.slane %v961, 6
    %v1522 = vrot.slane %v962, 6
    %v1523 = vrot.slane %v963, 6
    %v1524 = vrot.slane %v964, 6
    %vm1525 = vcmp.lt.s32.totalorder %v41, 2
    %v1526 = vsel %vm1525, %v1523, %v1524
    %v1527 = vsel %vm1525, %v1522, %v1523
    %v1528 = vsel %vm1525, %v1521, %v1522
    %v1529 = vsel %vm1525, %v1520, %v1521
    %v1530 = vsel %vm1525, %v1519, %v1520
    %v1531 = vsel %vm1525, %v1518, %v1519
    %v1532 = vsel %vm1525, %v1517, %v1518
    %v1533 = vsel %vm1525, %v1516, %v1517
    %v1534 = vsel %vm1525, %v1515, %v1516
    %v1535 = vsel %vm1525, %v1524, %v1515
    %v1536 = vsel %vm161, 1, 0
    %v1537 = vsel %vm162, 1, 0
    %v1538 = vsel %vm163, 1, 0
    %v1539 = vsel %vm164, 1, 0
    %v1540 = vsel %vm165, 1, 0
    %v1541 = vsel %vm166, 1, 0
    %v1542 = vsel %vm167, 1, 0
    %v1543 = vsel %vm168, 1, 0
    %v1544 = vsel %vm169, 1, 0
    %v1545 = vsel %vm170, 1, 0
    %vm1546 = vcmp.eq.s32.totalorder %v1536, 1
    %vm1547 = vcmp.eq.s32.totalorder %v1537, 1
    %vm1548 = vcmp.eq.s32.totalorder %v1538, 1
    %vm1549 = vcmp.eq.s32.totalorder %v1539, 1
    %vm1550 = vcmp.eq.s32.totalorder %v1540, 1
    %vm1551 = vcmp.eq.s32.totalorder %v1541, 1
    %vm1552 = vcmp.eq.s32.totalorder %v1542, 1
    %vm1553 = vcmp.eq.s32.totalorder %v1543, 1
    %vm1554 = vcmp.eq.s32.totalorder %v1544, 1
    %vm1555 = vcmp.eq.s32.totalorder %v1545, 1
    %v1556 = vsel %vm1546, %v1535, 0.0
    %v1557 = vsel %vm1547, %v1534, 0.0
    %v1558 = vsel %vm1548, %v1533, 0.0
    %v1559 = vsel %vm1549, %v1532, 0.0
    %v1560 = vsel %vm1550, %v1531, 0.0
    %v1561 = vsel %vm1551, %v1530, 0.0
    %v1562 = vsel %vm1552, %v1529, 0.0
    %v1563 = vsel %vm1553, %v1528, 0.0
    %v1564 = vsel %vm1554, %v1527, 0.0
    %v1565 = vsel %vm1555, %v1526, 0.0
    %1576 = vrot.lane.b32.xlu0 %v1556, 96
    %v1577 = vpop.permute.xlu0 %1576
    %1578 = vrot.lane.b32.xlu0 %v1557, 96
    %v1579 = vpop.permute.xlu0 %1578
    %1580 = vrot.lane.b32.xlu0 %v1558, 96
    %v1581 = vpop.permute.xlu0 %1580
    %1582 = vrot.lane.b32.xlu0 %v1559, 96
    %v1583 = vpop.permute.xlu0 %1582
    %1584 = vrot.lane.b32.xlu0 %v1560, 96
    %v1585 = vpop.permute.xlu0 %1584
    %1586 = vrot.lane.b32.xlu0 %v1561, 96
    %v1587 = vpop.permute.xlu0 %1586
    %1588 = vrot.lane.b32.xlu0 %v1562, 96
    %v1589 = vpop.permute.xlu0 %1588
    %1590 = vrot.lane.b32.xlu0 %v1563, 96
    %v1591 = vpop.permute.xlu0 %1590
    %1592 = vrot.lane.b32.xlu0 %v1564, 96
    %v1593 = vpop.permute.xlu0 %1592
    %1594 = vrot.lane.b32.xlu0 %v1565, 96
    %v1595 = vpop.permute.xlu0 %1594
    %vm1606 = vcmask 917248
    %1607 = vst.msk [vmem:[#allocation2] sm:$0xff] %vm1606, %v1577
    %1608 = vst.msk [vmem:[#allocation2 + $0x8] sm:$0xff] %vm1606, %v1579
    %1609 = vst.msk [vmem:[#allocation2 + $0x10] sm:$0xff] %vm1606, %v1581
    %1610 = vst.msk [vmem:[#allocation2 + $0x18] sm:$0xff] %vm1606, %v1583
    %1611 = vst.msk [vmem:[#allocation2 + $0x20] sm:$0xff] %vm1606, %v1585
    %1612 = vst.msk [vmem:[#allocation2 + $0x28] sm:$0xff] %vm1606, %v1587
    %1613 = vst.msk [vmem:[#allocation2 + $0x30] sm:$0xff] %vm1606, %v1589
    %1614 = vst.msk [vmem:[#allocation2 + $0x38] sm:$0xff] %vm1606, %v1591
    %1615 = vst.msk [vmem:[#allocation2 + $0x40] sm:$0xff] %vm1606, %v1593
    %1616 = vst.msk [vmem:[#allocation2 + $0x48] sm:$0xff] %vm1606, %v1595
    %v1617 = vrot.slane %v955, 7
    %v1618 = vrot.slane %v956, 7
    %v1619 = vrot.slane %v957, 7
    %v1620 = vrot.slane %v958, 7
    %v1621 = vrot.slane %v959, 7
    %v1622 = vrot.slane %v960, 7
    %v1623 = vrot.slane %v961, 7
    %v1624 = vrot.slane %v962, 7
    %v1625 = vrot.slane %v963, 7
    %v1626 = vrot.slane %v964, 7
    %vm1627 = vcmp.lt.s32.totalorder %v41, 1
    %v1628 = vsel %vm1627, %v1625, %v1626
    %v1629 = vsel %vm1627, %v1624, %v1625
    %v1630 = vsel %vm1627, %v1623, %v1624
    %v1631 = vsel %vm1627, %v1622, %v1623
    %v1632 = vsel %vm1627, %v1621, %v1622
    %v1633 = vsel %vm1627, %v1620, %v1621
    %v1634 = vsel %vm1627, %v1619, %v1620
    %v1635 = vsel %vm1627, %v1618, %v1619
    %v1636 = vsel %vm1627, %v1617, %v1618
    %v1637 = vsel %vm1627, %v1626, %v1617
    %v1638 = vsel %vm171, 1, 0
    %v1639 = vsel %vm172, 1, 0
    %v1640 = vsel %vm173, 1, 0
    %v1641 = vsel %vm174, 1, 0
    %v1642 = vsel %vm175, 1, 0
    %v1643 = vsel %vm176, 1, 0
    %v1644 = vsel %vm177, 1, 0
    %v1645 = vsel %vm178, 1, 0
    %v1646 = vsel %vm179, 1, 0
    %v1647 = vsel %vm180, 1, 0
    %vm1648 = vcmp.eq.s32.totalorder %v1638, 1
    %vm1649 = vcmp.eq.s32.totalorder %v1639, 1
    %vm1650 = vcmp.eq.s32.totalorder %v1640, 1
    %vm1651 = vcmp.eq.s32.totalorder %v1641, 1
    %vm1652 = vcmp.eq.s32.totalorder %v1642, 1
    %vm1653 = vcmp.eq.s32.totalorder %v1643, 1
    %vm1654 = vcmp.eq.s32.totalorder %v1644, 1
    %vm1655 = vcmp.eq.s32.totalorder %v1645, 1
    %vm1656 = vcmp.eq.s32.totalorder %v1646, 1
    %vm1657 = vcmp.eq.s32.totalorder %v1647, 1
    %v1658 = vsel %vm1648, %v1637, 0.0
    %v1659 = vsel %vm1649, %v1636, 0.0
    %v1660 = vsel %vm1650, %v1635, 0.0
    %v1661 = vsel %vm1651, %v1634, 0.0
    %v1662 = vsel %vm1652, %v1633, 0.0
    %v1663 = vsel %vm1653, %v1632, 0.0
    %v1664 = vsel %vm1654, %v1631, 0.0
    %v1665 = vsel %vm1655, %v1630, 0.0
    %v1666 = vsel %vm1656, %v1629, 0.0
    %v1667 = vsel %vm1657, %v1628, 0.0
    %1678 = vrot.lane.b32.xlu0 %v1658, 112
    %v1679 = vpop.permute.xlu0 %1678
    %1680 = vrot.lane.b32.xlu0 %v1659, 112
    %v1681 = vpop.permute.xlu0 %1680
    %1682 = vrot.lane.b32.xlu0 %v1660, 112
    %v1683 = vpop.permute.xlu0 %1682
    %1684 = vrot.lane.b32.xlu0 %v1661, 112
    %v1685 = vpop.permute.xlu0 %1684
    %1686 = vrot.lane.b32.xlu0 %v1662, 112
    %v1687 = vpop.permute.xlu0 %1686
    %1688 = vrot.lane.b32.xlu0 %v1663, 112
    %v1689 = vpop.permute.xlu0 %1688
    %1690 = vrot.lane.b32.xlu0 %v1664, 112
    %v1691 = vpop.permute.xlu0 %1690
    %1692 = vrot.lane.b32.xlu0 %v1665, 112
    %v1693 = vpop.permute.xlu0 %1692
    %1694 = vrot.lane.b32.xlu0 %v1666, 112
    %v1695 = vpop.permute.xlu0 %1694
    %1696 = vrot.lane.b32.xlu0 %v1667, 112
    %v1697 = vpop.permute.xlu0 %1696
    %vm1708 = vcmask 1048448
    %1709 = vst.msk [vmem:[#allocation2] sm:$0xff] %vm1708, %v1679
    %1710 = vst.msk [vmem:[#allocation2 + $0x8] sm:$0xff] %vm1708, %v1681
    %1711 = vst.msk [vmem:[#allocation2 + $0x10] sm:$0xff] %vm1708, %v1683
    %1712 = vst.msk [vmem:[#allocation2 + $0x18] sm:$0xff] %vm1708, %v1685
    %1713 = vst.msk [vmem:[#allocation2 + $0x20] sm:$0xff] %vm1708, %v1687
    %1714 = vst.msk [vmem:[#allocation2 + $0x28] sm:$0xff] %vm1708, %v1689
    %1715 = vst.msk [vmem:[#allocation2 + $0x30] sm:$0xff] %vm1708, %v1691
    %1716 = vst.msk [vmem:[#allocation2 + $0x38] sm:$0xff] %vm1708, %v1693
    %1717 = vst.msk [vmem:[#allocation2 + $0x40] sm:$0xff] %vm1708, %v1695
    %1718 = vst.msk [vmem:[#allocation2 + $0x48] sm:$0xff] %vm1708, %v1697
    %v1719 = vld [vmem:[#allocation2] sm:$0xff]
    %v1720 = vld [vmem:[#allocation2 + $0x8] sm:$0xff]
    %v1721 = vld [vmem:[#allocation2 + $0x10] sm:$0xff]
    %v1722 = vld [vmem:[#allocation2 + $0x18] sm:$0xff]
    %v1723 = vld [vmem:[#allocation2 + $0x20] sm:$0xff]
    %v1724 = vld [vmem:[#allocation2 + $0x28] sm:$0xff]
    %v1725 = vld [vmem:[#allocation2 + $0x30] sm:$0xff]
    %v1726 = vld [vmem:[#allocation2 + $0x38] sm:$0xff]
    %v1727 = vld [vmem:[#allocation2 + $0x40] sm:$0xff]
    %v1728 = vld [vmem:[#allocation2 + $0x48] sm:$0xff]
    %v1729 = vld [vmem:[%s6] sm:$0xff]
    %v1730 = vld [vmem:[%s6 + $0x8] sm:$0xff]
    %v1731 = vld [vmem:[%s6 + $0x10] sm:$0xff]
    %v1732 = vld [vmem:[%s6 + $0x18] sm:$0xff]
    %v1733 = vld [vmem:[%s6 + $0x20] sm:$0xff]
    %v1734 = vld [vmem:[%s6 + $0x28] sm:$0xff]
    %v1735 = vld [vmem:[%s6 + $0x30] sm:$0xff]
    %v1736 = vld [vmem:[%s6 + $0x38] sm:$0xff]
    %v1737 = vld [vmem:[%s6 + $0x40] sm:$0xff]
    %v1738 = vld [vmem:[%s6 + $0x48] sm:$0xff]
    %v1739 = vld [vmem:[%s6 + $0x50] sm:$0xff]
    %v1740 = vld [vmem:[%s6 + $0x58] sm:$0xff]
    %v1741 = vld [vmem:[%s6 + $0x60] sm:$0xff]
    %v1742 = vld [vmem:[%s6 + $0x68] sm:$0xff]
    %v1743 = vld [vmem:[%s6 + $0x70] sm:$0xff]
    %v1744 = vld [vmem:[%s6 + $0x78] sm:$0xff]
    %v1745 = vlaneseq
    %v1746 = vshrl.u32 %v1745, 7
    %v1747 = vsub.s32 0, %v1746
    %v1748 = vrot.slane %v36, %v1747
    %1749 = vmatprep.subr.mxu0 0.0
    %1750 = vmatpush1.msra.mxu0 %v1729
    %1751 = vmatprep.subr.mxu0 0.0
    %1752 = vmatpush1.msra.mxu0 %v1730
    %1753 = vmatprep.subr.mxu0 0.0
    %1754 = vmatpush1.msra.mxu0 %v1731
    %1755 = vmatprep.subr.mxu0 0.0
    %1756 = vmatpush1.msra.mxu0 %v1732
    %1757 = vmatprep.subr.mxu0 0.0
    %1758 = vmatpush1.msra.mxu0 %v1733
    %1759 = vmatprep.subr.mxu0 0.0
    %1760 = vmatpush1.msra.mxu0 %v1734
    %1761 = vmatprep.subr.mxu0 0.0
    %1762 = vmatpush1.msra.mxu0 %v1735
    %1763 = vmatprep.subr.mxu0 0.0
    %1764 = vmatpush1.msra.mxu0 %v1736
    %1765 = vmatprep.subr.mxu0 0.0
    %1766 = vmatpush1.msra.mxu0 %v1737
    %1767 = vmatprep.subr.mxu0 0.0
    %1768 = vmatpush1.msra.mxu0 %v1738
    %1769 = vmatprep.subr.mxu0 0.0
    %1770 = vmatpush1.msra.mxu0 %v1739
    %1771 = vmatprep.subr.mxu0 0.0
    %1772 = vmatpush1.msra.mxu0 %v1740
    %1773 = vmatprep.subr.mxu0 0.0
    %1774 = vmatpush1.msra.mxu0 %v1741
    %1775 = vmatprep.subr.mxu0 0.0
    %1776 = vmatpush1.msra.mxu0 %v1742
    %1777 = vmatprep.subr.mxu0 0.0
    %1778 = vmatpush1.msra.mxu0 %v1743
    %1779 = vmatprep.subr.mxu0 0.0
    %1780 = vmatpush1.msra.mxu0 %v1744
    %1781 = vmatprep.subr.mxu0 0.0
    %1782 = vmatpush1.msra.mxu0 0.0
    %1783 = vmatprep.subr.mxu0 0.0
    %1784 = vmatpush1.msra.mxu0 0.0
    %1785 = vmatprep.subr.mxu0 0.0
    %1786 = vmatpush1.msra.mxu0 0.0
    %1787 = vmatprep.subr.mxu0 0.0
    %1788 = vmatpush1.msra.mxu0 0.0
    %1789 = vmatprep.subr.mxu0 0.0
    %1790 = vmatpush1.msra.mxu0 0.0
    %1791 = vmatprep.subr.mxu0 0.0
    %1792 = vmatpush1.msra.mxu0 0.0
    %1793 = vmatprep.subr.mxu0 0.0
    %1794 = vmatpush1.msra.mxu0 0.0
    %1795 = vmatprep.subr.mxu0 0.0
    %1796 = vmatpush1.msra.mxu0 0.0
    %1797 = vmatprep.subr.mxu0 0.0
    %1798 = vmatpush1.msra.mxu0 0.0
    %1799 = vmatprep.subr.mxu0 0.0
    %1800 = vmatpush1.msra.mxu0 0.0
    %1801 = vmatprep.subr.mxu0 0.0
    %1802 = vmatpush1.msra.mxu0 0.0
    %1803 = vmatprep.subr.mxu0 0.0
    %1804 = vmatpush1.msra.mxu0 0.0
    %1805 = vmatprep.subr.mxu0 0.0
    %1806 = vmatpush1.msra.mxu0 0.0
    %1807 = vmatprep.subr.mxu0 0.0
    %1808 = vmatpush1.msra.mxu0 0.0
    %1809 = vmatprep.subr.mxu0 0.0
    %1810 = vmatpush1.msra.mxu0 0.0
    %1811 = vmatprep.subr.mxu0 0.0
    %1812 = vmatpush1.msra.mxu0 0.0
    %1813 = vmatprep.mubr.f32.mxu0 0.0
    %1814 = vmatmul.mubr.f32.gmra.mrb[0].mxu0 %v1719
    %v1815 = vpop.f32.mrb[0].mxu0
    %v1816 = vadd.f32 %v1748, %v1815
    %v1817 = vpop.f32.mrb[0].mxu0
    %1818 = vmatprep.mubr.f32.mxu0 0.0
    %1819 = vmatmul.mubr.f32.gmra.mrb[0].mxu0 %v1720
    %v1820 = vpop.f32.mrb[0].mxu0
    %v1821 = vadd.f32 %v1748, %v1820
    %v1822 = vpop.f32.mrb[0].mxu0
    %1823 = vmatprep.mubr.f32.mxu0 0.0
    %1824 = vmatmul.mubr.f32.gmra.mrb[0].mxu0 %v1721
    %v1825 = vpop.f32.mrb[0].mxu0
    %v1826 = vadd.f32 %v1748, %v1825
    %v1827 = vpop.f32.mrb[0].mxu0
    %1828 = vmatprep.mubr.f32.mxu0 0.0
    %1829 = vmatmul.mubr.f32.gmra.mrb[0].mxu0 %v1722
    %v1830 = vpop.f32.mrb[0].mxu0
    %v1831 = vadd.f32 %v1748, %v1830
    %v1832 = vpop.f32.mrb[0].mxu0
    %1833 = vmatprep.mubr.f32.mxu0 0.0
    %1834 = vmatmul.mubr.f32.gmra.mrb[0].mxu0 %v1723
    %v1835 = vpop.f32.mrb[0].mxu0
    %v1836 = vadd.f32 %v1748, %v1835
    %v1837 = vpop.f32.mrb[0].mxu0
    %1838 = vmatprep.mubr.f32.mxu0 0.0
    %1839 = vmatmul.mubr.f32.gmra.mrb[0].mxu0 %v1724
    %v1840 = vpop.f32.mrb[0].mxu0
    %v1841 = vadd.f32 %v1748, %v1840
    %v1842 = vpop.f32.mrb[0].mxu0
    %1843 = vmatprep.mubr.f32.mxu0 0.0
    %1844 = vmatmul.mubr.f32.gmra.mrb[0].mxu0 %v1725
    %v1845 = vpop.f32.mrb[0].mxu0
    %v1846 = vadd.f32 %v1748, %v1845
    %v1847 = vpop.f32.mrb[0].mxu0
    %1848 = vmatprep.mubr.f32.mxu0 0.0
    %1849 = vmatmul.mubr.f32.gmra.mrb[0].mxu0 %v1726
    %v1850 = vpop.f32.mrb[0].mxu0
    %v1851 = vadd.f32 %v1748, %v1850
    %v1852 = vpop.f32.mrb[0].mxu0
    %1853 = vmatprep.mubr.f32.mxu0 0.0
    %1854 = vmatmul.mubr.f32.gmra.mrb[0].mxu0 %v1727
    %v1855 = vpop.f32.mrb[0].mxu0
    %v1856 = vadd.f32 %v1748, %v1855
    %v1857 = vpop.f32.mrb[0].mxu0
    %1858 = vmatprep.mubr.f32.mxu0 0.0
    %1859 = vmatmul.mubr.f32.gmra.mrb[0].mxu0 %v1728
    %v1860 = vpop.f32.mrb[0].mxu0
    %v1861 = vadd.f32 %v1748, %v1860
    %v1862 = vpop.f32.mrb[0].mxu0
    %1863 = vdwg.mxu0
    %v1864 = vsel %vm191, %v1816, 0.0
    %1865 = vadd.xlane.f32.xlu0 %v1864
    %v1866 = vpop.xlane.xlu0 %1865
    %v1867 = vsel %vm191, %v1821, 0.0
    %1868 = vadd.xlane.f32.xlu0 %v1867
    %v1869 = vpop.xlane.xlu0 %1868
    %v1870 = vsel %vm191, %v1826, 0.0
    %1871 = vadd.xlane.f32.xlu0 %v1870
    %v1872 = vpop.xlane.xlu0 %1871
    %v1873 = vsel %vm191, %v1831, 0.0
    %1874 = vadd.xlane.f32.xlu0 %v1873
    %v1875 = vpop.xlane.xlu0 %1874
    %v1876 = vsel %vm191, %v1836, 0.0
    %1877 = vadd.xlane.f32.xlu0 %v1876
    %v1878 = vpop.xlane.xlu0 %1877
    %v1879 = vsel %vm191, %v1841, 0.0
    %1880 = vadd.xlane.f32.xlu0 %v1879
    %v1881 = vpop.xlane.xlu0 %1880
    %v1882 = vsel %vm191, %v1846, 0.0
    %1883 = vadd.xlane.f32.xlu0 %v1882
    %v1884 = vpop.xlane.xlu0 %1883
    %v1885 = vsel %vm191, %v1851, 0.0
    %1886 = vadd.xlane.f32.xlu0 %v1885
    %v1887 = vpop.xlane.xlu0 %1886
    %v1888 = vsel %vm191, %v1856, 0.0
    %1889 = vadd.xlane.f32.xlu0 %v1888
    %v1890 = vpop.xlane.xlu0 %1889
    %v1891 = vsel %vm191, %v1861, 0.0
    %1892 = vadd.xlane.f32.xlu0 %v1891
    %v1893 = vpop.xlane.xlu0 %1892
    %v1894 = vmul.f32 %v1866, %v222
    %v1895 = vmul.f32 %v1869, %v222
    %v1896 = vmul.f32 %v1872, %v222
    %v1897 = vmul.f32 %v1875, %v222
    %v1898 = vmul.f32 %v1878, %v222
    %v1899 = vmul.f32 %v1881, %v222
    %v1900 = vmul.f32 %v1884, %v222
    %v1901 = vmul.f32 %v1887, %v222
    %v1902 = vmul.f32 %v1890, %v222
    %v1903 = vmul.f32 %v1893, %v222
    %v1904 = vsub.f32 %v1816, %v1894
    %v1905 = vsub.f32 %v1821, %v1895
    %v1906 = vsub.f32 %v1826, %v1896
    %v1907 = vsub.f32 %v1831, %v1897
    %v1908 = vsub.f32 %v1836, %v1898
    %v1909 = vsub.f32 %v1841, %v1899
    %v1910 = vsub.f32 %v1846, %v1900
    %v1911 = vsub.f32 %v1851, %v1901
    %v1912 = vsub.f32 %v1856, %v1902
    %v1913 = vsub.f32 %v1861, %v1903
    %v1914 = vmul.f32 %v1904, %v1904
    %v1915 = vmul.f32 %v1905, %v1905
    %v1916 = vmul.f32 %v1906, %v1906
    %v1917 = vmul.f32 %v1907, %v1907
    %v1918 = vmul.f32 %v1908, %v1908
    %v1919 = vmul.f32 %v1909, %v1909
    %v1920 = vmul.f32 %v1910, %v1910
    %v1921 = vmul.f32 %v1911, %v1911
    %v1922 = vmul.f32 %v1912, %v1912
    %v1923 = vmul.f32 %v1913, %v1913
    %v1924 = vsel %vm191, %v1914, 0.0
    %1925 = vadd.xlane.f32.xlu0 %v1924
    %v1926 = vpop.xlane.xlu0 %1925
    %v1927 = vsel %vm191, %v1915, 0.0
    %1928 = vadd.xlane.f32.xlu0 %v1927
    %v1929 = vpop.xlane.xlu0 %1928
    %v1930 = vsel %vm191, %v1916, 0.0
    %1931 = vadd.xlane.f32.xlu0 %v1930
    %v1932 = vpop.xlane.xlu0 %1931
    %v1933 = vsel %vm191, %v1917, 0.0
    %1934 = vadd.xlane.f32.xlu0 %v1933
    %v1935 = vpop.xlane.xlu0 %1934
    %v1936 = vsel %vm191, %v1918, 0.0
    %1937 = vadd.xlane.f32.xlu0 %v1936
    %v1938 = vpop.xlane.xlu0 %1937
    %v1939 = vsel %vm191, %v1919, 0.0
    %1940 = vadd.xlane.f32.xlu0 %v1939
    %v1941 = vpop.xlane.xlu0 %1940
    %v1942 = vsel %vm191, %v1920, 0.0
    %1943 = vadd.xlane.f32.xlu0 %v1942
    %v1944 = vpop.xlane.xlu0 %1943
    %v1945 = vsel %vm191, %v1921, 0.0
    %1946 = vadd.xlane.f32.xlu0 %v1945
    %v1947 = vpop.xlane.xlu0 %1946
    %v1948 = vsel %vm191, %v1922, 0.0
    %1949 = vadd.xlane.f32.xlu0 %v1948
    %v1950 = vpop.xlane.xlu0 %1949
    %v1951 = vsel %vm191, %v1923, 0.0
    %1952 = vadd.xlane.f32.xlu0 %v1951
    %v1953 = vpop.xlane.xlu0 %1952
    %v1954 = vmul.f32 %v1926, %v222
    %v1955 = vmul.f32 %v1929, %v222
    %v1956 = vmul.f32 %v1932, %v222
    %v1957 = vmul.f32 %v1935, %v222
    %v1958 = vmul.f32 %v1938, %v222
    %v1959 = vmul.f32 %v1941, %v222
    %v1960 = vmul.f32 %v1944, %v222
    %v1961 = vmul.f32 %v1947, %v222
    %v1962 = vmul.f32 %v1950, %v222
    %v1963 = vmul.f32 %v1953, %v222
    %v1964 = vadd.f32 %v1954, 1e-12
    %v1965 = vadd.f32 %v1955, 1e-12
    %v1966 = vadd.f32 %v1956, 1e-12
    %v1967 = vadd.f32 %v1957, 1e-12
    %v1968 = vadd.f32 %v1958, 1e-12
    %v1969 = vadd.f32 %v1959, 1e-12
    %v1970 = vadd.f32 %v1960, 1e-12
    %v1971 = vadd.f32 %v1961, 1e-12
    %v1972 = vadd.f32 %v1962, 1e-12
    %v1973 = vadd.f32 %v1963, 1e-12
    %v1974 = vrsqrt.pop %v1964
    %v1975 = vrsqrt.pop %v1965
    %v1976 = vrsqrt.pop %v1966
    %v1977 = vrsqrt.pop %v1967
    %v1978 = vrsqrt.pop %v1968
    %v1979 = vrsqrt.pop %v1969
    %v1980 = vrsqrt.pop %v1970
    %v1981 = vrsqrt.pop %v1971
    %v1982 = vrsqrt.pop %v1972
    %v1983 = vrsqrt.pop %v1973
    %v1984 = vmul.f32 %v1904, %v1974
    %v1985 = vmul.f32 %v1905, %v1975
    %v1986 = vmul.f32 %v1906, %v1976
    %v1987 = vmul.f32 %v1907, %v1977
    %v1988 = vmul.f32 %v1908, %v1978
    %v1989 = vmul.f32 %v1909, %v1979
    %v1990 = vmul.f32 %v1910, %v1980
    %v1991 = vmul.f32 %v1911, %v1981
    %v1992 = vmul.f32 %v1912, %v1982
    %v1993 = vmul.f32 %v1913, %v1983
    %v1994 = vlaneseq
    %v1995 = vshrl.u32 %v1994, 7
    %v1996 = vsub.s32 1, %v1995
    %v1997 = vrot.slane %v36, %v1996
    %v1998 = vmul.f32 %v1984, %v1997
    %v1999 = vmul.f32 %v1985, %v1997
    %v2000 = vmul.f32 %v1986, %v1997
    %v2001 = vmul.f32 %v1987, %v1997
    %v2002 = vmul.f32 %v1988, %v1997
    %v2003 = vmul.f32 %v1989, %v1997
    %v2004 = vmul.f32 %v1990, %v1997
    %v2005 = vmul.f32 %v1991, %v1997
    %v2006 = vmul.f32 %v1992, %v1997
    %v2007 = vmul.f32 %v1993, %v1997
    %v2008 = vlaneseq
    %v2009 = vshrl.u32 %v2008, 7
    %v2010 = vsub.s32 2, %v2009
    %v2011 = vrot.slane %v36, %v2010
    %v2012 = vadd.f32 %v1998, %v2011
    %v2013 = vadd.f32 %v1999, %v2011
    %v2014 = vadd.f32 %v2000, %v2011
    %v2015 = vadd.f32 %v2001, %v2011
    %v2016 = vadd.f32 %v2002, %v2011
    %v2017 = vadd.f32 %v2003, %v2011
    %v2018 = vadd.f32 %v2004, %v2011
    %v2019 = vadd.f32 %v2005, %v2011
    %v2020 = vadd.f32 %v2006, %v2011
    %v2021 = vadd.f32 %v2007, %v2011
    %v2022 = vmax.f32 %v2012, 0.0
    %v2023 = vmax.f32 %v2013, 0.0
    %v2024 = vmax.f32 %v2014, 0.0
    %v2025 = vmax.f32 %v2015, 0.0
    %v2026 = vmax.f32 %v2016, 0.0
    %v2027 = vmax.f32 %v2017, 0.0
    %v2028 = vmax.f32 %v2018, 0.0
    %v2029 = vmax.f32 %v2019, 0.0
    %v2030 = vmax.f32 %v2020, 0.0
    %v2031 = vmax.f32 %v2021, 0.0
    %v2032 = vld [vmem:[%s7] sm:$0xff]
    %v2033 = vld [vmem:[%s7 + $0x8] sm:$0xff]
    %v2034 = vlaneseq
    %v2035 = vshrl.u32 %v2034, 7
    %v2036 = vsub.s32 3, %v2035
    %v2037 = vrot.slane %v36, %v2036
    %v2039 = vsel %vm191, %v2022, 0
    %v2042 = vsel %vm191, %v2023, 0
    %v2045 = vsel %vm191, %v2024, 0
    %v2048 = vsel %vm191, %v2025, 0
    %v2051 = vsel %vm191, %v2026, 0
    %v2054 = vsel %vm191, %v2027, 0
    %v2057 = vsel %vm191, %v2028, 0
    %v2060 = vsel %vm191, %v2029, 0
    %v2063 = vsel %vm191, %v2030, 0
    %v2066 = vsel %vm191, %v2031, 0
    %2068 = vmatprep.subr.mxu0 0.0
    %2069 = vmatpush1.msra.mxu0 %v2032
    %2070 = vmatprep.subr.mxu0 0.0
    %2071 = vmatpush1.msra.mxu0 %v2033
    %2072 = vmatprep.subr.mxu0 0.0
    %2073 = vmatpush1.msra.mxu0 0.0
    %2074 = vmatprep.subr.mxu0 0.0
    %2075 = vmatpush1.msra.mxu0 0.0
    %2076 = vmatprep.subr.mxu0 0.0
    %2077 = vmatpush1.msra.mxu0 0.0
    %2078 = vmatprep.subr.mxu0 0.0
    %2079 = vmatpush1.msra.mxu0 0.0
    %2080 = vmatprep.subr.mxu0 0.0
    %2081 = vmatpush1.msra.mxu0 0.0
    %2082 = vmatprep.subr.mxu0 0.0
    %2083 = vmatpush1.msra.mxu0 0.0
    %2084 = vmatprep.subr.mxu0 0.0
    %2085 = vmatpush1.msra.mxu0 0.0
    %2086 = vmatprep.subr.mxu0 0.0
    %2087 = vmatpush1.msra.mxu0 0.0
    %2088 = vmatprep.subr.mxu0 0.0
    %2089 = vmatpush1.msra.mxu0 0.0
    %2090 = vmatprep.subr.mxu0 0.0
    %2091 = vmatpush1.msra.mxu0 0.0
    %2092 = vmatprep.subr.mxu0 0.0
    %2093 = vmatpush1.msra.mxu0 0.0
    %2094 = vmatprep.subr.mxu0 0.0
    %2095 = vmatpush1.msra.mxu0 0.0
    %2096 = vmatprep.subr.mxu0 0.0
    %2097 = vmatpush1.msra.mxu0 0.0
    %2098 = vmatprep.subr.mxu0 0.0
    %2099 = vmatpush1.msra.mxu0 0.0
    %2100 = vmatprep.subr.mxu0 0.0
    %2101 = vmatpush1.msra.mxu0 0.0
    %2102 = vmatprep.subr.mxu0 0.0
    %2103 = vmatpush1.msra.mxu0 0.0
    %2104 = vmatprep.subr.mxu0 0.0
    %2105 = vmatpush1.msra.mxu0 0.0
    %2106 = vmatprep.subr.mxu0 0.0
    %2107 = vmatpush1.msra.mxu0 0.0
    %2108 = vmatprep.subr.mxu0 0.0
    %2109 = vmatpush1.msra.mxu0 0.0
    %2110 = vmatprep.subr.mxu0 0.0
    %2111 = vmatpush1.msra.mxu0 0.0
    %2112 = vmatprep.subr.mxu0 0.0
    %2113 = vmatpush1.msra.mxu0 0.0
    %2114 = vmatprep.subr.mxu0 0.0
    %2115 = vmatpush1.msra.mxu0 0.0
    %2116 = vmatprep.subr.mxu0 0.0
    %2117 = vmatpush1.msra.mxu0 0.0
    %2118 = vmatprep.subr.mxu0 0.0
    %2119 = vmatpush1.msra.mxu0 0.0
    %2120 = vmatprep.subr.mxu0 0.0
    %2121 = vmatpush1.msra.mxu0 0.0
    %2122 = vmatprep.subr.mxu0 0.0
    %2123 = vmatpush1.msra.mxu0 0.0
    %2124 = vmatprep.subr.mxu0 0.0
    %2125 = vmatpush1.msra.mxu0 0.0
    %2126 = vmatprep.subr.mxu0 0.0
    %2127 = vmatpush1.msra.mxu0 0.0
    %2128 = vmatprep.subr.mxu0 0.0
    %2129 = vmatpush1.msra.mxu0 0.0
    %2130 = vmatprep.subr.mxu0 0.0
    %2131 = vmatpush1.msra.mxu0 0.0
    %2132 = vmatprep.mubr.f32.mxu0 0.0
    %2133 = vmatmul.mubr.f32.gmra.mrb[0].mxu0 %v2039
    %v2134 = vpop.f32.mrb[0].mxu0
    %v2135 = vadd.f32 %v2037, %v2134
    %v2136 = vpop.f32.mrb[0].mxu0
    %2137 = vmatprep.mubr.f32.mxu0 0.0
    %2138 = vmatmul.mubr.f32.gmra.mrb[0].mxu0 %v2042
    %v2139 = vpop.f32.mrb[0].mxu0
    %v2140 = vadd.f32 %v2037, %v2139
    %v2141 = vpop.f32.mrb[0].mxu0
    %2142 = vmatprep.mubr.f32.mxu0 0.0
    %2143 = vmatmul.mubr.f32.gmra.mrb[0].mxu0 %v2045
    %v2144 = vpop.f32.mrb[0].mxu0
    %v2145 = vadd.f32 %v2037, %v2144
    %v2146 = vpop.f32.mrb[0].mxu0
    %2147 = vmatprep.mubr.f32.mxu0 0.0
    %2148 = vmatmul.mubr.f32.gmra.mrb[0].mxu0 %v2048
    %v2149 = vpop.f32.mrb[0].mxu0
    %v2150 = vadd.f32 %v2037, %v2149
    %v2151 = vpop.f32.mrb[0].mxu0
    %2152 = vmatprep.mubr.f32.mxu0 0.0
    %2153 = vmatmul.mubr.f32.gmra.mrb[0].mxu0 %v2051
    %v2154 = vpop.f32.mrb[0].mxu0
    %v2155 = vadd.f32 %v2037, %v2154
    %v2156 = vpop.f32.mrb[0].mxu0
    %2157 = vmatprep.mubr.f32.mxu0 0.0
    %2158 = vmatmul.mubr.f32.gmra.mrb[0].mxu0 %v2054
    %v2159 = vpop.f32.mrb[0].mxu0
    %v2160 = vadd.f32 %v2037, %v2159
    %v2161 = vpop.f32.mrb[0].mxu0
    %2162 = vmatprep.mubr.f32.mxu0 0.0
    %2163 = vmatmul.mubr.f32.gmra.mrb[0].mxu0 %v2057
    %v2164 = vpop.f32.mrb[0].mxu0
    %v2165 = vadd.f32 %v2037, %v2164
    %v2166 = vpop.f32.mrb[0].mxu0
    %2167 = vmatprep.mubr.f32.mxu0 0.0
    %2168 = vmatmul.mubr.f32.gmra.mrb[0].mxu0 %v2060
    %v2169 = vpop.f32.mrb[0].mxu0
    %v2170 = vadd.f32 %v2037, %v2169
    %v2171 = vpop.f32.mrb[0].mxu0
    %2172 = vmatprep.mubr.f32.mxu0 0.0
    %2173 = vmatmul.mubr.f32.gmra.mrb[0].mxu0 %v2063
    %v2174 = vpop.f32.mrb[0].mxu0
    %v2175 = vadd.f32 %v2037, %v2174
    %v2176 = vpop.f32.mrb[0].mxu0
    %2177 = vmatprep.mubr.f32.mxu0 0.0
    %2178 = vmatmul.mubr.f32.gmra.mrb[0].mxu0 %v2066
    %v2179 = vpop.f32.mrb[0].mxu0
    %v2180 = vadd.f32 %v2037, %v2179
    %v2181 = vpop.f32.mrb[0].mxu0
    %2182 = vdwg.mxu0
    %v2183 = vadd.f32 %v2135, %v426
    %v2184 = vadd.f32 %v2140, %v431
    %v2185 = vadd.f32 %v2145, %v436
    %v2186 = vadd.f32 %v2150, %v441
    %v2187 = vadd.f32 %v2155, %v446
    %v2188 = vadd.f32 %v2160, %v451
    %v2189 = vadd.f32 %v2165, %v456
    %v2190 = vadd.f32 %v2170, %v461
    %v2191 = vadd.f32 %v2175, %v466
    %v2192 = vadd.f32 %v2180, %v471
    %v2193 = vsel %vm474, %v2183, 0.0
    %2194 = vadd.xlane.f32.xlu0 %v2193
    %v2195 = vpop.xlane.xlu0 %2194
    %v2196 = vsel %vm474, %v2184, 0.0
    %2197 = vadd.xlane.f32.xlu0 %v2196
    %v2198 = vpop.xlane.xlu0 %2197
    %v2199 = vsel %vm474, %v2185, 0.0
    %2200 = vadd.xlane.f32.xlu0 %v2199
    %v2201 = vpop.xlane.xlu0 %2200
    %v2202 = vsel %vm474, %v2186, 0.0
    %2203 = vadd.xlane.f32.xlu0 %v2202
    %v2204 = vpop.xlane.xlu0 %2203
    %v2205 = vsel %vm474, %v2187, 0.0
    %2206 = vadd.xlane.f32.xlu0 %v2205
    %v2207 = vpop.xlane.xlu0 %2206
    %v2208 = vsel %vm474, %v2188, 0.0
    %2209 = vadd.xlane.f32.xlu0 %v2208
    %v2210 = vpop.xlane.xlu0 %2209
    %v2211 = vsel %vm474, %v2189, 0.0
    %2212 = vadd.xlane.f32.xlu0 %v2211
    %v2213 = vpop.xlane.xlu0 %2212
    %v2214 = vsel %vm474, %v2190, 0.0
    %2215 = vadd.xlane.f32.xlu0 %v2214
    %v2216 = vpop.xlane.xlu0 %2215
    %v2217 = vsel %vm474, %v2191, 0.0
    %2218 = vadd.xlane.f32.xlu0 %v2217
    %v2219 = vpop.xlane.xlu0 %2218
    %v2220 = vsel %vm474, %v2192, 0.0
    %2221 = vadd.xlane.f32.xlu0 %v2220
    %v2222 = vpop.xlane.xlu0 %2221
    %v2223 = vmul.f32 %v2195, %v505
    %v2224 = vmul.f32 %v2198, %v505
    %v2225 = vmul.f32 %v2201, %v505
    %v2226 = vmul.f32 %v2204, %v505
    %v2227 = vmul.f32 %v2207, %v505
    %v2228 = vmul.f32 %v2210, %v505
    %v2229 = vmul.f32 %v2213, %v505
    %v2230 = vmul.f32 %v2216, %v505
    %v2231 = vmul.f32 %v2219, %v505
    %v2232 = vmul.f32 %v2222, %v505
    %v2233 = vsub.f32 %v2183, %v2223
    %v2234 = vsub.f32 %v2184, %v2224
    %v2235 = vsub.f32 %v2185, %v2225
    %v2236 = vsub.f32 %v2186, %v2226
    %v2237 = vsub.f32 %v2187, %v2227
    %v2238 = vsub.f32 %v2188, %v2228
    %v2239 = vsub.f32 %v2189, %v2229
    %v2240 = vsub.f32 %v2190, %v2230
    %v2241 = vsub.f32 %v2191, %v2231
    %v2242 = vsub.f32 %v2192, %v2232
    %v2243 = vmul.f32 %v2233, %v2233
    %v2244 = vmul.f32 %v2234, %v2234
    %v2245 = vmul.f32 %v2235, %v2235
    %v2246 = vmul.f32 %v2236, %v2236
    %v2247 = vmul.f32 %v2237, %v2237
    %v2248 = vmul.f32 %v2238, %v2238
    %v2249 = vmul.f32 %v2239, %v2239
    %v2250 = vmul.f32 %v2240, %v2240
    %v2251 = vmul.f32 %v2241, %v2241
    %v2252 = vmul.f32 %v2242, %v2242
    %v2253 = vsel %vm474, %v2243, 0.0
    %2254 = vadd.xlane.f32.xlu0 %v2253
    %v2255 = vpop.xlane.xlu0 %2254
    %v2256 = vsel %vm474, %v2244, 0.0
    %2257 = vadd.xlane.f32.xlu0 %v2256
    %v2258 = vpop.xlane.xlu0 %2257
    %v2259 = vsel %vm474, %v2245, 0.0
    %2260 = vadd.xlane.f32.xlu0 %v2259
    %v2261 = vpop.xlane.xlu0 %2260
    %v2262 = vsel %vm474, %v2246, 0.0
    %2263 = vadd.xlane.f32.xlu0 %v2262
    %v2264 = vpop.xlane.xlu0 %2263
    %v2265 = vsel %vm474, %v2247, 0.0
    %2266 = vadd.xlane.f32.xlu0 %v2265
    %v2267 = vpop.xlane.xlu0 %2266
    %v2268 = vsel %vm474, %v2248, 0.0
    %2269 = vadd.xlane.f32.xlu0 %v2268
    %v2270 = vpop.xlane.xlu0 %2269
    %v2271 = vsel %vm474, %v2249, 0.0
    %2272 = vadd.xlane.f32.xlu0 %v2271
    %v2273 = vpop.xlane.xlu0 %2272
    %v2274 = vsel %vm474, %v2250, 0.0
    %2275 = vadd.xlane.f32.xlu0 %v2274
    %v2276 = vpop.xlane.xlu0 %2275
    %v2277 = vsel %vm474, %v2251, 0.0
    %2278 = vadd.xlane.f32.xlu0 %v2277
    %v2279 = vpop.xlane.xlu0 %2278
    %v2280 = vsel %vm474, %v2252, 0.0
    %2281 = vadd.xlane.f32.xlu0 %v2280
    %v2282 = vpop.xlane.xlu0 %2281
    %v2283 = vmul.f32 %v2255, %v505
    %v2284 = vmul.f32 %v2258, %v505
    %v2285 = vmul.f32 %v2261, %v505
    %v2286 = vmul.f32 %v2264, %v505
    %v2287 = vmul.f32 %v2267, %v505
    %v2288 = vmul.f32 %v2270, %v505
    %v2289 = vmul.f32 %v2273, %v505
    %v2290 = vmul.f32 %v2276, %v505
    %v2291 = vmul.f32 %v2279, %v505
    %v2292 = vmul.f32 %v2282, %v505
    %v2293 = vadd.f32 %v2283, 1e-12
    %v2294 = vadd.f32 %v2284, 1e-12
    %v2295 = vadd.f32 %v2285, 1e-12
    %v2296 = vadd.f32 %v2286, 1e-12
    %v2297 = vadd.f32 %v2287, 1e-12
    %v2298 = vadd.f32 %v2288, 1e-12
    %v2299 = vadd.f32 %v2289, 1e-12
    %v2300 = vadd.f32 %v2290, 1e-12
    %v2301 = vadd.f32 %v2291, 1e-12
    %v2302 = vadd.f32 %v2292, 1e-12
    %v2303 = vrsqrt.pop %v2293
    %v2304 = vrsqrt.pop %v2294
    %v2305 = vrsqrt.pop %v2295
    %v2306 = vrsqrt.pop %v2296
    %v2307 = vrsqrt.pop %v2297
    %v2308 = vrsqrt.pop %v2298
    %v2309 = vrsqrt.pop %v2299
    %v2310 = vrsqrt.pop %v2300
    %v2311 = vrsqrt.pop %v2301
    %v2312 = vrsqrt.pop %v2302
    %v2313 = vmul.f32 %v2233, %v2303
    %v2314 = vmul.f32 %v2234, %v2304
    %v2315 = vmul.f32 %v2235, %v2305
    %v2316 = vmul.f32 %v2236, %v2306
    %v2317 = vmul.f32 %v2237, %v2307
    %v2318 = vmul.f32 %v2238, %v2308
    %v2319 = vmul.f32 %v2239, %v2309
    %v2320 = vmul.f32 %v2240, %v2310
    %v2321 = vmul.f32 %v2241, %v2311
    %v2322 = vmul.f32 %v2242, %v2312
    %v2323 = vlaneseq
    %v2324 = vshrl.u32 %v2323, 7
    %v2325 = vsub.s32 4, %v2324
    %v2326 = vrot.slane %v36, %v2325
    %v2327 = vmul.f32 %v2313, %v2326
    %v2328 = vmul.f32 %v2314, %v2326
    %v2329 = vmul.f32 %v2315, %v2326
    %v2330 = vmul.f32 %v2316, %v2326
    %v2331 = vmul.f32 %v2317, %v2326
    %v2332 = vmul.f32 %v2318, %v2326
    %v2333 = vmul.f32 %v2319, %v2326
    %v2334 = vmul.f32 %v2320, %v2326
    %v2335 = vmul.f32 %v2321, %v2326
    %v2336 = vmul.f32 %v2322, %v2326
    %v2337 = vlaneseq
    %v2338 = vshrl.u32 %v2337, 7
    %v2339 = vsub.s32 5, %v2338
    %v2340 = vrot.slane %v36, %v2339
    %v2341 = vadd.f32 %v2327, %v2340
    %v2342 = vadd.f32 %v2328, %v2340
    %v2343 = vadd.f32 %v2329, %v2340
    %v2344 = vadd.f32 %v2330, %v2340
    %v2345 = vadd.f32 %v2331, %v2340
    %v2346 = vadd.f32 %v2332, %v2340
    %v2347 = vadd.f32 %v2333, %v2340
    %v2348 = vadd.f32 %v2334, %v2340
    %v2349 = vadd.f32 %v2335, %v2340
    %v2350 = vadd.f32 %v2336, %v2340
    %v2351 = vmax.f32 %v2341, 0.0
    %v2352 = vmax.f32 %v2342, 0.0
    %v2353 = vmax.f32 %v2343, 0.0
    %v2354 = vmax.f32 %v2344, 0.0
    %v2355 = vmax.f32 %v2345, 0.0
    %v2356 = vmax.f32 %v2346, 0.0
    %v2357 = vmax.f32 %v2347, 0.0
    %v2358 = vmax.f32 %v2348, 0.0
    %v2359 = vmax.f32 %v2349, 0.0
    %v2360 = vmax.f32 %v2350, 0.0
    %s2361 = scalar_lea.vmem %s5, 32
    %v2362 = vld [vmem:[%s2361] sm:$0xff]
    %v2363 = vld [vmem:[%s2361 + $0x8] sm:$0xff]
    %v2364 = vld [vmem:[%s2361 + $0x10] sm:$0xff]
    %v2365 = vld [vmem:[%s2361 + $0x18] sm:$0xff]
    %v2366 = vlaneseq
    %v2367 = vshrl.u32 %v2366, 7
    %v2368 = vsub.s32 6, %v2367
    %v2369 = vrot.slane %v36, %v2368
    %v2371 = vsel %vm474, %v2351, 0
    %v2374 = vsel %vm474, %v2352, 0
    %v2377 = vsel %vm474, %v2353, 0
    %v2380 = vsel %vm474, %v2354, 0
    %v2383 = vsel %vm474, %v2355, 0
    %v2386 = vsel %vm474, %v2356, 0
    %v2389 = vsel %vm474, %v2357, 0
    %v2392 = vsel %vm474, %v2358, 0
    %v2395 = vsel %vm474, %v2359, 0
    %v2398 = vsel %vm474, %v2360, 0
    %2400 = vmatprep.subr.mxu0 0.0
    %2401 = vmatpush1.msra.mxu0 %v2362
    %2402 = vmatprep.subr.mxu0 0.0
    %2403 = vmatpush1.msra.mxu0 %v2363
    %2404 = vmatprep.subr.mxu0 0.0
    %2405 = vmatpush1.msra.mxu0 %v2364
    %2406 = vmatprep.subr.mxu0 0.0
    %2407 = vmatpush1.msra.mxu0 %v2365
    %2408 = vmatprep.subr.mxu0 0.0
    %2409 = vmatpush1.msra.mxu0 0.0
    %2410 = vmatprep.subr.mxu0 0.0
    %2411 = vmatpush1.msra.mxu0 0.0
    %2412 = vmatprep.subr.mxu0 0.0
    %2413 = vmatpush1.msra.mxu0 0.0
    %2414 = vmatprep.subr.mxu0 0.0
    %2415 = vmatpush1.msra.mxu0 0.0
    %2416 = vmatprep.subr.mxu0 0.0
    %2417 = vmatpush1.msra.mxu0 0.0
    %2418 = vmatprep.subr.mxu0 0.0
    %2419 = vmatpush1.msra.mxu0 0.0
    %2420 = vmatprep.subr.mxu0 0.0
    %2421 = vmatpush1.msra.mxu0 0.0
    %2422 = vmatprep.subr.mxu0 0.0
    %2423 = vmatpush1.msra.mxu0 0.0
    %2424 = vmatprep.subr.mxu0 0.0
    %2425 = vmatpush1.msra.mxu0 0.0
    %2426 = vmatprep.subr.mxu0 0.0
    %2427 = vmatpush1.msra.mxu0 0.0
    %2428 = vmatprep.subr.mxu0 0.0
    %2429 = vmatpush1.msra.mxu0 0.0
    %2430 = vmatprep.subr.mxu0 0.0
    %2431 = vmatpush1.msra.mxu0 0.0
    %2432 = vmatprep.subr.mxu0 0.0
    %2433 = vmatpush1.msra.mxu0 0.0
    %2434 = vmatprep.subr.mxu0 0.0
    %2435 = vmatpush1.msra.mxu0 0.0
    %2436 = vmatprep.subr.mxu0 0.0
    %2437 = vmatpush1.msra.mxu0 0.0
    %2438 = vmatprep.subr.mxu0 0.0
    %2439 = vmatpush1.msra.mxu0 0.0
    %2440 = vmatprep.subr.mxu0 0.0
    %2441 = vmatpush1.msra.mxu0 0.0
    %2442 = vmatprep.subr.mxu0 0.0
    %2443 = vmatpush1.msra.mxu0 0.0
    %2444 = vmatprep.subr.mxu0 0.0
    %2445 = vmatpush1.msra.mxu0 0.0
    %2446 = vmatprep.subr.mxu0 0.0
    %2447 = vmatpush1.msra.mxu0 0.0
    %2448 = vmatprep.subr.mxu0 0.0
    %2449 = vmatpush1.msra.mxu0 0.0
    %2450 = vmatprep.subr.mxu0 0.0
    %2451 = vmatpush1.msra.mxu0 0.0
    %2452 = vmatprep.subr.mxu0 0.0
    %2453 = vmatpush1.msra.mxu0 0.0
    %2454 = vmatprep.subr.mxu0 0.0
    %2455 = vmatpush1.msra.mxu0 0.0
    %2456 = vmatprep.subr.mxu0 0.0
    %2457 = vmatpush1.msra.mxu0 0.0
    %2458 = vmatprep.subr.mxu0 0.0
    %2459 = vmatpush1.msra.mxu0 0.0
    %2460 = vmatprep.subr.mxu0 0.0
    %2461 = vmatpush1.msra.mxu0 0.0
    %2462 = vmatprep.subr.mxu0 0.0
    %2463 = vmatpush1.msra.mxu0 0.0
    %2464 = vmatprep.mubr.f32.mxu0 0.0
    %2465 = vmatmul.mubr.f32.gmra.mrb[0].mxu0 %v2371
    %v2466 = vpop.f32.mrb[0].mxu0
    %v2467 = vadd.f32 %v2369, %v2466
    %v2468 = vpop.f32.mrb[0].mxu0
    %2469 = vmatprep.mubr.f32.mxu0 0.0
    %2470 = vmatmul.mubr.f32.gmra.mrb[0].mxu0 %v2374
    %v2471 = vpop.f32.mrb[0].mxu0
    %v2472 = vadd.f32 %v2369, %v2471
    %v2473 = vpop.f32.mrb[0].mxu0
    %2474 = vmatprep.mubr.f32.mxu0 0.0
    %2475 = vmatmul.mubr.f32.gmra.mrb[0].mxu0 %v2377
    %v2476 = vpop.f32.mrb[0].mxu0
    %v2477 = vadd.f32 %v2369, %v2476
    %v2478 = vpop.f32.mrb[0].mxu0
    %2479 = vmatprep.mubr.f32.mxu0 0.0
    %2480 = vmatmul.mubr.f32.gmra.mrb[0].mxu0 %v2380
    %v2481 = vpop.f32.mrb[0].mxu0
    %v2482 = vadd.f32 %v2369, %v2481
    %v2483 = vpop.f32.mrb[0].mxu0
    %2484 = vmatprep.mubr.f32.mxu0 0.0
    %2485 = vmatmul.mubr.f32.gmra.mrb[0].mxu0 %v2383
    %v2486 = vpop.f32.mrb[0].mxu0
    %v2487 = vadd.f32 %v2369, %v2486
    %v2488 = vpop.f32.mrb[0].mxu0
    %2489 = vmatprep.mubr.f32.mxu0 0.0
    %2490 = vmatmul.mubr.f32.gmra.mrb[0].mxu0 %v2386
    %v2491 = vpop.f32.mrb[0].mxu0
    %v2492 = vadd.f32 %v2369, %v2491
    %v2493 = vpop.f32.mrb[0].mxu0
    %2494 = vmatprep.mubr.f32.mxu0 0.0
    %2495 = vmatmul.mubr.f32.gmra.mrb[0].mxu0 %v2389
    %v2496 = vpop.f32.mrb[0].mxu0
    %v2497 = vadd.f32 %v2369, %v2496
    %v2498 = vpop.f32.mrb[0].mxu0
    %2499 = vmatprep.mubr.f32.mxu0 0.0
    %2500 = vmatmul.mubr.f32.gmra.mrb[0].mxu0 %v2392
    %v2501 = vpop.f32.mrb[0].mxu0
    %v2502 = vadd.f32 %v2369, %v2501
    %v2503 = vpop.f32.mrb[0].mxu0
    %2504 = vmatprep.mubr.f32.mxu0 0.0
    %2505 = vmatmul.mubr.f32.gmra.mrb[0].mxu0 %v2395
    %v2506 = vpop.f32.mrb[0].mxu0
    %v2507 = vadd.f32 %v2369, %v2506
    %v2508 = vpop.f32.mrb[0].mxu0
    %2509 = vmatprep.mubr.f32.mxu0 0.0
    %2510 = vmatmul.mubr.f32.gmra.mrb[0].mxu0 %v2398
    %v2511 = vpop.f32.mrb[0].mxu0
    %v2512 = vadd.f32 %v2369, %v2511
    %v2513 = vpop.f32.mrb[0].mxu0
    %2514 = vdwg.mxu0
    %v2515 = vsel %vm191, %v2467, 0.0
    %2516 = vadd.xlane.f32.xlu0 %v2515
    %v2517 = vpop.xlane.xlu0 %2516
    %v2518 = vsel %vm191, %v2472, 0.0
    %2519 = vadd.xlane.f32.xlu0 %v2518
    %v2520 = vpop.xlane.xlu0 %2519
    %v2521 = vsel %vm191, %v2477, 0.0
    %2522 = vadd.xlane.f32.xlu0 %v2521
    %v2523 = vpop.xlane.xlu0 %2522
    %v2524 = vsel %vm191, %v2482, 0.0
    %2525 = vadd.xlane.f32.xlu0 %v2524
    %v2526 = vpop.xlane.xlu0 %2525
    %v2527 = vsel %vm191, %v2487, 0.0
    %2528 = vadd.xlane.f32.xlu0 %v2527
    %v2529 = vpop.xlane.xlu0 %2528
    %v2530 = vsel %vm191, %v2492, 0.0
    %2531 = vadd.xlane.f32.xlu0 %v2530
    %v2532 = vpop.xlane.xlu0 %2531
    %v2533 = vsel %vm191, %v2497, 0.0
    %2534 = vadd.xlane.f32.xlu0 %v2533
    %v2535 = vpop.xlane.xlu0 %2534
    %v2536 = vsel %vm191, %v2502, 0.0
    %2537 = vadd.xlane.f32.xlu0 %v2536
    %v2538 = vpop.xlane.xlu0 %2537
    %v2539 = vsel %vm191, %v2507, 0.0
    %2540 = vadd.xlane.f32.xlu0 %v2539
    %v2541 = vpop.xlane.xlu0 %2540
    %v2542 = vsel %vm191, %v2512, 0.0
    %2543 = vadd.xlane.f32.xlu0 %v2542
    %v2544 = vpop.xlane.xlu0 %2543
    %v2545 = vmul.f32 %v2517, %v222
    %v2546 = vmul.f32 %v2520, %v222
    %v2547 = vmul.f32 %v2523, %v222
    %v2548 = vmul.f32 %v2526, %v222
    %v2549 = vmul.f32 %v2529, %v222
    %v2550 = vmul.f32 %v2532, %v222
    %v2551 = vmul.f32 %v2535, %v222
    %v2552 = vmul.f32 %v2538, %v222
    %v2553 = vmul.f32 %v2541, %v222
    %v2554 = vmul.f32 %v2544, %v222
    %v2555 = vsub.f32 %v2467, %v2545
    %v2556 = vsub.f32 %v2472, %v2546
    %v2557 = vsub.f32 %v2477, %v2547
    %v2558 = vsub.f32 %v2482, %v2548
    %v2559 = vsub.f32 %v2487, %v2549
    %v2560 = vsub.f32 %v2492, %v2550
    %v2561 = vsub.f32 %v2497, %v2551
    %v2562 = vsub.f32 %v2502, %v2552
    %v2563 = vsub.f32 %v2507, %v2553
    %v2564 = vsub.f32 %v2512, %v2554
    %v2565 = vmul.f32 %v2555, %v2555
    %v2566 = vmul.f32 %v2556, %v2556
    %v2567 = vmul.f32 %v2557, %v2557
    %v2568 = vmul.f32 %v2558, %v2558
    %v2569 = vmul.f32 %v2559, %v2559
    %v2570 = vmul.f32 %v2560, %v2560
    %v2571 = vmul.f32 %v2561, %v2561
    %v2572 = vmul.f32 %v2562, %v2562
    %v2573 = vmul.f32 %v2563, %v2563
    %v2574 = vmul.f32 %v2564, %v2564
    %v2575 = vsel %vm191, %v2565, 0.0
    %2576 = vadd.xlane.f32.xlu0 %v2575
    %v2577 = vpop.xlane.xlu0 %2576
    %v2578 = vsel %vm191, %v2566, 0.0
    %2579 = vadd.xlane.f32.xlu0 %v2578
    %v2580 = vpop.xlane.xlu0 %2579
    %v2581 = vsel %vm191, %v2567, 0.0
    %2582 = vadd.xlane.f32.xlu0 %v2581
    %v2583 = vpop.xlane.xlu0 %2582
    %v2584 = vsel %vm191, %v2568, 0.0
    %2585 = vadd.xlane.f32.xlu0 %v2584
    %v2586 = vpop.xlane.xlu0 %2585
    %v2587 = vsel %vm191, %v2569, 0.0
    %2588 = vadd.xlane.f32.xlu0 %v2587
    %v2589 = vpop.xlane.xlu0 %2588
    %v2590 = vsel %vm191, %v2570, 0.0
    %2591 = vadd.xlane.f32.xlu0 %v2590
    %v2592 = vpop.xlane.xlu0 %2591
    %v2593 = vsel %vm191, %v2571, 0.0
    %2594 = vadd.xlane.f32.xlu0 %v2593
    %v2595 = vpop.xlane.xlu0 %2594
    %v2596 = vsel %vm191, %v2572, 0.0
    %2597 = vadd.xlane.f32.xlu0 %v2596
    %v2598 = vpop.xlane.xlu0 %2597
    %v2599 = vsel %vm191, %v2573, 0.0
    %2600 = vadd.xlane.f32.xlu0 %v2599
    %v2601 = vpop.xlane.xlu0 %2600
    %v2602 = vsel %vm191, %v2574, 0.0
    %2603 = vadd.xlane.f32.xlu0 %v2602
    %v2604 = vpop.xlane.xlu0 %2603
    %v2605 = vmul.f32 %v2577, %v222
    %v2606 = vmul.f32 %v2580, %v222
    %v2607 = vmul.f32 %v2583, %v222
    %v2608 = vmul.f32 %v2586, %v222
    %v2609 = vmul.f32 %v2589, %v222
    %v2610 = vmul.f32 %v2592, %v222
    %v2611 = vmul.f32 %v2595, %v222
    %v2612 = vmul.f32 %v2598, %v222
    %v2613 = vmul.f32 %v2601, %v222
    %v2614 = vmul.f32 %v2604, %v222
    %v2615 = vadd.f32 %v2605, 1e-12
    %v2616 = vadd.f32 %v2606, 1e-12
    %v2617 = vadd.f32 %v2607, 1e-12
    %v2618 = vadd.f32 %v2608, 1e-12
    %v2619 = vadd.f32 %v2609, 1e-12
    %v2620 = vadd.f32 %v2610, 1e-12
    %v2621 = vadd.f32 %v2611, 1e-12
    %v2622 = vadd.f32 %v2612, 1e-12
    %v2623 = vadd.f32 %v2613, 1e-12
    %v2624 = vadd.f32 %v2614, 1e-12
    %v2625 = vrsqrt.pop %v2615
    %v2626 = vrsqrt.pop %v2616
    %v2627 = vrsqrt.pop %v2617
    %v2628 = vrsqrt.pop %v2618
    %v2629 = vrsqrt.pop %v2619
    %v2630 = vrsqrt.pop %v2620
    %v2631 = vrsqrt.pop %v2621
    %v2632 = vrsqrt.pop %v2622
    %v2633 = vrsqrt.pop %v2623
    %v2634 = vrsqrt.pop %v2624
    %v2635 = vmul.f32 %v2555, %v2625
    %v2636 = vmul.f32 %v2556, %v2626
    %v2637 = vmul.f32 %v2557, %v2627
    %v2638 = vmul.f32 %v2558, %v2628
    %v2639 = vmul.f32 %v2559, %v2629
    %v2640 = vmul.f32 %v2560, %v2630
    %v2641 = vmul.f32 %v2561, %v2631
    %v2642 = vmul.f32 %v2562, %v2632
    %v2643 = vmul.f32 %v2563, %v2633
    %v2644 = vmul.f32 %v2564, %v2634
    %v2645 = vlaneseq
    %v2646 = vshrl.u32 %v2645, 7
    %v2647 = vsub.s32 7, %v2646
    %v2648 = vrot.slane %v36, %v2647
    %v2649 = vmul.f32 %v2635, %v2648
    %v2650 = vmul.f32 %v2636, %v2648
    %v2651 = vmul.f32 %v2637, %v2648
    %v2652 = vmul.f32 %v2638, %v2648
    %v2653 = vmul.f32 %v2639, %v2648
    %v2654 = vmul.f32 %v2640, %v2648
    %v2655 = vmul.f32 %v2641, %v2648
    %v2656 = vmul.f32 %v2642, %v2648
    %v2657 = vmul.f32 %v2643, %v2648
    %v2658 = vmul.f32 %v2644, %v2648
    %v2659 = vlaneseq
    %v2660 = vshrl.u32 %v2659, 7
    %v2661 = vsub.s32 0, %v2660
    %v2662 = vrot.slane %v37, %v2661
    %v2663 = vadd.f32 %v2649, %v2662
    %v2664 = vadd.f32 %v2650, %v2662
    %v2665 = vadd.f32 %v2651, %v2662
    %v2666 = vadd.f32 %v2652, %v2662
    %v2667 = vadd.f32 %v2653, %v2662
    %v2668 = vadd.f32 %v2654, %v2662
    %v2669 = vadd.f32 %v2655, %v2662
    %v2670 = vadd.f32 %v2656, %v2662
    %v2671 = vadd.f32 %v2657, %v2662
    %v2672 = vadd.f32 %v2658, %v2662
    %v2673 = vmax.f32 %v2663, 0.0
    %v2674 = vmax.f32 %v2664, 0.0
    %v2675 = vmax.f32 %v2665, 0.0
    %v2676 = vmax.f32 %v2666, 0.0
    %v2677 = vmax.f32 %v2667, 0.0
    %v2678 = vmax.f32 %v2668, 0.0
    %v2679 = vmax.f32 %v2669, 0.0
    %v2680 = vmax.f32 %v2670, 0.0
    %v2681 = vmax.f32 %v2671, 0.0
    %v2682 = vmax.f32 %v2672, 0.0
    %v2683 = vsel %vm975, %v2682, 0.0
    %v2684 = vsel %vm976, %v2673, 0.0
    %v2685 = vsel %vm977, %v2674, 0.0
    %v2686 = vsel %vm978, %v2675, 0.0
    %v2687 = vsel %vm979, %v2676, 0.0
    %v2688 = vsel %vm980, %v2677, 0.0
    %v2689 = vsel %vm981, %v2678, 0.0
    %v2690 = vsel %vm982, %v2679, 0.0
    %v2691 = vsel %vm983, %v2680, 0.0
    %v2692 = vsel %vm984, %v2681, 0.0
    %2693 = vst.msk [vmem:[#allocation2] sm:$0xff] %vm191, %v2683
    %2694 = vst.msk [vmem:[#allocation2 + $0x8] sm:$0xff] %vm191, %v2684
    %2695 = vst.msk [vmem:[#allocation2 + $0x10] sm:$0xff] %vm191, %v2685
    %2696 = vst.msk [vmem:[#allocation2 + $0x18] sm:$0xff] %vm191, %v2686
    %2697 = vst.msk [vmem:[#allocation2 + $0x20] sm:$0xff] %vm191, %v2687
    %2698 = vst.msk [vmem:[#allocation2 + $0x28] sm:$0xff] %vm191, %v2688
    %2699 = vst.msk [vmem:[#allocation2 + $0x30] sm:$0xff] %vm191, %v2689
    %2700 = vst.msk [vmem:[#allocation2 + $0x38] sm:$0xff] %vm191, %v2690
    %2701 = vst.msk [vmem:[#allocation2 + $0x40] sm:$0xff] %vm191, %v2691
    %2702 = vst.msk [vmem:[#allocation2 + $0x48] sm:$0xff] %vm191, %v2692
    %v2703 = vrot.slane %v2673, 1
    %v2704 = vrot.slane %v2674, 1
    %v2705 = vrot.slane %v2675, 1
    %v2706 = vrot.slane %v2676, 1
    %v2707 = vrot.slane %v2677, 1
    %v2708 = vrot.slane %v2678, 1
    %v2709 = vrot.slane %v2679, 1
    %v2710 = vrot.slane %v2680, 1
    %v2711 = vrot.slane %v2681, 1
    %v2712 = vrot.slane %v2682, 1
    %v2713 = vsel %vm1015, %v2711, %v2712
    %v2714 = vsel %vm1015, %v2710, %v2711
    %v2715 = vsel %vm1015, %v2709, %v2710
    %v2716 = vsel %vm1015, %v2708, %v2709
    %v2717 = vsel %vm1015, %v2707, %v2708
    %v2718 = vsel %vm1015, %v2706, %v2707
    %v2719 = vsel %vm1015, %v2705, %v2706
    %v2720 = vsel %vm1015, %v2704, %v2705
    %v2721 = vsel %vm1015, %v2703, %v2704
    %v2722 = vsel %vm1015, %v2712, %v2703
    %v2723 = vsel %vm1036, %v2722, 0.0
    %v2724 = vsel %vm1037, %v2721, 0.0
    %v2725 = vsel %vm1038, %v2720, 0.0
    %v2726 = vsel %vm1039, %v2719, 0.0
    %v2727 = vsel %vm1040, %v2718, 0.0
    %v2728 = vsel %vm1041, %v2717, 0.0
    %v2729 = vsel %vm1042, %v2716, 0.0
    %v2730 = vsel %vm1043, %v2715, 0.0
    %v2731 = vsel %vm1044, %v2714, 0.0
    %v2732 = vsel %vm1045, %v2713, 0.0
    %2743 = vrot.lane.b32.xlu0 %v2723, 16
    %v2744 = vpop.permute.xlu0 %2743
    %2745 = vrot.lane.b32.xlu0 %v2724, 16
    %v2746 = vpop.permute.xlu0 %2745
    %2747 = vrot.lane.b32.xlu0 %v2725, 16
    %v2748 = vpop.permute.xlu0 %2747
    %2749 = vrot.lane.b32.xlu0 %v2726, 16
    %v2750 = vpop.permute.xlu0 %2749
    %2751 = vrot.lane.b32.xlu0 %v2727, 16
    %v2752 = vpop.permute.xlu0 %2751
    %2753 = vrot.lane.b32.xlu0 %v2728, 16
    %v2754 = vpop.permute.xlu0 %2753
    %2755 = vrot.lane.b32.xlu0 %v2729, 16
    %v2756 = vpop.permute.xlu0 %2755
    %2757 = vrot.lane.b32.xlu0 %v2730, 16
    %v2758 = vpop.permute.xlu0 %2757
    %2759 = vrot.lane.b32.xlu0 %v2731, 16
    %v2760 = vpop.permute.xlu0 %2759
    %2761 = vrot.lane.b32.xlu0 %v2732, 16
    %v2762 = vpop.permute.xlu0 %2761
    %2773 = vst.msk [vmem:[#allocation2] sm:$0xff] %vm1096, %v2744
    %2774 = vst.msk [vmem:[#allocation2 + $0x8] sm:$0xff] %vm1096, %v2746
    %2775 = vst.msk [vmem:[#allocation2 + $0x10] sm:$0xff] %vm1096, %v2748
    %2776 = vst.msk [vmem:[#allocation2 + $0x18] sm:$0xff] %vm1096, %v2750
    %2777 = vst.msk [vmem:[#allocation2 + $0x20] sm:$0xff] %vm1096, %v2752
    %2778 = vst.msk [vmem:[#allocation2 + $0x28] sm:$0xff] %vm1096, %v2754
    %2779 = vst.msk [vmem:[#allocation2 + $0x30] sm:$0xff] %vm1096, %v2756
    %2780 = vst.msk [vmem:[#allocation2 + $0x38] sm:$0xff] %vm1096, %v2758
    %2781 = vst.msk [vmem:[#allocation2 + $0x40] sm:$0xff] %vm1096, %v2760
    %2782 = vst.msk [vmem:[#allocation2 + $0x48] sm:$0xff] %vm1096, %v2762
    %v2783 = vrot.slane %v2673, 2
    %v2784 = vrot.slane %v2674, 2
    %v2785 = vrot.slane %v2675, 2
    %v2786 = vrot.slane %v2676, 2
    %v2787 = vrot.slane %v2677, 2
    %v2788 = vrot.slane %v2678, 2
    %v2789 = vrot.slane %v2679, 2
    %v2790 = vrot.slane %v2680, 2
    %v2791 = vrot.slane %v2681, 2
    %v2792 = vrot.slane %v2682, 2
    %v2793 = vsel %vm1117, %v2791, %v2792
    %v2794 = vsel %vm1117, %v2790, %v2791
    %v2795 = vsel %vm1117, %v2789, %v2790
    %v2796 = vsel %vm1117, %v2788, %v2789
    %v2797 = vsel %vm1117, %v2787, %v2788
    %v2798 = vsel %vm1117, %v2786, %v2787
    %v2799 = vsel %vm1117, %v2785, %v2786
    %v2800 = vsel %vm1117, %v2784, %v2785
    %v2801 = vsel %vm1117, %v2783, %v2784
    %v2802 = vsel %vm1117, %v2792, %v2783
    %v2803 = vsel %vm1138, %v2802, 0.0
    %v2804 = vsel %vm1139, %v2801, 0.0
    %v2805 = vsel %vm1140, %v2800, 0.0
    %v2806 = vsel %vm1141, %v2799, 0.0
    %v2807 = vsel %vm1142, %v2798, 0.0
    %v2808 = vsel %vm1143, %v2797, 0.0
    %v2809 = vsel %vm1144, %v2796, 0.0
    %v2810 = vsel %vm1145, %v2795, 0.0
    %v2811 = vsel %vm1146, %v2794, 0.0
    %v2812 = vsel %vm1147, %v2793, 0.0
    %2823 = vrot.lane.b32.xlu0 %v2803, 32
    %v2824 = vpop.permute.xlu0 %2823
    %2825 = vrot.lane.b32.xlu0 %v2804, 32
    %v2826 = vpop.permute.xlu0 %2825
    %2827 = vrot.lane.b32.xlu0 %v2805, 32
    %v2828 = vpop.permute.xlu0 %2827
    %2829 = vrot.lane.b32.xlu0 %v2806, 32
    %v2830 = vpop.permute.xlu0 %2829
    %2831 = vrot.lane.b32.xlu0 %v2807, 32
    %v2832 = vpop.permute.xlu0 %2831
    %2833 = vrot.lane.b32.xlu0 %v2808, 32
    %v2834 = vpop.permute.xlu0 %2833
    %2835 = vrot.lane.b32.xlu0 %v2809, 32
    %v2836 = vpop.permute.xlu0 %2835
    %2837 = vrot.lane.b32.xlu0 %v2810, 32
    %v2838 = vpop.permute.xlu0 %2837
    %2839 = vrot.lane.b32.xlu0 %v2811, 32
    %v2840 = vpop.permute.xlu0 %2839
    %2841 = vrot.lane.b32.xlu0 %v2812, 32
    %v2842 = vpop.permute.xlu0 %2841
    %2853 = vst.msk [vmem:[#allocation2] sm:$0xff] %vm1198, %v2824
    %2854 = vst.msk [vmem:[#allocation2 + $0x8] sm:$0xff] %vm1198, %v2826
    %2855 = vst.msk [vmem:[#allocation2 + $0x10] sm:$0xff] %vm1198, %v2828
    %2856 = vst.msk [vmem:[#allocation2 + $0x18] sm:$0xff] %vm1198, %v2830
    %2857 = vst.msk [vmem:[#allocation2 + $0x20] sm:$0xff] %vm1198, %v2832
    %2858 = vst.msk [vmem:[#allocation2 + $0x28] sm:$0xff] %vm1198, %v2834
    %2859 = vst.msk [vmem:[#allocation2 + $0x30] sm:$0xff] %vm1198, %v2836
    %2860 = vst.msk [vmem:[#allocation2 + $0x38] sm:$0xff] %vm1198, %v2838
    %2861 = vst.msk [vmem:[#allocation2 + $0x40] sm:$0xff] %vm1198, %v2840
    %2862 = vst.msk [vmem:[#allocation2 + $0x48] sm:$0xff] %vm1198, %v2842
    %v2863 = vrot.slane %v2673, 3
    %v2864 = vrot.slane %v2674, 3
    %v2865 = vrot.slane %v2675, 3
    %v2866 = vrot.slane %v2676, 3
    %v2867 = vrot.slane %v2677, 3
    %v2868 = vrot.slane %v2678, 3
    %v2869 = vrot.slane %v2679, 3
    %v2870 = vrot.slane %v2680, 3
    %v2871 = vrot.slane %v2681, 3
    %v2872 = vrot.slane %v2682, 3
    %v2873 = vsel %vm1219, %v2871, %v2872
    %v2874 = vsel %vm1219, %v2870, %v2871
    %v2875 = vsel %vm1219, %v2869, %v2870
    %v2876 = vsel %vm1219, %v2868, %v2869
    %v2877 = vsel %vm1219, %v2867, %v2868
    %v2878 = vsel %vm1219, %v2866, %v2867
    %v2879 = vsel %vm1219, %v2865, %v2866
    %v2880 = vsel %vm1219, %v2864, %v2865
    %v2881 = vsel %vm1219, %v2863, %v2864
    %v2882 = vsel %vm1219, %v2872, %v2863
    %v2883 = vsel %vm1240, %v2882, 0.0
    %v2884 = vsel %vm1241, %v2881, 0.0
    %v2885 = vsel %vm1242, %v2880, 0.0
    %v2886 = vsel %vm1243, %v2879, 0.0
    %v2887 = vsel %vm1244, %v2878, 0.0
    %v2888 = vsel %vm1245, %v2877, 0.0
    %v2889 = vsel %vm1246, %v2876, 0.0
    %v2890 = vsel %vm1247, %v2875, 0.0
    %v2891 = vsel %vm1248, %v2874, 0.0
    %v2892 = vsel %vm1249, %v2873, 0.0
    %2903 = vrot.lane.b32.xlu0 %v2883, 48
    %v2904 = vpop.permute.xlu0 %2903
    %2905 = vrot.lane.b32.xlu0 %v2884, 48
    %v2906 = vpop.permute.xlu0 %2905
    %2907 = vrot.lane.b32.xlu0 %v2885, 48
    %v2908 = vpop.permute.xlu0 %2907
    %2909 = vrot.lane.b32.xlu0 %v2886, 48
    %v2910 = vpop.permute.xlu0 %2909
    %2911 = vrot.lane.b32.xlu0 %v2887, 48
    %v2912 = vpop.permute.xlu0 %2911
    %2913 = vrot.lane.b32.xlu0 %v2888, 48
    %v2914 = vpop.permute.xlu0 %2913
    %2915 = vrot.lane.b32.xlu0 %v2889, 48
    %v2916 = vpop.permute.xlu0 %2915
    %2917 = vrot.lane.b32.xlu0 %v2890, 48
    %v2918 = vpop.permute.xlu0 %2917
    %2919 = vrot.lane.b32.xlu0 %v2891, 48
    %v2920 = vpop.permute.xlu0 %2919
    %2921 = vrot.lane.b32.xlu0 %v2892, 48
    %v2922 = vpop.permute.xlu0 %2921
    %2933 = vst.msk [vmem:[#allocation2] sm:$0xff] %vm1300, %v2904
    %2934 = vst.msk [vmem:[#allocation2 + $0x8] sm:$0xff] %vm1300, %v2906
    %2935 = vst.msk [vmem:[#allocation2 + $0x10] sm:$0xff] %vm1300, %v2908
    %2936 = vst.msk [vmem:[#allocation2 + $0x18] sm:$0xff] %vm1300, %v2910
    %2937 = vst.msk [vmem:[#allocation2 + $0x20] sm:$0xff] %vm1300, %v2912
    %2938 = vst.msk [vmem:[#allocation2 + $0x28] sm:$0xff] %vm1300, %v2914
    %2939 = vst.msk [vmem:[#allocation2 + $0x30] sm:$0xff] %vm1300, %v2916
    %2940 = vst.msk [vmem:[#allocation2 + $0x38] sm:$0xff] %vm1300, %v2918
    %2941 = vst.msk [vmem:[#allocation2 + $0x40] sm:$0xff] %vm1300, %v2920
    %2942 = vst.msk [vmem:[#allocation2 + $0x48] sm:$0xff] %vm1300, %v2922
    %v2943 = vrot.slane %v2673, 4
    %v2944 = vrot.slane %v2674, 4
    %v2945 = vrot.slane %v2675, 4
    %v2946 = vrot.slane %v2676, 4
    %v2947 = vrot.slane %v2677, 4
    %v2948 = vrot.slane %v2678, 4
    %v2949 = vrot.slane %v2679, 4
    %v2950 = vrot.slane %v2680, 4
    %v2951 = vrot.slane %v2681, 4
    %v2952 = vrot.slane %v2682, 4
    %v2953 = vsel %vm1321, %v2951, %v2952
    %v2954 = vsel %vm1321, %v2950, %v2951
    %v2955 = vsel %vm1321, %v2949, %v2950
    %v2956 = vsel %vm1321, %v2948, %v2949
    %v2957 = vsel %vm1321, %v2947, %v2948
    %v2958 = vsel %vm1321, %v2946, %v2947
    %v2959 = vsel %vm1321, %v2945, %v2946
    %v2960 = vsel %vm1321, %v2944, %v2945
    %v2961 = vsel %vm1321, %v2943, %v2944
    %v2962 = vsel %vm1321, %v2952, %v2943
    %v2963 = vsel %vm1342, %v2962, 0.0
    %v2964 = vsel %vm1343, %v2961, 0.0
    %v2965 = vsel %vm1344, %v2960, 0.0
    %v2966 = vsel %vm1345, %v2959, 0.0
    %v2967 = vsel %vm1346, %v2958, 0.0
    %v2968 = vsel %vm1347, %v2957, 0.0
    %v2969 = vsel %vm1348, %v2956, 0.0
    %v2970 = vsel %vm1349, %v2955, 0.0
    %v2971 = vsel %vm1350, %v2954, 0.0
    %v2972 = vsel %vm1351, %v2953, 0.0
    %2983 = vrot.lane.b32.xlu0 %v2963, 64
    %v2984 = vpop.permute.xlu0 %2983
    %2985 = vrot.lane.b32.xlu0 %v2964, 64
    %v2986 = vpop.permute.xlu0 %2985
    %2987 = vrot.lane.b32.xlu0 %v2965, 64
    %v2988 = vpop.permute.xlu0 %2987
    %2989 = vrot.lane.b32.xlu0 %v2966, 64
    %v2990 = vpop.permute.xlu0 %2989
    %2991 = vrot.lane.b32.xlu0 %v2967, 64
    %v2992 = vpop.permute.xlu0 %2991
    %2993 = vrot.lane.b32.xlu0 %v2968, 64
    %v2994 = vpop.permute.xlu0 %2993
    %2995 = vrot.lane.b32.xlu0 %v2969, 64
    %v2996 = vpop.permute.xlu0 %2995
    %2997 = vrot.lane.b32.xlu0 %v2970, 64
    %v2998 = vpop.permute.xlu0 %2997
    %2999 = vrot.lane.b32.xlu0 %v2971, 64
    %v3000 = vpop.permute.xlu0 %2999
    %3001 = vrot.lane.b32.xlu0 %v2972, 64
    %v3002 = vpop.permute.xlu0 %3001
    %3013 = vst.msk [vmem:[#allocation2] sm:$0xff] %vm1402, %v2984
    %3014 = vst.msk [vmem:[#allocation2 + $0x8] sm:$0xff] %vm1402, %v2986
    %3015 = vst.msk [vmem:[#allocation2 + $0x10] sm:$0xff] %vm1402, %v2988
    %3016 = vst.msk [vmem:[#allocation2 + $0x18] sm:$0xff] %vm1402, %v2990
    %3017 = vst.msk [vmem:[#allocation2 + $0x20] sm:$0xff] %vm1402, %v2992
    %3018 = vst.msk [vmem:[#allocation2 + $0x28] sm:$0xff] %vm1402, %v2994
    %3019 = vst.msk [vmem:[#allocation2 + $0x30] sm:$0xff] %vm1402, %v2996
    %3020 = vst.msk [vmem:[#allocation2 + $0x38] sm:$0xff] %vm1402, %v2998
    %3021 = vst.msk [vmem:[#allocation2 + $0x40] sm:$0xff] %vm1402, %v3000
    %3022 = vst.msk [vmem:[#allocation2 + $0x48] sm:$0xff] %vm1402, %v3002
    %v3023 = vrot.slane %v2673, 5
    %v3024 = vrot.slane %v2674, 5
    %v3025 = vrot.slane %v2675, 5
    %v3026 = vrot.slane %v2676, 5
    %v3027 = vrot.slane %v2677, 5
    %v3028 = vrot.slane %v2678, 5
    %v3029 = vrot.slane %v2679, 5
    %v3030 = vrot.slane %v2680, 5
    %v3031 = vrot.slane %v2681, 5
    %v3032 = vrot.slane %v2682, 5
    %v3033 = vsel %vm1423, %v3031, %v3032
    %v3034 = vsel %vm1423, %v3030, %v3031
    %v3035 = vsel %vm1423, %v3029, %v3030
    %v3036 = vsel %vm1423, %v3028, %v3029
    %v3037 = vsel %vm1423, %v3027, %v3028
    %v3038 = vsel %vm1423, %v3026, %v3027
    %v3039 = vsel %vm1423, %v3025, %v3026
    %v3040 = vsel %vm1423, %v3024, %v3025
    %v3041 = vsel %vm1423, %v3023, %v3024
    %v3042 = vsel %vm1423, %v3032, %v3023
    %v3043 = vsel %vm1444, %v3042, 0.0
    %v3044 = vsel %vm1445, %v3041, 0.0
    %v3045 = vsel %vm1446, %v3040, 0.0
    %v3046 = vsel %vm1447, %v3039, 0.0
    %v3047 = vsel %vm1448, %v3038, 0.0
    %v3048 = vsel %vm1449, %v3037, 0.0
    %v3049 = vsel %vm1450, %v3036, 0.0
    %v3050 = vsel %vm1451, %v3035, 0.0
    %v3051 = vsel %vm1452, %v3034, 0.0
    %v3052 = vsel %vm1453, %v3033, 0.0
    %3063 = vrot.lane.b32.xlu0 %v3043, 80
    %v3064 = vpop.permute.xlu0 %3063
    %3065 = vrot.lane.b32.xlu0 %v3044, 80
    %v3066 = vpop.permute.xlu0 %3065
    %3067 = vrot.lane.b32.xlu0 %v3045, 80
    %v3068 = vpop.permute.xlu0 %3067
    %3069 = vrot.lane.b32.xlu0 %v3046, 80
    %v3070 = vpop.permute.xlu0 %3069
    %3071 = vrot.lane.b32.xlu0 %v3047, 80
    %v3072 = vpop.permute.xlu0 %3071
    %3073 = vrot.lane.b32.xlu0 %v3048, 80
    %v3074 = vpop.permute.xlu0 %3073
    %3075 = vrot.lane.b32.xlu0 %v3049, 80
    %v3076 = vpop.permute.xlu0 %3075
    %3077 = vrot.lane.b32.xlu0 %v3050, 80
    %v3078 = vpop.permute.xlu0 %3077
    %3079 = vrot.lane.b32.xlu0 %v3051, 80
    %v3080 = vpop.permute.xlu0 %3079
    %3081 = vrot.lane.b32.xlu0 %v3052, 80
    %v3082 = vpop.permute.xlu0 %3081
    %3093 = vst.msk [vmem:[#allocation2] sm:$0xff] %vm1504, %v3064
    %3094 = vst.msk [vmem:[#allocation2 + $0x8] sm:$0xff] %vm1504, %v3066
    %3095 = vst.msk [vmem:[#allocation2 + $0x10] sm:$0xff] %vm1504, %v3068
    %3096 = vst.msk [vmem:[#allocation2 + $0x18] sm:$0xff] %vm1504, %v3070
    %3097 = vst.msk [vmem:[#allocation2 + $0x20] sm:$0xff] %vm1504, %v3072
    %3098 = vst.msk [vmem:[#allocation2 + $0x28] sm:$0xff] %vm1504, %v3074
    %3099 = vst.msk [vmem:[#allocation2 + $0x30] sm:$0xff] %vm1504, %v3076
    %3100 = vst.msk [vmem:[#allocation2 + $0x38] sm:$0xff] %vm1504, %v3078
    %3101 = vst.msk [vmem:[#allocation2 + $0x40] sm:$0xff] %vm1504, %v3080
    %3102 = vst.msk [vmem:[#allocation2 + $0x48] sm:$0xff] %vm1504, %v3082
    %v3103 = vrot.slane %v2673, 6
    %v3104 = vrot.slane %v2674, 6
    %v3105 = vrot.slane %v2675, 6
    %v3106 = vrot.slane %v2676, 6
    %v3107 = vrot.slane %v2677, 6
    %v3108 = vrot.slane %v2678, 6
    %v3109 = vrot.slane %v2679, 6
    %v3110 = vrot.slane %v2680, 6
    %v3111 = vrot.slane %v2681, 6
    %v3112 = vrot.slane %v2682, 6
    %v3113 = vsel %vm1525, %v3111, %v3112
    %v3114 = vsel %vm1525, %v3110, %v3111
    %v3115 = vsel %vm1525, %v3109, %v3110
    %v3116 = vsel %vm1525, %v3108, %v3109
    %v3117 = vsel %vm1525, %v3107, %v3108
    %v3118 = vsel %vm1525, %v3106, %v3107
    %v3119 = vsel %vm1525, %v3105, %v3106
    %v3120 = vsel %vm1525, %v3104, %v3105
    %v3121 = vsel %vm1525, %v3103, %v3104
    %v3122 = vsel %vm1525, %v3112, %v3103
    %v3123 = vsel %vm1546, %v3122, 0.0
    %v3124 = vsel %vm1547, %v3121, 0.0
    %v3125 = vsel %vm1548, %v3120, 0.0
    %v3126 = vsel %vm1549, %v3119, 0.0
    %v3127 = vsel %vm1550, %v3118, 0.0
    %v3128 = vsel %vm1551, %v3117, 0.0
    %v3129 = vsel %vm1552, %v3116, 0.0
    %v3130 = vsel %vm1553, %v3115, 0.0
    %v3131 = vsel %vm1554, %v3114, 0.0
    %v3132 = vsel %vm1555, %v3113, 0.0
    %3143 = vrot.lane.b32.xlu0 %v3123, 96
    %v3144 = vpop.permute.xlu0 %3143
    %3145 = vrot.lane.b32.xlu0 %v3124, 96
    %v3146 = vpop.permute.xlu0 %3145
    %3147 = vrot.lane.b32.xlu0 %v3125, 96
    %v3148 = vpop.permute.xlu0 %3147
    %3149 = vrot.lane.b32.xlu0 %v3126, 96
    %v3150 = vpop.permute.xlu0 %3149
    %3151 = vrot.lane.b32.xlu0 %v3127, 96
    %v3152 = vpop.permute.xlu0 %3151
    %3153 = vrot.lane.b32.xlu0 %v3128, 96
    %v3154 = vpop.permute.xlu0 %3153
    %3155 = vrot.lane.b32.xlu0 %v3129, 96
    %v3156 = vpop.permute.xlu0 %3155
    %3157 = vrot.lane.b32.xlu0 %v3130, 96
    %v3158 = vpop.permute.xlu0 %3157
    %3159 = vrot.lane.b32.xlu0 %v3131, 96
    %v3160 = vpop.permute.xlu0 %3159
    %3161 = vrot.lane.b32.xlu0 %v3132, 96
    %v3162 = vpop.permute.xlu0 %3161
    %3173 = vst.msk [vmem:[#allocation2] sm:$0xff] %vm1606, %v3144
    %3174 = vst.msk [vmem:[#allocation2 + $0x8] sm:$0xff] %vm1606, %v3146
    %3175 = vst.msk [vmem:[#allocation2 + $0x10] sm:$0xff] %vm1606, %v3148
    %3176 = vst.msk [vmem:[#allocation2 + $0x18] sm:$0xff] %vm1606, %v3150
    %3177 = vst.msk [vmem:[#allocation2 + $0x20] sm:$0xff] %vm1606, %v3152
    %3178 = vst.msk [vmem:[#allocation2 + $0x28] sm:$0xff] %vm1606, %v3154
    %3179 = vst.msk [vmem:[#allocation2 + $0x30] sm:$0xff] %vm1606, %v3156
    %3180 = vst.msk [vmem:[#allocation2 + $0x38] sm:$0xff] %vm1606, %v3158
    %3181 = vst.msk [vmem:[#allocation2 + $0x40] sm:$0xff] %vm1606, %v3160
    %3182 = vst.msk [vmem:[#allocation2 + $0x48] sm:$0xff] %vm1606, %v3162
    %v3183 = vrot.slane %v2673, 7
    %v3184 = vrot.slane %v2674, 7
    %v3185 = vrot.slane %v2675, 7
    %v3186 = vrot.slane %v2676, 7
    %v3187 = vrot.slane %v2677, 7
    %v3188 = vrot.slane %v2678, 7
    %v3189 = vrot.slane %v2679, 7
    %v3190 = vrot.slane %v2680, 7
    %v3191 = vrot.slane %v2681, 7
    %v3192 = vrot.slane %v2682, 7
    %v3193 = vsel %vm1627, %v3191, %v3192
    %v3194 = vsel %vm1627, %v3190, %v3191
    %v3195 = vsel %vm1627, %v3189, %v3190
    %v3196 = vsel %vm1627, %v3188, %v3189
    %v3197 = vsel %vm1627, %v3187, %v3188
    %v3198 = vsel %vm1627, %v3186, %v3187
    %v3199 = vsel %vm1627, %v3185, %v3186
    %v3200 = vsel %vm1627, %v3184, %v3185
    %v3201 = vsel %vm1627, %v3183, %v3184
    %v3202 = vsel %vm1627, %v3192, %v3183
    %v3203 = vsel %vm1648, %v3202, 0.0
    %v3204 = vsel %vm1649, %v3201, 0.0
    %v3205 = vsel %vm1650, %v3200, 0.0
    %v3206 = vsel %vm1651, %v3199, 0.0
    %v3207 = vsel %vm1652, %v3198, 0.0
    %v3208 = vsel %vm1653, %v3197, 0.0
    %v3209 = vsel %vm1654, %v3196, 0.0
    %v3210 = vsel %vm1655, %v3195, 0.0
    %v3211 = vsel %vm1656, %v3194, 0.0
    %v3212 = vsel %vm1657, %v3193, 0.0
    %3223 = vrot.lane.b32.xlu0 %v3203, 112
    %v3224 = vpop.permute.xlu0 %3223
    %3225 = vrot.lane.b32.xlu0 %v3204, 112
    %v3226 = vpop.permute.xlu0 %3225
    %3227 = vrot.lane.b32.xlu0 %v3205, 112
    %v3228 = vpop.permute.xlu0 %3227
    %3229 = vrot.lane.b32.xlu0 %v3206, 112
    %v3230 = vpop.permute.xlu0 %3229
    %3231 = vrot.lane.b32.xlu0 %v3207, 112
    %v3232 = vpop.permute.xlu0 %3231
    %3233 = vrot.lane.b32.xlu0 %v3208, 112
    %v3234 = vpop.permute.xlu0 %3233
    %3235 = vrot.lane.b32.xlu0 %v3209, 112
    %v3236 = vpop.permute.xlu0 %3235
    %3237 = vrot.lane.b32.xlu0 %v3210, 112
    %v3238 = vpop.permute.xlu0 %3237
    %3239 = vrot.lane.b32.xlu0 %v3211, 112
    %v3240 = vpop.permute.xlu0 %3239
    %3241 = vrot.lane.b32.xlu0 %v3212, 112
    %v3242 = vpop.permute.xlu0 %3241
    %3253 = vst.msk [vmem:[#allocation2] sm:$0xff] %vm1708, %v3224
    %3254 = vst.msk [vmem:[#allocation2 + $0x8] sm:$0xff] %vm1708, %v3226
    %3255 = vst.msk [vmem:[#allocation2 + $0x10] sm:$0xff] %vm1708, %v3228
    %3256 = vst.msk [vmem:[#allocation2 + $0x18] sm:$0xff] %vm1708, %v3230
    %3257 = vst.msk [vmem:[#allocation2 + $0x20] sm:$0xff] %vm1708, %v3232
    %3258 = vst.msk [vmem:[#allocation2 + $0x28] sm:$0xff] %vm1708, %v3234
    %3259 = vst.msk [vmem:[#allocation2 + $0x30] sm:$0xff] %vm1708, %v3236
    %3260 = vst.msk [vmem:[#allocation2 + $0x38] sm:$0xff] %vm1708, %v3238
    %3261 = vst.msk [vmem:[#allocation2 + $0x40] sm:$0xff] %vm1708, %v3240
    %3262 = vst.msk [vmem:[#allocation2 + $0x48] sm:$0xff] %vm1708, %v3242
    %v3263 = vld [vmem:[#allocation2] sm:$0xff]
    %v3264 = vld [vmem:[#allocation2 + $0x8] sm:$0xff]
    %v3265 = vld [vmem:[#allocation2 + $0x10] sm:$0xff]
    %v3266 = vld [vmem:[#allocation2 + $0x18] sm:$0xff]
    %v3267 = vld [vmem:[#allocation2 + $0x20] sm:$0xff]
    %v3268 = vld [vmem:[#allocation2 + $0x28] sm:$0xff]
    %v3269 = vld [vmem:[#allocation2 + $0x30] sm:$0xff]
    %v3270 = vld [vmem:[#allocation2 + $0x38] sm:$0xff]
    %v3271 = vld [vmem:[#allocation2 + $0x40] sm:$0xff]
    %v3272 = vld [vmem:[#allocation2 + $0x48] sm:$0xff]
    %s3273 = scalar_lea.vmem %s6, 128
    %v3274 = vld [vmem:[%s3273] sm:$0xff]
    %v3275 = vld [vmem:[%s3273 + $0x8] sm:$0xff]
    %v3276 = vld [vmem:[%s3273 + $0x10] sm:$0xff]
    %v3277 = vld [vmem:[%s3273 + $0x18] sm:$0xff]
    %v3278 = vld [vmem:[%s3273 + $0x20] sm:$0xff]
    %v3279 = vld [vmem:[%s3273 + $0x28] sm:$0xff]
    %v3280 = vld [vmem:[%s3273 + $0x30] sm:$0xff]
    %v3281 = vld [vmem:[%s3273 + $0x38] sm:$0xff]
    %v3282 = vld [vmem:[%s3273 + $0x40] sm:$0xff]
    %v3283 = vld [vmem:[%s3273 + $0x48] sm:$0xff]
    %v3284 = vld [vmem:[%s3273 + $0x50] sm:$0xff]
    %v3285 = vld [vmem:[%s3273 + $0x58] sm:$0xff]
    %v3286 = vld [vmem:[%s3273 + $0x60] sm:$0xff]
    %v3287 = vld [vmem:[%s3273 + $0x68] sm:$0xff]
    %v3288 = vld [vmem:[%s3273 + $0x70] sm:$0xff]
    %v3289 = vld [vmem:[%s3273 + $0x78] sm:$0xff]
    %v3290 = vlaneseq
    %v3291 = vshrl.u32 %v3290, 7
    %v3292 = vsub.s32 1, %v3291
    %v3293 = vrot.slane %v37, %v3292
    %3294 = vmatprep.subr.mxu0 0.0
    %3295 = vmatpush1.msra.mxu0 %v3274
    %3296 = vmatprep.subr.mxu0 0.0
    %3297 = vmatpush1.msra.mxu0 %v3275
    %3298 = vmatprep.subr.mxu0 0.0
    %3299 = vmatpush1.msra.mxu0 %v3276
    %3300 = vmatprep.subr.mxu0 0.0
    %3301 = vmatpush1.msra.mxu0 %v3277
    %3302 = vmatprep.subr.mxu0 0.0
    %3303 = vmatpush1.msra.mxu0 %v3278
    %3304 = vmatprep.subr.mxu0 0.0
    %3305 = vmatpush1.msra.mxu0 %v3279
    %3306 = vmatprep.subr.mxu0 0.0
    %3307 = vmatpush1.msra.mxu0 %v3280
    %3308 = vmatprep.subr.mxu0 0.0
    %3309 = vmatpush1.msra.mxu0 %v3281
    %3310 = vmatprep.subr.mxu0 0.0
    %3311 = vmatpush1.msra.mxu0 %v3282
    %3312 = vmatprep.subr.mxu0 0.0
    %3313 = vmatpush1.msra.mxu0 %v3283
    %3314 = vmatprep.subr.mxu0 0.0
    %3315 = vmatpush1.msra.mxu0 %v3284
    %3316 = vmatprep.subr.mxu0 0.0
    %3317 = vmatpush1.msra.mxu0 %v3285
    %3318 = vmatprep.subr.mxu0 0.0
    %3319 = vmatpush1.msra.mxu0 %v3286
    %3320 = vmatprep.subr.mxu0 0.0
    %3321 = vmatpush1.msra.mxu0 %v3287
    %3322 = vmatprep.subr.mxu0 0.0
    %3323 = vmatpush1.msra.mxu0 %v3288
    %3324 = vmatprep.subr.mxu0 0.0
    %3325 = vmatpush1.msra.mxu0 %v3289
    %3326 = vmatprep.subr.mxu0 0.0
    %3327 = vmatpush1.msra.mxu0 0.0
    %3328 = vmatprep.subr.mxu0 0.0
    %3329 = vmatpush1.msra.mxu0 0.0
    %3330 = vmatprep.subr.mxu0 0.0
    %3331 = vmatpush1.msra.mxu0 0.0
    %3332 = vmatprep.subr.mxu0 0.0
    %3333 = vmatpush1.msra.mxu0 0.0
    %3334 = vmatprep.subr.mxu0 0.0
    %3335 = vmatpush1.msra.mxu0 0.0
    %3336 = vmatprep.subr.mxu0 0.0
    %3337 = vmatpush1.msra.mxu0 0.0
    %3338 = vmatprep.subr.mxu0 0.0
    %3339 = vmatpush1.msra.mxu0 0.0
    %3340 = vmatprep.subr.mxu0 0.0
    %3341 = vmatpush1.msra.mxu0 0.0
    %3342 = vmatprep.subr.mxu0 0.0
    %3343 = vmatpush1.msra.mxu0 0.0
    %3344 = vmatprep.subr.mxu0 0.0
    %3345 = vmatpush1.msra.mxu0 0.0
    %3346 = vmatprep.subr.mxu0 0.0
    %3347 = vmatpush1.msra.mxu0 0.0
    %3348 = vmatprep.subr.mxu0 0.0
    %3349 = vmatpush1.msra.mxu0 0.0
    %3350 = vmatprep.subr.mxu0 0.0
    %3351 = vmatpush1.msra.mxu0 0.0
    %3352 = vmatprep.subr.mxu0 0.0
    %3353 = vmatpush1.msra.mxu0 0.0
    %3354 = vmatprep.subr.mxu0 0.0
    %3355 = vmatpush1.msra.mxu0 0.0
    %3356 = vmatprep.subr.mxu0 0.0
    %3357 = vmatpush1.msra.mxu0 0.0
    %3358 = vmatprep.mubr.f32.mxu0 0.0
    %3359 = vmatmul.mubr.f32.gmra.mrb[0].mxu0 %v3263
    %v3360 = vpop.f32.mrb[0].mxu0
    %v3361 = vadd.f32 %v3293, %v3360
    %v3362 = vpop.f32.mrb[0].mxu0
    %3363 = vmatprep.mubr.f32.mxu0 0.0
    %3364 = vmatmul.mubr.f32.gmra.mrb[0].mxu0 %v3264
    %v3365 = vpop.f32.mrb[0].mxu0
    %v3366 = vadd.f32 %v3293, %v3365
    %v3367 = vpop.f32.mrb[0].mxu0
    %3368 = vmatprep.mubr.f32.mxu0 0.0
    %3369 = vmatmul.mubr.f32.gmra.mrb[0].mxu0 %v3265
    %v3370 = vpop.f32.mrb[0].mxu0
    %v3371 = vadd.f32 %v3293, %v3370
    %v3372 = vpop.f32.mrb[0].mxu0
    %3373 = vmatprep.mubr.f32.mxu0 0.0
    %3374 = vmatmul.mubr.f32.gmra.mrb[0].mxu0 %v3266
    %v3375 = vpop.f32.mrb[0].mxu0
    %v3376 = vadd.f32 %v3293, %v3375
    %v3377 = vpop.f32.mrb[0].mxu0
    %3378 = vmatprep.mubr.f32.mxu0 0.0
    %3379 = vmatmul.mubr.f32.gmra.mrb[0].mxu0 %v3267
    %v3380 = vpop.f32.mrb[0].mxu0
    %v3381 = vadd.f32 %v3293, %v3380
    %v3382 = vpop.f32.mrb[0].mxu0
    %3383 = vmatprep.mubr.f32.mxu0 0.0
    %3384 = vmatmul.mubr.f32.gmra.mrb[0].mxu0 %v3268
    %v3385 = vpop.f32.mrb[0].mxu0
    %v3386 = vadd.f32 %v3293, %v3385
    %v3387 = vpop.f32.mrb[0].mxu0
    %3388 = vmatprep.mubr.f32.mxu0 0.0
    %3389 = vmatmul.mubr.f32.gmra.mrb[0].mxu0 %v3269
    %v3390 = vpop.f32.mrb[0].mxu0
    %v3391 = vadd.f32 %v3293, %v3390
    %v3392 = vpop.f32.mrb[0].mxu0
    %3393 = vmatprep.mubr.f32.mxu0 0.0
    %3394 = vmatmul.mubr.f32.gmra.mrb[0].mxu0 %v3270
    %v3395 = vpop.f32.mrb[0].mxu0
    %v3396 = vadd.f32 %v3293, %v3395
    %v3397 = vpop.f32.mrb[0].mxu0
    %3398 = vmatprep.mubr.f32.mxu0 0.0
    %3399 = vmatmul.mubr.f32.gmra.mrb[0].mxu0 %v3271
    %v3400 = vpop.f32.mrb[0].mxu0
    %v3401 = vadd.f32 %v3293, %v3400
    %v3402 = vpop.f32.mrb[0].mxu0
    %3403 = vmatprep.mubr.f32.mxu0 0.0
    %3404 = vmatmul.mubr.f32.gmra.mrb[0].mxu0 %v3272
    %v3405 = vpop.f32.mrb[0].mxu0
    %v3406 = vadd.f32 %v3293, %v3405
    %v3407 = vpop.f32.mrb[0].mxu0
    %3408 = vdwg.mxu0
    %v3409 = vsel %vm191, %v3361, 0.0
    %3410 = vadd.xlane.f32.xlu0 %v3409
    %v3411 = vpop.xlane.xlu0 %3410
    %v3412 = vsel %vm191, %v3366, 0.0
    %3413 = vadd.xlane.f32.xlu0 %v3412
    %v3414 = vpop.xlane.xlu0 %3413
    %v3415 = vsel %vm191, %v3371, 0.0
    %3416 = vadd.xlane.f32.xlu0 %v3415
    %v3417 = vpop.xlane.xlu0 %3416
    %v3418 = vsel %vm191, %v3376, 0.0
    %3419 = vadd.xlane.f32.xlu0 %v3418
    %v3420 = vpop.xlane.xlu0 %3419
    %v3421 = vsel %vm191, %v3381, 0.0
    %3422 = vadd.xlane.f32.xlu0 %v3421
    %v3423 = vpop.xlane.xlu0 %3422
    %v3424 = vsel %vm191, %v3386, 0.0
    %3425 = vadd.xlane.f32.xlu0 %v3424
    %v3426 = vpop.xlane.xlu0 %3425
    %v3427 = vsel %vm191, %v3391, 0.0
    %3428 = vadd.xlane.f32.xlu0 %v3427
    %v3429 = vpop.xlane.xlu0 %3428
    %v3430 = vsel %vm191, %v3396, 0.0
    %3431 = vadd.xlane.f32.xlu0 %v3430
    %v3432 = vpop.xlane.xlu0 %3431
    %v3433 = vsel %vm191, %v3401, 0.0
    %3434 = vadd.xlane.f32.xlu0 %v3433
    %v3435 = vpop.xlane.xlu0 %3434
    %v3436 = vsel %vm191, %v3406, 0.0
    %3437 = vadd.xlane.f32.xlu0 %v3436
    %v3438 = vpop.xlane.xlu0 %3437
    %v3439 = vmul.f32 %v3411, %v222
    %v3440 = vmul.f32 %v3414, %v222
    %v3441 = vmul.f32 %v3417, %v222
    %v3442 = vmul.f32 %v3420, %v222
    %v3443 = vmul.f32 %v3423, %v222
    %v3444 = vmul.f32 %v3426, %v222
    %v3445 = vmul.f32 %v3429, %v222
    %v3446 = vmul.f32 %v3432, %v222
    %v3447 = vmul.f32 %v3435, %v222
    %v3448 = vmul.f32 %v3438, %v222
    %v3449 = vsub.f32 %v3361, %v3439
    %v3450 = vsub.f32 %v3366, %v3440
    %v3451 = vsub.f32 %v3371, %v3441
    %v3452 = vsub.f32 %v3376, %v3442
    %v3453 = vsub.f32 %v3381, %v3443
    %v3454 = vsub.f32 %v3386, %v3444
    %v3455 = vsub.f32 %v3391, %v3445
    %v3456 = vsub.f32 %v3396, %v3446
    %v3457 = vsub.f32 %v3401, %v3447
    %v3458 = vsub.f32 %v3406, %v3448
    %v3459 = vmul.f32 %v3449, %v3449
    %v3460 = vmul.f32 %v3450, %v3450
    %v3461 = vmul.f32 %v3451, %v3451
    %v3462 = vmul.f32 %v3452, %v3452
    %v3463 = vmul.f32 %v3453, %v3453
    %v3464 = vmul.f32 %v3454, %v3454
    %v3465 = vmul.f32 %v3455, %v3455
    %v3466 = vmul.f32 %v3456, %v3456
    %v3467 = vmul.f32 %v3457, %v3457
    %v3468 = vmul.f32 %v3458, %v3458
    %v3469 = vsel %vm191, %v3459, 0.0
    %3470 = vadd.xlane.f32.xlu0 %v3469
    %v3471 = vpop.xlane.xlu0 %3470
    %v3472 = vsel %vm191, %v3460, 0.0
    %3473 = vadd.xlane.f32.xlu0 %v3472
    %v3474 = vpop.xlane.xlu0 %3473
    %v3475 = vsel %vm191, %v3461, 0.0
    %3476 = vadd.xlane.f32.xlu0 %v3475
    %v3477 = vpop.xlane.xlu0 %3476
    %v3478 = vsel %vm191, %v3462, 0.0
    %3479 = vadd.xlane.f32.xlu0 %v3478
    %v3480 = vpop.xlane.xlu0 %3479
    %v3481 = vsel %vm191, %v3463, 0.0
    %3482 = vadd.xlane.f32.xlu0 %v3481
    %v3483 = vpop.xlane.xlu0 %3482
    %v3484 = vsel %vm191, %v3464, 0.0
    %3485 = vadd.xlane.f32.xlu0 %v3484
    %v3486 = vpop.xlane.xlu0 %3485
    %v3487 = vsel %vm191, %v3465, 0.0
    %3488 = vadd.xlane.f32.xlu0 %v3487
    %v3489 = vpop.xlane.xlu0 %3488
    %v3490 = vsel %vm191, %v3466, 0.0
    %3491 = vadd.xlane.f32.xlu0 %v3490
    %v3492 = vpop.xlane.xlu0 %3491
    %v3493 = vsel %vm191, %v3467, 0.0
    %3494 = vadd.xlane.f32.xlu0 %v3493
    %v3495 = vpop.xlane.xlu0 %3494
    %v3496 = vsel %vm191, %v3468, 0.0
    %3497 = vadd.xlane.f32.xlu0 %v3496
    %v3498 = vpop.xlane.xlu0 %3497
    %v3499 = vmul.f32 %v3471, %v222
    %v3500 = vmul.f32 %v3474, %v222
    %v3501 = vmul.f32 %v3477, %v222
    %v3502 = vmul.f32 %v3480, %v222
    %v3503 = vmul.f32 %v3483, %v222
    %v3504 = vmul.f32 %v3486, %v222
    %v3505 = vmul.f32 %v3489, %v222
    %v3506 = vmul.f32 %v3492, %v222
    %v3507 = vmul.f32 %v3495, %v222
    %v3508 = vmul.f32 %v3498, %v222
    %v3509 = vadd.f32 %v3499, 1e-12
    %v3510 = vadd.f32 %v3500, 1e-12
    %v3511 = vadd.f32 %v3501, 1e-12
    %v3512 = vadd.f32 %v3502, 1e-12
    %v3513 = vadd.f32 %v3503, 1e-12
    %v3514 = vadd.f32 %v3504, 1e-12
    %v3515 = vadd.f32 %v3505, 1e-12
    %v3516 = vadd.f32 %v3506, 1e-12
    %v3517 = vadd.f32 %v3507, 1e-12
    %v3518 = vadd.f32 %v3508, 1e-12
    %v3519 = vrsqrt.pop %v3509
    %v3520 = vrsqrt.pop %v3510
    %v3521 = vrsqrt.pop %v3511
    %v3522 = vrsqrt.pop %v3512
    %v3523 = vrsqrt.pop %v3513
    %v3524 = vrsqrt.pop %v3514
    %v3525 = vrsqrt.pop %v3515
    %v3526 = vrsqrt.pop %v3516
    %v3527 = vrsqrt.pop %v3517
    %v3528 = vrsqrt.pop %v3518
    %v3529 = vmul.f32 %v3449, %v3519
    %v3530 = vmul.f32 %v3450, %v3520
    %v3531 = vmul.f32 %v3451, %v3521
    %v3532 = vmul.f32 %v3452, %v3522
    %v3533 = vmul.f32 %v3453, %v3523
    %v3534 = vmul.f32 %v3454, %v3524
    %v3535 = vmul.f32 %v3455, %v3525
    %v3536 = vmul.f32 %v3456, %v3526
    %v3537 = vmul.f32 %v3457, %v3527
    %v3538 = vmul.f32 %v3458, %v3528
    %v3539 = vlaneseq
    %v3540 = vshrl.u32 %v3539, 7
    %v3541 = vsub.s32 2, %v3540
    %v3542 = vrot.slane %v37, %v3541
    %v3543 = vmul.f32 %v3529, %v3542
    %v3544 = vmul.f32 %v3530, %v3542
    %v3545 = vmul.f32 %v3531, %v3542
    %v3546 = vmul.f32 %v3532, %v3542
    %v3547 = vmul.f32 %v3533, %v3542
    %v3548 = vmul.f32 %v3534, %v3542
    %v3549 = vmul.f32 %v3535, %v3542
    %v3550 = vmul.f32 %v3536, %v3542
    %v3551 = vmul.f32 %v3537, %v3542
    %v3552 = vmul.f32 %v3538, %v3542
    %v3553 = vlaneseq
    %v3554 = vshrl.u32 %v3553, 7
    %v3555 = vsub.s32 3, %v3554
    %v3556 = vrot.slane %v37, %v3555
    %v3557 = vadd.f32 %v3543, %v3556
    %v3558 = vadd.f32 %v3544, %v3556
    %v3559 = vadd.f32 %v3545, %v3556
    %v3560 = vadd.f32 %v3546, %v3556
    %v3561 = vadd.f32 %v3547, %v3556
    %v3562 = vadd.f32 %v3548, %v3556
    %v3563 = vadd.f32 %v3549, %v3556
    %v3564 = vadd.f32 %v3550, %v3556
    %v3565 = vadd.f32 %v3551, %v3556
    %v3566 = vadd.f32 %v3552, %v3556
    %v3567 = vmax.f32 %v3557, 0.0
    %v3568 = vmax.f32 %v3558, 0.0
    %v3569 = vmax.f32 %v3559, 0.0
    %v3570 = vmax.f32 %v3560, 0.0
    %v3571 = vmax.f32 %v3561, 0.0
    %v3572 = vmax.f32 %v3562, 0.0
    %v3573 = vmax.f32 %v3563, 0.0
    %v3574 = vmax.f32 %v3564, 0.0
    %v3575 = vmax.f32 %v3565, 0.0
    %v3576 = vmax.f32 %v3566, 0.0
    %s3577 = scalar_lea.vmem %s7, 16
    %v3578 = vld [vmem:[%s3577] sm:$0xff]
    %v3579 = vld [vmem:[%s3577 + $0x8] sm:$0xff]
    %v3580 = vlaneseq
    %v3581 = vshrl.u32 %v3580, 7
    %v3582 = vsub.s32 4, %v3581
    %v3583 = vrot.slane %v37, %v3582
    %v3585 = vsel %vm191, %v3567, 0
    %v3588 = vsel %vm191, %v3568, 0
    %v3591 = vsel %vm191, %v3569, 0
    %v3594 = vsel %vm191, %v3570, 0
    %v3597 = vsel %vm191, %v3571, 0
    %v3600 = vsel %vm191, %v3572, 0
    %v3603 = vsel %vm191, %v3573, 0
    %v3606 = vsel %vm191, %v3574, 0
    %v3609 = vsel %vm191, %v3575, 0
    %v3612 = vsel %vm191, %v3576, 0
    %3614 = vmatprep.subr.mxu0 0.0
    %3615 = vmatpush1.msra.mxu0 %v3578
    %3616 = vmatprep.subr.mxu0 0.0
    %3617 = vmatpush1.msra.mxu0 %v3579
    %3618 = vmatprep.subr.mxu0 0.0
    %3619 = vmatpush1.msra.mxu0 0.0
    %3620 = vmatprep.subr.mxu0 0.0
    %3621 = vmatpush1.msra.mxu0 0.0
    %3622 = vmatprep.subr.mxu0 0.0
    %3623 = vmatpush1.msra.mxu0 0.0
    %3624 = vmatprep.subr.mxu0 0.0
    %3625 = vmatpush1.msra.mxu0 0.0
    %3626 = vmatprep.subr.mxu0 0.0
    %3627 = vmatpush1.msra.mxu0 0.0
    %3628 = vmatprep.subr.mxu0 0.0
    %3629 = vmatpush1.msra.mxu0 0.0
    %3630 = vmatprep.subr.mxu0 0.0
    %3631 = vmatpush1.msra.mxu0 0.0
    %3632 = vmatprep.subr.mxu0 0.0
    %3633 = vmatpush1.msra.mxu0 0.0
    %3634 = vmatprep.subr.mxu0 0.0
    %3635 = vmatpush1.msra.mxu0 0.0
    %3636 = vmatprep.subr.mxu0 0.0
    %3637 = vmatpush1.msra.mxu0 0.0
    %3638 = vmatprep.subr.mxu0 0.0
    %3639 = vmatpush1.msra.mxu0 0.0
    %3640 = vmatprep.subr.mxu0 0.0
    %3641 = vmatpush1.msra.mxu0 0.0
    %3642 = vmatprep.subr.mxu0 0.0
    %3643 = vmatpush1.msra.mxu0 0.0
    %3644 = vmatprep.subr.mxu0 0.0
    %3645 = vmatpush1.msra.mxu0 0.0
    %3646 = vmatprep.subr.mxu0 0.0
    %3647 = vmatpush1.msra.mxu0 0.0
    %3648 = vmatprep.subr.mxu0 0.0
    %3649 = vmatpush1.msra.mxu0 0.0
    %3650 = vmatprep.subr.mxu0 0.0
    %3651 = vmatpush1.msra.mxu0 0.0
    %3652 = vmatprep.subr.mxu0 0.0
    %3653 = vmatpush1.msra.mxu0 0.0
    %3654 = vmatprep.subr.mxu0 0.0
    %3655 = vmatpush1.msra.mxu0 0.0
    %3656 = vmatprep.subr.mxu0 0.0
    %3657 = vmatpush1.msra.mxu0 0.0
    %3658 = vmatprep.subr.mxu0 0.0
    %3659 = vmatpush1.msra.mxu0 0.0
    %3660 = vmatprep.subr.mxu0 0.0
    %3661 = vmatpush1.msra.mxu0 0.0
    %3662 = vmatprep.subr.mxu0 0.0
    %3663 = vmatpush1.msra.mxu0 0.0
    %3664 = vmatprep.subr.mxu0 0.0
    %3665 = vmatpush1.msra.mxu0 0.0
    %3666 = vmatprep.subr.mxu0 0.0
    %3667 = vmatpush1.msra.mxu0 0.0
    %3668 = vmatprep.subr.mxu0 0.0
    %3669 = vmatpush1.msra.mxu0 0.0
    %3670 = vmatprep.subr.mxu0 0.0
    %3671 = vmatpush1.msra.mxu0 0.0
    %3672 = vmatprep.subr.mxu0 0.0
    %3673 = vmatpush1.msra.mxu0 0.0
    %3674 = vmatprep.subr.mxu0 0.0
    %3675 = vmatpush1.msra.mxu0 0.0
    %3676 = vmatprep.subr.mxu0 0.0
    %3677 = vmatpush1.msra.mxu0 0.0
    %3678 = vmatprep.mubr.f32.mxu0 0.0
    %3679 = vmatmul.mubr.f32.gmra.mrb[0].mxu0 %v3585
    %v3680 = vpop.f32.mrb[0].mxu0
    %v3681 = vadd.f32 %v3583, %v3680
    %v3682 = vpop.f32.mrb[0].mxu0
    %3683 = vmatprep.mubr.f32.mxu0 0.0
    %3684 = vmatmul.mubr.f32.gmra.mrb[0].mxu0 %v3588
    %v3685 = vpop.f32.mrb[0].mxu0
    %v3686 = vadd.f32 %v3583, %v3685
    %v3687 = vpop.f32.mrb[0].mxu0
    %3688 = vmatprep.mubr.f32.mxu0 0.0
    %3689 = vmatmul.mubr.f32.gmra.mrb[0].mxu0 %v3591
    %v3690 = vpop.f32.mrb[0].mxu0
    %v3691 = vadd.f32 %v3583, %v3690
    %v3692 = vpop.f32.mrb[0].mxu0
    %3693 = vmatprep.mubr.f32.mxu0 0.0
    %3694 = vmatmul.mubr.f32.gmra.mrb[0].mxu0 %v3594
    %v3695 = vpop.f32.mrb[0].mxu0
    %v3696 = vadd.f32 %v3583, %v3695
    %v3697 = vpop.f32.mrb[0].mxu0
    %3698 = vmatprep.mubr.f32.mxu0 0.0
    %3699 = vmatmul.mubr.f32.gmra.mrb[0].mxu0 %v3597
    %v3700 = vpop.f32.mrb[0].mxu0
    %v3701 = vadd.f32 %v3583, %v3700
    %v3702 = vpop.f32.mrb[0].mxu0
    %3703 = vmatprep.mubr.f32.mxu0 0.0
    %3704 = vmatmul.mubr.f32.gmra.mrb[0].mxu0 %v3600
    %v3705 = vpop.f32.mrb[0].mxu0
    %v3706 = vadd.f32 %v3583, %v3705
    %v3707 = vpop.f32.mrb[0].mxu0
    %3708 = vmatprep.mubr.f32.mxu0 0.0
    %3709 = vmatmul.mubr.f32.gmra.mrb[0].mxu0 %v3603
    %v3710 = vpop.f32.mrb[0].mxu0
    %v3711 = vadd.f32 %v3583, %v3710
    %v3712 = vpop.f32.mrb[0].mxu0
    %3713 = vmatprep.mubr.f32.mxu0 0.0
    %3714 = vmatmul.mubr.f32.gmra.mrb[0].mxu0 %v3606
    %v3715 = vpop.f32.mrb[0].mxu0
    %v3716 = vadd.f32 %v3583, %v3715
    %v3717 = vpop.f32.mrb[0].mxu0
    %3718 = vmatprep.mubr.f32.mxu0 0.0
    %3719 = vmatmul.mubr.f32.gmra.mrb[0].mxu0 %v3609
    %v3720 = vpop.f32.mrb[0].mxu0
    %v3721 = vadd.f32 %v3583, %v3720
    %v3722 = vpop.f32.mrb[0].mxu0
    %3723 = vmatprep.mubr.f32.mxu0 0.0
    %3724 = vmatmul.mubr.f32.gmra.mrb[0].mxu0 %v3612
    %v3725 = vpop.f32.mrb[0].mxu0
    %v3726 = vadd.f32 %v3583, %v3725
    %v3727 = vpop.f32.mrb[0].mxu0
    %3728 = vdwg.mxu0
    %v3729 = vadd.f32 %v3681, %v2183
    %v3730 = vadd.f32 %v3686, %v2184
    %v3731 = vadd.f32 %v3691, %v2185
    %v3732 = vadd.f32 %v3696, %v2186
    %v3733 = vadd.f32 %v3701, %v2187
    %v3734 = vadd.f32 %v3706, %v2188
    %v3735 = vadd.f32 %v3711, %v2189
    %v3736 = vadd.f32 %v3716, %v2190
    %v3737 = vadd.f32 %v3721, %v2191
    %v3738 = vadd.f32 %v3726, %v2192
    %v3739 = vsel %vm474, %v3729, 0.0
    %3740 = vadd.xlane.f32.xlu0 %v3739
    %v3741 = vpop.xlane.xlu0 %3740
    %v3742 = vsel %vm474, %v3730, 0.0
    %3743 = vadd.xlane.f32.xlu0 %v3742
    %v3744 = vpop.xlane.xlu0 %3743
    %v3745 = vsel %vm474, %v3731, 0.0
    %3746 = vadd.xlane.f32.xlu0 %v3745
    %v3747 = vpop.xlane.xlu0 %3746
    %v3748 = vsel %vm474, %v3732, 0.0
    %3749 = vadd.xlane.f32.xlu0 %v3748
    %v3750 = vpop.xlane.xlu0 %3749
    %v3751 = vsel %vm474, %v3733, 0.0
    %3752 = vadd.xlane.f32.xlu0 %v3751
    %v3753 = vpop.xlane.xlu0 %3752
    %v3754 = vsel %vm474, %v3734, 0.0
    %3755 = vadd.xlane.f32.xlu0 %v3754
    %v3756 = vpop.xlane.xlu0 %3755
    %v3757 = vsel %vm474, %v3735, 0.0
    %3758 = vadd.xlane.f32.xlu0 %v3757
    %v3759 = vpop.xlane.xlu0 %3758
    %v3760 = vsel %vm474, %v3736, 0.0
    %3761 = vadd.xlane.f32.xlu0 %v3760
    %v3762 = vpop.xlane.xlu0 %3761
    %v3763 = vsel %vm474, %v3737, 0.0
    %3764 = vadd.xlane.f32.xlu0 %v3763
    %v3765 = vpop.xlane.xlu0 %3764
    %v3766 = vsel %vm474, %v3738, 0.0
    %3767 = vadd.xlane.f32.xlu0 %v3766
    %v3768 = vpop.xlane.xlu0 %3767
    %v3769 = vmul.f32 %v3741, %v505
    %v3770 = vmul.f32 %v3744, %v505
    %v3771 = vmul.f32 %v3747, %v505
    %v3772 = vmul.f32 %v3750, %v505
    %v3773 = vmul.f32 %v3753, %v505
    %v3774 = vmul.f32 %v3756, %v505
    %v3775 = vmul.f32 %v3759, %v505
    %v3776 = vmul.f32 %v3762, %v505
    %v3777 = vmul.f32 %v3765, %v505
    %v3778 = vmul.f32 %v3768, %v505
    %v3779 = vsub.f32 %v3729, %v3769
    %v3780 = vsub.f32 %v3730, %v3770
    %v3781 = vsub.f32 %v3731, %v3771
    %v3782 = vsub.f32 %v3732, %v3772
    %v3783 = vsub.f32 %v3733, %v3773
    %v3784 = vsub.f32 %v3734, %v3774
    %v3785 = vsub.f32 %v3735, %v3775
    %v3786 = vsub.f32 %v3736, %v3776
    %v3787 = vsub.f32 %v3737, %v3777
    %v3788 = vsub.f32 %v3738, %v3778
    %v3789 = vmul.f32 %v3779, %v3779
    %v3790 = vmul.f32 %v3780, %v3780
    %v3791 = vmul.f32 %v3781, %v3781
    %v3792 = vmul.f32 %v3782, %v3782
    %v3793 = vmul.f32 %v3783, %v3783
    %v3794 = vmul.f32 %v3784, %v3784
    %v3795 = vmul.f32 %v3785, %v3785
    %v3796 = vmul.f32 %v3786, %v3786
    %v3797 = vmul.f32 %v3787, %v3787
    %v3798 = vmul.f32 %v3788, %v3788
    %v3799 = vsel %vm474, %v3789, 0.0
    %3800 = vadd.xlane.f32.xlu0 %v3799
    %v3801 = vpop.xlane.xlu0 %3800
    %v3802 = vsel %vm474, %v3790, 0.0
    %3803 = vadd.xlane.f32.xlu0 %v3802
    %v3804 = vpop.xlane.xlu0 %3803
    %v3805 = vsel %vm474, %v3791, 0.0
    %3806 = vadd.xlane.f32.xlu0 %v3805
    %v3807 = vpop.xlane.xlu0 %3806
    %v3808 = vsel %vm474, %v3792, 0.0
    %3809 = vadd.xlane.f32.xlu0 %v3808
    %v3810 = vpop.xlane.xlu0 %3809
    %v3811 = vsel %vm474, %v3793, 0.0
    %3812 = vadd.xlane.f32.xlu0 %v3811
    %v3813 = vpop.xlane.xlu0 %3812
    %v3814 = vsel %vm474, %v3794, 0.0
    %3815 = vadd.xlane.f32.xlu0 %v3814
    %v3816 = vpop.xlane.xlu0 %3815
    %v3817 = vsel %vm474, %v3795, 0.0
    %3818 = vadd.xlane.f32.xlu0 %v3817
    %v3819 = vpop.xlane.xlu0 %3818
    %v3820 = vsel %vm474, %v3796, 0.0
    %3821 = vadd.xlane.f32.xlu0 %v3820
    %v3822 = vpop.xlane.xlu0 %3821
    %v3823 = vsel %vm474, %v3797, 0.0
    %3824 = vadd.xlane.f32.xlu0 %v3823
    %v3825 = vpop.xlane.xlu0 %3824
    %v3826 = vsel %vm474, %v3798, 0.0
    %3827 = vadd.xlane.f32.xlu0 %v3826
    %v3828 = vpop.xlane.xlu0 %3827
    %v3829 = vmul.f32 %v3801, %v505
    %v3830 = vmul.f32 %v3804, %v505
    %v3831 = vmul.f32 %v3807, %v505
    %v3832 = vmul.f32 %v3810, %v505
    %v3833 = vmul.f32 %v3813, %v505
    %v3834 = vmul.f32 %v3816, %v505
    %v3835 = vmul.f32 %v3819, %v505
    %v3836 = vmul.f32 %v3822, %v505
    %v3837 = vmul.f32 %v3825, %v505
    %v3838 = vmul.f32 %v3828, %v505
    %v3839 = vadd.f32 %v3829, 1e-12
    %v3840 = vadd.f32 %v3830, 1e-12
    %v3841 = vadd.f32 %v3831, 1e-12
    %v3842 = vadd.f32 %v3832, 1e-12
    %v3843 = vadd.f32 %v3833, 1e-12
    %v3844 = vadd.f32 %v3834, 1e-12
    %v3845 = vadd.f32 %v3835, 1e-12
    %v3846 = vadd.f32 %v3836, 1e-12
    %v3847 = vadd.f32 %v3837, 1e-12
    %v3848 = vadd.f32 %v3838, 1e-12
    %v3849 = vrsqrt.pop %v3839
    %v3850 = vrsqrt.pop %v3840
    %v3851 = vrsqrt.pop %v3841
    %v3852 = vrsqrt.pop %v3842
    %v3853 = vrsqrt.pop %v3843
    %v3854 = vrsqrt.pop %v3844
    %v3855 = vrsqrt.pop %v3845
    %v3856 = vrsqrt.pop %v3846
    %v3857 = vrsqrt.pop %v3847
    %v3858 = vrsqrt.pop %v3848
    %v3859 = vmul.f32 %v3779, %v3849
    %v3860 = vmul.f32 %v3780, %v3850
    %v3861 = vmul.f32 %v3781, %v3851
    %v3862 = vmul.f32 %v3782, %v3852
    %v3863 = vmul.f32 %v3783, %v3853
    %v3864 = vmul.f32 %v3784, %v3854
    %v3865 = vmul.f32 %v3785, %v3855
    %v3866 = vmul.f32 %v3786, %v3856
    %v3867 = vmul.f32 %v3787, %v3857
    %v3868 = vmul.f32 %v3788, %v3858
    %v3869 = vlaneseq
    %v3870 = vshrl.u32 %v3869, 7
    %v3871 = vsub.s32 5, %v3870
    %v3872 = vrot.slane %v37, %v3871
    %v3873 = vmul.f32 %v3859, %v3872
    %v3874 = vmul.f32 %v3860, %v3872
    %v3875 = vmul.f32 %v3861, %v3872
    %v3876 = vmul.f32 %v3862, %v3872
    %v3877 = vmul.f32 %v3863, %v3872
    %v3878 = vmul.f32 %v3864, %v3872
    %v3879 = vmul.f32 %v3865, %v3872
    %v3880 = vmul.f32 %v3866, %v3872
    %v3881 = vmul.f32 %v3867, %v3872
    %v3882 = vmul.f32 %v3868, %v3872
    %v3883 = vlaneseq
    %v3884 = vshrl.u32 %v3883, 7
    %v3885 = vsub.s32 6, %v3884
    %v3886 = vrot.slane %v37, %v3885
    %v3887 = vadd.f32 %v3873, %v3886
    %v3888 = vadd.f32 %v3874, %v3886
    %v3889 = vadd.f32 %v3875, %v3886
    %v3890 = vadd.f32 %v3876, %v3886
    %v3891 = vadd.f32 %v3877, %v3886
    %v3892 = vadd.f32 %v3878, %v3886
    %v3893 = vadd.f32 %v3879, %v3886
    %v3894 = vadd.f32 %v3880, %v3886
    %v3895 = vadd.f32 %v3881, %v3886
    %v3896 = vadd.f32 %v3882, %v3886
    %v3897 = vmax.f32 %v3887, 0.0
    %v3898 = vmax.f32 %v3888, 0.0
    %v3899 = vmax.f32 %v3889, 0.0
    %v3900 = vmax.f32 %v3890, 0.0
    %v3901 = vmax.f32 %v3891, 0.0
    %v3902 = vmax.f32 %v3892, 0.0
    %v3903 = vmax.f32 %v3893, 0.0
    %v3904 = vmax.f32 %v3894, 0.0
    %v3905 = vmax.f32 %v3895, 0.0
    %v3906 = vmax.f32 %v3896, 0.0
    %s3907 = scalar_lea.vmem %s5, 64
    %v3908 = vld [vmem:[%s3907] sm:$0xff]
    %v3909 = vld [vmem:[%s3907 + $0x8] sm:$0xff]
    %v3910 = vld [vmem:[%s3907 + $0x10] sm:$0xff]
    %v3911 = vld [vmem:[%s3907 + $0x18] sm:$0xff]
    %v3912 = vlaneseq
    %v3913 = vshrl.u32 %v3912, 7
    %v3914 = vsub.s32 7, %v3913
    %v3915 = vrot.slane %v37, %v3914
    %v3917 = vsel %vm474, %v3897, 0
    %v3920 = vsel %vm474, %v3898, 0
    %v3923 = vsel %vm474, %v3899, 0
    %v3926 = vsel %vm474, %v3900, 0
    %v3929 = vsel %vm474, %v3901, 0
    %v3932 = vsel %vm474, %v3902, 0
    %v3935 = vsel %vm474, %v3903, 0
    %v3938 = vsel %vm474, %v3904, 0
    %v3941 = vsel %vm474, %v3905, 0
    %v3944 = vsel %vm474, %v3906, 0
    %3946 = vmatprep.subr.mxu0 0.0
    %3947 = vmatpush1.msra.mxu0 %v3908
    %3948 = vmatprep.subr.mxu0 0.0
    %3949 = vmatpush1.msra.mxu0 %v3909
    %3950 = vmatprep.subr.mxu0 0.0
    %3951 = vmatpush1.msra.mxu0 %v3910
    %3952 = vmatprep.subr.mxu0 0.0
    %3953 = vmatpush1.msra.mxu0 %v3911
    %3954 = vmatprep.subr.mxu0 0.0
    %3955 = vmatpush1.msra.mxu0 0.0
    %3956 = vmatprep.subr.mxu0 0.0
    %3957 = vmatpush1.msra.mxu0 0.0
    %3958 = vmatprep.subr.mxu0 0.0
    %3959 = vmatpush1.msra.mxu0 0.0
    %3960 = vmatprep.subr.mxu0 0.0
    %3961 = vmatpush1.msra.mxu0 0.0
    %3962 = vmatprep.subr.mxu0 0.0
    %3963 = vmatpush1.msra.mxu0 0.0
    %3964 = vmatprep.subr.mxu0 0.0
    %3965 = vmatpush1.msra.mxu0 0.0
    %3966 = vmatprep.subr.mxu0 0.0
    %3967 = vmatpush1.msra.mxu0 0.0
    %3968 = vmatprep.subr.mxu0 0.0
    %3969 = vmatpush1.msra.mxu0 0.0
    %3970 = vmatprep.subr.mxu0 0.0
    %3971 = vmatpush1.msra.mxu0 0.0
    %3972 = vmatprep.subr.mxu0 0.0
    %3973 = vmatpush1.msra.mxu0 0.0
    %3974 = vmatprep.subr.mxu0 0.0
    %3975 = vmatpush1.msra.mxu0 0.0
    %3976 = vmatprep.subr.mxu0 0.0
    %3977 = vmatpush1.msra.mxu0 0.0
    %3978 = vmatprep.subr.mxu0 0.0
    %3979 = vmatpush1.msra.mxu0 0.0
    %3980 = vmatprep.subr.mxu0 0.0
    %3981 = vmatpush1.msra.mxu0 0.0
    %3982 = vmatprep.subr.mxu0 0.0
    %3983 = vmatpush1.msra.mxu0 0.0
    %3984 = vmatprep.subr.mxu0 0.0
    %3985 = vmatpush1.msra.mxu0 0.0
    %3986 = vmatprep.subr.mxu0 0.0
    %3987 = vmatpush1.msra.mxu0 0.0
    %3988 = vmatprep.subr.mxu0 0.0
    %3989 = vmatpush1.msra.mxu0 0.0
    %3990 = vmatprep.subr.mxu0 0.0
    %3991 = vmatpush1.msra.mxu0 0.0
    %3992 = vmatprep.subr.mxu0 0.0
    %3993 = vmatpush1.msra.mxu0 0.0
    %3994 = vmatprep.subr.mxu0 0.0
    %3995 = vmatpush1.msra.mxu0 0.0
    %3996 = vmatprep.subr.mxu0 0.0
    %3997 = vmatpush1.msra.mxu0 0.0
    %3998 = vmatprep.subr.mxu0 0.0
    %3999 = vmatpush1.msra.mxu0 0.0
    %4000 = vmatprep.subr.mxu0 0.0
    %4001 = vmatpush1.msra.mxu0 0.0
    %4002 = vmatprep.subr.mxu0 0.0
    %4003 = vmatpush1.msra.mxu0 0.0
    %4004 = vmatprep.subr.mxu0 0.0
    %4005 = vmatpush1.msra.mxu0 0.0
    %4006 = vmatprep.subr.mxu0 0.0
    %4007 = vmatpush1.msra.mxu0 0.0
    %4008 = vmatprep.subr.mxu0 0.0
    %4009 = vmatpush1.msra.mxu0 0.0
    %4010 = vmatprep.mubr.f32.mxu0 0.0
    %4011 = vmatmul.mubr.f32.gmra.mrb[0].mxu0 %v3917
    %v4012 = vpop.f32.mrb[0].mxu0
    %v4013 = vadd.f32 %v3915, %v4012
    %v4014 = vpop.f32.mrb[0].mxu0
    %4015 = vmatprep.mubr.f32.mxu0 0.0
    %4016 = vmatmul.mubr.f32.gmra.mrb[0].mxu0 %v3920
    %v4017 = vpop.f32.mrb[0].mxu0
    %v4018 = vadd.f32 %v3915, %v4017
    %v4019 = vpop.f32.mrb[0].mxu0
    %4020 = vmatprep.mubr.f32.mxu0 0.0
    %4021 = vmatmul.mubr.f32.gmra.mrb[0].mxu0 %v3923
    %v4022 = vpop.f32.mrb[0].mxu0
    %v4023 = vadd.f32 %v3915, %v4022
    %v4024 = vpop.f32.mrb[0].mxu0
    %4025 = vmatprep.mubr.f32.mxu0 0.0
    %4026 = vmatmul.mubr.f32.gmra.mrb[0].mxu0 %v3926
    %v4027 = vpop.f32.mrb[0].mxu0
    %v4028 = vadd.f32 %v3915, %v4027
    %v4029 = vpop.f32.mrb[0].mxu0
    %4030 = vmatprep.mubr.f32.mxu0 0.0
    %4031 = vmatmul.mubr.f32.gmra.mrb[0].mxu0 %v3929
    %v4032 = vpop.f32.mrb[0].mxu0
    %v4033 = vadd.f32 %v3915, %v4032
    %v4034 = vpop.f32.mrb[0].mxu0
    %4035 = vmatprep.mubr.f32.mxu0 0.0
    %4036 = vmatmul.mubr.f32.gmra.mrb[0].mxu0 %v3932
    %v4037 = vpop.f32.mrb[0].mxu0
    %v4038 = vadd.f32 %v3915, %v4037
    %v4039 = vpop.f32.mrb[0].mxu0
    %4040 = vmatprep.mubr.f32.mxu0 0.0
    %4041 = vmatmul.mubr.f32.gmra.mrb[0].mxu0 %v3935
    %v4042 = vpop.f32.mrb[0].mxu0
    %v4043 = vadd.f32 %v3915, %v4042
    %v4044 = vpop.f32.mrb[0].mxu0
    %4045 = vmatprep.mubr.f32.mxu0 0.0
    %4046 = vmatmul.mubr.f32.gmra.mrb[0].mxu0 %v3938
    %v4047 = vpop.f32.mrb[0].mxu0
    %v4048 = vadd.f32 %v3915, %v4047
    %v4049 = vpop.f32.mrb[0].mxu0
    %4050 = vmatprep.mubr.f32.mxu0 0.0
    %4051 = vmatmul.mubr.f32.gmra.mrb[0].mxu0 %v3941
    %v4052 = vpop.f32.mrb[0].mxu0
    %v4053 = vadd.f32 %v3915, %v4052
    %v4054 = vpop.f32.mrb[0].mxu0
    %4055 = vmatprep.mubr.f32.mxu0 0.0
    %4056 = vmatmul.mubr.f32.gmra.mrb[0].mxu0 %v3944
    %v4057 = vpop.f32.mrb[0].mxu0
    %v4058 = vadd.f32 %v3915, %v4057
    %v4059 = vpop.f32.mrb[0].mxu0
    %4060 = vdwg.mxu0
    %v4061 = vsel %vm191, %v4013, 0.0
    %4062 = vadd.xlane.f32.xlu0 %v4061
    %v4063 = vpop.xlane.xlu0 %4062
    %v4064 = vsel %vm191, %v4018, 0.0
    %4065 = vadd.xlane.f32.xlu0 %v4064
    %v4066 = vpop.xlane.xlu0 %4065
    %v4067 = vsel %vm191, %v4023, 0.0
    %4068 = vadd.xlane.f32.xlu0 %v4067
    %v4069 = vpop.xlane.xlu0 %4068
    %v4070 = vsel %vm191, %v4028, 0.0
    %4071 = vadd.xlane.f32.xlu0 %v4070
    %v4072 = vpop.xlane.xlu0 %4071
    %v4073 = vsel %vm191, %v4033, 0.0
    %4074 = vadd.xlane.f32.xlu0 %v4073
    %v4075 = vpop.xlane.xlu0 %4074
    %v4076 = vsel %vm191, %v4038, 0.0
    %4077 = vadd.xlane.f32.xlu0 %v4076
    %v4078 = vpop.xlane.xlu0 %4077
    %v4079 = vsel %vm191, %v4043, 0.0
    %4080 = vadd.xlane.f32.xlu0 %v4079
    %v4081 = vpop.xlane.xlu0 %4080
    %v4082 = vsel %vm191, %v4048, 0.0
    %4083 = vadd.xlane.f32.xlu0 %v4082
    %v4084 = vpop.xlane.xlu0 %4083
    %v4085 = vsel %vm191, %v4053, 0.0
    %4086 = vadd.xlane.f32.xlu0 %v4085
    %v4087 = vpop.xlane.xlu0 %4086
    %v4088 = vsel %vm191, %v4058, 0.0
    %4089 = vadd.xlane.f32.xlu0 %v4088
    %v4090 = vpop.xlane.xlu0 %4089
    %v4091 = vmul.f32 %v4063, %v222
    %v4092 = vmul.f32 %v4066, %v222
    %v4093 = vmul.f32 %v4069, %v222
    %v4094 = vmul.f32 %v4072, %v222
    %v4095 = vmul.f32 %v4075, %v222
    %v4096 = vmul.f32 %v4078, %v222
    %v4097 = vmul.f32 %v4081, %v222
    %v4098 = vmul.f32 %v4084, %v222
    %v4099 = vmul.f32 %v4087, %v222
    %v4100 = vmul.f32 %v4090, %v222
    %v4101 = vsub.f32 %v4013, %v4091
    %v4102 = vsub.f32 %v4018, %v4092
    %v4103 = vsub.f32 %v4023, %v4093
    %v4104 = vsub.f32 %v4028, %v4094
    %v4105 = vsub.f32 %v4033, %v4095
    %v4106 = vsub.f32 %v4038, %v4096
    %v4107 = vsub.f32 %v4043, %v4097
    %v4108 = vsub.f32 %v4048, %v4098
    %v4109 = vsub.f32 %v4053, %v4099
    %v4110 = vsub.f32 %v4058, %v4100
    %v4111 = vmul.f32 %v4101, %v4101
    %v4112 = vmul.f32 %v4102, %v4102
    %v4113 = vmul.f32 %v4103, %v4103
    %v4114 = vmul.f32 %v4104, %v4104
    %v4115 = vmul.f32 %v4105, %v4105
    %v4116 = vmul.f32 %v4106, %v4106
    %v4117 = vmul.f32 %v4107, %v4107
    %v4118 = vmul.f32 %v4108, %v4108
    %v4119 = vmul.f32 %v4109, %v4109
    %v4120 = vmul.f32 %v4110, %v4110
    %v4121 = vsel %vm191, %v4111, 0.0
    %4122 = vadd.xlane.f32.xlu0 %v4121
    %v4123 = vpop.xlane.xlu0 %4122
    %v4124 = vsel %vm191, %v4112, 0.0
    %4125 = vadd.xlane.f32.xlu0 %v4124
    %v4126 = vpop.xlane.xlu0 %4125
    %v4127 = vsel %vm191, %v4113, 0.0
    %4128 = vadd.xlane.f32.xlu0 %v4127
    %v4129 = vpop.xlane.xlu0 %4128
    %v4130 = vsel %vm191, %v4114, 0.0
    %4131 = vadd.xlane.f32.xlu0 %v4130
    %v4132 = vpop.xlane.xlu0 %4131
    %v4133 = vsel %vm191, %v4115, 0.0
    %4134 = vadd.xlane.f32.xlu0 %v4133
    %v4135 = vpop.xlane.xlu0 %4134
    %v4136 = vsel %vm191, %v4116, 0.0
    %4137 = vadd.xlane.f32.xlu0 %v4136
    %v4138 = vpop.xlane.xlu0 %4137
    %v4139 = vsel %vm191, %v4117, 0.0
    %4140 = vadd.xlane.f32.xlu0 %v4139
    %v4141 = vpop.xlane.xlu0 %4140
    %v4142 = vsel %vm191, %v4118, 0.0
    %4143 = vadd.xlane.f32.xlu0 %v4142
    %v4144 = vpop.xlane.xlu0 %4143
    %v4145 = vsel %vm191, %v4119, 0.0
    %4146 = vadd.xlane.f32.xlu0 %v4145
    %v4147 = vpop.xlane.xlu0 %4146
    %v4148 = vsel %vm191, %v4120, 0.0
    %4149 = vadd.xlane.f32.xlu0 %v4148
    %v4150 = vpop.xlane.xlu0 %4149
    %v4151 = vmul.f32 %v4123, %v222
    %v4152 = vmul.f32 %v4126, %v222
    %v4153 = vmul.f32 %v4129, %v222
    %v4154 = vmul.f32 %v4132, %v222
    %v4155 = vmul.f32 %v4135, %v222
    %v4156 = vmul.f32 %v4138, %v222
    %v4157 = vmul.f32 %v4141, %v222
    %v4158 = vmul.f32 %v4144, %v222
    %v4159 = vmul.f32 %v4147, %v222
    %v4160 = vmul.f32 %v4150, %v222
    %v4161 = vadd.f32 %v4151, 1e-12
    %v4162 = vadd.f32 %v4152, 1e-12
    %v4163 = vadd.f32 %v4153, 1e-12
    %v4164 = vadd.f32 %v4154, 1e-12
    %v4165 = vadd.f32 %v4155, 1e-12
    %v4166 = vadd.f32 %v4156, 1e-12
    %v4167 = vadd.f32 %v4157, 1e-12
    %v4168 = vadd.f32 %v4158, 1e-12
    %v4169 = vadd.f32 %v4159, 1e-12
    %v4170 = vadd.f32 %v4160, 1e-12
    %v4171 = vrsqrt.pop %v4161
    %v4172 = vrsqrt.pop %v4162
    %v4173 = vrsqrt.pop %v4163
    %v4174 = vrsqrt.pop %v4164
    %v4175 = vrsqrt.pop %v4165
    %v4176 = vrsqrt.pop %v4166
    %v4177 = vrsqrt.pop %v4167
    %v4178 = vrsqrt.pop %v4168
    %v4179 = vrsqrt.pop %v4169
    %v4180 = vrsqrt.pop %v4170
    %v4181 = vmul.f32 %v4101, %v4171
    %v4182 = vmul.f32 %v4102, %v4172
    %v4183 = vmul.f32 %v4103, %v4173
    %v4184 = vmul.f32 %v4104, %v4174
    %v4185 = vmul.f32 %v4105, %v4175
    %v4186 = vmul.f32 %v4106, %v4176
    %v4187 = vmul.f32 %v4107, %v4177
    %v4188 = vmul.f32 %v4108, %v4178
    %v4189 = vmul.f32 %v4109, %v4179
    %v4190 = vmul.f32 %v4110, %v4180
    %v4191 = vlaneseq
    %v4192 = vshrl.u32 %v4191, 7
    %v4193 = vsub.s32 0, %v4192
    %v4194 = vrot.slane %v38, %v4193
    %v4195 = vmul.f32 %v4181, %v4194
    %v4196 = vmul.f32 %v4182, %v4194
    %v4197 = vmul.f32 %v4183, %v4194
    %v4198 = vmul.f32 %v4184, %v4194
    %v4199 = vmul.f32 %v4185, %v4194
    %v4200 = vmul.f32 %v4186, %v4194
    %v4201 = vmul.f32 %v4187, %v4194
    %v4202 = vmul.f32 %v4188, %v4194
    %v4203 = vmul.f32 %v4189, %v4194
    %v4204 = vmul.f32 %v4190, %v4194
    %v4205 = vlaneseq
    %v4206 = vshrl.u32 %v4205, 7
    %v4207 = vsub.s32 1, %v4206
    %v4208 = vrot.slane %v38, %v4207
    %v4209 = vadd.f32 %v4195, %v4208
    %v4210 = vadd.f32 %v4196, %v4208
    %v4211 = vadd.f32 %v4197, %v4208
    %v4212 = vadd.f32 %v4198, %v4208
    %v4213 = vadd.f32 %v4199, %v4208
    %v4214 = vadd.f32 %v4200, %v4208
    %v4215 = vadd.f32 %v4201, %v4208
    %v4216 = vadd.f32 %v4202, %v4208
    %v4217 = vadd.f32 %v4203, %v4208
    %v4218 = vadd.f32 %v4204, %v4208
    %v4219 = vmax.f32 %v4209, 0.0
    %v4220 = vmax.f32 %v4210, 0.0
    %v4221 = vmax.f32 %v4211, 0.0
    %v4222 = vmax.f32 %v4212, 0.0
    %v4223 = vmax.f32 %v4213, 0.0
    %v4224 = vmax.f32 %v4214, 0.0
    %v4225 = vmax.f32 %v4215, 0.0
    %v4226 = vmax.f32 %v4216, 0.0
    %v4227 = vmax.f32 %v4217, 0.0
    %v4228 = vmax.f32 %v4218, 0.0
    %v4229 = vsel %vm975, %v4228, 0.0
    %v4230 = vsel %vm976, %v4219, 0.0
    %v4231 = vsel %vm977, %v4220, 0.0
    %v4232 = vsel %vm978, %v4221, 0.0
    %v4233 = vsel %vm979, %v4222, 0.0
    %v4234 = vsel %vm980, %v4223, 0.0
    %v4235 = vsel %vm981, %v4224, 0.0
    %v4236 = vsel %vm982, %v4225, 0.0
    %v4237 = vsel %vm983, %v4226, 0.0
    %v4238 = vsel %vm984, %v4227, 0.0
    %4239 = vst.msk [vmem:[#allocation2] sm:$0xff] %vm191, %v4229
    %4240 = vst.msk [vmem:[#allocation2 + $0x8] sm:$0xff] %vm191, %v4230
    %4241 = vst.msk [vmem:[#allocation2 + $0x10] sm:$0xff] %vm191, %v4231
    %4242 = vst.msk [vmem:[#allocation2 + $0x18] sm:$0xff] %vm191, %v4232
    %4243 = vst.msk [vmem:[#allocation2 + $0x20] sm:$0xff] %vm191, %v4233
    %4244 = vst.msk [vmem:[#allocation2 + $0x28] sm:$0xff] %vm191, %v4234
    %4245 = vst.msk [vmem:[#allocation2 + $0x30] sm:$0xff] %vm191, %v4235
    %4246 = vst.msk [vmem:[#allocation2 + $0x38] sm:$0xff] %vm191, %v4236
    %4247 = vst.msk [vmem:[#allocation2 + $0x40] sm:$0xff] %vm191, %v4237
    %4248 = vst.msk [vmem:[#allocation2 + $0x48] sm:$0xff] %vm191, %v4238
    %v4249 = vrot.slane %v4219, 1
    %v4250 = vrot.slane %v4220, 1
    %v4251 = vrot.slane %v4221, 1
    %v4252 = vrot.slane %v4222, 1
    %v4253 = vrot.slane %v4223, 1
    %v4254 = vrot.slane %v4224, 1
    %v4255 = vrot.slane %v4225, 1
    %v4256 = vrot.slane %v4226, 1
    %v4257 = vrot.slane %v4227, 1
    %v4258 = vrot.slane %v4228, 1
    %v4259 = vsel %vm1015, %v4257, %v4258
    %v4260 = vsel %vm1015, %v4256, %v4257
    %v4261 = vsel %vm1015, %v4255, %v4256
    %v4262 = vsel %vm1015, %v4254, %v4255
    %v4263 = vsel %vm1015, %v4253, %v4254
    %v4264 = vsel %vm1015, %v4252, %v4253
    %v4265 = vsel %vm1015, %v4251, %v4252
    %v4266 = vsel %vm1015, %v4250, %v4251
    %v4267 = vsel %vm1015, %v4249, %v4250
    %v4268 = vsel %vm1015, %v4258, %v4249
    %v4269 = vsel %vm1036, %v4268, 0.0
    %v4270 = vsel %vm1037, %v4267, 0.0
    %v4271 = vsel %vm1038, %v4266, 0.0
    %v4272 = vsel %vm1039, %v4265, 0.0
    %v4273 = vsel %vm1040, %v4264, 0.0
    %v4274 = vsel %vm1041, %v4263, 0.0
    %v4275 = vsel %vm1042, %v4262, 0.0
    %v4276 = vsel %vm1043, %v4261, 0.0
    %v4277 = vsel %vm1044, %v4260, 0.0
    %v4278 = vsel %vm1045, %v4259, 0.0
    %4289 = vrot.lane.b32.xlu0 %v4269, 16
    %v4290 = vpop.permute.xlu0 %4289
    %4291 = vrot.lane.b32.xlu0 %v4270, 16
    %v4292 = vpop.permute.xlu0 %4291
    %4293 = vrot.lane.b32.xlu0 %v4271, 16
    %v4294 = vpop.permute.xlu0 %4293
    %4295 = vrot.lane.b32.xlu0 %v4272, 16
    %v4296 = vpop.permute.xlu0 %4295
    %4297 = vrot.lane.b32.xlu0 %v4273, 16
    %v4298 = vpop.permute.xlu0 %4297
    %4299 = vrot.lane.b32.xlu0 %v4274, 16
    %v4300 = vpop.permute.xlu0 %4299
    %4301 = vrot.lane.b32.xlu0 %v4275, 16
    %v4302 = vpop.permute.xlu0 %4301
    %4303 = vrot.lane.b32.xlu0 %v4276, 16
    %v4304 = vpop.permute.xlu0 %4303
    %4305 = vrot.lane.b32.xlu0 %v4277, 16
    %v4306 = vpop.permute.xlu0 %4305
    %4307 = vrot.lane.b32.xlu0 %v4278, 16
    %v4308 = vpop.permute.xlu0 %4307
    %4319 = vst.msk [vmem:[#allocation2] sm:$0xff] %vm1096, %v4290
    %4320 = vst.msk [vmem:[#allocation2 + $0x8] sm:$0xff] %vm1096, %v4292
    %4321 = vst.msk [vmem:[#allocation2 + $0x10] sm:$0xff] %vm1096, %v4294
    %4322 = vst.msk [vmem:[#allocation2 + $0x18] sm:$0xff] %vm1096, %v4296
    %4323 = vst.msk [vmem:[#allocation2 + $0x20] sm:$0xff] %vm1096, %v4298
    %4324 = vst.msk [vmem:[#allocation2 + $0x28] sm:$0xff] %vm1096, %v4300
    %4325 = vst.msk [vmem:[#allocation2 + $0x30] sm:$0xff] %vm1096, %v4302
    %4326 = vst.msk [vmem:[#allocation2 + $0x38] sm:$0xff] %vm1096, %v4304
    %4327 = vst.msk [vmem:[#allocation2 + $0x40] sm:$0xff] %vm1096, %v4306
    %4328 = vst.msk [vmem:[#allocation2 + $0x48] sm:$0xff] %vm1096, %v4308
    %v4329 = vrot.slane %v4219, 2
    %v4330 = vrot.slane %v4220, 2
    %v4331 = vrot.slane %v4221, 2
    %v4332 = vrot.slane %v4222, 2
    %v4333 = vrot.slane %v4223, 2
    %v4334 = vrot.slane %v4224, 2
    %v4335 = vrot.slane %v4225, 2
    %v4336 = vrot.slane %v4226, 2
    %v4337 = vrot.slane %v4227, 2
    %v4338 = vrot.slane %v4228, 2
    %v4339 = vsel %vm1117, %v4337, %v4338
    %v4340 = vsel %vm1117, %v4336, %v4337
    %v4341 = vsel %vm1117, %v4335, %v4336
    %v4342 = vsel %vm1117, %v4334, %v4335
    %v4343 = vsel %vm1117, %v4333, %v4334
    %v4344 = vsel %vm1117, %v4332, %v4333
    %v4345 = vsel %vm1117, %v4331, %v4332
    %v4346 = vsel %vm1117, %v4330, %v4331
    %v4347 = vsel %vm1117, %v4329, %v4330
    %v4348 = vsel %vm1117, %v4338, %v4329
    %v4349 = vsel %vm1138, %v4348, 0.0
    %v4350 = vsel %vm1139, %v4347, 0.0
    %v4351 = vsel %vm1140, %v4346, 0.0
    %v4352 = vsel %vm1141, %v4345, 0.0
    %v4353 = vsel %vm1142, %v4344, 0.0
    %v4354 = vsel %vm1143, %v4343, 0.0
    %v4355 = vsel %vm1144, %v4342, 0.0
    %v4356 = vsel %vm1145, %v4341, 0.0
    %v4357 = vsel %vm1146, %v4340, 0.0
    %v4358 = vsel %vm1147, %v4339, 0.0
    %4369 = vrot.lane.b32.xlu0 %v4349, 32
    %v4370 = vpop.permute.xlu0 %4369
    %4371 = vrot.lane.b32.xlu0 %v4350, 32
    %v4372 = vpop.permute.xlu0 %4371
    %4373 = vrot.lane.b32.xlu0 %v4351, 32
    %v4374 = vpop.permute.xlu0 %4373
    %4375 = vrot.lane.b32.xlu0 %v4352, 32
    %v4376 = vpop.permute.xlu0 %4375
    %4377 = vrot.lane.b32.xlu0 %v4353, 32
    %v4378 = vpop.permute.xlu0 %4377
    %4379 = vrot.lane.b32.xlu0 %v4354, 32
    %v4380 = vpop.permute.xlu0 %4379
    %4381 = vrot.lane.b32.xlu0 %v4355, 32
    %v4382 = vpop.permute.xlu0 %4381
    %4383 = vrot.lane.b32.xlu0 %v4356, 32
    %v4384 = vpop.permute.xlu0 %4383
    %4385 = vrot.lane.b32.xlu0 %v4357, 32
    %v4386 = vpop.permute.xlu0 %4385
    %4387 = vrot.lane.b32.xlu0 %v4358, 32
    %v4388 = vpop.permute.xlu0 %4387
    %4399 = vst.msk [vmem:[#allocation2] sm:$0xff] %vm1198, %v4370
    %4400 = vst.msk [vmem:[#allocation2 + $0x8] sm:$0xff] %vm1198, %v4372
    %4401 = vst.msk [vmem:[#allocation2 + $0x10] sm:$0xff] %vm1198, %v4374
    %4402 = vst.msk [vmem:[#allocation2 + $0x18] sm:$0xff] %vm1198, %v4376
    %4403 = vst.msk [vmem:[#allocation2 + $0x20] sm:$0xff] %vm1198, %v4378
    %4404 = vst.msk [vmem:[#allocation2 + $0x28] sm:$0xff] %vm1198, %v4380
    %4405 = vst.msk [vmem:[#allocation2 + $0x30] sm:$0xff] %vm1198, %v4382
    %4406 = vst.msk [vmem:[#allocation2 + $0x38] sm:$0xff] %vm1198, %v4384
    %4407 = vst.msk [vmem:[#allocation2 + $0x40] sm:$0xff] %vm1198, %v4386
    %4408 = vst.msk [vmem:[#allocation2 + $0x48] sm:$0xff] %vm1198, %v4388
    %v4409 = vrot.slane %v4219, 3
    %v4410 = vrot.slane %v4220, 3
    %v4411 = vrot.slane %v4221, 3
    %v4412 = vrot.slane %v4222, 3
    %v4413 = vrot.slane %v4223, 3
    %v4414 = vrot.slane %v4224, 3
    %v4415 = vrot.slane %v4225, 3
    %v4416 = vrot.slane %v4226, 3
    %v4417 = vrot.slane %v4227, 3
    %v4418 = vrot.slane %v4228, 3
    %v4419 = vsel %vm1219, %v4417, %v4418
    %v4420 = vsel %vm1219, %v4416, %v4417
    %v4421 = vsel %vm1219, %v4415, %v4416
    %v4422 = vsel %vm1219, %v4414, %v4415
    %v4423 = vsel %vm1219, %v4413, %v4414
    %v4424 = vsel %vm1219, %v4412, %v4413
    %v4425 = vsel %vm1219, %v4411, %v4412
    %v4426 = vsel %vm1219, %v4410, %v4411
    %v4427 = vsel %vm1219, %v4409, %v4410
    %v4428 = vsel %vm1219, %v4418, %v4409
    %v4429 = vsel %vm1240, %v4428, 0.0
    %v4430 = vsel %vm1241, %v4427, 0.0
    %v4431 = vsel %vm1242, %v4426, 0.0
    %v4432 = vsel %vm1243, %v4425, 0.0
    %v4433 = vsel %vm1244, %v4424, 0.0
    %v4434 = vsel %vm1245, %v4423, 0.0
    %v4435 = vsel %vm1246, %v4422, 0.0
    %v4436 = vsel %vm1247, %v4421, 0.0
    %v4437 = vsel %vm1248, %v4420, 0.0
    %v4438 = vsel %vm1249, %v4419, 0.0
    %4449 = vrot.lane.b32.xlu0 %v4429, 48
    %v4450 = vpop.permute.xlu0 %4449
    %4451 = vrot.lane.b32.xlu0 %v4430, 48
    %v4452 = vpop.permute.xlu0 %4451
    %4453 = vrot.lane.b32.xlu0 %v4431, 48
    %v4454 = vpop.permute.xlu0 %4453
    %4455 = vrot.lane.b32.xlu0 %v4432, 48
    %v4456 = vpop.permute.xlu0 %4455
    %4457 = vrot.lane.b32.xlu0 %v4433, 48
    %v4458 = vpop.permute.xlu0 %4457
    %4459 = vrot.lane.b32.xlu0 %v4434, 48
    %v4460 = vpop.permute.xlu0 %4459
    %4461 = vrot.lane.b32.xlu0 %v4435, 48
    %v4462 = vpop.permute.xlu0 %4461
    %4463 = vrot.lane.b32.xlu0 %v4436, 48
    %v4464 = vpop.permute.xlu0 %4463
    %4465 = vrot.lane.b32.xlu0 %v4437, 48
    %v4466 = vpop.permute.xlu0 %4465
    %4467 = vrot.lane.b32.xlu0 %v4438, 48
    %v4468 = vpop.permute.xlu0 %4467
    %4479 = vst.msk [vmem:[#allocation2] sm:$0xff] %vm1300, %v4450
    %4480 = vst.msk [vmem:[#allocation2 + $0x8] sm:$0xff] %vm1300, %v4452
    %4481 = vst.msk [vmem:[#allocation2 + $0x10] sm:$0xff] %vm1300, %v4454
    %4482 = vst.msk [vmem:[#allocation2 + $0x18] sm:$0xff] %vm1300, %v4456
    %4483 = vst.msk [vmem:[#allocation2 + $0x20] sm:$0xff] %vm1300, %v4458
    %4484 = vst.msk [vmem:[#allocation2 + $0x28] sm:$0xff] %vm1300, %v4460
    %4485 = vst.msk [vmem:[#allocation2 + $0x30] sm:$0xff] %vm1300, %v4462
    %4486 = vst.msk [vmem:[#allocation2 + $0x38] sm:$0xff] %vm1300, %v4464
    %4487 = vst.msk [vmem:[#allocation2 + $0x40] sm:$0xff] %vm1300, %v4466
    %4488 = vst.msk [vmem:[#allocation2 + $0x48] sm:$0xff] %vm1300, %v4468
    %v4489 = vrot.slane %v4219, 4
    %v4490 = vrot.slane %v4220, 4
    %v4491 = vrot.slane %v4221, 4
    %v4492 = vrot.slane %v4222, 4
    %v4493 = vrot.slane %v4223, 4
    %v4494 = vrot.slane %v4224, 4
    %v4495 = vrot.slane %v4225, 4
    %v4496 = vrot.slane %v4226, 4
    %v4497 = vrot.slane %v4227, 4
    %v4498 = vrot.slane %v4228, 4
    %v4499 = vsel %vm1321, %v4497, %v4498
    %v4500 = vsel %vm1321, %v4496, %v4497
    %v4501 = vsel %vm1321, %v4495, %v4496
    %v4502 = vsel %vm1321, %v4494, %v4495
    %v4503 = vsel %vm1321, %v4493, %v4494
    %v4504 = vsel %vm1321, %v4492, %v4493
    %v4505 = vsel %vm1321, %v4491, %v4492
    %v4506 = vsel %vm1321, %v4490, %v4491
    %v4507 = vsel %vm1321, %v4489, %v4490
    %v4508 = vsel %vm1321, %v4498, %v4489
    %v4509 = vsel %vm1342, %v4508, 0.0
    %v4510 = vsel %vm1343, %v4507, 0.0
    %v4511 = vsel %vm1344, %v4506, 0.0
    %v4512 = vsel %vm1345, %v4505, 0.0
    %v4513 = vsel %vm1346, %v4504, 0.0
    %v4514 = vsel %vm1347, %v4503, 0.0
    %v4515 = vsel %vm1348, %v4502, 0.0
    %v4516 = vsel %vm1349, %v4501, 0.0
    %v4517 = vsel %vm1350, %v4500, 0.0
    %v4518 = vsel %vm1351, %v4499, 0.0
    %4529 = vrot.lane.b32.xlu0 %v4509, 64
    %v4530 = vpop.permute.xlu0 %4529
    %4531 = vrot.lane.b32.xlu0 %v4510, 64
    %v4532 = vpop.permute.xlu0 %4531
    %4533 = vrot.lane.b32.xlu0 %v4511, 64
    %v4534 = vpop.permute.xlu0 %4533
    %4535 = vrot.lane.b32.xlu0 %v4512, 64
    %v4536 = vpop.permute.xlu0 %4535
    %4537 = vrot.lane.b32.xlu0 %v4513, 64
    %v4538 = vpop.permute.xlu0 %4537
    %4539 = vrot.lane.b32.xlu0 %v4514, 64
    %v4540 = vpop.permute.xlu0 %4539
    %4541 = vrot.lane.b32.xlu0 %v4515, 64
    %v4542 = vpop.permute.xlu0 %4541
    %4543 = vrot.lane.b32.xlu0 %v4516, 64
    %v4544 = vpop.permute.xlu0 %4543
    %4545 = vrot.lane.b32.xlu0 %v4517, 64
    %v4546 = vpop.permute.xlu0 %4545
    %4547 = vrot.lane.b32.xlu0 %v4518, 64
    %v4548 = vpop.permute.xlu0 %4547
    %4559 = vst.msk [vmem:[#allocation2] sm:$0xff] %vm1402, %v4530
    %4560 = vst.msk [vmem:[#allocation2 + $0x8] sm:$0xff] %vm1402, %v4532
    %4561 = vst.msk [vmem:[#allocation2 + $0x10] sm:$0xff] %vm1402, %v4534
    %4562 = vst.msk [vmem:[#allocation2 + $0x18] sm:$0xff] %vm1402, %v4536
    %4563 = vst.msk [vmem:[#allocation2 + $0x20] sm:$0xff] %vm1402, %v4538
    %4564 = vst.msk [vmem:[#allocation2 + $0x28] sm:$0xff] %vm1402, %v4540
    %4565 = vst.msk [vmem:[#allocation2 + $0x30] sm:$0xff] %vm1402, %v4542
    %4566 = vst.msk [vmem:[#allocation2 + $0x38] sm:$0xff] %vm1402, %v4544
    %4567 = vst.msk [vmem:[#allocation2 + $0x40] sm:$0xff] %vm1402, %v4546
    %4568 = vst.msk [vmem:[#allocation2 + $0x48] sm:$0xff] %vm1402, %v4548
    %v4569 = vrot.slane %v4219, 5
    %v4570 = vrot.slane %v4220, 5
    %v4571 = vrot.slane %v4221, 5
    %v4572 = vrot.slane %v4222, 5
    %v4573 = vrot.slane %v4223, 5
    %v4574 = vrot.slane %v4224, 5
    %v4575 = vrot.slane %v4225, 5
    %v4576 = vrot.slane %v4226, 5
    %v4577 = vrot.slane %v4227, 5
    %v4578 = vrot.slane %v4228, 5
    %v4579 = vsel %vm1423, %v4577, %v4578
    %v4580 = vsel %vm1423, %v4576, %v4577
    %v4581 = vsel %vm1423, %v4575, %v4576
    %v4582 = vsel %vm1423, %v4574, %v4575
    %v4583 = vsel %vm1423, %v4573, %v4574
    %v4584 = vsel %vm1423, %v4572, %v4573
    %v4585 = vsel %vm1423, %v4571, %v4572
    %v4586 = vsel %vm1423, %v4570, %v4571
    %v4587 = vsel %vm1423, %v4569, %v4570
    %v4588 = vsel %vm1423, %v4578, %v4569
    %v4589 = vsel %vm1444, %v4588, 0.0
    %v4590 = vsel %vm1445, %v4587, 0.0
    %v4591 = vsel %vm1446, %v4586, 0.0
    %v4592 = vsel %vm1447, %v4585, 0.0
    %v4593 = vsel %vm1448, %v4584, 0.0
    %v4594 = vsel %vm1449, %v4583, 0.0
    %v4595 = vsel %vm1450, %v4582, 0.0
    %v4596 = vsel %vm1451, %v4581, 0.0
    %v4597 = vsel %vm1452, %v4580, 0.0
    %v4598 = vsel %vm1453, %v4579, 0.0
    %4609 = vrot.lane.b32.xlu0 %v4589, 80
    %v4610 = vpop.permute.xlu0 %4609
    %4611 = vrot.lane.b32.xlu0 %v4590, 80
    %v4612 = vpop.permute.xlu0 %4611
    %4613 = vrot.lane.b32.xlu0 %v4591, 80
    %v4614 = vpop.permute.xlu0 %4613
    %4615 = vrot.lane.b32.xlu0 %v4592, 80
    %v4616 = vpop.permute.xlu0 %4615
    %4617 = vrot.lane.b32.xlu0 %v4593, 80
    %v4618 = vpop.permute.xlu0 %4617
    %4619 = vrot.lane.b32.xlu0 %v4594, 80
    %v4620 = vpop.permute.xlu0 %4619
    %4621 = vrot.lane.b32.xlu0 %v4595, 80
    %v4622 = vpop.permute.xlu0 %4621
    %4623 = vrot.lane.b32.xlu0 %v4596, 80
    %v4624 = vpop.permute.xlu0 %4623
    %4625 = vrot.lane.b32.xlu0 %v4597, 80
    %v4626 = vpop.permute.xlu0 %4625
    %4627 = vrot.lane.b32.xlu0 %v4598, 80
    %v4628 = vpop.permute.xlu0 %4627
    %4639 = vst.msk [vmem:[#allocation2] sm:$0xff] %vm1504, %v4610
    %4640 = vst.msk [vmem:[#allocation2 + $0x8] sm:$0xff] %vm1504, %v4612
    %4641 = vst.msk [vmem:[#allocation2 + $0x10] sm:$0xff] %vm1504, %v4614
    %4642 = vst.msk [vmem:[#allocation2 + $0x18] sm:$0xff] %vm1504, %v4616
    %4643 = vst.msk [vmem:[#allocation2 + $0x20] sm:$0xff] %vm1504, %v4618
    %4644 = vst.msk [vmem:[#allocation2 + $0x28] sm:$0xff] %vm1504, %v4620
    %4645 = vst.msk [vmem:[#allocation2 + $0x30] sm:$0xff] %vm1504, %v4622
    %4646 = vst.msk [vmem:[#allocation2 + $0x38] sm:$0xff] %vm1504, %v4624
    %4647 = vst.msk [vmem:[#allocation2 + $0x40] sm:$0xff] %vm1504, %v4626
    %4648 = vst.msk [vmem:[#allocation2 + $0x48] sm:$0xff] %vm1504, %v4628
    %v4649 = vrot.slane %v4219, 6
    %v4650 = vrot.slane %v4220, 6
    %v4651 = vrot.slane %v4221, 6
    %v4652 = vrot.slane %v4222, 6
    %v4653 = vrot.slane %v4223, 6
    %v4654 = vrot.slane %v4224, 6
    %v4655 = vrot.slane %v4225, 6
    %v4656 = vrot.slane %v4226, 6
    %v4657 = vrot.slane %v4227, 6
    %v4658 = vrot.slane %v4228, 6
    %v4659 = vsel %vm1525, %v4657, %v4658
    %v4660 = vsel %vm1525, %v4656, %v4657
    %v4661 = vsel %vm1525, %v4655, %v4656
    %v4662 = vsel %vm1525, %v4654, %v4655
    %v4663 = vsel %vm1525, %v4653, %v4654
    %v4664 = vsel %vm1525, %v4652, %v4653
    %v4665 = vsel %vm1525, %v4651, %v4652
    %v4666 = vsel %vm1525, %v4650, %v4651
    %v4667 = vsel %vm1525, %v4649, %v4650
    %v4668 = vsel %vm1525, %v4658, %v4649
    %v4669 = vsel %vm1546, %v4668, 0.0
    %v4670 = vsel %vm1547, %v4667, 0.0
    %v4671 = vsel %vm1548, %v4666, 0.0
    %v4672 = vsel %vm1549, %v4665, 0.0
    %v4673 = vsel %vm1550, %v4664, 0.0
    %v4674 = vsel %vm1551, %v4663, 0.0
    %v4675 = vsel %vm1552, %v4662, 0.0
    %v4676 = vsel %vm1553, %v4661, 0.0
    %v4677 = vsel %vm1554, %v4660, 0.0
    %v4678 = vsel %vm1555, %v4659, 0.0
    %4689 = vrot.lane.b32.xlu0 %v4669, 96
    %v4690 = vpop.permute.xlu0 %4689
    %4691 = vrot.lane.b32.xlu0 %v4670, 96
    %v4692 = vpop.permute.xlu0 %4691
    %4693 = vrot.lane.b32.xlu0 %v4671, 96
    %v4694 = vpop.permute.xlu0 %4693
    %4695 = vrot.lane.b32.xlu0 %v4672, 96
    %v4696 = vpop.permute.xlu0 %4695
    %4697 = vrot.lane.b32.xlu0 %v4673, 96
    %v4698 = vpop.permute.xlu0 %4697
    %4699 = vrot.lane.b32.xlu0 %v4674, 96
    %v4700 = vpop.permute.xlu0 %4699
    %4701 = vrot.lane.b32.xlu0 %v4675, 96
    %v4702 = vpop.permute.xlu0 %4701
    %4703 = vrot.lane.b32.xlu0 %v4676, 96
    %v4704 = vpop.permute.xlu0 %4703
    %4705 = vrot.lane.b32.xlu0 %v4677, 96
    %v4706 = vpop.permute.xlu0 %4705
    %4707 = vrot.lane.b32.xlu0 %v4678, 96
    %v4708 = vpop.permute.xlu0 %4707
    %4719 = vst.msk [vmem:[#allocation2] sm:$0xff] %vm1606, %v4690
    %4720 = vst.msk [vmem:[#allocation2 + $0x8] sm:$0xff] %vm1606, %v4692
    %4721 = vst.msk [vmem:[#allocation2 + $0x10] sm:$0xff] %vm1606, %v4694
    %4722 = vst.msk [vmem:[#allocation2 + $0x18] sm:$0xff] %vm1606, %v4696
    %4723 = vst.msk [vmem:[#allocation2 + $0x20] sm:$0xff] %vm1606, %v4698
    %4724 = vst.msk [vmem:[#allocation2 + $0x28] sm:$0xff] %vm1606, %v4700
    %4725 = vst.msk [vmem:[#allocation2 + $0x30] sm:$0xff] %vm1606, %v4702
    %4726 = vst.msk [vmem:[#allocation2 + $0x38] sm:$0xff] %vm1606, %v4704
    %4727 = vst.msk [vmem:[#allocation2 + $0x40] sm:$0xff] %vm1606, %v4706
    %4728 = vst.msk [vmem:[#allocation2 + $0x48] sm:$0xff] %vm1606, %v4708
    %v4729 = vrot.slane %v4219, 7
    %v4730 = vrot.slane %v4220, 7
    %v4731 = vrot.slane %v4221, 7
    %v4732 = vrot.slane %v4222, 7
    %v4733 = vrot.slane %v4223, 7
    %v4734 = vrot.slane %v4224, 7
    %v4735 = vrot.slane %v4225, 7
    %v4736 = vrot.slane %v4226, 7
    %v4737 = vrot.slane %v4227, 7
    %v4738 = vrot.slane %v4228, 7
    %v4739 = vsel %vm1627, %v4737, %v4738
    %v4740 = vsel %vm1627, %v4736, %v4737
    %v4741 = vsel %vm1627, %v4735, %v4736
    %v4742 = vsel %vm1627, %v4734, %v4735
    %v4743 = vsel %vm1627, %v4733, %v4734
    %v4744 = vsel %vm1627, %v4732, %v4733
    %v4745 = vsel %vm1627, %v4731, %v4732
    %v4746 = vsel %vm1627, %v4730, %v4731
    %v4747 = vsel %vm1627, %v4729, %v4730
    %v4748 = vsel %vm1627, %v4738, %v4729
    %v4749 = vsel %vm1648, %v4748, 0.0
    %v4750 = vsel %vm1649, %v4747, 0.0
    %v4751 = vsel %vm1650, %v4746, 0.0
    %v4752 = vsel %vm1651, %v4745, 0.0
    %v4753 = vsel %vm1652, %v4744, 0.0
    %v4754 = vsel %vm1653, %v4743, 0.0
    %v4755 = vsel %vm1654, %v4742, 0.0
    %v4756 = vsel %vm1655, %v4741, 0.0
    %v4757 = vsel %vm1656, %v4740, 0.0
    %v4758 = vsel %vm1657, %v4739, 0.0
    %4769 = vrot.lane.b32.xlu0 %v4749, 112
    %v4770 = vpop.permute.xlu0 %4769
    %4771 = vrot.lane.b32.xlu0 %v4750, 112
    %v4772 = vpop.permute.xlu0 %4771
    %4773 = vrot.lane.b32.xlu0 %v4751, 112
    %v4774 = vpop.permute.xlu0 %4773
    %4775 = vrot.lane.b32.xlu0 %v4752, 112
    %v4776 = vpop.permute.xlu0 %4775
    %4777 = vrot.lane.b32.xlu0 %v4753, 112
    %v4778 = vpop.permute.xlu0 %4777
    %4779 = vrot.lane.b32.xlu0 %v4754, 112
    %v4780 = vpop.permute.xlu0 %4779
    %4781 = vrot.lane.b32.xlu0 %v4755, 112
    %v4782 = vpop.permute.xlu0 %4781
    %4783 = vrot.lane.b32.xlu0 %v4756, 112
    %v4784 = vpop.permute.xlu0 %4783
    %4785 = vrot.lane.b32.xlu0 %v4757, 112
    %v4786 = vpop.permute.xlu0 %4785
    %4787 = vrot.lane.b32.xlu0 %v4758, 112
    %v4788 = vpop.permute.xlu0 %4787
    %4799 = vst.msk [vmem:[#allocation2] sm:$0xff] %vm1708, %v4770
    %4800 = vst.msk [vmem:[#allocation2 + $0x8] sm:$0xff] %vm1708, %v4772
    %4801 = vst.msk [vmem:[#allocation2 + $0x10] sm:$0xff] %vm1708, %v4774
    %4802 = vst.msk [vmem:[#allocation2 + $0x18] sm:$0xff] %vm1708, %v4776
    %4803 = vst.msk [vmem:[#allocation2 + $0x20] sm:$0xff] %vm1708, %v4778
    %4804 = vst.msk [vmem:[#allocation2 + $0x28] sm:$0xff] %vm1708, %v4780
    %4805 = vst.msk [vmem:[#allocation2 + $0x30] sm:$0xff] %vm1708, %v4782
    %4806 = vst.msk [vmem:[#allocation2 + $0x38] sm:$0xff] %vm1708, %v4784
    %4807 = vst.msk [vmem:[#allocation2 + $0x40] sm:$0xff] %vm1708, %v4786
    %4808 = vst.msk [vmem:[#allocation2 + $0x48] sm:$0xff] %vm1708, %v4788
    %v4809 = vld [vmem:[#allocation2] sm:$0xff]
    %v4810 = vld [vmem:[#allocation2 + $0x8] sm:$0xff]
    %v4811 = vld [vmem:[#allocation2 + $0x10] sm:$0xff]
    %v4812 = vld [vmem:[#allocation2 + $0x18] sm:$0xff]
    %v4813 = vld [vmem:[#allocation2 + $0x20] sm:$0xff]
    %v4814 = vld [vmem:[#allocation2 + $0x28] sm:$0xff]
    %v4815 = vld [vmem:[#allocation2 + $0x30] sm:$0xff]
    %v4816 = vld [vmem:[#allocation2 + $0x38] sm:$0xff]
    %v4817 = vld [vmem:[#allocation2 + $0x40] sm:$0xff]
    %v4818 = vld [vmem:[#allocation2 + $0x48] sm:$0xff]
    %s4819 = scalar_lea.vmem %s6, 256
    %v4820 = vld [vmem:[%s4819] sm:$0xff]
    %v4821 = vld [vmem:[%s4819 + $0x8] sm:$0xff]
    %v4822 = vld [vmem:[%s4819 + $0x10] sm:$0xff]
    %v4823 = vld [vmem:[%s4819 + $0x18] sm:$0xff]
    %v4824 = vld [vmem:[%s4819 + $0x20] sm:$0xff]
    %v4825 = vld [vmem:[%s4819 + $0x28] sm:$0xff]
    %v4826 = vld [vmem:[%s4819 + $0x30] sm:$0xff]
    %v4827 = vld [vmem:[%s4819 + $0x38] sm:$0xff]
    %v4828 = vld [vmem:[%s4819 + $0x40] sm:$0xff]
    %v4829 = vld [vmem:[%s4819 + $0x48] sm:$0xff]
    %v4830 = vld [vmem:[%s4819 + $0x50] sm:$0xff]
    %v4831 = vld [vmem:[%s4819 + $0x58] sm:$0xff]
    %v4832 = vld [vmem:[%s4819 + $0x60] sm:$0xff]
    %v4833 = vld [vmem:[%s4819 + $0x68] sm:$0xff]
    %v4834 = vld [vmem:[%s4819 + $0x70] sm:$0xff]
    %v4835 = vld [vmem:[%s4819 + $0x78] sm:$0xff]
    %v4836 = vlaneseq
    %v4837 = vshrl.u32 %v4836, 7
    %v4838 = vsub.s32 2, %v4837
    %v4839 = vrot.slane %v38, %v4838
    %4840 = vmatprep.subr.mxu0 0.0
    %4841 = vmatpush1.msra.mxu0 %v4820
    %4842 = vmatprep.subr.mxu0 0.0
    %4843 = vmatpush1.msra.mxu0 %v4821
    %4844 = vmatprep.subr.mxu0 0.0
    %4845 = vmatpush1.msra.mxu0 %v4822
    %4846 = vmatprep.subr.mxu0 0.0
    %4847 = vmatpush1.msra.mxu0 %v4823
    %4848 = vmatprep.subr.mxu0 0.0
    %4849 = vmatpush1.msra.mxu0 %v4824
    %4850 = vmatprep.subr.mxu0 0.0
    %4851 = vmatpush1.msra.mxu0 %v4825
    %4852 = vmatprep.subr.mxu0 0.0
    %4853 = vmatpush1.msra.mxu0 %v4826
    %4854 = vmatprep.subr.mxu0 0.0
    %4855 = vmatpush1.msra.mxu0 %v4827
    %4856 = vmatprep.subr.mxu0 0.0
    %4857 = vmatpush1.msra.mxu0 %v4828
    %4858 = vmatprep.subr.mxu0 0.0
    %4859 = vmatpush1.msra.mxu0 %v4829
    %4860 = vmatprep.subr.mxu0 0.0
    %4861 = vmatpush1.msra.mxu0 %v4830
    %4862 = vmatprep.subr.mxu0 0.0
    %4863 = vmatpush1.msra.mxu0 %v4831
    %4864 = vmatprep.subr.mxu0 0.0
    %4865 = vmatpush1.msra.mxu0 %v4832
    %4866 = vmatprep.subr.mxu0 0.0
    %4867 = vmatpush1.msra.mxu0 %v4833
    %4868 = vmatprep.subr.mxu0 0.0
    %4869 = vmatpush1.msra.mxu0 %v4834
    %4870 = vmatprep.subr.mxu0 0.0
    %4871 = vmatpush1.msra.mxu0 %v4835
    %4872 = vmatprep.subr.mxu0 0.0
    %4873 = vmatpush1.msra.mxu0 0.0
    %4874 = vmatprep.subr.mxu0 0.0
    %4875 = vmatpush1.msra.mxu0 0.0
    %4876 = vmatprep.subr.mxu0 0.0
    %4877 = vmatpush1.msra.mxu0 0.0
    %4878 = vmatprep.subr.mxu0 0.0
    %4879 = vmatpush1.msra.mxu0 0.0
    %4880 = vmatprep.subr.mxu0 0.0
    %4881 = vmatpush1.msra.mxu0 0.0
    %4882 = vmatprep.subr.mxu0 0.0
    %4883 = vmatpush1.msra.mxu0 0.0
    %4884 = vmatprep.subr.mxu0 0.0
    %4885 = vmatpush1.msra.mxu0 0.0
    %4886 = vmatprep.subr.mxu0 0.0
    %4887 = vmatpush1.msra.mxu0 0.0
    %4888 = vmatprep.subr.mxu0 0.0
    %4889 = vmatpush1.msra.mxu0 0.0
    %4890 = vmatprep.subr.mxu0 0.0
    %4891 = vmatpush1.msra.mxu0 0.0
    %4892 = vmatprep.subr.mxu0 0.0
    %4893 = vmatpush1.msra.mxu0 0.0
    %4894 = vmatprep.subr.mxu0 0.0
    %4895 = vmatpush1.msra.mxu0 0.0
    %4896 = vmatprep.subr.mxu0 0.0
    %4897 = vmatpush1.msra.mxu0 0.0
    %4898 = vmatprep.subr.mxu0 0.0
    %4899 = vmatpush1.msra.mxu0 0.0
    %4900 = vmatprep.subr.mxu0 0.0
    %4901 = vmatpush1.msra.mxu0 0.0
    %4902 = vmatprep.subr.mxu0 0.0
    %4903 = vmatpush1.msra.mxu0 0.0
    %4904 = vmatprep.mubr.f32.mxu0 0.0
    %4905 = vmatmul.mubr.f32.gmra.mrb[0].mxu0 %v4809
    %v4906 = vpop.f32.mrb[0].mxu0
    %v4907 = vadd.f32 %v4839, %v4906
    %v4908 = vpop.f32.mrb[0].mxu0
    %4909 = vmatprep.mubr.f32.mxu0 0.0
    %4910 = vmatmul.mubr.f32.gmra.mrb[0].mxu0 %v4810
    %v4911 = vpop.f32.mrb[0].mxu0
    %v4912 = vadd.f32 %v4839, %v4911
    %v4913 = vpop.f32.mrb[0].mxu0
    %4914 = vmatprep.mubr.f32.mxu0 0.0
    %4915 = vmatmul.mubr.f32.gmra.mrb[0].mxu0 %v4811
    %v4916 = vpop.f32.mrb[0].mxu0
    %v4917 = vadd.f32 %v4839, %v4916
    %v4918 = vpop.f32.mrb[0].mxu0
    %4919 = vmatprep.mubr.f32.mxu0 0.0
    %4920 = vmatmul.mubr.f32.gmra.mrb[0].mxu0 %v4812
    %v4921 = vpop.f32.mrb[0].mxu0
    %v4922 = vadd.f32 %v4839, %v4921
    %v4923 = vpop.f32.mrb[0].mxu0
    %4924 = vmatprep.mubr.f32.mxu0 0.0
    %4925 = vmatmul.mubr.f32.gmra.mrb[0].mxu0 %v4813
    %v4926 = vpop.f32.mrb[0].mxu0
    %v4927 = vadd.f32 %v4839, %v4926
    %v4928 = vpop.f32.mrb[0].mxu0
    %4929 = vmatprep.mubr.f32.mxu0 0.0
    %4930 = vmatmul.mubr.f32.gmra.mrb[0].mxu0 %v4814
    %v4931 = vpop.f32.mrb[0].mxu0
    %v4932 = vadd.f32 %v4839, %v4931
    %v4933 = vpop.f32.mrb[0].mxu0
    %4934 = vmatprep.mubr.f32.mxu0 0.0
    %4935 = vmatmul.mubr.f32.gmra.mrb[0].mxu0 %v4815
    %v4936 = vpop.f32.mrb[0].mxu0
    %v4937 = vadd.f32 %v4839, %v4936
    %v4938 = vpop.f32.mrb[0].mxu0
    %4939 = vmatprep.mubr.f32.mxu0 0.0
    %4940 = vmatmul.mubr.f32.gmra.mrb[0].mxu0 %v4816
    %v4941 = vpop.f32.mrb[0].mxu0
    %v4942 = vadd.f32 %v4839, %v4941
    %v4943 = vpop.f32.mrb[0].mxu0
    %4944 = vmatprep.mubr.f32.mxu0 0.0
    %4945 = vmatmul.mubr.f32.gmra.mrb[0].mxu0 %v4817
    %v4946 = vpop.f32.mrb[0].mxu0
    %v4947 = vadd.f32 %v4839, %v4946
    %v4948 = vpop.f32.mrb[0].mxu0
    %4949 = vmatprep.mubr.f32.mxu0 0.0
    %4950 = vmatmul.mubr.f32.gmra.mrb[0].mxu0 %v4818
    %v4951 = vpop.f32.mrb[0].mxu0
    %v4952 = vadd.f32 %v4839, %v4951
    %v4953 = vpop.f32.mrb[0].mxu0
    %4954 = vdwg.mxu0
    %v4955 = vsel %vm191, %v4907, 0.0
    %4956 = vadd.xlane.f32.xlu0 %v4955
    %v4957 = vpop.xlane.xlu0 %4956
    %v4958 = vsel %vm191, %v4912, 0.0
    %4959 = vadd.xlane.f32.xlu0 %v4958
    %v4960 = vpop.xlane.xlu0 %4959
    %v4961 = vsel %vm191, %v4917, 0.0
    %4962 = vadd.xlane.f32.xlu0 %v4961
    %v4963 = vpop.xlane.xlu0 %4962
    %v4964 = vsel %vm191, %v4922, 0.0
    %4965 = vadd.xlane.f32.xlu0 %v4964
    %v4966 = vpop.xlane.xlu0 %4965
    %v4967 = vsel %vm191, %v4927, 0.0
    %4968 = vadd.xlane.f32.xlu0 %v4967
    %v4969 = vpop.xlane.xlu0 %4968
    %v4970 = vsel %vm191, %v4932, 0.0
    %4971 = vadd.xlane.f32.xlu0 %v4970
    %v4972 = vpop.xlane.xlu0 %4971
    %v4973 = vsel %vm191, %v4937, 0.0
    %4974 = vadd.xlane.f32.xlu0 %v4973
    %v4975 = vpop.xlane.xlu0 %4974
    %v4976 = vsel %vm191, %v4942, 0.0
    %4977 = vadd.xlane.f32.xlu0 %v4976
    %v4978 = vpop.xlane.xlu0 %4977
    %v4979 = vsel %vm191, %v4947, 0.0
    %4980 = vadd.xlane.f32.xlu0 %v4979
    %v4981 = vpop.xlane.xlu0 %4980
    %v4982 = vsel %vm191, %v4952, 0.0
    %4983 = vadd.xlane.f32.xlu0 %v4982
    %v4984 = vpop.xlane.xlu0 %4983
    %v4985 = vmul.f32 %v4957, %v222
    %v4986 = vmul.f32 %v4960, %v222
    %v4987 = vmul.f32 %v4963, %v222
    %v4988 = vmul.f32 %v4966, %v222
    %v4989 = vmul.f32 %v4969, %v222
    %v4990 = vmul.f32 %v4972, %v222
    %v4991 = vmul.f32 %v4975, %v222
    %v4992 = vmul.f32 %v4978, %v222
    %v4993 = vmul.f32 %v4981, %v222
    %v4994 = vmul.f32 %v4984, %v222
    %v4995 = vsub.f32 %v4907, %v4985
    %v4996 = vsub.f32 %v4912, %v4986
    %v4997 = vsub.f32 %v4917, %v4987
    %v4998 = vsub.f32 %v4922, %v4988
    %v4999 = vsub.f32 %v4927, %v4989
    %v5000 = vsub.f32 %v4932, %v4990
    %v5001 = vsub.f32 %v4937, %v4991
    %v5002 = vsub.f32 %v4942, %v4992
    %v5003 = vsub.f32 %v4947, %v4993
    %v5004 = vsub.f32 %v4952, %v4994
    %v5005 = vmul.f32 %v4995, %v4995
    %v5006 = vmul.f32 %v4996, %v4996
    %v5007 = vmul.f32 %v4997, %v4997
    %v5008 = vmul.f32 %v4998, %v4998
    %v5009 = vmul.f32 %v4999, %v4999
    %v5010 = vmul.f32 %v5000, %v5000
    %v5011 = vmul.f32 %v5001, %v5001
    %v5012 = vmul.f32 %v5002, %v5002
    %v5013 = vmul.f32 %v5003, %v5003
    %v5014 = vmul.f32 %v5004, %v5004
    %v5015 = vsel %vm191, %v5005, 0.0
    %5016 = vadd.xlane.f32.xlu0 %v5015
    %v5017 = vpop.xlane.xlu0 %5016
    %v5018 = vsel %vm191, %v5006, 0.0
    %5019 = vadd.xlane.f32.xlu0 %v5018
    %v5020 = vpop.xlane.xlu0 %5019
    %v5021 = vsel %vm191, %v5007, 0.0
    %5022 = vadd.xlane.f32.xlu0 %v5021
    %v5023 = vpop.xlane.xlu0 %5022
    %v5024 = vsel %vm191, %v5008, 0.0
    %5025 = vadd.xlane.f32.xlu0 %v5024
    %v5026 = vpop.xlane.xlu0 %5025
    %v5027 = vsel %vm191, %v5009, 0.0
    %5028 = vadd.xlane.f32.xlu0 %v5027
    %v5029 = vpop.xlane.xlu0 %5028
    %v5030 = vsel %vm191, %v5010, 0.0
    %5031 = vadd.xlane.f32.xlu0 %v5030
    %v5032 = vpop.xlane.xlu0 %5031
    %v5033 = vsel %vm191, %v5011, 0.0
    %5034 = vadd.xlane.f32.xlu0 %v5033
    %v5035 = vpop.xlane.xlu0 %5034
    %v5036 = vsel %vm191, %v5012, 0.0
    %5037 = vadd.xlane.f32.xlu0 %v5036
    %v5038 = vpop.xlane.xlu0 %5037
    %v5039 = vsel %vm191, %v5013, 0.0
    %5040 = vadd.xlane.f32.xlu0 %v5039
    %v5041 = vpop.xlane.xlu0 %5040
    %v5042 = vsel %vm191, %v5014, 0.0
    %5043 = vadd.xlane.f32.xlu0 %v5042
    %v5044 = vpop.xlane.xlu0 %5043
    %v5045 = vmul.f32 %v5017, %v222
    %v5046 = vmul.f32 %v5020, %v222
    %v5047 = vmul.f32 %v5023, %v222
    %v5048 = vmul.f32 %v5026, %v222
    %v5049 = vmul.f32 %v5029, %v222
    %v5050 = vmul.f32 %v5032, %v222
    %v5051 = vmul.f32 %v5035, %v222
    %v5052 = vmul.f32 %v5038, %v222
    %v5053 = vmul.f32 %v5041, %v222
    %v5054 = vmul.f32 %v5044, %v222
    %v5055 = vadd.f32 %v5045, 1e-12
    %v5056 = vadd.f32 %v5046, 1e-12
    %v5057 = vadd.f32 %v5047, 1e-12
    %v5058 = vadd.f32 %v5048, 1e-12
    %v5059 = vadd.f32 %v5049, 1e-12
    %v5060 = vadd.f32 %v5050, 1e-12
    %v5061 = vadd.f32 %v5051, 1e-12
    %v5062 = vadd.f32 %v5052, 1e-12
    %v5063 = vadd.f32 %v5053, 1e-12
    %v5064 = vadd.f32 %v5054, 1e-12
    %v5065 = vrsqrt.pop %v5055
    %v5066 = vrsqrt.pop %v5056
    %v5067 = vrsqrt.pop %v5057
    %v5068 = vrsqrt.pop %v5058
    %v5069 = vrsqrt.pop %v5059
    %v5070 = vrsqrt.pop %v5060
    %v5071 = vrsqrt.pop %v5061
    %v5072 = vrsqrt.pop %v5062
    %v5073 = vrsqrt.pop %v5063
    %v5074 = vrsqrt.pop %v5064
    %v5075 = vmul.f32 %v4995, %v5065
    %v5076 = vmul.f32 %v4996, %v5066
    %v5077 = vmul.f32 %v4997, %v5067
    %v5078 = vmul.f32 %v4998, %v5068
    %v5079 = vmul.f32 %v4999, %v5069
    %v5080 = vmul.f32 %v5000, %v5070
    %v5081 = vmul.f32 %v5001, %v5071
    %v5082 = vmul.f32 %v5002, %v5072
    %v5083 = vmul.f32 %v5003, %v5073
    %v5084 = vmul.f32 %v5004, %v5074
    %v5085 = vlaneseq
    %v5086 = vshrl.u32 %v5085, 7
    %v5087 = vsub.s32 3, %v5086
    %v5088 = vrot.slane %v38, %v5087
    %v5089 = vmul.f32 %v5075, %v5088
    %v5090 = vmul.f32 %v5076, %v5088
    %v5091 = vmul.f32 %v5077, %v5088
    %v5092 = vmul.f32 %v5078, %v5088
    %v5093 = vmul.f32 %v5079, %v5088
    %v5094 = vmul.f32 %v5080, %v5088
    %v5095 = vmul.f32 %v5081, %v5088
    %v5096 = vmul.f32 %v5082, %v5088
    %v5097 = vmul.f32 %v5083, %v5088
    %v5098 = vmul.f32 %v5084, %v5088
    %v5099 = vlaneseq
    %v5100 = vshrl.u32 %v5099, 7
    %v5101 = vsub.s32 4, %v5100
    %v5102 = vrot.slane %v38, %v5101
    %v5103 = vadd.f32 %v5089, %v5102
    %v5104 = vadd.f32 %v5090, %v5102
    %v5105 = vadd.f32 %v5091, %v5102
    %v5106 = vadd.f32 %v5092, %v5102
    %v5107 = vadd.f32 %v5093, %v5102
    %v5108 = vadd.f32 %v5094, %v5102
    %v5109 = vadd.f32 %v5095, %v5102
    %v5110 = vadd.f32 %v5096, %v5102
    %v5111 = vadd.f32 %v5097, %v5102
    %v5112 = vadd.f32 %v5098, %v5102
    %v5113 = vmax.f32 %v5103, 0.0
    %v5114 = vmax.f32 %v5104, 0.0
    %v5115 = vmax.f32 %v5105, 0.0
    %v5116 = vmax.f32 %v5106, 0.0
    %v5117 = vmax.f32 %v5107, 0.0
    %v5118 = vmax.f32 %v5108, 0.0
    %v5119 = vmax.f32 %v5109, 0.0
    %v5120 = vmax.f32 %v5110, 0.0
    %v5121 = vmax.f32 %v5111, 0.0
    %v5122 = vmax.f32 %v5112, 0.0
    %s5123 = scalar_lea.vmem %s7, 32
    %v5124 = vld [vmem:[%s5123] sm:$0xff]
    %v5125 = vld [vmem:[%s5123 + $0x8] sm:$0xff]
    %v5126 = vlaneseq
    %v5127 = vshrl.u32 %v5126, 7
    %v5128 = vsub.s32 5, %v5127
    %v5129 = vrot.slane %v38, %v5128
    %v5131 = vsel %vm191, %v5113, 0
    %v5134 = vsel %vm191, %v5114, 0
    %v5137 = vsel %vm191, %v5115, 0
    %v5140 = vsel %vm191, %v5116, 0
    %v5143 = vsel %vm191, %v5117, 0
    %v5146 = vsel %vm191, %v5118, 0
    %v5149 = vsel %vm191, %v5119, 0
    %v5152 = vsel %vm191, %v5120, 0
    %v5155 = vsel %vm191, %v5121, 0
    %v5158 = vsel %vm191, %v5122, 0
    %5160 = vmatprep.subr.mxu0 0.0
    %5161 = vmatpush1.msra.mxu0 %v5124
    %5162 = vmatprep.subr.mxu0 0.0
    %5163 = vmatpush1.msra.mxu0 %v5125
    %5164 = vmatprep.subr.mxu0 0.0
    %5165 = vmatpush1.msra.mxu0 0.0
    %5166 = vmatprep.subr.mxu0 0.0
    %5167 = vmatpush1.msra.mxu0 0.0
    %5168 = vmatprep.subr.mxu0 0.0
    %5169 = vmatpush1.msra.mxu0 0.0
    %5170 = vmatprep.subr.mxu0 0.0
    %5171 = vmatpush1.msra.mxu0 0.0
    %5172 = vmatprep.subr.mxu0 0.0
    %5173 = vmatpush1.msra.mxu0 0.0
    %5174 = vmatprep.subr.mxu0 0.0
    %5175 = vmatpush1.msra.mxu0 0.0
    %5176 = vmatprep.subr.mxu0 0.0
    %5177 = vmatpush1.msra.mxu0 0.0
    %5178 = vmatprep.subr.mxu0 0.0
    %5179 = vmatpush1.msra.mxu0 0.0
    %5180 = vmatprep.subr.mxu0 0.0
    %5181 = vmatpush1.msra.mxu0 0.0
    %5182 = vmatprep.subr.mxu0 0.0
    %5183 = vmatpush1.msra.mxu0 0.0
    %5184 = vmatprep.subr.mxu0 0.0
    %5185 = vmatpush1.msra.mxu0 0.0
    %5186 = vmatprep.subr.mxu0 0.0
    %5187 = vmatpush1.msra.mxu0 0.0
    %5188 = vmatprep.subr.mxu0 0.0
    %5189 = vmatpush1.msra.mxu0 0.0
    %5190 = vmatprep.subr.mxu0 0.0
    %5191 = vmatpush1.msra.mxu0 0.0
    %5192 = vmatprep.subr.mxu0 0.0
    %5193 = vmatpush1.msra.mxu0 0.0
    %5194 = vmatprep.subr.mxu0 0.0
    %5195 = vmatpush1.msra.mxu0 0.0
    %5196 = vmatprep.subr.mxu0 0.0
    %5197 = vmatpush1.msra.mxu0 0.0
    %5198 = vmatprep.subr.mxu0 0.0
    %5199 = vmatpush1.msra.mxu0 0.0
    %5200 = vmatprep.subr.mxu0 0.0
    %5201 = vmatpush1.msra.mxu0 0.0
    %5202 = vmatprep.subr.mxu0 0.0
    %5203 = vmatpush1.msra.mxu0 0.0
    %5204 = vmatprep.subr.mxu0 0.0
    %5205 = vmatpush1.msra.mxu0 0.0
    %5206 = vmatprep.subr.mxu0 0.0
    %5207 = vmatpush1.msra.mxu0 0.0
    %5208 = vmatprep.subr.mxu0 0.0
    %5209 = vmatpush1.msra.mxu0 0.0
    %5210 = vmatprep.subr.mxu0 0.0
    %5211 = vmatpush1.msra.mxu0 0.0
    %5212 = vmatprep.subr.mxu0 0.0
    %5213 = vmatpush1.msra.mxu0 0.0
    %5214 = vmatprep.subr.mxu0 0.0
    %5215 = vmatpush1.msra.mxu0 0.0
    %5216 = vmatprep.subr.mxu0 0.0
    %5217 = vmatpush1.msra.mxu0 0.0
    %5218 = vmatprep.subr.mxu0 0.0
    %5219 = vmatpush1.msra.mxu0 0.0
    %5220 = vmatprep.subr.mxu0 0.0
    %5221 = vmatpush1.msra.mxu0 0.0
    %5222 = vmatprep.subr.mxu0 0.0
    %5223 = vmatpush1.msra.mxu0 0.0
    %5224 = vmatprep.mubr.f32.mxu0 0.0
    %5225 = vmatmul.mubr.f32.gmra.mrb[0].mxu0 %v5131
    %v5226 = vpop.f32.mrb[0].mxu0
    %v5227 = vadd.f32 %v5129, %v5226
    %v5228 = vpop.f32.mrb[0].mxu0
    %5229 = vmatprep.mubr.f32.mxu0 0.0
    %5230 = vmatmul.mubr.f32.gmra.mrb[0].mxu0 %v5134
    %v5231 = vpop.f32.mrb[0].mxu0
    %v5232 = vadd.f32 %v5129, %v5231
    %v5233 = vpop.f32.mrb[0].mxu0
    %5234 = vmatprep.mubr.f32.mxu0 0.0
    %5235 = vmatmul.mubr.f32.gmra.mrb[0].mxu0 %v5137
    %v5236 = vpop.f32.mrb[0].mxu0
    %v5237 = vadd.f32 %v5129, %v5236
    %v5238 = vpop.f32.mrb[0].mxu0
    %5239 = vmatprep.mubr.f32.mxu0 0.0
    %5240 = vmatmul.mubr.f32.gmra.mrb[0].mxu0 %v5140
    %v5241 = vpop.f32.mrb[0].mxu0
    %v5242 = vadd.f32 %v5129, %v5241
    %v5243 = vpop.f32.mrb[0].mxu0
    %5244 = vmatprep.mubr.f32.mxu0 0.0
    %5245 = vmatmul.mubr.f32.gmra.mrb[0].mxu0 %v5143
    %v5246 = vpop.f32.mrb[0].mxu0
    %v5247 = vadd.f32 %v5129, %v5246
    %v5248 = vpop.f32.mrb[0].mxu0
    %5249 = vmatprep.mubr.f32.mxu0 0.0
    %5250 = vmatmul.mubr.f32.gmra.mrb[0].mxu0 %v5146
    %v5251 = vpop.f32.mrb[0].mxu0
    %v5252 = vadd.f32 %v5129, %v5251
    %v5253 = vpop.f32.mrb[0].mxu0
    %5254 = vmatprep.mubr.f32.mxu0 0.0
    %5255 = vmatmul.mubr.f32.gmra.mrb[0].mxu0 %v5149
    %v5256 = vpop.f32.mrb[0].mxu0
    %v5257 = vadd.f32 %v5129, %v5256
    %v5258 = vpop.f32.mrb[0].mxu0
    %5259 = vmatprep.mubr.f32.mxu0 0.0
    %5260 = vmatmul.mubr.f32.gmra.mrb[0].mxu0 %v5152
    %v5261 = vpop.f32.mrb[0].mxu0
    %v5262 = vadd.f32 %v5129, %v5261
    %v5263 = vpop.f32.mrb[0].mxu0
    %5264 = vmatprep.mubr.f32.mxu0 0.0
    %5265 = vmatmul.mubr.f32.gmra.mrb[0].mxu0 %v5155
    %v5266 = vpop.f32.mrb[0].mxu0
    %v5267 = vadd.f32 %v5129, %v5266
    %v5268 = vpop.f32.mrb[0].mxu0
    %5269 = vmatprep.mubr.f32.mxu0 0.0
    %5270 = vmatmul.mubr.f32.gmra.mrb[0].mxu0 %v5158
    %v5271 = vpop.f32.mrb[0].mxu0
    %v5272 = vadd.f32 %v5129, %v5271
    %v5273 = vpop.f32.mrb[0].mxu0
    %5274 = vdwg.mxu0
    %v5275 = vadd.f32 %v5227, %v3729
    %v5276 = vadd.f32 %v5232, %v3730
    %v5277 = vadd.f32 %v5237, %v3731
    %v5278 = vadd.f32 %v5242, %v3732
    %v5279 = vadd.f32 %v5247, %v3733
    %v5280 = vadd.f32 %v5252, %v3734
    %v5281 = vadd.f32 %v5257, %v3735
    %v5282 = vadd.f32 %v5262, %v3736
    %v5283 = vadd.f32 %v5267, %v3737
    %v5284 = vadd.f32 %v5272, %v3738
    %v5285 = vsel %vm474, %v5275, 0.0
    %5286 = vadd.xlane.f32.xlu0 %v5285
    %v5287 = vpop.xlane.xlu0 %5286
    %v5288 = vsel %vm474, %v5276, 0.0
    %5289 = vadd.xlane.f32.xlu0 %v5288
    %v5290 = vpop.xlane.xlu0 %5289
    %v5291 = vsel %vm474, %v5277, 0.0
    %5292 = vadd.xlane.f32.xlu0 %v5291
    %v5293 = vpop.xlane.xlu0 %5292
    %v5294 = vsel %vm474, %v5278, 0.0
    %5295 = vadd.xlane.f32.xlu0 %v5294
    %v5296 = vpop.xlane.xlu0 %5295
    %v5297 = vsel %vm474, %v5279, 0.0
    %5298 = vadd.xlane.f32.xlu0 %v5297
    %v5299 = vpop.xlane.xlu0 %5298
    %v5300 = vsel %vm474, %v5280, 0.0
    %5301 = vadd.xlane.f32.xlu0 %v5300
    %v5302 = vpop.xlane.xlu0 %5301
    %v5303 = vsel %vm474, %v5281, 0.0
    %5304 = vadd.xlane.f32.xlu0 %v5303
    %v5305 = vpop.xlane.xlu0 %5304
    %v5306 = vsel %vm474, %v5282, 0.0
    %5307 = vadd.xlane.f32.xlu0 %v5306
    %v5308 = vpop.xlane.xlu0 %5307
    %v5309 = vsel %vm474, %v5283, 0.0
    %5310 = vadd.xlane.f32.xlu0 %v5309
    %v5311 = vpop.xlane.xlu0 %5310
    %v5312 = vsel %vm474, %v5284, 0.0
    %5313 = vadd.xlane.f32.xlu0 %v5312
    %v5314 = vpop.xlane.xlu0 %5313
    %v5315 = vmul.f32 %v5287, %v505
    %v5316 = vmul.f32 %v5290, %v505
    %v5317 = vmul.f32 %v5293, %v505
    %v5318 = vmul.f32 %v5296, %v505
    %v5319 = vmul.f32 %v5299, %v505
    %v5320 = vmul.f32 %v5302, %v505
    %v5321 = vmul.f32 %v5305, %v505
    %v5322 = vmul.f32 %v5308, %v505
    %v5323 = vmul.f32 %v5311, %v505
    %v5324 = vmul.f32 %v5314, %v505
    %v5325 = vsub.f32 %v5275, %v5315
    %v5326 = vsub.f32 %v5276, %v5316
    %v5327 = vsub.f32 %v5277, %v5317
    %v5328 = vsub.f32 %v5278, %v5318
    %v5329 = vsub.f32 %v5279, %v5319
    %v5330 = vsub.f32 %v5280, %v5320
    %v5331 = vsub.f32 %v5281, %v5321
    %v5332 = vsub.f32 %v5282, %v5322
    %v5333 = vsub.f32 %v5283, %v5323
    %v5334 = vsub.f32 %v5284, %v5324
    %v5335 = vmul.f32 %v5325, %v5325
    %v5336 = vmul.f32 %v5326, %v5326
    %v5337 = vmul.f32 %v5327, %v5327
    %v5338 = vmul.f32 %v5328, %v5328
    %v5339 = vmul.f32 %v5329, %v5329
    %v5340 = vmul.f32 %v5330, %v5330
    %v5341 = vmul.f32 %v5331, %v5331
    %v5342 = vmul.f32 %v5332, %v5332
    %v5343 = vmul.f32 %v5333, %v5333
    %v5344 = vmul.f32 %v5334, %v5334
    %v5345 = vsel %vm474, %v5335, 0.0
    %5346 = vadd.xlane.f32.xlu0 %v5345
    %v5347 = vpop.xlane.xlu0 %5346
    %v5348 = vsel %vm474, %v5336, 0.0
    %5349 = vadd.xlane.f32.xlu0 %v5348
    %v5350 = vpop.xlane.xlu0 %5349
    %v5351 = vsel %vm474, %v5337, 0.0
    %5352 = vadd.xlane.f32.xlu0 %v5351
    %v5353 = vpop.xlane.xlu0 %5352
    %v5354 = vsel %vm474, %v5338, 0.0
    %5355 = vadd.xlane.f32.xlu0 %v5354
    %v5356 = vpop.xlane.xlu0 %5355
    %v5357 = vsel %vm474, %v5339, 0.0
    %5358 = vadd.xlane.f32.xlu0 %v5357
    %v5359 = vpop.xlane.xlu0 %5358
    %v5360 = vsel %vm474, %v5340, 0.0
    %5361 = vadd.xlane.f32.xlu0 %v5360
    %v5362 = vpop.xlane.xlu0 %5361
    %v5363 = vsel %vm474, %v5341, 0.0
    %5364 = vadd.xlane.f32.xlu0 %v5363
    %v5365 = vpop.xlane.xlu0 %5364
    %v5366 = vsel %vm474, %v5342, 0.0
    %5367 = vadd.xlane.f32.xlu0 %v5366
    %v5368 = vpop.xlane.xlu0 %5367
    %v5369 = vsel %vm474, %v5343, 0.0
    %5370 = vadd.xlane.f32.xlu0 %v5369
    %v5371 = vpop.xlane.xlu0 %5370
    %v5372 = vsel %vm474, %v5344, 0.0
    %5373 = vadd.xlane.f32.xlu0 %v5372
    %v5374 = vpop.xlane.xlu0 %5373
    %v5375 = vmul.f32 %v5347, %v505
    %v5376 = vmul.f32 %v5350, %v505
    %v5377 = vmul.f32 %v5353, %v505
    %v5378 = vmul.f32 %v5356, %v505
    %v5379 = vmul.f32 %v5359, %v505
    %v5380 = vmul.f32 %v5362, %v505
    %v5381 = vmul.f32 %v5365, %v505
    %v5382 = vmul.f32 %v5368, %v505
    %v5383 = vmul.f32 %v5371, %v505
    %v5384 = vmul.f32 %v5374, %v505
    %v5385 = vadd.f32 %v5375, 1e-12
    %v5386 = vadd.f32 %v5376, 1e-12
    %v5387 = vadd.f32 %v5377, 1e-12
    %v5388 = vadd.f32 %v5378, 1e-12
    %v5389 = vadd.f32 %v5379, 1e-12
    %v5390 = vadd.f32 %v5380, 1e-12
    %v5391 = vadd.f32 %v5381, 1e-12
    %v5392 = vadd.f32 %v5382, 1e-12
    %v5393 = vadd.f32 %v5383, 1e-12
    %v5394 = vadd.f32 %v5384, 1e-12
    %v5395 = vrsqrt.pop %v5385
    %v5396 = vrsqrt.pop %v5386
    %v5397 = vrsqrt.pop %v5387
    %v5398 = vrsqrt.pop %v5388
    %v5399 = vrsqrt.pop %v5389
    %v5400 = vrsqrt.pop %v5390
    %v5401 = vrsqrt.pop %v5391
    %v5402 = vrsqrt.pop %v5392
    %v5403 = vrsqrt.pop %v5393
    %v5404 = vrsqrt.pop %v5394
    %v5405 = vmul.f32 %v5325, %v5395
    %v5406 = vmul.f32 %v5326, %v5396
    %v5407 = vmul.f32 %v5327, %v5397
    %v5408 = vmul.f32 %v5328, %v5398
    %v5409 = vmul.f32 %v5329, %v5399
    %v5410 = vmul.f32 %v5330, %v5400
    %v5411 = vmul.f32 %v5331, %v5401
    %v5412 = vmul.f32 %v5332, %v5402
    %v5413 = vmul.f32 %v5333, %v5403
    %v5414 = vmul.f32 %v5334, %v5404
    %v5415 = vlaneseq
    %v5416 = vshrl.u32 %v5415, 7
    %v5417 = vsub.s32 6, %v5416
    %v5418 = vrot.slane %v38, %v5417
    %v5419 = vmul.f32 %v5405, %v5418
    %v5420 = vmul.f32 %v5406, %v5418
    %v5421 = vmul.f32 %v5407, %v5418
    %v5422 = vmul.f32 %v5408, %v5418
    %v5423 = vmul.f32 %v5409, %v5418
    %v5424 = vmul.f32 %v5410, %v5418
    %v5425 = vmul.f32 %v5411, %v5418
    %v5426 = vmul.f32 %v5412, %v5418
    %v5427 = vmul.f32 %v5413, %v5418
    %v5428 = vmul.f32 %v5414, %v5418
    %v5429 = vlaneseq
    %v5430 = vshrl.u32 %v5429, 7
    %v5431 = vsub.s32 7, %v5430
    %v5432 = vrot.slane %v38, %v5431
    %v5433 = vadd.f32 %v5419, %v5432
    %v5434 = vadd.f32 %v5420, %v5432
    %v5435 = vadd.f32 %v5421, %v5432
    %v5436 = vadd.f32 %v5422, %v5432
    %v5437 = vadd.f32 %v5423, %v5432
    %v5438 = vadd.f32 %v5424, %v5432
    %v5439 = vadd.f32 %v5425, %v5432
    %v5440 = vadd.f32 %v5426, %v5432
    %v5441 = vadd.f32 %v5427, %v5432
    %v5442 = vadd.f32 %v5428, %v5432
    %v5443 = vmax.f32 %v5433, 0.0
    %v5444 = vmax.f32 %v5434, 0.0
    %v5445 = vmax.f32 %v5435, 0.0
    %v5446 = vmax.f32 %v5436, 0.0
    %v5447 = vmax.f32 %v5437, 0.0
    %v5448 = vmax.f32 %v5438, 0.0
    %v5449 = vmax.f32 %v5439, 0.0
    %v5450 = vmax.f32 %v5440, 0.0
    %v5451 = vmax.f32 %v5441, 0.0
    %v5452 = vmax.f32 %v5442, 0.0
    %s5453 = scalar_lea.vmem %s5, 96
    %v5454 = vld [vmem:[%s5453] sm:$0xff]
    %v5455 = vld [vmem:[%s5453 + $0x8] sm:$0xff]
    %v5456 = vld [vmem:[%s5453 + $0x10] sm:$0xff]
    %v5457 = vld [vmem:[%s5453 + $0x18] sm:$0xff]
    %v5458 = vlaneseq
    %v5459 = vshrl.u32 %v5458, 7
    %v5460 = vsub.s32 0, %v5459
    %v5461 = vrot.slane %v39, %v5460
    %v5463 = vsel %vm474, %v5443, 0
    %v5466 = vsel %vm474, %v5444, 0
    %v5469 = vsel %vm474, %v5445, 0
    %v5472 = vsel %vm474, %v5446, 0
    %v5475 = vsel %vm474, %v5447, 0
    %v5478 = vsel %vm474, %v5448, 0
    %v5481 = vsel %vm474, %v5449, 0
    %v5484 = vsel %vm474, %v5450, 0
    %v5487 = vsel %vm474, %v5451, 0
    %v5490 = vsel %vm474, %v5452, 0
    %5492 = vmatprep.subr.mxu0 0.0
    %5493 = vmatpush1.msra.mxu0 %v5454
    %5494 = vmatprep.subr.mxu0 0.0
    %5495 = vmatpush1.msra.mxu0 %v5455
    %5496 = vmatprep.subr.mxu0 0.0
    %5497 = vmatpush1.msra.mxu0 %v5456
    %5498 = vmatprep.subr.mxu0 0.0
    %5499 = vmatpush1.msra.mxu0 %v5457
    %5500 = vmatprep.subr.mxu0 0.0
    %5501 = vmatpush1.msra.mxu0 0.0
    %5502 = vmatprep.subr.mxu0 0.0
    %5503 = vmatpush1.msra.mxu0 0.0
    %5504 = vmatprep.subr.mxu0 0.0
    %5505 = vmatpush1.msra.mxu0 0.0
    %5506 = vmatprep.subr.mxu0 0.0
    %5507 = vmatpush1.msra.mxu0 0.0
    %5508 = vmatprep.subr.mxu0 0.0
    %5509 = vmatpush1.msra.mxu0 0.0
    %5510 = vmatprep.subr.mxu0 0.0
    %5511 = vmatpush1.msra.mxu0 0.0
    %5512 = vmatprep.subr.mxu0 0.0
    %5513 = vmatpush1.msra.mxu0 0.0
    %5514 = vmatprep.subr.mxu0 0.0
    %5515 = vmatpush1.msra.mxu0 0.0
    %5516 = vmatprep.subr.mxu0 0.0
    %5517 = vmatpush1.msra.mxu0 0.0
    %5518 = vmatprep.subr.mxu0 0.0
    %5519 = vmatpush1.msra.mxu0 0.0
    %5520 = vmatprep.subr.mxu0 0.0
    %5521 = vmatpush1.msra.mxu0 0.0
    %5522 = vmatprep.subr.mxu0 0.0
    %5523 = vmatpush1.msra.mxu0 0.0
    %5524 = vmatprep.subr.mxu0 0.0
    %5525 = vmatpush1.msra.mxu0 0.0
    %5526 = vmatprep.subr.mxu0 0.0
    %5527 = vmatpush1.msra.mxu0 0.0
    %5528 = vmatprep.subr.mxu0 0.0
    %5529 = vmatpush1.msra.mxu0 0.0
    %5530 = vmatprep.subr.mxu0 0.0
    %5531 = vmatpush1.msra.mxu0 0.0
    %5532 = vmatprep.subr.mxu0 0.0
    %5533 = vmatpush1.msra.mxu0 0.0
    %5534 = vmatprep.subr.mxu0 0.0
    %5535 = vmatpush1.msra.mxu0 0.0
    %5536 = vmatprep.subr.mxu0 0.0
    %5537 = vmatpush1.msra.mxu0 0.0
    %5538 = vmatprep.subr.mxu0 0.0
    %5539 = vmatpush1.msra.mxu0 0.0
    %5540 = vmatprep.subr.mxu0 0.0
    %5541 = vmatpush1.msra.mxu0 0.0
    %5542 = vmatprep.subr.mxu0 0.0
    %5543 = vmatpush1.msra.mxu0 0.0
    %5544 = vmatprep.subr.mxu0 0.0
    %5545 = vmatpush1.msra.mxu0 0.0
    %5546 = vmatprep.subr.mxu0 0.0
    %5547 = vmatpush1.msra.mxu0 0.0
    %5548 = vmatprep.subr.mxu0 0.0
    %5549 = vmatpush1.msra.mxu0 0.0
    %5550 = vmatprep.subr.mxu0 0.0
    %5551 = vmatpush1.msra.mxu0 0.0
    %5552 = vmatprep.subr.mxu0 0.0
    %5553 = vmatpush1.msra.mxu0 0.0
    %5554 = vmatprep.subr.mxu0 0.0
    %5555 = vmatpush1.msra.mxu0 0.0
    %5556 = vmatprep.mubr.f32.mxu0 0.0
    %5557 = vmatmul.mubr.f32.gmra.mrb[0].mxu0 %v5463
    %v5558 = vpop.f32.mrb[0].mxu0
    %v5559 = vadd.f32 %v5461, %v5558
    %v5560 = vpop.f32.mrb[0].mxu0
    %5561 = vmatprep.mubr.f32.mxu0 0.0
    %5562 = vmatmul.mubr.f32.gmra.mrb[0].mxu0 %v5466
    %v5563 = vpop.f32.mrb[0].mxu0
    %v5564 = vadd.f32 %v5461, %v5563
    %v5565 = vpop.f32.mrb[0].mxu0
    %5566 = vmatprep.mubr.f32.mxu0 0.0
    %5567 = vmatmul.mubr.f32.gmra.mrb[0].mxu0 %v5469
    %v5568 = vpop.f32.mrb[0].mxu0
    %v5569 = vadd.f32 %v5461, %v5568
    %v5570 = vpop.f32.mrb[0].mxu0
    %5571 = vmatprep.mubr.f32.mxu0 0.0
    %5572 = vmatmul.mubr.f32.gmra.mrb[0].mxu0 %v5472
    %v5573 = vpop.f32.mrb[0].mxu0
    %v5574 = vadd.f32 %v5461, %v5573
    %v5575 = vpop.f32.mrb[0].mxu0
    %5576 = vmatprep.mubr.f32.mxu0 0.0
    %5577 = vmatmul.mubr.f32.gmra.mrb[0].mxu0 %v5475
    %v5578 = vpop.f32.mrb[0].mxu0
    %v5579 = vadd.f32 %v5461, %v5578
    %v5580 = vpop.f32.mrb[0].mxu0
    %5581 = vmatprep.mubr.f32.mxu0 0.0
    %5582 = vmatmul.mubr.f32.gmra.mrb[0].mxu0 %v5478
    %v5583 = vpop.f32.mrb[0].mxu0
    %v5584 = vadd.f32 %v5461, %v5583
    %v5585 = vpop.f32.mrb[0].mxu0
    %5586 = vmatprep.mubr.f32.mxu0 0.0
    %5587 = vmatmul.mubr.f32.gmra.mrb[0].mxu0 %v5481
    %v5588 = vpop.f32.mrb[0].mxu0
    %v5589 = vadd.f32 %v5461, %v5588
    %v5590 = vpop.f32.mrb[0].mxu0
    %5591 = vmatprep.mubr.f32.mxu0 0.0
    %5592 = vmatmul.mubr.f32.gmra.mrb[0].mxu0 %v5484
    %v5593 = vpop.f32.mrb[0].mxu0
    %v5594 = vadd.f32 %v5461, %v5593
    %v5595 = vpop.f32.mrb[0].mxu0
    %5596 = vmatprep.mubr.f32.mxu0 0.0
    %5597 = vmatmul.mubr.f32.gmra.mrb[0].mxu0 %v5487
    %v5598 = vpop.f32.mrb[0].mxu0
    %v5599 = vadd.f32 %v5461, %v5598
    %v5600 = vpop.f32.mrb[0].mxu0
    %5601 = vmatprep.mubr.f32.mxu0 0.0
    %5602 = vmatmul.mubr.f32.gmra.mrb[0].mxu0 %v5490
    %v5603 = vpop.f32.mrb[0].mxu0
    %v5604 = vadd.f32 %v5461, %v5603
    %v5605 = vpop.f32.mrb[0].mxu0
    %5606 = vdwg.mxu0
    %v5607 = vsel %vm191, %v5559, 0.0
    %5608 = vadd.xlane.f32.xlu0 %v5607
    %v5609 = vpop.xlane.xlu0 %5608
    %v5610 = vsel %vm191, %v5564, 0.0
    %5611 = vadd.xlane.f32.xlu0 %v5610
    %v5612 = vpop.xlane.xlu0 %5611
    %v5613 = vsel %vm191, %v5569, 0.0
    %5614 = vadd.xlane.f32.xlu0 %v5613
    %v5615 = vpop.xlane.xlu0 %5614
    %v5616 = vsel %vm191, %v5574, 0.0
    %5617 = vadd.xlane.f32.xlu0 %v5616
    %v5618 = vpop.xlane.xlu0 %5617
    %v5619 = vsel %vm191, %v5579, 0.0
    %5620 = vadd.xlane.f32.xlu0 %v5619
    %v5621 = vpop.xlane.xlu0 %5620
    %v5622 = vsel %vm191, %v5584, 0.0
    %5623 = vadd.xlane.f32.xlu0 %v5622
    %v5624 = vpop.xlane.xlu0 %5623
    %v5625 = vsel %vm191, %v5589, 0.0
    %5626 = vadd.xlane.f32.xlu0 %v5625
    %v5627 = vpop.xlane.xlu0 %5626
    %v5628 = vsel %vm191, %v5594, 0.0
    %5629 = vadd.xlane.f32.xlu0 %v5628
    %v5630 = vpop.xlane.xlu0 %5629
    %v5631 = vsel %vm191, %v5599, 0.0
    %5632 = vadd.xlane.f32.xlu0 %v5631
    %v5633 = vpop.xlane.xlu0 %5632
    %v5634 = vsel %vm191, %v5604, 0.0
    %5635 = vadd.xlane.f32.xlu0 %v5634
    %v5636 = vpop.xlane.xlu0 %5635
    %v5637 = vmul.f32 %v5609, %v222
    %v5638 = vmul.f32 %v5612, %v222
    %v5639 = vmul.f32 %v5615, %v222
    %v5640 = vmul.f32 %v5618, %v222
    %v5641 = vmul.f32 %v5621, %v222
    %v5642 = vmul.f32 %v5624, %v222
    %v5643 = vmul.f32 %v5627, %v222
    %v5644 = vmul.f32 %v5630, %v222
    %v5645 = vmul.f32 %v5633, %v222
    %v5646 = vmul.f32 %v5636, %v222
    %v5647 = vsub.f32 %v5559, %v5637
    %v5648 = vsub.f32 %v5564, %v5638
    %v5649 = vsub.f32 %v5569, %v5639
    %v5650 = vsub.f32 %v5574, %v5640
    %v5651 = vsub.f32 %v5579, %v5641
    %v5652 = vsub.f32 %v5584, %v5642
    %v5653 = vsub.f32 %v5589, %v5643
    %v5654 = vsub.f32 %v5594, %v5644
    %v5655 = vsub.f32 %v5599, %v5645
    %v5656 = vsub.f32 %v5604, %v5646
    %v5657 = vmul.f32 %v5647, %v5647
    %v5658 = vmul.f32 %v5648, %v5648
    %v5659 = vmul.f32 %v5649, %v5649
    %v5660 = vmul.f32 %v5650, %v5650
    %v5661 = vmul.f32 %v5651, %v5651
    %v5662 = vmul.f32 %v5652, %v5652
    %v5663 = vmul.f32 %v5653, %v5653
    %v5664 = vmul.f32 %v5654, %v5654
    %v5665 = vmul.f32 %v5655, %v5655
    %v5666 = vmul.f32 %v5656, %v5656
    %v5667 = vsel %vm191, %v5657, 0.0
    %5668 = vadd.xlane.f32.xlu0 %v5667
    %v5669 = vpop.xlane.xlu0 %5668
    %v5670 = vsel %vm191, %v5658, 0.0
    %5671 = vadd.xlane.f32.xlu0 %v5670
    %v5672 = vpop.xlane.xlu0 %5671
    %v5673 = vsel %vm191, %v5659, 0.0
    %5674 = vadd.xlane.f32.xlu0 %v5673
    %v5675 = vpop.xlane.xlu0 %5674
    %v5676 = vsel %vm191, %v5660, 0.0
    %5677 = vadd.xlane.f32.xlu0 %v5676
    %v5678 = vpop.xlane.xlu0 %5677
    %v5679 = vsel %vm191, %v5661, 0.0
    %5680 = vadd.xlane.f32.xlu0 %v5679
    %v5681 = vpop.xlane.xlu0 %5680
    %v5682 = vsel %vm191, %v5662, 0.0
    %5683 = vadd.xlane.f32.xlu0 %v5682
    %v5684 = vpop.xlane.xlu0 %5683
    %v5685 = vsel %vm191, %v5663, 0.0
    %5686 = vadd.xlane.f32.xlu0 %v5685
    %v5687 = vpop.xlane.xlu0 %5686
    %v5688 = vsel %vm191, %v5664, 0.0
    %5689 = vadd.xlane.f32.xlu0 %v5688
    %v5690 = vpop.xlane.xlu0 %5689
    %v5691 = vsel %vm191, %v5665, 0.0
    %5692 = vadd.xlane.f32.xlu0 %v5691
    %v5693 = vpop.xlane.xlu0 %5692
    %v5694 = vsel %vm191, %v5666, 0.0
    %5695 = vadd.xlane.f32.xlu0 %v5694
    %v5696 = vpop.xlane.xlu0 %5695
    %v5697 = vmul.f32 %v5669, %v222
    %v5698 = vmul.f32 %v5672, %v222
    %v5699 = vmul.f32 %v5675, %v222
    %v5700 = vmul.f32 %v5678, %v222
    %v5701 = vmul.f32 %v5681, %v222
    %v5702 = vmul.f32 %v5684, %v222
    %v5703 = vmul.f32 %v5687, %v222
    %v5704 = vmul.f32 %v5690, %v222
    %v5705 = vmul.f32 %v5693, %v222
    %v5706 = vmul.f32 %v5696, %v222
    %v5707 = vadd.f32 %v5697, 1e-12
    %v5708 = vadd.f32 %v5698, 1e-12
    %v5709 = vadd.f32 %v5699, 1e-12
    %v5710 = vadd.f32 %v5700, 1e-12
    %v5711 = vadd.f32 %v5701, 1e-12
    %v5712 = vadd.f32 %v5702, 1e-12
    %v5713 = vadd.f32 %v5703, 1e-12
    %v5714 = vadd.f32 %v5704, 1e-12
    %v5715 = vadd.f32 %v5705, 1e-12
    %v5716 = vadd.f32 %v5706, 1e-12
    %v5717 = vrsqrt.pop %v5707
    %v5718 = vrsqrt.pop %v5708
    %v5719 = vrsqrt.pop %v5709
    %v5720 = vrsqrt.pop %v5710
    %v5721 = vrsqrt.pop %v5711
    %v5722 = vrsqrt.pop %v5712
    %v5723 = vrsqrt.pop %v5713
    %v5724 = vrsqrt.pop %v5714
    %v5725 = vrsqrt.pop %v5715
    %v5726 = vrsqrt.pop %v5716
    %v5727 = vmul.f32 %v5647, %v5717
    %v5728 = vmul.f32 %v5648, %v5718
    %v5729 = vmul.f32 %v5649, %v5719
    %v5730 = vmul.f32 %v5650, %v5720
    %v5731 = vmul.f32 %v5651, %v5721
    %v5732 = vmul.f32 %v5652, %v5722
    %v5733 = vmul.f32 %v5653, %v5723
    %v5734 = vmul.f32 %v5654, %v5724
    %v5735 = vmul.f32 %v5655, %v5725
    %v5736 = vmul.f32 %v5656, %v5726
    %v5737 = vlaneseq
    %v5738 = vshrl.u32 %v5737, 7
    %v5739 = vsub.s32 1, %v5738
    %v5740 = vrot.slane %v39, %v5739
    %v5741 = vmul.f32 %v5727, %v5740
    %v5742 = vmul.f32 %v5728, %v5740
    %v5743 = vmul.f32 %v5729, %v5740
    %v5744 = vmul.f32 %v5730, %v5740
    %v5745 = vmul.f32 %v5731, %v5740
    %v5746 = vmul.f32 %v5732, %v5740
    %v5747 = vmul.f32 %v5733, %v5740
    %v5748 = vmul.f32 %v5734, %v5740
    %v5749 = vmul.f32 %v5735, %v5740
    %v5750 = vmul.f32 %v5736, %v5740
    %v5751 = vlaneseq
    %v5752 = vshrl.u32 %v5751, 7
    %v5753 = vsub.s32 2, %v5752
    %v5754 = vrot.slane %v39, %v5753
    %v5755 = vadd.f32 %v5741, %v5754
    %v5756 = vadd.f32 %v5742, %v5754
    %v5757 = vadd.f32 %v5743, %v5754
    %v5758 = vadd.f32 %v5744, %v5754
    %v5759 = vadd.f32 %v5745, %v5754
    %v5760 = vadd.f32 %v5746, %v5754
    %v5761 = vadd.f32 %v5747, %v5754
    %v5762 = vadd.f32 %v5748, %v5754
    %v5763 = vadd.f32 %v5749, %v5754
    %v5764 = vadd.f32 %v5750, %v5754
    %v5765 = vmax.f32 %v5755, 0.0
    %v5766 = vmax.f32 %v5756, 0.0
    %v5767 = vmax.f32 %v5757, 0.0
    %v5768 = vmax.f32 %v5758, 0.0
    %v5769 = vmax.f32 %v5759, 0.0
    %v5770 = vmax.f32 %v5760, 0.0
    %v5771 = vmax.f32 %v5761, 0.0
    %v5772 = vmax.f32 %v5762, 0.0
    %v5773 = vmax.f32 %v5763, 0.0
    %v5774 = vmax.f32 %v5764, 0.0
    %v5775 = vsel %vm975, %v5774, 0.0
    %v5776 = vsel %vm976, %v5765, 0.0
    %v5777 = vsel %vm977, %v5766, 0.0
    %v5778 = vsel %vm978, %v5767, 0.0
    %v5779 = vsel %vm979, %v5768, 0.0
    %v5780 = vsel %vm980, %v5769, 0.0
    %v5781 = vsel %vm981, %v5770, 0.0
    %v5782 = vsel %vm982, %v5771, 0.0
    %v5783 = vsel %vm983, %v5772, 0.0
    %v5784 = vsel %vm984, %v5773, 0.0
    %5785 = vst.msk [vmem:[#allocation2] sm:$0xff] %vm191, %v5775
    %5786 = vst.msk [vmem:[#allocation2 + $0x8] sm:$0xff] %vm191, %v5776
    %5787 = vst.msk [vmem:[#allocation2 + $0x10] sm:$0xff] %vm191, %v5777
    %5788 = vst.msk [vmem:[#allocation2 + $0x18] sm:$0xff] %vm191, %v5778
    %5789 = vst.msk [vmem:[#allocation2 + $0x20] sm:$0xff] %vm191, %v5779
    %5790 = vst.msk [vmem:[#allocation2 + $0x28] sm:$0xff] %vm191, %v5780
    %5791 = vst.msk [vmem:[#allocation2 + $0x30] sm:$0xff] %vm191, %v5781
    %5792 = vst.msk [vmem:[#allocation2 + $0x38] sm:$0xff] %vm191, %v5782
    %5793 = vst.msk [vmem:[#allocation2 + $0x40] sm:$0xff] %vm191, %v5783
    %5794 = vst.msk [vmem:[#allocation2 + $0x48] sm:$0xff] %vm191, %v5784
    %v5795 = vrot.slane %v5765, 1
    %v5796 = vrot.slane %v5766, 1
    %v5797 = vrot.slane %v5767, 1
    %v5798 = vrot.slane %v5768, 1
    %v5799 = vrot.slane %v5769, 1
    %v5800 = vrot.slane %v5770, 1
    %v5801 = vrot.slane %v5771, 1
    %v5802 = vrot.slane %v5772, 1
    %v5803 = vrot.slane %v5773, 1
    %v5804 = vrot.slane %v5774, 1
    %v5805 = vsel %vm1015, %v5803, %v5804
    %v5806 = vsel %vm1015, %v5802, %v5803
    %v5807 = vsel %vm1015, %v5801, %v5802
    %v5808 = vsel %vm1015, %v5800, %v5801
    %v5809 = vsel %vm1015, %v5799, %v5800
    %v5810 = vsel %vm1015, %v5798, %v5799
    %v5811 = vsel %vm1015, %v5797, %v5798
    %v5812 = vsel %vm1015, %v5796, %v5797
    %v5813 = vsel %vm1015, %v5795, %v5796
    %v5814 = vsel %vm1015, %v5804, %v5795
    %v5815 = vsel %vm1036, %v5814, 0.0
    %v5816 = vsel %vm1037, %v5813, 0.0
    %v5817 = vsel %vm1038, %v5812, 0.0
    %v5818 = vsel %vm1039, %v5811, 0.0
    %v5819 = vsel %vm1040, %v5810, 0.0
    %v5820 = vsel %vm1041, %v5809, 0.0
    %v5821 = vsel %vm1042, %v5808, 0.0
    %v5822 = vsel %vm1043, %v5807, 0.0
    %v5823 = vsel %vm1044, %v5806, 0.0
    %v5824 = vsel %vm1045, %v5805, 0.0
    %5835 = vrot.lane.b32.xlu0 %v5815, 16
    %v5836 = vpop.permute.xlu0 %5835
    %5837 = vrot.lane.b32.xlu0 %v5816, 16
    %v5838 = vpop.permute.xlu0 %5837
    %5839 = vrot.lane.b32.xlu0 %v5817, 16
    %v5840 = vpop.permute.xlu0 %5839
    %5841 = vrot.lane.b32.xlu0 %v5818, 16
    %v5842 = vpop.permute.xlu0 %5841
    %5843 = vrot.lane.b32.xlu0 %v5819, 16
    %v5844 = vpop.permute.xlu0 %5843
    %5845 = vrot.lane.b32.xlu0 %v5820, 16
    %v5846 = vpop.permute.xlu0 %5845
    %5847 = vrot.lane.b32.xlu0 %v5821, 16
    %v5848 = vpop.permute.xlu0 %5847
    %5849 = vrot.lane.b32.xlu0 %v5822, 16
    %v5850 = vpop.permute.xlu0 %5849
    %5851 = vrot.lane.b32.xlu0 %v5823, 16
    %v5852 = vpop.permute.xlu0 %5851
    %5853 = vrot.lane.b32.xlu0 %v5824, 16
    %v5854 = vpop.permute.xlu0 %5853
    %5865 = vst.msk [vmem:[#allocation2] sm:$0xff] %vm1096, %v5836
    %5866 = vst.msk [vmem:[#allocation2 + $0x8] sm:$0xff] %vm1096, %v5838
    %5867 = vst.msk [vmem:[#allocation2 + $0x10] sm:$0xff] %vm1096, %v5840
    %5868 = vst.msk [vmem:[#allocation2 + $0x18] sm:$0xff] %vm1096, %v5842
    %5869 = vst.msk [vmem:[#allocation2 + $0x20] sm:$0xff] %vm1096, %v5844
    %5870 = vst.msk [vmem:[#allocation2 + $0x28] sm:$0xff] %vm1096, %v5846
    %5871 = vst.msk [vmem:[#allocation2 + $0x30] sm:$0xff] %vm1096, %v5848
    %5872 = vst.msk [vmem:[#allocation2 + $0x38] sm:$0xff] %vm1096, %v5850
    %5873 = vst.msk [vmem:[#allocation2 + $0x40] sm:$0xff] %vm1096, %v5852
    %5874 = vst.msk [vmem:[#allocation2 + $0x48] sm:$0xff] %vm1096, %v5854
    %v5875 = vrot.slane %v5765, 2
    %v5876 = vrot.slane %v5766, 2
    %v5877 = vrot.slane %v5767, 2
    %v5878 = vrot.slane %v5768, 2
    %v5879 = vrot.slane %v5769, 2
    %v5880 = vrot.slane %v5770, 2
    %v5881 = vrot.slane %v5771, 2
    %v5882 = vrot.slane %v5772, 2
    %v5883 = vrot.slane %v5773, 2
    %v5884 = vrot.slane %v5774, 2
    %v5885 = vsel %vm1117, %v5883, %v5884
    %v5886 = vsel %vm1117, %v5882, %v5883
    %v5887 = vsel %vm1117, %v5881, %v5882
    %v5888 = vsel %vm1117, %v5880, %v5881
    %v5889 = vsel %vm1117, %v5879, %v5880
    %v5890 = vsel %vm1117, %v5878, %v5879
    %v5891 = vsel %vm1117, %v5877, %v5878
    %v5892 = vsel %vm1117, %v5876, %v5877
    %v5893 = vsel %vm1117, %v5875, %v5876
    %v5894 = vsel %vm1117, %v5884, %v5875
    %v5895 = vsel %vm1138, %v5894, 0.0
    %v5896 = vsel %vm1139, %v5893, 0.0
    %v5897 = vsel %vm1140, %v5892, 0.0
    %v5898 = vsel %vm1141, %v5891, 0.0
    %v5899 = vsel %vm1142, %v5890, 0.0
    %v5900 = vsel %vm1143, %v5889, 0.0
    %v5901 = vsel %vm1144, %v5888, 0.0
    %v5902 = vsel %vm1145, %v5887, 0.0
    %v5903 = vsel %vm1146, %v5886, 0.0
    %v5904 = vsel %vm1147, %v5885, 0.0
    %5915 = vrot.lane.b32.xlu0 %v5895, 32
    %v5916 = vpop.permute.xlu0 %5915
    %5917 = vrot.lane.b32.xlu0 %v5896, 32
    %v5918 = vpop.permute.xlu0 %5917
    %5919 = vrot.lane.b32.xlu0 %v5897, 32
    %v5920 = vpop.permute.xlu0 %5919
    %5921 = vrot.lane.b32.xlu0 %v5898, 32
    %v5922 = vpop.permute.xlu0 %5921
    %5923 = vrot.lane.b32.xlu0 %v5899, 32
    %v5924 = vpop.permute.xlu0 %5923
    %5925 = vrot.lane.b32.xlu0 %v5900, 32
    %v5926 = vpop.permute.xlu0 %5925
    %5927 = vrot.lane.b32.xlu0 %v5901, 32
    %v5928 = vpop.permute.xlu0 %5927
    %5929 = vrot.lane.b32.xlu0 %v5902, 32
    %v5930 = vpop.permute.xlu0 %5929
    %5931 = vrot.lane.b32.xlu0 %v5903, 32
    %v5932 = vpop.permute.xlu0 %5931
    %5933 = vrot.lane.b32.xlu0 %v5904, 32
    %v5934 = vpop.permute.xlu0 %5933
    %5945 = vst.msk [vmem:[#allocation2] sm:$0xff] %vm1198, %v5916
    %5946 = vst.msk [vmem:[#allocation2 + $0x8] sm:$0xff] %vm1198, %v5918
    %5947 = vst.msk [vmem:[#allocation2 + $0x10] sm:$0xff] %vm1198, %v5920
    %5948 = vst.msk [vmem:[#allocation2 + $0x18] sm:$0xff] %vm1198, %v5922
    %5949 = vst.msk [vmem:[#allocation2 + $0x20] sm:$0xff] %vm1198, %v5924
    %5950 = vst.msk [vmem:[#allocation2 + $0x28] sm:$0xff] %vm1198, %v5926
    %5951 = vst.msk [vmem:[#allocation2 + $0x30] sm:$0xff] %vm1198, %v5928
    %5952 = vst.msk [vmem:[#allocation2 + $0x38] sm:$0xff] %vm1198, %v5930
    %5953 = vst.msk [vmem:[#allocation2 + $0x40] sm:$0xff] %vm1198, %v5932
    %5954 = vst.msk [vmem:[#allocation2 + $0x48] sm:$0xff] %vm1198, %v5934
    %v5955 = vrot.slane %v5765, 3
    %v5956 = vrot.slane %v5766, 3
    %v5957 = vrot.slane %v5767, 3
    %v5958 = vrot.slane %v5768, 3
    %v5959 = vrot.slane %v5769, 3
    %v5960 = vrot.slane %v5770, 3
    %v5961 = vrot.slane %v5771, 3
    %v5962 = vrot.slane %v5772, 3
    %v5963 = vrot.slane %v5773, 3
    %v5964 = vrot.slane %v5774, 3
    %v5965 = vsel %vm1219, %v5963, %v5964
    %v5966 = vsel %vm1219, %v5962, %v5963
    %v5967 = vsel %vm1219, %v5961, %v5962
    %v5968 = vsel %vm1219, %v5960, %v5961
    %v5969 = vsel %vm1219, %v5959, %v5960
    %v5970 = vsel %vm1219, %v5958, %v5959
    %v5971 = vsel %vm1219, %v5957, %v5958
    %v5972 = vsel %vm1219, %v5956, %v5957
    %v5973 = vsel %vm1219, %v5955, %v5956
    %v5974 = vsel %vm1219, %v5964, %v5955
    %v5975 = vsel %vm1240, %v5974, 0.0
    %v5976 = vsel %vm1241, %v5973, 0.0
    %v5977 = vsel %vm1242, %v5972, 0.0
    %v5978 = vsel %vm1243, %v5971, 0.0
    %v5979 = vsel %vm1244, %v5970, 0.0
    %v5980 = vsel %vm1245, %v5969, 0.0
    %v5981 = vsel %vm1246, %v5968, 0.0
    %v5982 = vsel %vm1247, %v5967, 0.0
    %v5983 = vsel %vm1248, %v5966, 0.0
    %v5984 = vsel %vm1249, %v5965, 0.0
    %5995 = vrot.lane.b32.xlu0 %v5975, 48
    %v5996 = vpop.permute.xlu0 %5995
    %5997 = vrot.lane.b32.xlu0 %v5976, 48
    %v5998 = vpop.permute.xlu0 %5997
    %5999 = vrot.lane.b32.xlu0 %v5977, 48
    %v6000 = vpop.permute.xlu0 %5999
    %6001 = vrot.lane.b32.xlu0 %v5978, 48
    %v6002 = vpop.permute.xlu0 %6001
    %6003 = vrot.lane.b32.xlu0 %v5979, 48
    %v6004 = vpop.permute.xlu0 %6003
    %6005 = vrot.lane.b32.xlu0 %v5980, 48
    %v6006 = vpop.permute.xlu0 %6005
    %6007 = vrot.lane.b32.xlu0 %v5981, 48
    %v6008 = vpop.permute.xlu0 %6007
    %6009 = vrot.lane.b32.xlu0 %v5982, 48
    %v6010 = vpop.permute.xlu0 %6009
    %6011 = vrot.lane.b32.xlu0 %v5983, 48
    %v6012 = vpop.permute.xlu0 %6011
    %6013 = vrot.lane.b32.xlu0 %v5984, 48
    %v6014 = vpop.permute.xlu0 %6013
    %6025 = vst.msk [vmem:[#allocation2] sm:$0xff] %vm1300, %v5996
    %6026 = vst.msk [vmem:[#allocation2 + $0x8] sm:$0xff] %vm1300, %v5998
    %6027 = vst.msk [vmem:[#allocation2 + $0x10] sm:$0xff] %vm1300, %v6000
    %6028 = vst.msk [vmem:[#allocation2 + $0x18] sm:$0xff] %vm1300, %v6002
    %6029 = vst.msk [vmem:[#allocation2 + $0x20] sm:$0xff] %vm1300, %v6004
    %6030 = vst.msk [vmem:[#allocation2 + $0x28] sm:$0xff] %vm1300, %v6006
    %6031 = vst.msk [vmem:[#allocation2 + $0x30] sm:$0xff] %vm1300, %v6008
    %6032 = vst.msk [vmem:[#allocation2 + $0x38] sm:$0xff] %vm1300, %v6010
    %6033 = vst.msk [vmem:[#allocation2 + $0x40] sm:$0xff] %vm1300, %v6012
    %6034 = vst.msk [vmem:[#allocation2 + $0x48] sm:$0xff] %vm1300, %v6014
    %v6035 = vrot.slane %v5765, 4
    %v6036 = vrot.slane %v5766, 4
    %v6037 = vrot.slane %v5767, 4
    %v6038 = vrot.slane %v5768, 4
    %v6039 = vrot.slane %v5769, 4
    %v6040 = vrot.slane %v5770, 4
    %v6041 = vrot.slane %v5771, 4
    %v6042 = vrot.slane %v5772, 4
    %v6043 = vrot.slane %v5773, 4
    %v6044 = vrot.slane %v5774, 4
    %v6045 = vsel %vm1321, %v6043, %v6044
    %v6046 = vsel %vm1321, %v6042, %v6043
    %v6047 = vsel %vm1321, %v6041, %v6042
    %v6048 = vsel %vm1321, %v6040, %v6041
    %v6049 = vsel %vm1321, %v6039, %v6040
    %v6050 = vsel %vm1321, %v6038, %v6039
    %v6051 = vsel %vm1321, %v6037, %v6038
    %v6052 = vsel %vm1321, %v6036, %v6037
    %v6053 = vsel %vm1321, %v6035, %v6036
    %v6054 = vsel %vm1321, %v6044, %v6035
    %v6055 = vsel %vm1342, %v6054, 0.0
    %v6056 = vsel %vm1343, %v6053, 0.0
    %v6057 = vsel %vm1344, %v6052, 0.0
    %v6058 = vsel %vm1345, %v6051, 0.0
    %v6059 = vsel %vm1346, %v6050, 0.0
    %v6060 = vsel %vm1347, %v6049, 0.0
    %v6061 = vsel %vm1348, %v6048, 0.0
    %v6062 = vsel %vm1349, %v6047, 0.0
    %v6063 = vsel %vm1350, %v6046, 0.0
    %v6064 = vsel %vm1351, %v6045, 0.0
    %6075 = vrot.lane.b32.xlu0 %v6055, 64
    %v6076 = vpop.permute.xlu0 %6075
    %6077 = vrot.lane.b32.xlu0 %v6056, 64
    %v6078 = vpop.permute.xlu0 %6077
    %6079 = vrot.lane.b32.xlu0 %v6057, 64
    %v6080 = vpop.permute.xlu0 %6079
    %6081 = vrot.lane.b32.xlu0 %v6058, 64
    %v6082 = vpop.permute.xlu0 %6081
    %6083 = vrot.lane.b32.xlu0 %v6059, 64
    %v6084 = vpop.permute.xlu0 %6083
    %6085 = vrot.lane.b32.xlu0 %v6060, 64
    %v6086 = vpop.permute.xlu0 %6085
    %6087 = vrot.lane.b32.xlu0 %v6061, 64
    %v6088 = vpop.permute.xlu0 %6087
    %6089 = vrot.lane.b32.xlu0 %v6062, 64
    %v6090 = vpop.permute.xlu0 %6089
    %6091 = vrot.lane.b32.xlu0 %v6063, 64
    %v6092 = vpop.permute.xlu0 %6091
    %6093 = vrot.lane.b32.xlu0 %v6064, 64
    %v6094 = vpop.permute.xlu0 %6093
    %6105 = vst.msk [vmem:[#allocation2] sm:$0xff] %vm1402, %v6076
    %6106 = vst.msk [vmem:[#allocation2 + $0x8] sm:$0xff] %vm1402, %v6078
    %6107 = vst.msk [vmem:[#allocation2 + $0x10] sm:$0xff] %vm1402, %v6080
    %6108 = vst.msk [vmem:[#allocation2 + $0x18] sm:$0xff] %vm1402, %v6082
    %6109 = vst.msk [vmem:[#allocation2 + $0x20] sm:$0xff] %vm1402, %v6084
    %6110 = vst.msk [vmem:[#allocation2 + $0x28] sm:$0xff] %vm1402, %v6086
    %6111 = vst.msk [vmem:[#allocation2 + $0x30] sm:$0xff] %vm1402, %v6088
    %6112 = vst.msk [vmem:[#allocation2 + $0x38] sm:$0xff] %vm1402, %v6090
    %6113 = vst.msk [vmem:[#allocation2 + $0x40] sm:$0xff] %vm1402, %v6092
    %6114 = vst.msk [vmem:[#allocation2 + $0x48] sm:$0xff] %vm1402, %v6094
    %v6115 = vrot.slane %v5765, 5
    %v6116 = vrot.slane %v5766, 5
    %v6117 = vrot.slane %v5767, 5
    %v6118 = vrot.slane %v5768, 5
    %v6119 = vrot.slane %v5769, 5
    %v6120 = vrot.slane %v5770, 5
    %v6121 = vrot.slane %v5771, 5
    %v6122 = vrot.slane %v5772, 5
    %v6123 = vrot.slane %v5773, 5
    %v6124 = vrot.slane %v5774, 5
    %v6125 = vsel %vm1423, %v6123, %v6124
    %v6126 = vsel %vm1423, %v6122, %v6123
    %v6127 = vsel %vm1423, %v6121, %v6122
    %v6128 = vsel %vm1423, %v6120, %v6121
    %v6129 = vsel %vm1423, %v6119, %v6120
    %v6130 = vsel %vm1423, %v6118, %v6119
    %v6131 = vsel %vm1423, %v6117, %v6118
    %v6132 = vsel %vm1423, %v6116, %v6117
    %v6133 = vsel %vm1423, %v6115, %v6116
    %v6134 = vsel %vm1423, %v6124, %v6115
    %v6135 = vsel %vm1444, %v6134, 0.0
    %v6136 = vsel %vm1445, %v6133, 0.0
    %v6137 = vsel %vm1446, %v6132, 0.0
    %v6138 = vsel %vm1447, %v6131, 0.0
    %v6139 = vsel %vm1448, %v6130, 0.0
    %v6140 = vsel %vm1449, %v6129, 0.0
    %v6141 = vsel %vm1450, %v6128, 0.0
    %v6142 = vsel %vm1451, %v6127, 0.0
    %v6143 = vsel %vm1452, %v6126, 0.0
    %v6144 = vsel %vm1453, %v6125, 0.0
    %6155 = vrot.lane.b32.xlu0 %v6135, 80
    %v6156 = vpop.permute.xlu0 %6155
    %6157 = vrot.lane.b32.xlu0 %v6136, 80
    %v6158 = vpop.permute.xlu0 %6157
    %6159 = vrot.lane.b32.xlu0 %v6137, 80
    %v6160 = vpop.permute.xlu0 %6159
    %6161 = vrot.lane.b32.xlu0 %v6138, 80
    %v6162 = vpop.permute.xlu0 %6161
    %6163 = vrot.lane.b32.xlu0 %v6139, 80
    %v6164 = vpop.permute.xlu0 %6163
    %6165 = vrot.lane.b32.xlu0 %v6140, 80
    %v6166 = vpop.permute.xlu0 %6165
    %6167 = vrot.lane.b32.xlu0 %v6141, 80
    %v6168 = vpop.permute.xlu0 %6167
    %6169 = vrot.lane.b32.xlu0 %v6142, 80
    %v6170 = vpop.permute.xlu0 %6169
    %6171 = vrot.lane.b32.xlu0 %v6143, 80
    %v6172 = vpop.permute.xlu0 %6171
    %6173 = vrot.lane.b32.xlu0 %v6144, 80
    %v6174 = vpop.permute.xlu0 %6173
    %6185 = vst.msk [vmem:[#allocation2] sm:$0xff] %vm1504, %v6156
    %6186 = vst.msk [vmem:[#allocation2 + $0x8] sm:$0xff] %vm1504, %v6158
    %6187 = vst.msk [vmem:[#allocation2 + $0x10] sm:$0xff] %vm1504, %v6160
    %6188 = vst.msk [vmem:[#allocation2 + $0x18] sm:$0xff] %vm1504, %v6162
    %6189 = vst.msk [vmem:[#allocation2 + $0x20] sm:$0xff] %vm1504, %v6164
    %6190 = vst.msk [vmem:[#allocation2 + $0x28] sm:$0xff] %vm1504, %v6166
    %6191 = vst.msk [vmem:[#allocation2 + $0x30] sm:$0xff] %vm1504, %v6168
    %6192 = vst.msk [vmem:[#allocation2 + $0x38] sm:$0xff] %vm1504, %v6170
    %6193 = vst.msk [vmem:[#allocation2 + $0x40] sm:$0xff] %vm1504, %v6172
    %6194 = vst.msk [vmem:[#allocation2 + $0x48] sm:$0xff] %vm1504, %v6174
    %v6195 = vrot.slane %v5765, 6
    %v6196 = vrot.slane %v5766, 6
    %v6197 = vrot.slane %v5767, 6
    %v6198 = vrot.slane %v5768, 6
    %v6199 = vrot.slane %v5769, 6
    %v6200 = vrot.slane %v5770, 6
    %v6201 = vrot.slane %v5771, 6
    %v6202 = vrot.slane %v5772, 6
    %v6203 = vrot.slane %v5773, 6
    %v6204 = vrot.slane %v5774, 6
    %v6205 = vsel %vm1525, %v6203, %v6204
    %v6206 = vsel %vm1525, %v6202, %v6203
    %v6207 = vsel %vm1525, %v6201, %v6202
    %v6208 = vsel %vm1525, %v6200, %v6201
    %v6209 = vsel %vm1525, %v6199, %v6200
    %v6210 = vsel %vm1525, %v6198, %v6199
    %v6211 = vsel %vm1525, %v6197, %v6198
    %v6212 = vsel %vm1525, %v6196, %v6197
    %v6213 = vsel %vm1525, %v6195, %v6196
    %v6214 = vsel %vm1525, %v6204, %v6195
    %v6215 = vsel %vm1546, %v6214, 0.0
    %v6216 = vsel %vm1547, %v6213, 0.0
    %v6217 = vsel %vm1548, %v6212, 0.0
    %v6218 = vsel %vm1549, %v6211, 0.0
    %v6219 = vsel %vm1550, %v6210, 0.0
    %v6220 = vsel %vm1551, %v6209, 0.0
    %v6221 = vsel %vm1552, %v6208, 0.0
    %v6222 = vsel %vm1553, %v6207, 0.0
    %v6223 = vsel %vm1554, %v6206, 0.0
    %v6224 = vsel %vm1555, %v6205, 0.0
    %6235 = vrot.lane.b32.xlu0 %v6215, 96
    %v6236 = vpop.permute.xlu0 %6235
    %6237 = vrot.lane.b32.xlu0 %v6216, 96
    %v6238 = vpop.permute.xlu0 %6237
    %6239 = vrot.lane.b32.xlu0 %v6217, 96
    %v6240 = vpop.permute.xlu0 %6239
    %6241 = vrot.lane.b32.xlu0 %v6218, 96
    %v6242 = vpop.permute.xlu0 %6241
    %6243 = vrot.lane.b32.xlu0 %v6219, 96
    %v6244 = vpop.permute.xlu0 %6243
    %6245 = vrot.lane.b32.xlu0 %v6220, 96
    %v6246 = vpop.permute.xlu0 %6245
    %6247 = vrot.lane.b32.xlu0 %v6221, 96
    %v6248 = vpop.permute.xlu0 %6247
    %6249 = vrot.lane.b32.xlu0 %v6222, 96
    %v6250 = vpop.permute.xlu0 %6249
    %6251 = vrot.lane.b32.xlu0 %v6223, 96
    %v6252 = vpop.permute.xlu0 %6251
    %6253 = vrot.lane.b32.xlu0 %v6224, 96
    %v6254 = vpop.permute.xlu0 %6253
    %6265 = vst.msk [vmem:[#allocation2] sm:$0xff] %vm1606, %v6236
    %6266 = vst.msk [vmem:[#allocation2 + $0x8] sm:$0xff] %vm1606, %v6238
    %6267 = vst.msk [vmem:[#allocation2 + $0x10] sm:$0xff] %vm1606, %v6240
    %6268 = vst.msk [vmem:[#allocation2 + $0x18] sm:$0xff] %vm1606, %v6242
    %6269 = vst.msk [vmem:[#allocation2 + $0x20] sm:$0xff] %vm1606, %v6244
    %6270 = vst.msk [vmem:[#allocation2 + $0x28] sm:$0xff] %vm1606, %v6246
    %6271 = vst.msk [vmem:[#allocation2 + $0x30] sm:$0xff] %vm1606, %v6248
    %6272 = vst.msk [vmem:[#allocation2 + $0x38] sm:$0xff] %vm1606, %v6250
    %6273 = vst.msk [vmem:[#allocation2 + $0x40] sm:$0xff] %vm1606, %v6252
    %6274 = vst.msk [vmem:[#allocation2 + $0x48] sm:$0xff] %vm1606, %v6254
    %v6275 = vrot.slane %v5765, 7
    %v6276 = vrot.slane %v5766, 7
    %v6277 = vrot.slane %v5767, 7
    %v6278 = vrot.slane %v5768, 7
    %v6279 = vrot.slane %v5769, 7
    %v6280 = vrot.slane %v5770, 7
    %v6281 = vrot.slane %v5771, 7
    %v6282 = vrot.slane %v5772, 7
    %v6283 = vrot.slane %v5773, 7
    %v6284 = vrot.slane %v5774, 7
    %v6285 = vsel %vm1627, %v6283, %v6284
    %v6286 = vsel %vm1627, %v6282, %v6283
    %v6287 = vsel %vm1627, %v6281, %v6282
    %v6288 = vsel %vm1627, %v6280, %v6281
    %v6289 = vsel %vm1627, %v6279, %v6280
    %v6290 = vsel %vm1627, %v6278, %v6279
    %v6291 = vsel %vm1627, %v6277, %v6278
    %v6292 = vsel %vm1627, %v6276, %v6277
    %v6293 = vsel %vm1627, %v6275, %v6276
    %v6294 = vsel %vm1627, %v6284, %v6275
    %v6295 = vsel %vm1648, %v6294, 0.0
    %v6296 = vsel %vm1649, %v6293, 0.0
    %v6297 = vsel %vm1650, %v6292, 0.0
    %v6298 = vsel %vm1651, %v6291, 0.0
    %v6299 = vsel %vm1652, %v6290, 0.0
    %v6300 = vsel %vm1653, %v6289, 0.0
    %v6301 = vsel %vm1654, %v6288, 0.0
    %v6302 = vsel %vm1655, %v6287, 0.0
    %v6303 = vsel %vm1656, %v6286, 0.0
    %v6304 = vsel %vm1657, %v6285, 0.0
    %6315 = vrot.lane.b32.xlu0 %v6295, 112
    %v6316 = vpop.permute.xlu0 %6315
    %6317 = vrot.lane.b32.xlu0 %v6296, 112
    %v6318 = vpop.permute.xlu0 %6317
    %6319 = vrot.lane.b32.xlu0 %v6297, 112
    %v6320 = vpop.permute.xlu0 %6319
    %6321 = vrot.lane.b32.xlu0 %v6298, 112
    %v6322 = vpop.permute.xlu0 %6321
    %6323 = vrot.lane.b32.xlu0 %v6299, 112
    %v6324 = vpop.permute.xlu0 %6323
    %6325 = vrot.lane.b32.xlu0 %v6300, 112
    %v6326 = vpop.permute.xlu0 %6325
    %6327 = vrot.lane.b32.xlu0 %v6301, 112
    %v6328 = vpop.permute.xlu0 %6327
    %6329 = vrot.lane.b32.xlu0 %v6302, 112
    %v6330 = vpop.permute.xlu0 %6329
    %6331 = vrot.lane.b32.xlu0 %v6303, 112
    %v6332 = vpop.permute.xlu0 %6331
    %6333 = vrot.lane.b32.xlu0 %v6304, 112
    %v6334 = vpop.permute.xlu0 %6333
    %6345 = vst.msk [vmem:[#allocation2] sm:$0xff] %vm1708, %v6316
    %6346 = vst.msk [vmem:[#allocation2 + $0x8] sm:$0xff] %vm1708, %v6318
    %6347 = vst.msk [vmem:[#allocation2 + $0x10] sm:$0xff] %vm1708, %v6320
    %6348 = vst.msk [vmem:[#allocation2 + $0x18] sm:$0xff] %vm1708, %v6322
    %6349 = vst.msk [vmem:[#allocation2 + $0x20] sm:$0xff] %vm1708, %v6324
    %6350 = vst.msk [vmem:[#allocation2 + $0x28] sm:$0xff] %vm1708, %v6326
    %6351 = vst.msk [vmem:[#allocation2 + $0x30] sm:$0xff] %vm1708, %v6328
    %6352 = vst.msk [vmem:[#allocation2 + $0x38] sm:$0xff] %vm1708, %v6330
    %6353 = vst.msk [vmem:[#allocation2 + $0x40] sm:$0xff] %vm1708, %v6332
    %6354 = vst.msk [vmem:[#allocation2 + $0x48] sm:$0xff] %vm1708, %v6334
    %v6355 = vld [vmem:[#allocation2] sm:$0xff]
    %v6356 = vld [vmem:[#allocation2 + $0x8] sm:$0xff]
    %v6357 = vld [vmem:[#allocation2 + $0x10] sm:$0xff]
    %v6358 = vld [vmem:[#allocation2 + $0x18] sm:$0xff]
    %v6359 = vld [vmem:[#allocation2 + $0x20] sm:$0xff]
    %v6360 = vld [vmem:[#allocation2 + $0x28] sm:$0xff]
    %v6361 = vld [vmem:[#allocation2 + $0x30] sm:$0xff]
    %v6362 = vld [vmem:[#allocation2 + $0x38] sm:$0xff]
    %v6363 = vld [vmem:[#allocation2 + $0x40] sm:$0xff]
    %v6364 = vld [vmem:[#allocation2 + $0x48] sm:$0xff]
    %s6365 = scalar_lea.vmem %s6, 384
    %v6366 = vld [vmem:[%s6365] sm:$0xff]
    %v6367 = vld [vmem:[%s6365 + $0x8] sm:$0xff]
    %v6368 = vld [vmem:[%s6365 + $0x10] sm:$0xff]
    %v6369 = vld [vmem:[%s6365 + $0x18] sm:$0xff]
    %v6370 = vld [vmem:[%s6365 + $0x20] sm:$0xff]
    %v6371 = vld [vmem:[%s6365 + $0x28] sm:$0xff]
    %v6372 = vld [vmem:[%s6365 + $0x30] sm:$0xff]
    %v6373 = vld [vmem:[%s6365 + $0x38] sm:$0xff]
    %v6374 = vld [vmem:[%s6365 + $0x40] sm:$0xff]
    %v6375 = vld [vmem:[%s6365 + $0x48] sm:$0xff]
    %v6376 = vld [vmem:[%s6365 + $0x50] sm:$0xff]
    %v6377 = vld [vmem:[%s6365 + $0x58] sm:$0xff]
    %v6378 = vld [vmem:[%s6365 + $0x60] sm:$0xff]
    %v6379 = vld [vmem:[%s6365 + $0x68] sm:$0xff]
    %v6380 = vld [vmem:[%s6365 + $0x70] sm:$0xff]
    %v6381 = vld [vmem:[%s6365 + $0x78] sm:$0xff]
    %v6382 = vlaneseq
    %v6383 = vshrl.u32 %v6382, 7
    %v6384 = vsub.s32 3, %v6383
    %v6385 = vrot.slane %v39, %v6384
    %6386 = vmatprep.subr.mxu0 0.0
    %6387 = vmatpush1.msra.mxu0 %v6366
    %6388 = vmatprep.subr.mxu0 0.0
    %6389 = vmatpush1.msra.mxu0 %v6367
    %6390 = vmatprep.subr.mxu0 0.0
    %6391 = vmatpush1.msra.mxu0 %v6368
    %6392 = vmatprep.subr.mxu0 0.0
    %6393 = vmatpush1.msra.mxu0 %v6369
    %6394 = vmatprep.subr.mxu0 0.0
    %6395 = vmatpush1.msra.mxu0 %v6370
    %6396 = vmatprep.subr.mxu0 0.0
    %6397 = vmatpush1.msra.mxu0 %v6371
    %6398 = vmatprep.subr.mxu0 0.0
    %6399 = vmatpush1.msra.mxu0 %v6372
    %6400 = vmatprep.subr.mxu0 0.0
    %6401 = vmatpush1.msra.mxu0 %v6373
    %6402 = vmatprep.subr.mxu0 0.0
    %6403 = vmatpush1.msra.mxu0 %v6374
    %6404 = vmatprep.subr.mxu0 0.0
    %6405 = vmatpush1.msra.mxu0 %v6375
    %6406 = vmatprep.subr.mxu0 0.0
    %6407 = vmatpush1.msra.mxu0 %v6376
    %6408 = vmatprep.subr.mxu0 0.0
    %6409 = vmatpush1.msra.mxu0 %v6377
    %6410 = vmatprep.subr.mxu0 0.0
    %6411 = vmatpush1.msra.mxu0 %v6378
    %6412 = vmatprep.subr.mxu0 0.0
    %6413 = vmatpush1.msra.mxu0 %v6379
    %6414 = vmatprep.subr.mxu0 0.0
    %6415 = vmatpush1.msra.mxu0 %v6380
    %6416 = vmatprep.subr.mxu0 0.0
    %6417 = vmatpush1.msra.mxu0 %v6381
    %6418 = vmatprep.subr.mxu0 0.0
    %6419 = vmatpush1.msra.mxu0 0.0
    %6420 = vmatprep.subr.mxu0 0.0
    %6421 = vmatpush1.msra.mxu0 0.0
    %6422 = vmatprep.subr.mxu0 0.0
    %6423 = vmatpush1.msra.mxu0 0.0
    %6424 = vmatprep.subr.mxu0 0.0
    %6425 = vmatpush1.msra.mxu0 0.0
    %6426 = vmatprep.subr.mxu0 0.0
    %6427 = vmatpush1.msra.mxu0 0.0
    %6428 = vmatprep.subr.mxu0 0.0
    %6429 = vmatpush1.msra.mxu0 0.0
    %6430 = vmatprep.subr.mxu0 0.0
    %6431 = vmatpush1.msra.mxu0 0.0
    %6432 = vmatprep.subr.mxu0 0.0
    %6433 = vmatpush1.msra.mxu0 0.0
    %6434 = vmatprep.subr.mxu0 0.0
    %6435 = vmatpush1.msra.mxu0 0.0
    %6436 = vmatprep.subr.mxu0 0.0
    %6437 = vmatpush1.msra.mxu0 0.0
    %6438 = vmatprep.subr.mxu0 0.0
    %6439 = vmatpush1.msra.mxu0 0.0
    %6440 = vmatprep.subr.mxu0 0.0
    %6441 = vmatpush1.msra.mxu0 0.0
    %6442 = vmatprep.subr.mxu0 0.0
    %6443 = vmatpush1.msra.mxu0 0.0
    %6444 = vmatprep.subr.mxu0 0.0
    %6445 = vmatpush1.msra.mxu0 0.0
    %6446 = vmatprep.subr.mxu0 0.0
    %6447 = vmatpush1.msra.mxu0 0.0
    %6448 = vmatprep.subr.mxu0 0.0
    %6449 = vmatpush1.msra.mxu0 0.0
    %6450 = vmatprep.mubr.f32.mxu0 0.0
    %6451 = vmatmul.mubr.f32.gmra.mrb[0].mxu0 %v6355
    %v6452 = vpop.f32.mrb[0].mxu0
    %v6453 = vadd.f32 %v6385, %v6452
    %v6454 = vpop.f32.mrb[0].mxu0
    %6455 = vmatprep.mubr.f32.mxu0 0.0
    %6456 = vmatmul.mubr.f32.gmra.mrb[0].mxu0 %v6356
    %v6457 = vpop.f32.mrb[0].mxu0
    %v6458 = vadd.f32 %v6385, %v6457
    %v6459 = vpop.f32.mrb[0].mxu0
    %6460 = vmatprep.mubr.f32.mxu0 0.0
    %6461 = vmatmul.mubr.f32.gmra.mrb[0].mxu0 %v6357
    %v6462 = vpop.f32.mrb[0].mxu0
    %v6463 = vadd.f32 %v6385, %v6462
    %v6464 = vpop.f32.mrb[0].mxu0
    %6465 = vmatprep.mubr.f32.mxu0 0.0
    %6466 = vmatmul.mubr.f32.gmra.mrb[0].mxu0 %v6358
    %v6467 = vpop.f32.mrb[0].mxu0
    %v6468 = vadd.f32 %v6385, %v6467
    %v6469 = vpop.f32.mrb[0].mxu0
    %6470 = vmatprep.mubr.f32.mxu0 0.0
    %6471 = vmatmul.mubr.f32.gmra.mrb[0].mxu0 %v6359
    %v6472 = vpop.f32.mrb[0].mxu0
    %v6473 = vadd.f32 %v6385, %v6472
    %v6474 = vpop.f32.mrb[0].mxu0
    %6475 = vmatprep.mubr.f32.mxu0 0.0
    %6476 = vmatmul.mubr.f32.gmra.mrb[0].mxu0 %v6360
    %v6477 = vpop.f32.mrb[0].mxu0
    %v6478 = vadd.f32 %v6385, %v6477
    %v6479 = vpop.f32.mrb[0].mxu0
    %6480 = vmatprep.mubr.f32.mxu0 0.0
    %6481 = vmatmul.mubr.f32.gmra.mrb[0].mxu0 %v6361
    %v6482 = vpop.f32.mrb[0].mxu0
    %v6483 = vadd.f32 %v6385, %v6482
    %v6484 = vpop.f32.mrb[0].mxu0
    %6485 = vmatprep.mubr.f32.mxu0 0.0
    %6486 = vmatmul.mubr.f32.gmra.mrb[0].mxu0 %v6362
    %v6487 = vpop.f32.mrb[0].mxu0
    %v6488 = vadd.f32 %v6385, %v6487
    %v6489 = vpop.f32.mrb[0].mxu0
    %6490 = vmatprep.mubr.f32.mxu0 0.0
    %6491 = vmatmul.mubr.f32.gmra.mrb[0].mxu0 %v6363
    %v6492 = vpop.f32.mrb[0].mxu0
    %v6493 = vadd.f32 %v6385, %v6492
    %v6494 = vpop.f32.mrb[0].mxu0
    %6495 = vmatprep.mubr.f32.mxu0 0.0
    %6496 = vmatmul.mubr.f32.gmra.mrb[0].mxu0 %v6364
    %v6497 = vpop.f32.mrb[0].mxu0
    %v6498 = vadd.f32 %v6385, %v6497
    %v6499 = vpop.f32.mrb[0].mxu0
    %6500 = vdwg.mxu0
    %v6501 = vsel %vm191, %v6453, 0.0
    %6502 = vadd.xlane.f32.xlu0 %v6501
    %v6503 = vpop.xlane.xlu0 %6502
    %v6504 = vsel %vm191, %v6458, 0.0
    %6505 = vadd.xlane.f32.xlu0 %v6504
    %v6506 = vpop.xlane.xlu0 %6505
    %v6507 = vsel %vm191, %v6463, 0.0
    %6508 = vadd.xlane.f32.xlu0 %v6507
    %v6509 = vpop.xlane.xlu0 %6508
    %v6510 = vsel %vm191, %v6468, 0.0
    %6511 = vadd.xlane.f32.xlu0 %v6510
    %v6512 = vpop.xlane.xlu0 %6511
    %v6513 = vsel %vm191, %v6473, 0.0
    %6514 = vadd.xlane.f32.xlu0 %v6513
    %v6515 = vpop.xlane.xlu0 %6514
    %v6516 = vsel %vm191, %v6478, 0.0
    %6517 = vadd.xlane.f32.xlu0 %v6516
    %v6518 = vpop.xlane.xlu0 %6517
    %v6519 = vsel %vm191, %v6483, 0.0
    %6520 = vadd.xlane.f32.xlu0 %v6519
    %v6521 = vpop.xlane.xlu0 %6520
    %v6522 = vsel %vm191, %v6488, 0.0
    %6523 = vadd.xlane.f32.xlu0 %v6522
    %v6524 = vpop.xlane.xlu0 %6523
    %v6525 = vsel %vm191, %v6493, 0.0
    %6526 = vadd.xlane.f32.xlu0 %v6525
    %v6527 = vpop.xlane.xlu0 %6526
    %v6528 = vsel %vm191, %v6498, 0.0
    %6529 = vadd.xlane.f32.xlu0 %v6528
    %v6530 = vpop.xlane.xlu0 %6529
    %v6531 = vmul.f32 %v6503, %v222
    %v6532 = vmul.f32 %v6506, %v222
    %v6533 = vmul.f32 %v6509, %v222
    %v6534 = vmul.f32 %v6512, %v222
    %v6535 = vmul.f32 %v6515, %v222
    %v6536 = vmul.f32 %v6518, %v222
    %v6537 = vmul.f32 %v6521, %v222
    %v6538 = vmul.f32 %v6524, %v222
    %v6539 = vmul.f32 %v6527, %v222
    %v6540 = vmul.f32 %v6530, %v222
    %v6541 = vsub.f32 %v6453, %v6531
    %v6542 = vsub.f32 %v6458, %v6532
    %v6543 = vsub.f32 %v6463, %v6533
    %v6544 = vsub.f32 %v6468, %v6534
    %v6545 = vsub.f32 %v6473, %v6535
    %v6546 = vsub.f32 %v6478, %v6536
    %v6547 = vsub.f32 %v6483, %v6537
    %v6548 = vsub.f32 %v6488, %v6538
    %v6549 = vsub.f32 %v6493, %v6539
    %v6550 = vsub.f32 %v6498, %v6540
    %v6551 = vmul.f32 %v6541, %v6541
    %v6552 = vmul.f32 %v6542, %v6542
    %v6553 = vmul.f32 %v6543, %v6543
    %v6554 = vmul.f32 %v6544, %v6544
    %v6555 = vmul.f32 %v6545, %v6545
    %v6556 = vmul.f32 %v6546, %v6546
    %v6557 = vmul.f32 %v6547, %v6547
    %v6558 = vmul.f32 %v6548, %v6548
    %v6559 = vmul.f32 %v6549, %v6549
    %v6560 = vmul.f32 %v6550, %v6550
    %v6561 = vsel %vm191, %v6551, 0.0
    %6562 = vadd.xlane.f32.xlu0 %v6561
    %v6563 = vpop.xlane.xlu0 %6562
    %v6564 = vsel %vm191, %v6552, 0.0
    %6565 = vadd.xlane.f32.xlu0 %v6564
    %v6566 = vpop.xlane.xlu0 %6565
    %v6567 = vsel %vm191, %v6553, 0.0
    %6568 = vadd.xlane.f32.xlu0 %v6567
    %v6569 = vpop.xlane.xlu0 %6568
    %v6570 = vsel %vm191, %v6554, 0.0
    %6571 = vadd.xlane.f32.xlu0 %v6570
    %v6572 = vpop.xlane.xlu0 %6571
    %v6573 = vsel %vm191, %v6555, 0.0
    %6574 = vadd.xlane.f32.xlu0 %v6573
    %v6575 = vpop.xlane.xlu0 %6574
    %v6576 = vsel %vm191, %v6556, 0.0
    %6577 = vadd.xlane.f32.xlu0 %v6576
    %v6578 = vpop.xlane.xlu0 %6577
    %v6579 = vsel %vm191, %v6557, 0.0
    %6580 = vadd.xlane.f32.xlu0 %v6579
    %v6581 = vpop.xlane.xlu0 %6580
    %v6582 = vsel %vm191, %v6558, 0.0
    %6583 = vadd.xlane.f32.xlu0 %v6582
    %v6584 = vpop.xlane.xlu0 %6583
    %v6585 = vsel %vm191, %v6559, 0.0
    %6586 = vadd.xlane.f32.xlu0 %v6585
    %v6587 = vpop.xlane.xlu0 %6586
    %v6588 = vsel %vm191, %v6560, 0.0
    %6589 = vadd.xlane.f32.xlu0 %v6588
    %v6590 = vpop.xlane.xlu0 %6589
    %v6591 = vmul.f32 %v6563, %v222
    %v6592 = vmul.f32 %v6566, %v222
    %v6593 = vmul.f32 %v6569, %v222
    %v6594 = vmul.f32 %v6572, %v222
    %v6595 = vmul.f32 %v6575, %v222
    %v6596 = vmul.f32 %v6578, %v222
    %v6597 = vmul.f32 %v6581, %v222
    %v6598 = vmul.f32 %v6584, %v222
    %v6599 = vmul.f32 %v6587, %v222
    %v6600 = vmul.f32 %v6590, %v222
    %v6601 = vadd.f32 %v6591, 1e-12
    %v6602 = vadd.f32 %v6592, 1e-12
    %v6603 = vadd.f32 %v6593, 1e-12
    %v6604 = vadd.f32 %v6594, 1e-12
    %v6605 = vadd.f32 %v6595, 1e-12
    %v6606 = vadd.f32 %v6596, 1e-12
    %v6607 = vadd.f32 %v6597, 1e-12
    %v6608 = vadd.f32 %v6598, 1e-12
    %v6609 = vadd.f32 %v6599, 1e-12
    %v6610 = vadd.f32 %v6600, 1e-12
    %v6611 = vrsqrt.pop %v6601
    %v6612 = vrsqrt.pop %v6602
    %v6613 = vrsqrt.pop %v6603
    %v6614 = vrsqrt.pop %v6604
    %v6615 = vrsqrt.pop %v6605
    %v6616 = vrsqrt.pop %v6606
    %v6617 = vrsqrt.pop %v6607
    %v6618 = vrsqrt.pop %v6608
    %v6619 = vrsqrt.pop %v6609
    %v6620 = vrsqrt.pop %v6610
    %v6621 = vmul.f32 %v6541, %v6611
    %v6622 = vmul.f32 %v6542, %v6612
    %v6623 = vmul.f32 %v6543, %v6613
    %v6624 = vmul.f32 %v6544, %v6614
    %v6625 = vmul.f32 %v6545, %v6615
    %v6626 = vmul.f32 %v6546, %v6616
    %v6627 = vmul.f32 %v6547, %v6617
    %v6628 = vmul.f32 %v6548, %v6618
    %v6629 = vmul.f32 %v6549, %v6619
    %v6630 = vmul.f32 %v6550, %v6620
    %v6631 = vlaneseq
    %v6632 = vshrl.u32 %v6631, 7
    %v6633 = vsub.s32 4, %v6632
    %v6634 = vrot.slane %v39, %v6633
    %v6635 = vmul.f32 %v6621, %v6634
    %v6636 = vmul.f32 %v6622, %v6634
    %v6637 = vmul.f32 %v6623, %v6634
    %v6638 = vmul.f32 %v6624, %v6634
    %v6639 = vmul.f32 %v6625, %v6634
    %v6640 = vmul.f32 %v6626, %v6634
    %v6641 = vmul.f32 %v6627, %v6634
    %v6642 = vmul.f32 %v6628, %v6634
    %v6643 = vmul.f32 %v6629, %v6634
    %v6644 = vmul.f32 %v6630, %v6634
    %v6645 = vlaneseq
    %v6646 = vshrl.u32 %v6645, 7
    %v6647 = vsub.s32 5, %v6646
    %v6648 = vrot.slane %v39, %v6647
    %v6649 = vadd.f32 %v6635, %v6648
    %v6650 = vadd.f32 %v6636, %v6648
    %v6651 = vadd.f32 %v6637, %v6648
    %v6652 = vadd.f32 %v6638, %v6648
    %v6653 = vadd.f32 %v6639, %v6648
    %v6654 = vadd.f32 %v6640, %v6648
    %v6655 = vadd.f32 %v6641, %v6648
    %v6656 = vadd.f32 %v6642, %v6648
    %v6657 = vadd.f32 %v6643, %v6648
    %v6658 = vadd.f32 %v6644, %v6648
    %v6659 = vmax.f32 %v6649, 0.0
    %v6660 = vmax.f32 %v6650, 0.0
    %v6661 = vmax.f32 %v6651, 0.0
    %v6662 = vmax.f32 %v6652, 0.0
    %v6663 = vmax.f32 %v6653, 0.0
    %v6664 = vmax.f32 %v6654, 0.0
    %v6665 = vmax.f32 %v6655, 0.0
    %v6666 = vmax.f32 %v6656, 0.0
    %v6667 = vmax.f32 %v6657, 0.0
    %v6668 = vmax.f32 %v6658, 0.0
    %s6669 = scalar_lea.vmem %s7, 48
    %v6670 = vld [vmem:[%s6669] sm:$0xff]
    %v6671 = vld [vmem:[%s6669 + $0x8] sm:$0xff]
    %v6672 = vlaneseq
    %v6673 = vshrl.u32 %v6672, 7
    %v6674 = vsub.s32 6, %v6673
    %v6675 = vrot.slane %v39, %v6674
    %v6677 = vsel %vm191, %v6659, 0
    %v6680 = vsel %vm191, %v6660, 0
    %v6683 = vsel %vm191, %v6661, 0
    %v6686 = vsel %vm191, %v6662, 0
    %v6689 = vsel %vm191, %v6663, 0
    %v6692 = vsel %vm191, %v6664, 0
    %v6695 = vsel %vm191, %v6665, 0
    %v6698 = vsel %vm191, %v6666, 0
    %v6701 = vsel %vm191, %v6667, 0
    %v6704 = vsel %vm191, %v6668, 0
    %6706 = vmatprep.subr.mxu0 0.0
    %6707 = vmatpush1.msra.mxu0 %v6670
    %6708 = vmatprep.subr.mxu0 0.0
    %6709 = vmatpush1.msra.mxu0 %v6671
    %6710 = vmatprep.subr.mxu0 0.0
    %6711 = vmatpush1.msra.mxu0 0.0
    %6712 = vmatprep.subr.mxu0 0.0
    %6713 = vmatpush1.msra.mxu0 0.0
    %6714 = vmatprep.subr.mxu0 0.0
    %6715 = vmatpush1.msra.mxu0 0.0
    %6716 = vmatprep.subr.mxu0 0.0
    %6717 = vmatpush1.msra.mxu0 0.0
    %6718 = vmatprep.subr.mxu0 0.0
    %6719 = vmatpush1.msra.mxu0 0.0
    %6720 = vmatprep.subr.mxu0 0.0
    %6721 = vmatpush1.msra.mxu0 0.0
    %6722 = vmatprep.subr.mxu0 0.0
    %6723 = vmatpush1.msra.mxu0 0.0
    %6724 = vmatprep.subr.mxu0 0.0
    %6725 = vmatpush1.msra.mxu0 0.0
    %6726 = vmatprep.subr.mxu0 0.0
    %6727 = vmatpush1.msra.mxu0 0.0
    %6728 = vmatprep.subr.mxu0 0.0
    %6729 = vmatpush1.msra.mxu0 0.0
    %6730 = vmatprep.subr.mxu0 0.0
    %6731 = vmatpush1.msra.mxu0 0.0
    %6732 = vmatprep.subr.mxu0 0.0
    %6733 = vmatpush1.msra.mxu0 0.0
    %6734 = vmatprep.subr.mxu0 0.0
    %6735 = vmatpush1.msra.mxu0 0.0
    %6736 = vmatprep.subr.mxu0 0.0
    %6737 = vmatpush1.msra.mxu0 0.0
    %6738 = vmatprep.subr.mxu0 0.0
    %6739 = vmatpush1.msra.mxu0 0.0
    %6740 = vmatprep.subr.mxu0 0.0
    %6741 = vmatpush1.msra.mxu0 0.0
    %6742 = vmatprep.subr.mxu0 0.0
    %6743 = vmatpush1.msra.mxu0 0.0
    %6744 = vmatprep.subr.mxu0 0.0
    %6745 = vmatpush1.msra.mxu0 0.0
    %6746 = vmatprep.subr.mxu0 0.0
    %6747 = vmatpush1.msra.mxu0 0.0
    %6748 = vmatprep.subr.mxu0 0.0
    %6749 = vmatpush1.msra.mxu0 0.0
    %6750 = vmatprep.subr.mxu0 0.0
    %6751 = vmatpush1.msra.mxu0 0.0
    %6752 = vmatprep.subr.mxu0 0.0
    %6753 = vmatpush1.msra.mxu0 0.0
    %6754 = vmatprep.subr.mxu0 0.0
    %6755 = vmatpush1.msra.mxu0 0.0
    %6756 = vmatprep.subr.mxu0 0.0
    %6757 = vmatpush1.msra.mxu0 0.0
    %6758 = vmatprep.subr.mxu0 0.0
    %6759 = vmatpush1.msra.mxu0 0.0
    %6760 = vmatprep.subr.mxu0 0.0
    %6761 = vmatpush1.msra.mxu0 0.0
    %6762 = vmatprep.subr.mxu0 0.0
    %6763 = vmatpush1.msra.mxu0 0.0
    %6764 = vmatprep.subr.mxu0 0.0
    %6765 = vmatpush1.msra.mxu0 0.0
    %6766 = vmatprep.subr.mxu0 0.0
    %6767 = vmatpush1.msra.mxu0 0.0
    %6768 = vmatprep.subr.mxu0 0.0
    %6769 = vmatpush1.msra.mxu0 0.0
    %6770 = vmatprep.mubr.f32.mxu0 0.0
    %6771 = vmatmul.mubr.f32.gmra.mrb[0].mxu0 %v6677
    %v6772 = vpop.f32.mrb[0].mxu0
    %v6773 = vadd.f32 %v6675, %v6772
    %v6774 = vpop.f32.mrb[0].mxu0
    %6775 = vmatprep.mubr.f32.mxu0 0.0
    %6776 = vmatmul.mubr.f32.gmra.mrb[0].mxu0 %v6680
    %v6777 = vpop.f32.mrb[0].mxu0
    %v6778 = vadd.f32 %v6675, %v6777
    %v6779 = vpop.f32.mrb[0].mxu0
    %6780 = vmatprep.mubr.f32.mxu0 0.0
    %6781 = vmatmul.mubr.f32.gmra.mrb[0].mxu0 %v6683
    %v6782 = vpop.f32.mrb[0].mxu0
    %v6783 = vadd.f32 %v6675, %v6782
    %v6784 = vpop.f32.mrb[0].mxu0
    %6785 = vmatprep.mubr.f32.mxu0 0.0
    %6786 = vmatmul.mubr.f32.gmra.mrb[0].mxu0 %v6686
    %v6787 = vpop.f32.mrb[0].mxu0
    %v6788 = vadd.f32 %v6675, %v6787
    %v6789 = vpop.f32.mrb[0].mxu0
    %6790 = vmatprep.mubr.f32.mxu0 0.0
    %6791 = vmatmul.mubr.f32.gmra.mrb[0].mxu0 %v6689
    %v6792 = vpop.f32.mrb[0].mxu0
    %v6793 = vadd.f32 %v6675, %v6792
    %v6794 = vpop.f32.mrb[0].mxu0
    %6795 = vmatprep.mubr.f32.mxu0 0.0
    %6796 = vmatmul.mubr.f32.gmra.mrb[0].mxu0 %v6692
    %v6797 = vpop.f32.mrb[0].mxu0
    %v6798 = vadd.f32 %v6675, %v6797
    %v6799 = vpop.f32.mrb[0].mxu0
    %6800 = vmatprep.mubr.f32.mxu0 0.0
    %6801 = vmatmul.mubr.f32.gmra.mrb[0].mxu0 %v6695
    %v6802 = vpop.f32.mrb[0].mxu0
    %v6803 = vadd.f32 %v6675, %v6802
    %v6804 = vpop.f32.mrb[0].mxu0
    %6805 = vmatprep.mubr.f32.mxu0 0.0
    %6806 = vmatmul.mubr.f32.gmra.mrb[0].mxu0 %v6698
    %v6807 = vpop.f32.mrb[0].mxu0
    %v6808 = vadd.f32 %v6675, %v6807
    %v6809 = vpop.f32.mrb[0].mxu0
    %6810 = vmatprep.mubr.f32.mxu0 0.0
    %6811 = vmatmul.mubr.f32.gmra.mrb[0].mxu0 %v6701
    %v6812 = vpop.f32.mrb[0].mxu0
    %v6813 = vadd.f32 %v6675, %v6812
    %v6814 = vpop.f32.mrb[0].mxu0
    %6815 = vmatprep.mubr.f32.mxu0 0.0
    %6816 = vmatmul.mubr.f32.gmra.mrb[0].mxu0 %v6704
    %v6817 = vpop.f32.mrb[0].mxu0
    %v6818 = vadd.f32 %v6675, %v6817
    %v6819 = vpop.f32.mrb[0].mxu0
    %6820 = vdwg.mxu0
    %v6821 = vadd.f32 %v6773, %v5275
    %v6822 = vadd.f32 %v6778, %v5276
    %v6823 = vadd.f32 %v6783, %v5277
    %v6824 = vadd.f32 %v6788, %v5278
    %v6825 = vadd.f32 %v6793, %v5279
    %v6826 = vadd.f32 %v6798, %v5280
    %v6827 = vadd.f32 %v6803, %v5281
    %v6828 = vadd.f32 %v6808, %v5282
    %v6829 = vadd.f32 %v6813, %v5283
    %v6830 = vadd.f32 %v6818, %v5284
    %s6831 = sld [smem:[#allocation4]]
    %s6832 = scvt.s32.f32 %s6831
    %v6833 = vstv %s6832
    %vm6834 = vcmp.eq.f32.partialorder %v91, %v6833
    %vm6835 = vcmp.eq.f32.partialorder %v92, %v6833
    %vm6836 = vcmp.eq.f32.partialorder %v93, %v6833
    %vm6837 = vcmp.eq.f32.partialorder %v94, %v6833
    %vm6838 = vcmp.eq.f32.partialorder %v95, %v6833
    %vm6839 = vcmp.eq.f32.partialorder %v96, %v6833
    %vm6840 = vcmp.eq.f32.partialorder %v97, %v6833
    %vm6841 = vcmp.eq.f32.partialorder %v98, %v6833
    %vm6842 = vcmp.eq.f32.partialorder %v99, %v6833
    %vm6843 = vcmp.eq.f32.partialorder %v100, %v6833
    %v6844 = vsel %vm6834, 1, 0
    %v6845 = vsel %vm6835, 1, 0
    %v6846 = vsel %vm6836, 1, 0
    %v6847 = vsel %vm6837, 1, 0
    %v6848 = vsel %vm6838, 1, 0
    %v6849 = vsel %vm6839, 1, 0
    %v6850 = vsel %vm6840, 1, 0
    %v6851 = vsel %vm6841, 1, 0
    %v6852 = vsel %vm6842, 1, 0
    %v6853 = vsel %vm6843, 1, 0
    %v6854 = vcvt.s32.f32 %v6844
    %v6855 = vcvt.s32.f32 %v6845
    %v6856 = vcvt.s32.f32 %v6846
    %v6857 = vcvt.s32.f32 %v6847
    %v6858 = vcvt.s32.f32 %v6848
    %v6859 = vcvt.s32.f32 %v6849
    %v6860 = vcvt.s32.f32 %v6850
    %v6861 = vcvt.s32.f32 %v6851
    %v6862 = vcvt.s32.f32 %v6852
    %v6863 = vcvt.s32.f32 %v6853
    %v6864 = vmul.f32 %v6821, %v6854
    %v6865 = vmul.f32 %v6822, %v6855
    %v6866 = vmul.f32 %v6823, %v6856
    %v6867 = vmul.f32 %v6824, %v6857
    %v6868 = vmul.f32 %v6825, %v6858
    %v6869 = vmul.f32 %v6826, %v6859
    %v6870 = vmul.f32 %v6827, %v6860
    %v6871 = vmul.f32 %v6828, %v6861
    %v6872 = vmul.f32 %v6829, %v6862
    %v6873 = vmul.f32 %v6830, %v6863
    %v6874 = vsel %vm474, %v6864, 0.0
    %v6875 = vsel %vm474, %v6865, 0.0
    %v6876 = vadd.f32 %v6874, %v6875
    %v6877 = vsel %vm474, %v6866, 0.0
    %v6878 = vadd.f32 %v6876, %v6877
    %v6879 = vsel %vm474, %v6867, 0.0
    %v6880 = vadd.f32 %v6878, %v6879
    %v6881 = vsel %vm474, %v6868, 0.0
    %v6882 = vadd.f32 %v6880, %v6881
    %v6883 = vrot.slane %v6882, 4
    %v6884 = vadd.f32 %v6882, %v6883
    %v6885 = vrot.slane %v6884, 2
    %v6886 = vadd.f32 %v6884, %v6885
    %v6887 = vrot.slane %v6886, 1
    %v6888 = vadd.f32 %v6886, %v6887
    %v6889 = vsel %vm474, %v6869, 0.0
    %v6890 = vsel %vm474, %v6870, 0.0
    %v6891 = vadd.f32 %v6889, %v6890
    %v6892 = vsel %vm474, %v6871, 0.0
    %v6893 = vadd.f32 %v6891, %v6892
    %v6894 = vsel %vm474, %v6872, 0.0
    %v6895 = vadd.f32 %v6893, %v6894
    %v6896 = vsel %vm474, %v6873, 0.0
    %v6897 = vadd.f32 %v6895, %v6896
    %v6898 = vrot.slane %v6897, 4
    %v6899 = vadd.f32 %v6897, %v6898
    %v6900 = vrot.slane %v6899, 2
    %v6901 = vadd.f32 %v6899, %v6900
    %v6902 = vrot.slane %v6901, 1
    %v6903 = vadd.f32 %v6901, %v6902
    %vm6904 = vcmask 1040384
    %v6905 = vsel %vm6904, %v6888, %v6903
    %v6906 = vld [vmem:[%s2] sm:$0x3]
    %6908 = vrot.lane.b32.xlu0 %v6906, 32
    %v6909 = vpop.permute.xlu0 %6908
    %v6911 = vsel %vm474, %v6905, %v6909
    %v6912 = vld [vmem:[%s8] sm:$0xff]
    %v6913 = vld [vmem:[%s8 + $0x8] sm:$0xff]
    %v6914 = vld [vmem:[%s8 + $0x10] sm:$0xff]
    %v6915 = vld [vmem:[%s8 + $0x18] sm:$0xff]
    %v6916 = vld [vmem:[%s8 + $0x20] sm:$0x1]
    %v6917 = vlaneseq
    %v6918 = vshrl.u32 %v6917, 7
    %v6919 = vsub.s32 1, %v6918
    %v6920 = vrot.slane %v35, %v6919
    %vm6921 = vcmask 269312
    %v6923 = vsel %vm6921, %v6911, 0
    %v6926 = vsel %vm6904, %v6916, 0
    %6928 = vmatprep.subr.mxu0 0.0
    %6929 = vmatpush1.msra.mxu0 %v6912
    %6930 = vmatprep.subr.mxu0 0.0
    %6931 = vmatpush1.msra.mxu0 %v6913
    %6932 = vmatprep.subr.mxu0 0.0
    %6933 = vmatpush1.msra.mxu0 %v6914
    %6934 = vmatprep.subr.mxu0 0.0
    %6935 = vmatpush1.msra.mxu0 %v6915
    %6936 = vmatprep.subr.mxu0 0.0
    %6937 = vmatpush1.msra.mxu0 %v6926
    %6938 = vmatprep.subr.mxu0 0.0
    %6939 = vmatpush1.msra.mxu0 0.0
    %6940 = vmatprep.subr.mxu0 0.0
    %6941 = vmatpush1.msra.mxu0 0.0
    %6942 = vmatprep.subr.mxu0 0.0
    %6943 = vmatpush1.msra.mxu0 0.0
    %6944 = vmatprep.subr.mxu0 0.0
    %6945 = vmatpush1.msra.mxu0 0.0
    %6946 = vmatprep.subr.mxu0 0.0
    %6947 = vmatpush1.msra.mxu0 0.0
    %6948 = vmatprep.subr.mxu0 0.0
    %6949 = vmatpush1.msra.mxu0 0.0
    %6950 = vmatprep.subr.mxu0 0.0
    %6951 = vmatpush1.msra.mxu0 0.0
    %6952 = vmatprep.subr.mxu0 0.0
    %6953 = vmatpush1.msra.mxu0 0.0
    %6954 = vmatprep.subr.mxu0 0.0
    %6955 = vmatpush1.msra.mxu0 0.0
    %6956 = vmatprep.subr.mxu0 0.0
    %6957 = vmatpush1.msra.mxu0 0.0
    %6958 = vmatprep.subr.mxu0 0.0
    %6959 = vmatpush1.msra.mxu0 0.0
    %6960 = vmatprep.subr.mxu0 0.0
    %6961 = vmatpush1.msra.mxu0 0.0
    %6962 = vmatprep.subr.mxu0 0.0
    %6963 = vmatpush1.msra.mxu0 0.0
    %6964 = vmatprep.subr.mxu0 0.0
    %6965 = vmatpush1.msra.mxu0 0.0
    %6966 = vmatprep.subr.mxu0 0.0
    %6967 = vmatpush1.msra.mxu0 0.0
    %6968 = vmatprep.subr.mxu0 0.0
    %6969 = vmatpush1.msra.mxu0 0.0
    %6970 = vmatprep.subr.mxu0 0.0
    %6971 = vmatpush1.msra.mxu0 0.0
    %6972 = vmatprep.subr.mxu0 0.0
    %6973 = vmatpush1.msra.mxu0 0.0
    %6974 = vmatprep.subr.mxu0 0.0
    %6975 = vmatpush1.msra.mxu0 0.0
    %6976 = vmatprep.subr.mxu0 0.0
    %6977 = vmatpush1.msra.mxu0 0.0
    %6978 = vmatprep.subr.mxu0 0.0
    %6979 = vmatpush1.msra.mxu0 0.0
    %6980 = vmatprep.subr.mxu0 0.0
    %6981 = vmatpush1.msra.mxu0 0.0
    %6982 = vmatprep.subr.mxu0 0.0
    %6983 = vmatpush1.msra.mxu0 0.0
    %6984 = vmatprep.subr.mxu0 0.0
    %6985 = vmatpush1.msra.mxu0 0.0
    %6986 = vmatprep.subr.mxu0 0.0
    %6987 = vmatpush1.msra.mxu0 0.0
    %6988 = vmatprep.subr.mxu0 0.0
    %6989 = vmatpush1.msra.mxu0 0.0
    %6990 = vmatprep.subr.mxu0 0.0
    %6991 = vmatpush1.msra.mxu0 0.0
    %6992 = vmatprep.mubr.f32.mxu0 0.0
    %6993 = vmatmul.mubr.f32.gmra.mrb[0].mxu0 %v6923
    %v6994 = vpop.f32.mrb[0].mxu0
    %v6995 = vadd.f32 %v6920, %v6994
    %v6996 = vpop.f32.mrb[0].mxu0
    %6997 = vdwg.mxu0
    %v6998 = vmax.f32 %v6995, 0.0
    %vm6999 = vcmask 263168
    %v7000 = vsel %vm6999, %v6998, 0.0
    %7001 = vadd.xlane.f32.xlu0 %v7000
    %v7002 = vpop.xlane.xlu0 %7001
    %v7003 = vrcp.pop 33.0
    %v7004 = vmul.f32 %v7002, %v7003
    %v7005 = vsub.f32 %v6998, %v7004
    %v7006 = vmul.f32 %v7005, %v7005
    %v7007 = vsel %vm6999, %v7006, 0.0
    %7008 = vadd.xlane.f32.xlu0 %v7007
    %v7009 = vpop.xlane.xlu0 %7008
    %v7010 = vmul.f32 %v7009, %v7003
    %v7011 = vadd.f32 %v7010, 1e-12
    %v7012 = vrsqrt.pop %v7011
    %v7013 = vmul.f32 %v7005, %v7012
    %v7014 = vld [vmem:[%s9] sm:$0xff]
    %v7015 = vld [vmem:[%s9 + $0x8] sm:$0xff]
    %v7016 = vld [vmem:[%s9 + $0x10] sm:$0xff]
    %v7017 = vld [vmem:[%s9 + $0x18] sm:$0xff]
    %v7018 = vld [vmem:[%s9 + $0x20] sm:$0x1]
    %v7019 = vlaneseq
    %v7020 = vshrl.u32 %v7019, 7
    %v7021 = vsub.s32 2, %v7020
    %v7022 = vrot.slane %v35, %v7021
    %v7024 = vsel %vm6921, %v7013, 0
    %v7027 = vsel %vm6904, %v7018, 0
    %7029 = vmatprep.subr.mxu0 0.0
    %7030 = vmatpush1.msra.mxu0 %v7014
    %7031 = vmatprep.subr.mxu0 0.0
    %7032 = vmatpush1.msra.mxu0 %v7015
    %7033 = vmatprep.subr.mxu0 0.0
    %7034 = vmatpush1.msra.mxu0 %v7016
    %7035 = vmatprep.subr.mxu0 0.0
    %7036 = vmatpush1.msra.mxu0 %v7017
    %7037 = vmatprep.subr.mxu0 0.0
    %7038 = vmatpush1.msra.mxu0 %v7027
    %7039 = vmatprep.subr.mxu0 0.0
    %7040 = vmatpush1.msra.mxu0 0.0
    %7041 = vmatprep.subr.mxu0 0.0
    %7042 = vmatpush1.msra.mxu0 0.0
    %7043 = vmatprep.subr.mxu0 0.0
    %7044 = vmatpush1.msra.mxu0 0.0
    %7045 = vmatprep.subr.mxu0 0.0
    %7046 = vmatpush1.msra.mxu0 0.0
    %7047 = vmatprep.subr.mxu0 0.0
    %7048 = vmatpush1.msra.mxu0 0.0
    %7049 = vmatprep.subr.mxu0 0.0
    %7050 = vmatpush1.msra.mxu0 0.0
    %7051 = vmatprep.subr.mxu0 0.0
    %7052 = vmatpush1.msra.mxu0 0.0
    %7053 = vmatprep.subr.mxu0 0.0
    %7054 = vmatpush1.msra.mxu0 0.0
    %7055 = vmatprep.subr.mxu0 0.0
    %7056 = vmatpush1.msra.mxu0 0.0
    %7057 = vmatprep.subr.mxu0 0.0
    %7058 = vmatpush1.msra.mxu0 0.0
    %7059 = vmatprep.subr.mxu0 0.0
    %7060 = vmatpush1.msra.mxu0 0.0
    %7061 = vmatprep.subr.mxu0 0.0
    %7062 = vmatpush1.msra.mxu0 0.0
    %7063 = vmatprep.subr.mxu0 0.0
    %7064 = vmatpush1.msra.mxu0 0.0
    %7065 = vmatprep.subr.mxu0 0.0
    %7066 = vmatpush1.msra.mxu0 0.0
    %7067 = vmatprep.subr.mxu0 0.0
    %7068 = vmatpush1.msra.mxu0 0.0
    %7069 = vmatprep.subr.mxu0 0.0
    %7070 = vmatpush1.msra.mxu0 0.0
    %7071 = vmatprep.subr.mxu0 0.0
    %7072 = vmatpush1.msra.mxu0 0.0
    %7073 = vmatprep.subr.mxu0 0.0
    %7074 = vmatpush1.msra.mxu0 0.0
    %7075 = vmatprep.subr.mxu0 0.0
    %7076 = vmatpush1.msra.mxu0 0.0
    %7077 = vmatprep.subr.mxu0 0.0
    %7078 = vmatpush1.msra.mxu0 0.0
    %7079 = vmatprep.subr.mxu0 0.0
    %7080 = vmatpush1.msra.mxu0 0.0
    %7081 = vmatprep.subr.mxu0 0.0
    %7082 = vmatpush1.msra.mxu0 0.0
    %7083 = vmatprep.subr.mxu0 0.0
    %7084 = vmatpush1.msra.mxu0 0.0
    %7085 = vmatprep.subr.mxu0 0.0
    %7086 = vmatpush1.msra.mxu0 0.0
    %7087 = vmatprep.subr.mxu0 0.0
    %7088 = vmatpush1.msra.mxu0 0.0
    %7089 = vmatprep.subr.mxu0 0.0
    %7090 = vmatpush1.msra.mxu0 0.0
    %7091 = vmatprep.subr.mxu0 0.0
    %7092 = vmatpush1.msra.mxu0 0.0
    %7093 = vmatprep.mubr.f32.mxu0 0.0
    %7094 = vmatmul.mubr.f32.gmra.mrb[0].mxu0 %v7024
    %v7095 = vpop.f32.mrb[0].mxu0
    %v7096 = vadd.f32 %v7022, %v7095
    %v7097 = vpop.f32.mrb[0].mxu0
    %7098 = vdwg.mxu0
    %7099 = vst [vmem:[#allocation5] sm:$0x3] %v7096
    // Predicated region
    $region38: #{tpu_custom_call.1} parent=1 // pred_check
      _
    $region39: #{tpu_custom_call.1} parent=1 // pred_check_branch
      %7101 = sbr.rel (0) target = $region41
    $region40: #{tpu_custom_call.1} parent=1 // pred_region
      %s7103 = ssub.s32 32, 32
      %7104 = vsyncadd [#allocation6], %s7103
      %s7106 = sshll.u32 [#allocation5], 4
      %s7107 = int_to_ptr.vmem [resolvable:$true] %s7106
      %7109 = dma.vmem_to_hbm [thread:$0]  %s7107, 32, %s10, [#allocation6]
    $region41: #{tpu_custom_call.1} parent=1 // pred_fallthru
      _
    // Predicated region
    $region42: #{tpu_custom_call.1} parent=1 // pred_check
      _
    $region43: #{tpu_custom_call.1} parent=1 // pred_check_branch
      %7111 = sbr.rel (0) target = $region45
    $region44: #{tpu_custom_call.1} parent=1 // pred_region
      %7112 = dma.done [#allocation6], 32
    $region45: #{tpu_custom_call.1} parent=1 // pred_fallthru
      _
    %7113 = vsyncpa [#allocation6], 1

</llo_original>
